<compile_context>
chip_gen: v7x
topology: tpu7x:2x2x1
jax: 0.10.0
libtpu: 0.0.40
codegen_flags: <defaults>
</compile_context>

<pallas_src>
import functools

import jax
import jax.numpy as jnp
from jax import lax
from jax.experimental import pallas as pl
from jax.experimental.pallas import tpu as pltpu

_CHUNK_TARGET = 1024   # points per inner step
_UNROLL_MAX = 16       # fully unroll the chunk loop up to this many chunks


# ------------------------------ fused Pallas kernel ------------------------------

def _pointnet_kernel(x_ref,
                     s_w1, s_b1, s_w2, s_b2, s_w3, s_b3,
                     s_w4, s_b4, s_w5, s_b5,
                     a_w6, a_b6,
                     e_w1b, e_b1, e_w2, e_b2, e_w3, e_b3,
                     out_ref, *, n_chunks, chunk, cp, x_dim):
    f32, bf16 = jnp.float32, jnp.bfloat16

    def tile(i):
        # (cp, chunk) bf16 tile: channels on sublanes, points on lanes.
        off = i * chunk
        if not isinstance(off, int):
            off = pl.multiple_of(off, chunk)
        return x_ref[:, :, pl.ds(off, chunk)][0]

    def mm(w_ref, a):
        # bf16 MXU matmul with f32 accumulation; bias/ReLU/max stay f32 on the VPU.
        return jnp.dot(w_ref[...], a, preferred_element_type=f32)

    def strip_max(acc, h):
        # Running max over 128-lane strips: pure VPU elementwise maxes into a
        # vreg-aligned (C, 128) accumulator; single XLU collapse after the loop.
        for k in range(chunk // 128):
            acc = jnp.maximum(acc, h[:, k * 128:(k + 1) * 128])
        return acc

    def chunk_loop(body, init):
        if n_chunks <= _UNROLL_MAX:      # full unroll: LLO sees across chunks
            acc = init
            for i in range(n_chunks):
                acc = body(i, acc)
            return acc
        return lax.fori_loop(0, n_chunks, body, init)

    # ---- STN point MLP, channel-major, online max over points ----
    def stn_body(i, acc):
        t = tile(i)
        h = jnp.maximum(mm(s_w1, t) + s_b1[...], 0.0)                    # (64, chunk)
        h = jnp.maximum(mm(s_w2, h.astype(bf16)) + s_b2[...], 0.0)       # (128, chunk)
        h = jnp.maximum(mm(s_w3, h.astype(bf16)) + s_b3[...], 0.0)       # (1024, chunk)
        return strip_max(acc, h)

    g128 = chunk_loop(stn_body, jnp.full((1024, 128), -jnp.inf, f32))
    g = jnp.max(g128, axis=1, keepdims=True)                             # (1024, 1)
    gb = jnp.broadcast_to(g, (1024, 128)).astype(bf16)                   # keep MXU N=128

    # ---- STN FC head (all 128 columns identical) ----
    h = jnp.maximum(mm(s_w4, gb) + s_b4[...], 0.0)                       # (512, 128)
    h = jnp.maximum(mm(s_w5, h.astype(bf16)) + s_b5[...], 0.0)           # (256, 128)
    # a_w6/a_b6 already fold We1c and the flattened identity into fc3, so column 0
    # of m stacks (We1c @ T^T)[:, a] for a = 0, 1, 2 (no t9 reshape needed).
    m = mm(a_w6, h.astype(bf16)) + a_b6[...]                             # (192, 128)

    # ---- assemble the transform-folded encoder conv1 weight (64, cp) ----
    lane = lax.broadcasted_iota(jnp.int32, (1, cp), 1)
    w1 = e_w1b[...]                                                      # feats cols, f32
    for a in range(3):
        col = m[64 * a:64 * (a + 1), 0:1]                                # (64, 1)
        w1 = w1 + col * (lane == a).astype(f32)
    w1 = w1.astype(bf16)

    # ---- encoder MLP, online max; accumulator starts at -inf (no final ReLU) ----
    def enc_body(i, acc):
        t = tile(i)
        h = jnp.maximum(jnp.dot(w1, t, preferred_element_type=f32) + e_b1[...], 0.0)
        h = jnp.maximum(mm(e_w2, h.astype(bf16)) + e_b2[...], 0.0)       # (128, chunk)
        h = mm(e_w3, h.astype(bf16)) + e_b3[...]                         # (x_dim, chunk)
        return strip_max(acc, h)

    o128 = chunk_loop(enc_body, jnp.full((x_dim, 128), -jnp.inf, f32))
    out_ref[0] = jnp.max(o128, axis=1, keepdims=True)                    # (x_dim, 1)


# --------------------------------- JAX wrapper -----------------------------------

def _const_spec(shape):
    nd = len(shape)
    return pl.BlockSpec(shape, lambda b, _nd=nd: (0,) * _nd)


def _prepare_kernel_params(p, D, cp, x_dim):
    """Base (PyTorch-oriented, BN-folded, f32) params -> kernel-ready arrays."""
    f32, bf16 = jnp.float32, jnp.bfloat16

    def col(b):
        return jnp.asarray(b, f32).reshape(-1, 1)

    k = {}
    s_w1 = jnp.zeros((64, cp), f32).at[:, :3].set(p["s_w1"])     # pad to cp channels
    k["s_w1"], k["s_b1"] = s_w1.astype(bf16), col(p["s_b1"])
    k["s_w2"], k["s_b2"] = p["s_w2"].astype(bf16), col(p["s_b2"])
    k["s_w3"], k["s_b3"] = p["s_w3"].astype(bf16), col(p["s_b3"])
    k["s_w4"], k["s_b4"] = p["s_w4"].astype(bf16), col(p["s_b4"])
    k["s_w5"], k["s_b5"] = p["s_w5"].astype(bf16), col(p["s_b5"])

    # Fold encoder conv1 coordinate weight through STN fc3 + flattened identity:
    #   (We1c @ T^T)[:, a] = We1c @ t9[3a:3a+3],  t9 = Ws6 @ f2 + bs6 + vec(I3)
    # Done in f32 here; one bf16 rounding of the combined weight.
    we1c = jnp.asarray(p["e_w1"][:, :3], f32)
    eye3 = jnp.eye(3, dtype=f32)
    a_blocks, d_blocks = [], []
    for a in range(3):
        a_blocks.append(we1c @ p["s_w6"][3 * a:3 * a + 3, :])            # (64, 256)
        d_blocks.append(we1c @ (p["s_b6"][3 * a:3 * a + 3] + eye3[a]))   # (64,)
    k["a_w6"] = jnp.concatenate(a_blocks, axis=0).astype(bf16)           # (192, 256)
    k["a_b6"] = jnp.concatenate(d_blocks, axis=0).reshape(-1, 1).astype(f32)

    # Non-coordinate (feature) part of encoder conv1; coord columns filled in-kernel.
    e_w1b = jnp.zeros((64, cp), f32)
    if D > 3:
        e_w1b = e_w1b.at[:, 3:D].set(p["e_w1"][:, 3:])
    k["e_w1b"], k["e_b1"] = e_w1b, col(p["e_b1"])
    k["e_w2"], k["e_b2"] = p["e_w2"].astype(bf16), col(p["e_b2"])
    k["e_w3"], k["e_b3"] = p["e_w3"].astype(bf16), col(p["e_b3"])
    return k


def pointnet_encoder_forward(x, params, x_dim):
    """x: (B, D, N) float32 (PyTorch NCW convention). Returns (B, x_dim) float32."""
    B, D, N = x.shape
    assert D >= 3, "PointNetEncoder expects at least 3 coordinate channels"
    cp = ((max(D, 8) + 7) // 8) * 8

    n0 = -(-N // _CHUNK_TARGET)
    chunk = ((-(-N // n0) + 127) // 128) * 128
    n_chunks = -(-N // chunk)
    Np = n_chunks * chunk

    # Single pad: channels -> cp (padded channels hit zero weight columns, exact),
    # points -> Np (edge mode replicates the last point: max-invariant).
    xp = jnp.pad(x.astype(jnp.float32), ((0, 0), (0, cp - D), (0, Np - N)),
                 mode="edge").astype(jnp.bfloat16)

    kp = _prepare_kernel_params(params, D, cp, x_dim)
    worder = ["s_w1", "s_b1", "s_w2", "s_b2", "s_w3", "s_b3",
              "s_w4", "s_b4", "s_w5", "s_b5", "a_w6", "a_b6",
              "e_w1b", "e_b1", "e_w2", "e_b2", "e_w3", "e_b3"]
    wargs = [kp[n] for n in worder]

    # Generation-dependent scoped VMEM limit (96 MiB on 128-MiB parts, cap-16 on v7x).
    try:
        vmem_cap = int(pltpu.get_tpu_info().vmem_capacity_bytes)
    except Exception:
        vmem_cap = 128 * 1024 * 1024
    vmem_limit = max(32 * 1024 * 1024,
                     min(vmem_cap - 16 * 1024 * 1024, 96 * 1024 * 1024))

    flops = B * (2 * Np * (cp * 64 + 64 * 128 + 128 * 1024)
                 + 2 * 128 * (1024 * 512 + 512 * 256 + 256 * 192)
                 + 2 * Np * (cp * 64 + 64 * 128 + 128 * x_dim))
    bytes_accessed = (B * cp * Np * 2 + B * x_dim * 4
                      + sum(int(a.size) * a.dtype.itemsize for a in wargs))

    out = pl.pallas_call(
        functools.partial(_pointnet_kernel, n_chunks=n_chunks, chunk=chunk,
                          cp=cp, x_dim=x_dim),
        out_shape=jax.ShapeDtypeStruct((B, x_dim, 1), jnp.float32),
        grid=(B,),
        in_specs=[
            pl.BlockSpec((1, cp, Np), lambda b: (b, 0, 0)),   # per-batch point cloud
            # Weights/biases: full-array blocks, constant index map (DMA'd once).
            # pl.Buffered(1) single-buffering skipped for compile robustness --
            # the duplicate buffer is ~1.7 MiB of bf16, negligible at this budget.
            *[_const_spec(a.shape) for a in wargs],
        ],
        out_specs=pl.BlockSpec((1, x_dim, 1), lambda b: (b, 0, 0)),
        compiler_params=pltpu.CompilerParams(
            dimension_semantics=("parallel",),                # batch axis -> megacore
            vmem_limit_bytes=int(vmem_limit)),
        cost_estimate=pl.CostEstimate(flops=int(flops), transcendentals=0,
                                      bytes_accessed=int(bytes_accessed)),
    )(xp, *wargs)

    return out[:, :, 0]


# ------------------------ deterministic parameter setup ---------------------------

def init_params(key, channel=4, x_dim=32, eps=1e-5):
    """BN-folded (inference running stats), PyTorch-oriented (C_out, C_in) f32 params."""
    keys = iter(jax.random.split(key, 64))

    def nrm(shape, scale):
        return scale * jax.random.normal(next(keys), shape, dtype=jnp.float32)

    def layer(cin, cout, with_bn=True, w_scale=0.1):
        w = nrm((cout, cin), w_scale)
        b = nrm((cout,), 0.05)
        if with_bn:
            gamma = 1.0 + nrm((cout,), 0.1)
            beta = nrm((cout,), 0.05)
            mean = nrm((cout,), 0.05)
            var = 0.5 + jnp.abs(nrm((cout,), 0.2))
            s = gamma / jnp.sqrt(var + eps)
            return w * s[:, None], (b - mean) * s + beta
        return w, b

    p = {}
    # STN(k=3)
    p["s_w1"], p["s_b1"] = layer(3, 64)
    p["s_w2"], p["s_b2"] = layer(64, 128)
    p["s_w3"], p["s_b3"] = layer(128, 1024)
    p["s_w4"], p["s_b4"] = layer(1024, 512)
    p["s_w5"], p["s_b5"] = layer(512, 256)
    p["s_w6"], p["s_b6"] = layer(256, 9, with_bn=False, w_scale=0.02)   # near-identity STN
    # Encoder
    p["e_w1"], p["e_b1"] = layer(channel, 64)
    p["e_w2"], p["e_b2"] = layer(64, 128)
    p["e_w3"], p["e_b3"] = layer(128, x_dim)
    return p


# ------------------------------ pure-JAX reference --------------------------------

def ref_forward(x, p, x_dim):
    """Mirror of the PyTorch module from the base params (independent of kernel
    folds), with the same bf16-matmul / f32-accumulation precision policy."""
    f32, bf16 = jnp.float32, jnp.bfloat16

    def mm(a, w):   # a: (..., K), w: PyTorch (C_out, K) -> (..., C_out)
        return jnp.dot(a.astype(bf16), w.T.astype(bf16), preferred_element_type=f32)

    B, D, N = x.shape
    pts = jnp.transpose(x, (0, 2, 1)).astype(f32)          # (B, N, D)
    c = pts[:, :, :3]
    h = jax.nn.relu(mm(c, p["s_w1"]) + p["s_b1"])
    h = jax.nn.relu(mm(h, p["s_w2"]) + p["s_b2"])
    h = jax.nn.relu(mm(h, p["s_w3"]) + p["s_b3"])
    g = jnp.max(h, axis=1)
    g = jax.nn.relu(mm(g, p["s_w4"]) + p["s_b4"])
    g = jax.nn.relu(mm(g, p["s_w5"]) + p["s_b5"])
    t9 = mm(g, p["s_w6"]) + p["s_b6"] + jnp.eye(3, dtype=f32).reshape(1, 9)
    trans = t9.reshape(B, 3, 3)
    ct = jnp.einsum("bnk,bkj->bnj", c, trans)
    xc = jnp.concatenate([ct, pts[:, :, 3:]], axis=-1) if D > 3 else ct
    h = jax.nn.relu(mm(xc, p["e_w1"]) + p["e_b1"])
    h = jax.nn.relu(mm(h, p["e_w2"]) + p["e_b2"])
    h = mm(h, p["e_w3"]) + p["e_b3"]
    return jnp.max(h, axis=1)


# ------------------------------------- main ---------------------------------------

if __name__ == "__main__":
    B, channel, N, x_dim = 2, 4, 16, 32
    key = jax.random.PRNGKey(0)
    kx, kp = jax.random.split(key)
    x = jax.random.normal(kx, (B, channel, N), dtype=jnp.float32)
    params = init_params(kp, channel=channel, x_dim=x_dim)

    fwd = jax.jit(pointnet_encoder_forward, static_argnums=(2,))
    out = jax.block_until_ready(fwd(x, params, x_dim))
    ref = jax.block_until_ready(ref_forward(x, params, x_dim))

    assert out.shape == (B, x_dim), out.shape
    err = float(jnp.max(jnp.abs(out - ref)))
    if not (err < 3e-2):
        raise AssertionError(f"kernel/reference mismatch: max abs err = {err}")
    print("KERNEL_OK")
</pallas_src>

<mosaic_0001>
module attributes {stable_mosaic.version = 11 : i64} {
  func.func @_pointnet_kernel(%arg0: i32, %arg1: memref<1x8x128xbf16, #tpu.memory_space<vmem>>, %arg2: memref<64x8xbf16, #tpu.memory_space<vmem>>, %arg3: memref<64x1xf32, #tpu.memory_space<vmem>>, %arg4: memref<128x64xbf16, #tpu.memory_space<vmem>>, %arg5: memref<128x1xf32, #tpu.memory_space<vmem>>, %arg6: memref<1024x128xbf16, #tpu.memory_space<vmem>>, %arg7: memref<1024x1xf32, #tpu.memory_space<vmem>>, %arg8: memref<512x1024xbf16, #tpu.memory_space<vmem>>, %arg9: memref<512x1xf32, #tpu.memory_space<vmem>>, %arg10: memref<256x512xbf16, #tpu.memory_space<vmem>>, %arg11: memref<256x1xf32, #tpu.memory_space<vmem>>, %arg12: memref<192x256xbf16, #tpu.memory_space<vmem>>, %arg13: memref<192x1xf32, #tpu.memory_space<vmem>>, %arg14: memref<64x8xf32, #tpu.memory_space<vmem>>, %arg15: memref<64x1xf32, #tpu.memory_space<vmem>>, %arg16: memref<128x64xbf16, #tpu.memory_space<vmem>>, %arg17: memref<128x1xf32, #tpu.memory_space<vmem>>, %arg18: memref<32x128xbf16, #tpu.memory_space<vmem>>, %arg19: memref<32x1xf32, #tpu.memory_space<vmem>>, %arg20: memref<1x32x1xf32, #tpu.memory_space<vmem>>) attributes {dimension_semantics = [#tpu.dimension_semantics<parallel>], iteration_bounds = array<i64: 2>, scalar_prefetch = 0 : i64, scratch_operands = 0 : i64, tpu.core_type = #tpu.core_type<tc>, window_params = [{transform_indices = @transform_0, window_bounds = array<i64: 1, 8, 128>}, {pipeline_mode = #tpu.pipeline_mode<synchronous>, transform_indices = @transform_1, window_bounds = array<i64: 64, 8>}, {pipeline_mode = #tpu.pipeline_mode<synchronous>, transform_indices = @transform_2, window_bounds = array<i64: 64, 1>}, {pipeline_mode = #tpu.pipeline_mode<synchronous>, transform_indices = @transform_3, window_bounds = array<i64: 128, 64>}, {pipeline_mode = #tpu.pipeline_mode<synchronous>, transform_indices = @transform_4, window_bounds = array<i64: 128, 1>}, {pipeline_mode = #tpu.pipeline_mode<synchronous>, transform_indices = @transform_5, window_bounds = array<i64: 1024, 128>}, {pipeline_mode = #tpu.pipeline_mode<synchronous>, transform_indices = @transform_6, window_bounds = array<i64: 1024, 1>}, {pipeline_mode = #tpu.pipeline_mode<synchronous>, transform_indices = @transform_7, window_bounds = array<i64: 512, 1024>}, {pipeline_mode = #tpu.pipeline_mode<synchronous>, transform_indices = @transform_8, window_bounds = array<i64: 512, 1>}, {pipeline_mode = #tpu.pipeline_mode<synchronous>, transform_indices = @transform_9, window_bounds = array<i64: 256, 512>}, {pipeline_mode = #tpu.pipeline_mode<synchronous>, transform_indices = @transform_10, window_bounds = array<i64: 256, 1>}, {pipeline_mode = #tpu.pipeline_mode<synchronous>, transform_indices = @transform_11, window_bounds = array<i64: 192, 256>}, {pipeline_mode = #tpu.pipeline_mode<synchronous>, transform_indices = @transform_12, window_bounds = array<i64: 192, 1>}, {pipeline_mode = #tpu.pipeline_mode<synchronous>, transform_indices = @transform_13, window_bounds = array<i64: 64, 8>}, {pipeline_mode = #tpu.pipeline_mode<synchronous>, transform_indices = @transform_14, window_bounds = array<i64: 64, 1>}, {pipeline_mode = #tpu.pipeline_mode<synchronous>, transform_indices = @transform_15, window_bounds = array<i64: 128, 64>}, {pipeline_mode = #tpu.pipeline_mode<synchronous>, transform_indices = @transform_16, window_bounds = array<i64: 128, 1>}, {pipeline_mode = #tpu.pipeline_mode<synchronous>, transform_indices = @transform_17, window_bounds = array<i64: 32, 128>}, {pipeline_mode = #tpu.pipeline_mode<synchronous>, transform_indices = @transform_18, window_bounds = array<i64: 32, 1>}, {transform_indices = @transform_19, window_bounds = array<i64: 1, 32, 1>}]} {
    %cst = arith.constant 0xFF800000 : f32
    %0 = vector.broadcast %cst : f32 to vector<1024x128xf32>
    %c0 = arith.constant 0 : index
    %c0_0 = arith.constant 0 : index
    %c0_1 = arith.constant 0 : index
    %1 = vector.load %arg1[%c0, %c0_0, %c0_1] : memref<1x8x128xbf16, #tpu.memory_space<vmem>>, vector<1x8x128xbf16>
    %2 = vector.shape_cast %1 : vector<1x8x128xbf16> to vector<8x128xbf16>
    %c0_2 = arith.constant 0 : index
    %c0_3 = arith.constant 0 : index
    %3 = vector.load %arg2[%c0_2, %c0_3] : memref<64x8xbf16, #tpu.memory_space<vmem>>, vector<64x8xbf16>
    %cst_4 = arith.constant dense<0.000000e+00> : vector<64x128xf32>
    %4 = tpu.matmul %3, %2, %cst_4 {dimension_numbers = #tpu.dot_dimension_numbers<[1], [0], [0], [1], [0, 0, 1, 1], [], []>} : vector<64x8xbf16>, vector<8x128xbf16>, vector<64x128xf32> -> vector<64x128xf32>
    %c0_5 = arith.constant 0 : index
    %c0_6 = arith.constant 0 : index
    %5 = vector.load %arg3[%c0_5, %c0_6] : memref<64x1xf32, #tpu.memory_space<vmem>>, vector<64x1xf32>
    %6 = vector.broadcast %5 : vector<64x1xf32> to vector<64x128xf32>
    %7 = arith.addf %4, %6 : vector<64x128xf32>
    %cst_7 = arith.constant 0.000000e+00 : f32
    %8 = vector.broadcast %cst_7 : f32 to vector<64x128xf32>
    %9 = arith.maximumf %7, %8 : vector<64x128xf32>
    %10 = arith.truncf %9 : vector<64x128xf32> to vector<64x128xbf16>
    %c0_8 = arith.constant 0 : index
    %c0_9 = arith.constant 0 : index
    %11 = vector.load %arg4[%c0_8, %c0_9] : memref<128x64xbf16, #tpu.memory_space<vmem>>, vector<128x64xbf16>
    %cst_10 = arith.constant dense<0.000000e+00> : vector<128x128xf32>
    %12 = tpu.matmul %11, %10, %cst_10 {dimension_numbers = #tpu.dot_dimension_numbers<[1], [0], [0], [1], [0, 0, 1, 1], [], []>} : vector<128x64xbf16>, vector<64x128xbf16>, vector<128x128xf32> -> vector<128x128xf32>
    %c0_11 = arith.constant 0 : index
    %c0_12 = arith.constant 0 : index
    %13 = vector.load %arg5[%c0_11, %c0_12] : memref<128x1xf32, #tpu.memory_space<vmem>>, vector<128x1xf32>
    %14 = vector.broadcast %13 : vector<128x1xf32> to vector<128x128xf32>
    %15 = arith.addf %12, %14 : vector<128x128xf32>
    %cst_13 = arith.constant 0.000000e+00 : f32
    %16 = vector.broadcast %cst_13 : f32 to vector<128x128xf32>
    %17 = arith.maximumf %15, %16 : vector<128x128xf32>
    %18 = arith.truncf %17 : vector<128x128xf32> to vector<128x128xbf16>
    %c0_14 = arith.constant 0 : index
    %c0_15 = arith.constant 0 : index
    %19 = vector.load %arg6[%c0_14, %c0_15] : memref<1024x128xbf16, #tpu.memory_space<vmem>>, vector<1024x128xbf16>
    %cst_16 = arith.constant dense<0.000000e+00> : vector<1024x128xf32>
    %20 = tpu.matmul %19, %18, %cst_16 {dimension_numbers = #tpu.dot_dimension_numbers<[1], [0], [0], [1], [0, 0, 1, 1], [], []>} : vector<1024x128xbf16>, vector<128x128xbf16>, vector<1024x128xf32> -> vector<1024x128xf32>
    %c0_17 = arith.constant 0 : index
    %c0_18 = arith.constant 0 : index
    %21 = vector.load %arg7[%c0_17, %c0_18] : memref<1024x1xf32, #tpu.memory_space<vmem>>, vector<1024x1xf32>
    %22 = vector.broadcast %21 : vector<1024x1xf32> to vector<1024x128xf32>
    %23 = arith.addf %20, %22 : vector<1024x128xf32>
    %cst_19 = arith.constant 0.000000e+00 : f32
    %24 = vector.broadcast %cst_19 : f32 to vector<1024x128xf32>
    %25 = arith.maximumf %23, %24 : vector<1024x128xf32>
    %26 = arith.maximumf %0, %25 : vector<1024x128xf32>
    %cst_20 = arith.constant dense<0xFF800000> : vector<1024xf32>
    %27 = vector.multi_reduction <maximumf>, %26, %cst_20 [1] : vector<1024x128xf32> to vector<1024xf32>
    %28 = vector.shape_cast %27 : vector<1024xf32> to vector<1024x1xf32>
    %29 = vector.shape_cast %28 : vector<1024x1xf32> to vector<1024x1xf32>
    %30 = vector.broadcast %29 : vector<1024x1xf32> to vector<1024x128xf32>
    %31 = arith.truncf %30 : vector<1024x128xf32> to vector<1024x128xbf16>
    %c0_21 = arith.constant 0 : index
    %c0_22 = arith.constant 0 : index
    %32 = vector.load %arg8[%c0_21, %c0_22] : memref<512x1024xbf16, #tpu.memory_space<vmem>>, vector<512x1024xbf16>
    %cst_23 = arith.constant dense<0.000000e+00> : vector<512x128xf32>
    %33 = tpu.matmul %32, %31, %cst_23 {dimension_numbers = #tpu.dot_dimension_numbers<[1], [0], [0], [1], [0, 0, 1, 1], [], []>} : vector<512x1024xbf16>, vector<1024x128xbf16>, vector<512x128xf32> -> vector<512x128xf32>
    %c0_24 = arith.constant 0 : index
    %c0_25 = arith.constant 0 : index
    %34 = vector.load %arg9[%c0_24, %c0_25] : memref<512x1xf32, #tpu.memory_space<vmem>>, vector<512x1xf32>
    %35 = vector.broadcast %34 : vector<512x1xf32> to vector<512x128xf32>
    %36 = arith.addf %33, %35 : vector<512x128xf32>
    %cst_26 = arith.constant 0.000000e+00 : f32
    %37 = vector.broadcast %cst_26 : f32 to vector<512x128xf32>
    %38 = arith.maximumf %36, %37 : vector<512x128xf32>
    %39 = arith.truncf %38 : vector<512x128xf32> to vector<512x128xbf16>
    %c0_27 = arith.constant 0 : index
    %c0_28 = arith.constant 0 : index
    %40 = vector.load %arg10[%c0_27, %c0_28] : memref<256x512xbf16, #tpu.memory_space<vmem>>, vector<256x512xbf16>
    %cst_29 = arith.constant dense<0.000000e+00> : vector<256x128xf32>
    %41 = tpu.matmul %40, %39, %cst_29 {dimension_numbers = #tpu.dot_dimension_numbers<[1], [0], [0], [1], [0, 0, 1, 1], [], []>} : vector<256x512xbf16>, vector<512x128xbf16>, vector<256x128xf32> -> vector<256x128xf32>
    %c0_30 = arith.constant 0 : index
    %c0_31 = arith.constant 0 : index
    %42 = vector.load %arg11[%c0_30, %c0_31] : memref<256x1xf32, #tpu.memory_space<vmem>>, vector<256x1xf32>
    %43 = vector.broadcast %42 : vector<256x1xf32> to vector<256x128xf32>
    %44 = arith.addf %41, %43 : vector<256x128xf32>
    %cst_32 = arith.constant 0.000000e+00 : f32
    %45 = vector.broadcast %cst_32 : f32 to vector<256x128xf32>
    %46 = arith.maximumf %44, %45 : vector<256x128xf32>
    %47 = arith.truncf %46 : vector<256x128xf32> to vector<256x128xbf16>
    %c0_33 = arith.constant 0 : index
    %c0_34 = arith.constant 0 : index
    %48 = vector.load %arg12[%c0_33, %c0_34] : memref<192x256xbf16, #tpu.memory_space<vmem>>, vector<192x256xbf16>
    %cst_35 = arith.constant dense<0.000000e+00> : vector<192x128xf32>
    %49 = tpu.matmul %48, %47, %cst_35 {dimension_numbers = #tpu.dot_dimension_numbers<[1], [0], [0], [1], [0, 0, 1, 1], [], []>} : vector<192x256xbf16>, vector<256x128xbf16>, vector<192x128xf32> -> vector<192x128xf32>
    %c0_36 = arith.constant 0 : index
    %c0_37 = arith.constant 0 : index
    %50 = vector.load %arg13[%c0_36, %c0_37] : memref<192x1xf32, #tpu.memory_space<vmem>>, vector<192x1xf32>
    %51 = vector.broadcast %50 : vector<192x1xf32> to vector<192x128xf32>
    %52 = arith.addf %49, %51 : vector<192x128xf32>
    %53 = tpu.iota {dimensions = array<i32: 1>} : vector<1x8xi32>
    %c0_38 = arith.constant 0 : index
    %c0_39 = arith.constant 0 : index
    %54 = vector.load %arg14[%c0_38, %c0_39] : memref<64x8xf32, #tpu.memory_space<vmem>>, vector<64x8xf32>
    %55 = vector.extract_strided_slice %52 {offsets = [0, 0], sizes = [64, 1], strides = [1, 1]} : vector<192x128xf32> to vector<64x1xf32>
    %c0_i32 = arith.constant 0 : i32
    %56 = vector.broadcast %c0_i32 : i32 to vector<1x8xi32>
    %57 = arith.cmpi eq, %53, %56 : vector<1x8xi32>
    %58 = arith.extui %57 : vector<1x8xi1> to vector<1x8xi32>
    %59 = arith.sitofp %58 : vector<1x8xi32> to vector<1x8xf32>
    %60 = vector.broadcast %55 : vector<64x1xf32> to vector<64x8xf32>
    %61 = vector.broadcast %59 : vector<1x8xf32> to vector<64x8xf32>
    %62 = arith.mulf %60, %61 : vector<64x8xf32>
    %63 = arith.addf %54, %62 : vector<64x8xf32>
    %64 = vector.extract_strided_slice %52 {offsets = [64, 0], sizes = [64, 1], strides = [1, 1]} : vector<192x128xf32> to vector<64x1xf32>
    %c1_i32 = arith.constant 1 : i32
    %65 = vector.broadcast %c1_i32 : i32 to vector<1x8xi32>
    %66 = arith.cmpi eq, %53, %65 : vector<1x8xi32>
    %67 = arith.extui %66 : vector<1x8xi1> to vector<1x8xi32>
    %68 = arith.sitofp %67 : vector<1x8xi32> to vector<1x8xf32>
    %69 = vector.broadcast %64 : vector<64x1xf32> to vector<64x8xf32>
    %70 = vector.broadcast %68 : vector<1x8xf32> to vector<64x8xf32>
    %71 = arith.mulf %69, %70 : vector<64x8xf32>
    %72 = arith.addf %63, %71 : vector<64x8xf32>
    %73 = vector.extract_strided_slice %52 {offsets = [128, 0], sizes = [64, 1], strides = [1, 1]} : vector<192x128xf32> to vector<64x1xf32>
    %c2_i32 = arith.constant 2 : i32
    %74 = vector.broadcast %c2_i32 : i32 to vector<1x8xi32>
    %75 = arith.cmpi eq, %53, %74 : vector<1x8xi32>
    %76 = arith.extui %75 : vector<1x8xi1> to vector<1x8xi32>
    %77 = arith.sitofp %76 : vector<1x8xi32> to vector<1x8xf32>
    %78 = vector.broadcast %73 : vector<64x1xf32> to vector<64x8xf32>
    %79 = vector.broadcast %77 : vector<1x8xf32> to vector<64x8xf32>
    %80 = arith.mulf %78, %79 : vector<64x8xf32>
    %81 = arith.addf %72, %80 : vector<64x8xf32>
    %82 = arith.truncf %81 : vector<64x8xf32> to vector<64x8xbf16>
    %cst_40 = arith.constant 0xFF800000 : f32
    %83 = vector.broadcast %cst_40 : f32 to vector<32x128xf32>
    %c0_41 = arith.constant 0 : index
    %c0_42 = arith.constant 0 : index
    %c0_43 = arith.constant 0 : index
    %84 = vector.load %arg1[%c0_41, %c0_42, %c0_43] : memref<1x8x128xbf16, #tpu.memory_space<vmem>>, vector<1x8x128xbf16>
    %85 = vector.shape_cast %84 : vector<1x8x128xbf16> to vector<8x128xbf16>
    %cst_44 = arith.constant dense<0.000000e+00> : vector<64x128xf32>
    %86 = tpu.matmul %82, %85, %cst_44 {dimension_numbers = #tpu.dot_dimension_numbers<[1], [0], [0], [1], [0, 0, 1, 1], [], []>} : vector<64x8xbf16>, vector<8x128xbf16>, vector<64x128xf32> -> vector<64x128xf32>
    %c0_45 = arith.constant 0 : index
    %c0_46 = arith.constant 0 : index
    %87 = vector.load %arg15[%c0_45, %c0_46] : memref<64x1xf32, #tpu.memory_space<vmem>>, vector<64x1xf32>
    %88 = vector.broadcast %87 : vector<64x1xf32> to vector<64x128xf32>
    %89 = arith.addf %86, %88 : vector<64x128xf32>
    %cst_47 = arith.constant 0.000000e+00 : f32
    %90 = vector.broadcast %cst_47 : f32 to vector<64x128xf32>
    %91 = arith.maximumf %89, %90 : vector<64x128xf32>
    %92 = arith.truncf %91 : vector<64x128xf32> to vector<64x128xbf16>
    %c0_48 = arith.constant 0 : index
    %c0_49 = arith.constant 0 : index
    %93 = vector.load %arg16[%c0_48, %c0_49] : memref<128x64xbf16, #tpu.memory_space<vmem>>, vector<128x64xbf16>
    %cst_50 = arith.constant dense<0.000000e+00> : vector<128x128xf32>
    %94 = tpu.matmul %93, %92, %cst_50 {dimension_numbers = #tpu.dot_dimension_numbers<[1], [0], [0], [1], [0, 0, 1, 1], [], []>} : vector<128x64xbf16>, vector<64x128xbf16>, vector<128x128xf32> -> vector<128x128xf32>
    %c0_51 = arith.constant 0 : index
    %c0_52 = arith.constant 0 : index
    %95 = vector.load %arg17[%c0_51, %c0_52] : memref<128x1xf32, #tpu.memory_space<vmem>>, vector<128x1xf32>
    %96 = vector.broadcast %95 : vector<128x1xf32> to vector<128x128xf32>
    %97 = arith.addf %94, %96 : vector<128x128xf32>
    %cst_53 = arith.constant 0.000000e+00 : f32
    %98 = vector.broadcast %cst_53 : f32 to vector<128x128xf32>
    %99 = arith.maximumf %97, %98 : vector<128x128xf32>
    %100 = arith.truncf %99 : vector<128x128xf32> to vector<128x128xbf16>
    %c0_54 = arith.constant 0 : index
    %c0_55 = arith.constant 0 : index
    %101 = vector.load %arg18[%c0_54, %c0_55] : memref<32x128xbf16, #tpu.memory_space<vmem>>, vector<32x128xbf16>
    %cst_56 = arith.constant dense<0.000000e+00> : vector<32x128xf32>
    %102 = tpu.matmul %101, %100, %cst_56 {dimension_numbers = #tpu.dot_dimension_numbers<[1], [0], [0], [1], [0, 0, 1, 1], [], []>} : vector<32x128xbf16>, vector<128x128xbf16>, vector<32x128xf32> -> vector<32x128xf32>
    %c0_57 = arith.constant 0 : index
    %c0_58 = arith.constant 0 : index
    %103 = vector.load %arg19[%c0_57, %c0_58] : memref<32x1xf32, #tpu.memory_space<vmem>>, vector<32x1xf32>
    %104 = vector.broadcast %103 : vector<32x1xf32> to vector<32x128xf32>
    %105 = arith.addf %102, %104 : vector<32x128xf32>
    %106 = arith.maximumf %83, %105 : vector<32x128xf32>
    %cst_59 = arith.constant dense<0xFF800000> : vector<32xf32>
    %107 = vector.multi_reduction <maximumf>, %106, %cst_59 [1] : vector<32x128xf32> to vector<32xf32>
    %108 = vector.shape_cast %107 : vector<32xf32> to vector<32x1xf32>
    %c0_60 = arith.constant 0 : index
    %c0_61 = arith.constant 0 : index
    %c0_62 = arith.constant 0 : index
    %109 = vector.load %arg20[%c0_60, %c0_61, %c0_62] : memref<1x32x1xf32, #tpu.memory_space<vmem>>, vector<1x32x1xf32>
    %110 = vector.shape_cast %109 : vector<1x32x1xf32> to vector<32x1xf32>
    %111 = vector.shape_cast %108 : vector<32x1xf32> to vector<1x32x1xf32>
    tpu.vector_store %arg20[%c0_60, %c0_61, %c0_62], %111 {strides = array<i32>} : memref<1x32x1xf32, #tpu.memory_space<vmem>>, vector<1x32x1xf32>,
    return
  }
  func.func @transform_0(%arg0: i32) -> (i32, i32, i32) {
    %c0_i32 = arith.constant 0 : i32
    %c0_i32_0 = arith.constant 0 : i32
    %c0_i32_1 = arith.constant 0 : i32
    return %arg0, %c0_i32, %c0_i32_0 : i32, i32, i32
  }
  func.func @transform_1(%arg0: i32) -> (i32, i32) {
    %c0_i32 = arith.constant 0 : i32
    %c0_i32_0 = arith.constant 0 : i32
    %c0_i32_1 = arith.constant 0 : i32
    return %c0_i32, %c0_i32_0 : i32, i32
  }
  func.func @transform_2(%arg0: i32) -> (i32, i32) {
    %c0_i32 = arith.constant 0 : i32
    %c0_i32_0 = arith.constant 0 : i32
    %c0_i32_1 = arith.constant 0 : i32
    return %c0_i32, %c0_i32_0 : i32, i32
  }
  func.func @transform_3(%arg0: i32) -> (i32, i32) {
    %c0_i32 = arith.constant 0 : i32
    %c0_i32_0 = arith.constant 0 : i32
    %c0_i32_1 = arith.constant 0 : i32
    return %c0_i32, %c0_i32_0 : i32, i32
  }
  func.func @transform_4(%arg0: i32) -> (i32, i32) {
    %c0_i32 = arith.constant 0 : i32
    %c0_i32_0 = arith.constant 0 : i32
    %c0_i32_1 = arith.constant 0 : i32
    return %c0_i32, %c0_i32_0 : i32, i32
  }
  func.func @transform_5(%arg0: i32) -> (i32, i32) {
    %c0_i32 = arith.constant 0 : i32
    %c0_i32_0 = arith.constant 0 : i32
    %c0_i32_1 = arith.constant 0 : i32
    return %c0_i32, %c0_i32_0 : i32, i32
  }
  func.func @transform_6(%arg0: i32) -> (i32, i32) {
    %c0_i32 = arith.constant 0 : i32
    %c0_i32_0 = arith.constant 0 : i32
    %c0_i32_1 = arith.constant 0 : i32
    return %c0_i32, %c0_i32_0 : i32, i32
  }
  func.func @transform_7(%arg0: i32) -> (i32, i32) {
    %c0_i32 = arith.constant 0 : i32
    %c0_i32_0 = arith.constant 0 : i32
    %c0_i32_1 = arith.constant 0 : i32
    return %c0_i32, %c0_i32_0 : i32, i32
  }
  func.func @transform_8(%arg0: i32) -> (i32, i32) {
    %c0_i32 = arith.constant 0 : i32
    %c0_i32_0 = arith.constant 0 : i32
    %c0_i32_1 = arith.constant 0 : i32
    return %c0_i32, %c0_i32_0 : i32, i32
  }
  func.func @transform_9(%arg0: i32) -> (i32, i32) {
    %c0_i32 = arith.constant 0 : i32
    %c0_i32_0 = arith.constant 0 : i32
    %c0_i32_1 = arith.constant 0 : i32
    return %c0_i32, %c0_i32_0 : i32, i32
  }
  func.func @transform_10(%arg0: i32) -> (i32, i32) {
    %c0_i32 = arith.constant 0 : i32
    %c0_i32_0 = arith.constant 0 : i32
    %c0_i32_1 = arith.constant 0 : i32
    return %c0_i32, %c0_i32_0 : i32, i32
  }
  func.func @transform_11(%arg0: i32) -> (i32, i32) {
    %c0_i32 = arith.constant 0 : i32
    %c0_i32_0 = arith.constant 0 : i32
    %c0_i32_1 = arith.constant 0 : i32
    return %c0_i32, %c0_i32_0 : i32, i32
  }
  func.func @transform_12(%arg0: i32) -> (i32, i32) {
    %c0_i32 = arith.constant 0 : i32
    %c0_i32_0 = arith.constant 0 : i32
    %c0_i32_1 = arith.constant 0 : i32
    return %c0_i32, %c0_i32_0 : i32, i32
  }
  func.func @transform_13(%arg0: i32) -> (i32, i32) {
    %c0_i32 = arith.constant 0 : i32
    %c0_i32_0 = arith.constant 0 : i32
    %c0_i32_1 = arith.constant 0 : i32
    return %c0_i32, %c0_i32_0 : i32, i32
  }
  func.func @transform_14(%arg0: i32) -> (i32, i32) {
    %c0_i32 = arith.constant 0 : i32
    %c0_i32_0 = arith.constant 0 : i32
    %c0_i32_1 = arith.constant 0 : i32
    return %c0_i32, %c0_i32_0 : i32, i32
  }
  func.func @transform_15(%arg0: i32) -> (i32, i32) {
    %c0_i32 = arith.constant 0 : i32
    %c0_i32_0 = arith.constant 0 : i32
    %c0_i32_1 = arith.constant 0 : i32
    return %c0_i32, %c0_i32_0 : i32, i32
  }
  func.func @transform_16(%arg0: i32) -> (i32, i32) {
    %c0_i32 = arith.constant 0 : i32
    %c0_i32_0 = arith.constant 0 : i32
    %c0_i32_1 = arith.constant 0 : i32
    return %c0_i32, %c0_i32_0 : i32, i32
  }
  func.func @transform_17(%arg0: i32) -> (i32, i32) {
    %c0_i32 = arith.constant 0 : i32
    %c0_i32_0 = arith.constant 0 : i32
    %c0_i32_1 = arith.constant 0 : i32
    return %c0_i32, %c0_i32_0 : i32, i32
  }
  func.func @transform_18(%arg0: i32) -> (i32, i32) {
    %c0_i32 = arith.constant 0 : i32
    %c0_i32_0 = arith.constant 0 : i32
    %c0_i32_1 = arith.constant 0 : i32
    return %c0_i32, %c0_i32_0 : i32, i32
  }
  func.func @transform_19(%arg0: i32) -> (i32, i32, i32) {
    %c0_i32 = arith.constant 0 : i32
    %c0_i32_0 = arith.constant 0 : i32
    %c0_i32_1 = arith.constant 0 : i32
    return %arg0, %c0_i32, %c0_i32_0 : i32, i32, i32
  }
}

</mosaic_0001>

<llo_original>
// kernel: pointnet_encoder_forward.1
$region0: #{pointnet_encoder_forward.1}
  #allocation0 [shape = 'u32[]', space=smem, size = 0x4, offset = 0x4, fixed_abs, tag = 'smem constant byte address 0x4 - core index']
  #allocation1 [shape = 'u32[144,128]{1,0:T(1,128)}', space=vmem, size = 0x12000, scoped, tag = 'internal scratch']
  %s0 = inlined_call_operand.hbm [shape: bf16[2,8,128], index: 0, kind: input, shape index: {}]
  %s1 = inlined_call_operand.hbm [shape: bf16[64,8], index: 1, kind: input, shape index: {}]
  %s2 = inlined_call_operand.hbm [shape: f32[64,1], index: 2, kind: input, shape index: {}]
  %s3 = inlined_call_operand.hbm [shape: bf16[128,64], index: 3, kind: input, shape index: {}]
  %s4 = inlined_call_operand.hbm [shape: f32[128,1], index: 4, kind: input, shape index: {}]
  %s5 = inlined_call_operand.hbm [shape: bf16[1024,128], index: 5, kind: input, shape index: {}]
  %s6 = inlined_call_operand.hbm [shape: f32[1024,1], index: 6, kind: input, shape index: {}]
  %s7 = inlined_call_operand.hbm [shape: bf16[512,1024], index: 7, kind: input, shape index: {}]
  %s8 = inlined_call_operand.hbm [shape: f32[512,1], index: 8, kind: input, shape index: {}]
  %s9 = inlined_call_operand.hbm [shape: bf16[256,512], index: 9, kind: input, shape index: {}]
  %s10 = inlined_call_operand.hbm [shape: f32[256,1], index: 10, kind: input, shape index: {}]
  %s11 = inlined_call_operand.hbm [shape: bf16[192,256], index: 11, kind: input, shape index: {}]
  %s12 = inlined_call_operand.hbm [shape: f32[192,1], index: 12, kind: input, shape index: {}]
  %s13 = inlined_call_operand.hbm [shape: f32[64,8], index: 13, kind: input, shape index: {}]
  %s14 = inlined_call_operand.hbm [shape: f32[64,1], index: 14, kind: input, shape index: {}]
  %s15 = inlined_call_operand.hbm [shape: bf16[128,64], index: 15, kind: input, shape index: {}]
  %s16 = inlined_call_operand.hbm [shape: f32[128,1], index: 16, kind: input, shape index: {}]
  %s17 = inlined_call_operand.hbm [shape: bf16[32,128], index: 17, kind: input, shape index: {}]
  %s18 = inlined_call_operand.hbm [shape: f32[32,1], index: 18, kind: input, shape index: {}]
  %s19 = inlined_call_operand.hbm [shape: f32[2,32,1], index: 19, kind: output, shape index: {}]
  %s20 = sld [smem:[#allocation0]]
  $region185: #{pointnet_encoder_forward.1} parent=0
    _
  %s22 = ssub.s32 1, %s20
  %s23 = scalar_select 0, %s22, %s20
  $region1: #{pointnet_encoder_forward.1} parent=0
    #allocation2 [shape = 'u8[4096]{0}', space=vmem, size = 0x1000, scoped, tag = 'input window, operand 0']
    #allocation3 [shape = 's32[2]{0}', space=sflag, size = 0x8, scoped, tag = 'scoped memory for pointnet_encoder_forward.1']
    #allocation4 [shape = 's32[2]{0}', space=sflag, size = 0x8, scoped, tag = 'scoped memory for pointnet_encoder_forward.1']
    #allocation5 [shape = 'u8[16384]{0}', space=vmem, size = 0x4000, scoped, tag = 'input window, operand 1, single buffered']
    #allocation6 [shape = 's32[1]{0}', space=sflag, size = 0x4, scoped, tag = 'scoped memory for pointnet_encoder_forward.1']
    #allocation7 [shape = 'u8[32768]{0}', space=vmem, size = 0x8000, scoped, tag = 'input window, operand 2, single buffered']
    #allocation8 [shape = 'u8[32768]{0}', space=vmem, size = 0x8000, scoped, tag = 'input window, operand 3, single buffered']
    #allocation9 [shape = 's32[1]{0}', space=sflag, size = 0x4, scoped, tag = 'scoped memory for pointnet_encoder_forward.1']
    #allocation10 [shape = 'u8[65536]{0}', space=vmem, size = 0x10000, scoped, tag = 'input window, operand 4, single buffered']
    #allocation11 [shape = 'u8[262144]{0}', space=vmem, size = 0x40000, scoped, tag = 'input window, operand 5, single buffered']
    #allocation12 [shape = 's32[1]{0}', space=sflag, size = 0x4, scoped, tag = 'scoped memory for pointnet_encoder_forward.1']
    #allocation13 [shape = 'u8[524288]{0}', space=vmem, size = 0x80000, scoped, tag = 'input window, operand 6, single buffered']
    #allocation14 [shape = 'u8[1048576]{0}', space=vmem, size = 0x100000, scoped, tag = 'input window, operand 7, single buffered']
    #allocation15 [shape = 's32[1]{0}', space=sflag, size = 0x4, scoped, tag = 'scoped memory for pointnet_encoder_forward.1']
    #allocation16 [shape = 'u8[262144]{0}', space=vmem, size = 0x40000, scoped, tag = 'input window, operand 8, single buffered']
    #allocation17 [shape = 'u8[262144]{0}', space=vmem, size = 0x40000, scoped, tag = 'input window, operand 9, single buffered']
    #allocation18 [shape = 's32[1]{0}', space=sflag, size = 0x4, scoped, tag = 'scoped memory for pointnet_encoder_forward.1']
    #allocation19 [shape = 'u8[131072]{0}', space=vmem, size = 0x20000, scoped, tag = 'input window, operand 10, single buffered']
    #allocation20 [shape = 'u8[98304]{0}', space=vmem, size = 0x18000, scoped, tag = 'input window, operand 11, single buffered']
    #allocation21 [shape = 's32[1]{0}', space=sflag, size = 0x4, scoped, tag = 'scoped memory for pointnet_encoder_forward.1']
    #allocation22 [shape = 'u8[98304]{0}', space=vmem, size = 0x18000, scoped, tag = 'input window, operand 12, single buffered']
    #allocation23 [shape = 'u8[32768]{0}', space=vmem, size = 0x8000, scoped, tag = 'input window, operand 13, single buffered']
    #allocation24 [shape = 's32[1]{0}', space=sflag, size = 0x4, scoped, tag = 'scoped memory for pointnet_encoder_forward.1']
    #allocation25 [shape = 'u8[32768]{0}', space=vmem, size = 0x8000, scoped, tag = 'input window, operand 14, single buffered']
    #allocation26 [shape = 'u8[32768]{0}', space=vmem, size = 0x8000, scoped, tag = 'input window, operand 15, single buffered']
    #allocation27 [shape = 's32[1]{0}', space=sflag, size = 0x4, scoped, tag = 'scoped memory for pointnet_encoder_forward.1']
    #allocation28 [shape = 'u8[65536]{0}', space=vmem, size = 0x10000, scoped, tag = 'input window, operand 16, single buffered']
    #allocation29 [shape = 'u8[8192]{0}', space=vmem, size = 0x2000, scoped, tag = 'input window, operand 17, single buffered']
    #allocation30 [shape = 's32[1]{0}', space=sflag, size = 0x4, scoped, tag = 'scoped memory for pointnet_encoder_forward.1']
    #allocation31 [shape = 'u8[16384]{0}', space=vmem, size = 0x4000, scoped, tag = 'input window, operand 18, single buffered']
    #allocation32 [shape = 'u8[32768]{0}', space=vmem, size = 0x8000, scoped, tag = 'output window, operand 0']
    %24 = vsyncpa [#allocation3], 0
    %s25 = scalar_lea.sflag [#allocation3], 1
    %26 = vsyncpa %s25, 0
    %27 = vsyncpa [#allocation6], 0
    %28 = vsyncpa [#allocation9], 0
    %29 = vsyncpa [#allocation12], 0
    %30 = vsyncpa [#allocation15], 0
    %31 = vsyncpa [#allocation18], 0
    %32 = vsyncpa [#allocation21], 0
    %33 = vsyncpa [#allocation24], 0
    %34 = vsyncpa [#allocation27], 0
    %35 = vsyncpa [#allocation30], 0
    %36 = vsyncpa [#allocation4], 0
    %s37 = scalar_lea.sflag [#allocation4], 1
    %38 = vsyncpa %s37, 0
    loop: start=0, step=1, limit=4
    $region2: #{pointnet_encoder_forward.1} parent=1 // loop_pre_header
      _
    $region3: #{pointnet_encoder_forward.1} parent=1 // loop_header
      %s40 = sphi 0, %s44
      %p41 = scmp.ge.s32.totalorder %s40, 4
      %s50 = sphi 0, %s52
      %s53 = sphi 0, %s50
      %s54 = sphi 0, %s53
      %s70 = sphi 0, %s54
      %s74 = sphi 0, %s74
      %s76 = sphi 0, %s74
      %s77 = sphi 0, %s76
      %s91 = sphi 0, %s77
      %s95 = sphi 0, %s95
      %s97 = sphi 0, %s95
      %s98 = sphi 0, %s97
      %s112 = sphi 0, %s98
      %s116 = sphi 0, %s116
      %s118 = sphi 0, %s116
      %s119 = sphi 0, %s118
      %s133 = sphi 0, %s119
      %s137 = sphi 0, %s137
      %s139 = sphi 0, %s137
      %s140 = sphi 0, %s139
      %s154 = sphi 0, %s140
      %s158 = sphi 0, %s158
      %s160 = sphi 0, %s158
      %s161 = sphi 0, %s160
      %s175 = sphi 0, %s161
      %s179 = sphi 0, %s179
      %s181 = sphi 0, %s179
      %s182 = sphi 0, %s181
      %s196 = sphi 0, %s182
      %s200 = sphi 0, %s200
      %s202 = sphi 0, %s200
      %s203 = sphi 0, %s202
      %s217 = sphi 0, %s203
      %s221 = sphi 0, %s221
      %s223 = sphi 0, %s221
      %s224 = sphi 0, %s223
      %s238 = sphi 0, %s224
      %s242 = sphi 0, %s242
      %s244 = sphi 0, %s242
      %s245 = sphi 0, %s244
      %s259 = sphi 0, %s245
      %s263 = sphi 0, %s263
      %s265 = sphi 0, %s263
      %s266 = sphi 0, %s265
      %s280 = sphi 0, %s266
      %s284 = sphi 0, %s284
      %s286 = sphi 0, %s284
      %s287 = sphi 0, %s286
      %s301 = sphi 0, %s287
      %s305 = sphi 0, %s305
      %s307 = sphi 0, %s305
      %s308 = sphi 0, %s307
      %s322 = sphi 0, %s308
      %s326 = sphi 0, %s326
      %s328 = sphi 0, %s326
      %s329 = sphi 0, %s328
      %s343 = sphi 0, %s329
      %s347 = sphi 0, %s347
      %s349 = sphi 0, %s347
      %s350 = sphi 0, %s349
      %s364 = sphi 0, %s350
      %s368 = sphi 0, %s368
      %s370 = sphi 0, %s368
      %s371 = sphi 0, %s370
      %s385 = sphi 0, %s371
      %s389 = sphi 0, %s389
      %s391 = sphi 0, %s389
      %s392 = sphi 0, %s391
      %s406 = sphi 0, %s392
      %s410 = sphi 0, %s410
      %s412 = sphi 0, %s410
      %s413 = sphi 0, %s412
      %s427 = sphi 0, %s413
      %s431 = sphi 0, %s431
      %s433 = sphi 0, %s431
      %s434 = sphi 0, %s433
      %s448 = sphi 0, %s434
      %s454 = sphi 0, %s456
      %s457 = sphi 0, %s454
      %s458 = sphi 0, %s457
      %s474 = sphi 0, %s458
    $region4: #{pointnet_encoder_forward.1} parent=1 // loop_header_branch
      %43 = sbr.rel (%p41) target = $region8
    $region5: #{pointnet_encoder_forward.1} parent=1 // loop_body
      %s45 = ssub.s32 %s40, 1
      %s46 = ssub.s32 %s40, 2
      %s47 = sadd.s32 %s40, 1
      %s48 = ssub.s32 %s40, %s47
      %p49 = scmp.eq.s32.totalorder %s48, 0
      %s51 = sadd.s32 %s50, 1
      %s52 = scalar_select %p49, %s50, %s51
      %p55 = pneg %p49
      %p56 = scmp.eq.s32.totalorder %s40, 1
      %p57 = por %p55, %p56
      %p58 = scmp.ne.s32.totalorder %s50, %s53
      %p59 = scmp.eq.s32.totalorder %s40, 0
      %p60 = por %p58, %p59
      %p61 = scmp.ne.s32.totalorder %s50, %s53
      %p62 = scmp.eq.s32.totalorder %s45, 1
      %p63 = por %p61, %p62
      %p64 = scmp.ne.s32.totalorder %s53, %s54
      %p65 = scmp.eq.s32.totalorder %s45, 0
      %p66 = por %p64, %p65
      %p67 = scmp.ne.s32.totalorder %s53, %s54
      %p68 = scmp.eq.s32.totalorder %s46, 1
      %p69 = por %p67, %p68
      %p71 = scmp.ne.s32.totalorder %s54, %s70
      %p72 = scmp.eq.s32.totalorder %s46, 0
      %p73 = por %p71, %p72
      %s75 = sadd.s32 %s74, 1
      %p78 = scmp.eq.s32.totalorder %s40, 1
      %p79 = scmp.ne.s32.totalorder %s74, %s76
      %p80 = scmp.eq.s32.totalorder %s40, 0
      %p81 = por %p79, %p80
      %p82 = scmp.ne.s32.totalorder %s74, %s76
      %p83 = scmp.eq.s32.totalorder %s45, 1
      %p84 = por %p82, %p83
      %p85 = scmp.ne.s32.totalorder %s76, %s77
      %p86 = scmp.eq.s32.totalorder %s45, 0
      %p87 = por %p85, %p86
      %p88 = scmp.ne.s32.totalorder %s76, %s77
      %p89 = scmp.eq.s32.totalorder %s46, 1
      %p90 = por %p88, %p89
      %p92 = scmp.ne.s32.totalorder %s77, %s91
      %p93 = scmp.eq.s32.totalorder %s46, 0
      %p94 = por %p92, %p93
      %s96 = sadd.s32 %s95, 1
      %p99 = scmp.eq.s32.totalorder %s40, 1
      %p100 = scmp.ne.s32.totalorder %s95, %s97
      %p101 = scmp.eq.s32.totalorder %s40, 0
      %p102 = por %p100, %p101
      %p103 = scmp.ne.s32.totalorder %s95, %s97
      %p104 = scmp.eq.s32.totalorder %s45, 1
      %p105 = por %p103, %p104
      %p106 = scmp.ne.s32.totalorder %s97, %s98
      %p107 = scmp.eq.s32.totalorder %s45, 0
      %p108 = por %p106, %p107
      %p109 = scmp.ne.s32.totalorder %s97, %s98
      %p110 = scmp.eq.s32.totalorder %s46, 1
      %p111 = por %p109, %p110
      %p113 = scmp.ne.s32.totalorder %s98, %s112
      %p114 = scmp.eq.s32.totalorder %s46, 0
      %p115 = por %p113, %p114
      %s117 = sadd.s32 %s116, 1
      %p120 = scmp.eq.s32.totalorder %s40, 1
      %p121 = scmp.ne.s32.totalorder %s116, %s118
      %p122 = scmp.eq.s32.totalorder %s40, 0
      %p123 = por %p121, %p122
      %p124 = scmp.ne.s32.totalorder %s116, %s118
      %p125 = scmp.eq.s32.totalorder %s45, 1
      %p126 = por %p124, %p125
      %p127 = scmp.ne.s32.totalorder %s118, %s119
      %p128 = scmp.eq.s32.totalorder %s45, 0
      %p129 = por %p127, %p128
      %p130 = scmp.ne.s32.totalorder %s118, %s119
      %p131 = scmp.eq.s32.totalorder %s46, 1
      %p132 = por %p130, %p131
      %p134 = scmp.ne.s32.totalorder %s119, %s133
      %p135 = scmp.eq.s32.totalorder %s46, 0
      %p136 = por %p134, %p135
      %s138 = sadd.s32 %s137, 1
      %p141 = scmp.eq.s32.totalorder %s40, 1
      %p142 = scmp.ne.s32.totalorder %s137, %s139
      %p143 = scmp.eq.s32.totalorder %s40, 0
      %p144 = por %p142, %p143
      %p145 = scmp.ne.s32.totalorder %s137, %s139
      %p146 = scmp.eq.s32.totalorder %s45, 1
      %p147 = por %p145, %p146
      %p148 = scmp.ne.s32.totalorder %s139, %s140
      %p149 = scmp.eq.s32.totalorder %s45, 0
      %p150 = por %p148, %p149
      %p151 = scmp.ne.s32.totalorder %s139, %s140
      %p152 = scmp.eq.s32.totalorder %s46, 1
      %p153 = por %p151, %p152
      %p155 = scmp.ne.s32.totalorder %s140, %s154
      %p156 = scmp.eq.s32.totalorder %s46, 0
      %p157 = por %p155, %p156
      %s159 = sadd.s32 %s158, 1
      %p162 = scmp.eq.s32.totalorder %s40, 1
      %p163 = scmp.ne.s32.totalorder %s158, %s160
      %p164 = scmp.eq.s32.totalorder %s40, 0
      %p165 = por %p163, %p164
      %p166 = scmp.ne.s32.totalorder %s158, %s160
      %p167 = scmp.eq.s32.totalorder %s45, 1
      %p168 = por %p166, %p167
      %p169 = scmp.ne.s32.totalorder %s160, %s161
      %p170 = scmp.eq.s32.totalorder %s45, 0
      %p171 = por %p169, %p170
      %p172 = scmp.ne.s32.totalorder %s160, %s161
      %p173 = scmp.eq.s32.totalorder %s46, 1
      %p174 = por %p172, %p173
      %p176 = scmp.ne.s32.totalorder %s161, %s175
      %p177 = scmp.eq.s32.totalorder %s46, 0
      %p178 = por %p176, %p177
      %s180 = sadd.s32 %s179, 1
      %p183 = scmp.eq.s32.totalorder %s40, 1
      %p184 = scmp.ne.s32.totalorder %s179, %s181
      %p185 = scmp.eq.s32.totalorder %s40, 0
      %p186 = por %p184, %p185
      %p187 = scmp.ne.s32.totalorder %s179, %s181
      %p188 = scmp.eq.s32.totalorder %s45, 1
      %p189 = por %p187, %p188
      %p190 = scmp.ne.s32.totalorder %s181, %s182
      %p191 = scmp.eq.s32.totalorder %s45, 0
      %p192 = por %p190, %p191
      %p193 = scmp.ne.s32.totalorder %s181, %s182
      %p194 = scmp.eq.s32.totalorder %s46, 1
      %p195 = por %p193, %p194
      %p197 = scmp.ne.s32.totalorder %s182, %s196
      %p198 = scmp.eq.s32.totalorder %s46, 0
      %p199 = por %p197, %p198
      %s201 = sadd.s32 %s200, 1
      %p204 = scmp.eq.s32.totalorder %s40, 1
      %p205 = scmp.ne.s32.totalorder %s200, %s202
      %p206 = scmp.eq.s32.totalorder %s40, 0
      %p207 = por %p205, %p206
      %p208 = scmp.ne.s32.totalorder %s200, %s202
      %p209 = scmp.eq.s32.totalorder %s45, 1
      %p210 = por %p208, %p209
      %p211 = scmp.ne.s32.totalorder %s202, %s203
      %p212 = scmp.eq.s32.totalorder %s45, 0
      %p213 = por %p211, %p212
      %p214 = scmp.ne.s32.totalorder %s202, %s203
      %p215 = scmp.eq.s32.totalorder %s46, 1
      %p216 = por %p214, %p215
      %p218 = scmp.ne.s32.totalorder %s203, %s217
      %p219 = scmp.eq.s32.totalorder %s46, 0
      %p220 = por %p218, %p219
      %s222 = sadd.s32 %s221, 1
      %p225 = scmp.eq.s32.totalorder %s40, 1
      %p226 = scmp.ne.s32.totalorder %s221, %s223
      %p227 = scmp.eq.s32.totalorder %s40, 0
      %p228 = por %p226, %p227
      %p229 = scmp.ne.s32.totalorder %s221, %s223
      %p230 = scmp.eq.s32.totalorder %s45, 1
      %p231 = por %p229, %p230
      %p232 = scmp.ne.s32.totalorder %s223, %s224
      %p233 = scmp.eq.s32.totalorder %s45, 0
      %p234 = por %p232, %p233
      %p235 = scmp.ne.s32.totalorder %s223, %s224
      %p236 = scmp.eq.s32.totalorder %s46, 1
      %p237 = por %p235, %p236
      %p239 = scmp.ne.s32.totalorder %s224, %s238
      %p240 = scmp.eq.s32.totalorder %s46, 0
      %p241 = por %p239, %p240
      %s243 = sadd.s32 %s242, 1
      %p246 = scmp.eq.s32.totalorder %s40, 1
      %p247 = scmp.ne.s32.totalorder %s242, %s244
      %p248 = scmp.eq.s32.totalorder %s40, 0
      %p249 = por %p247, %p248
      %p250 = scmp.ne.s32.totalorder %s242, %s244
      %p251 = scmp.eq.s32.totalorder %s45, 1
      %p252 = por %p250, %p251
      %p253 = scmp.ne.s32.totalorder %s244, %s245
      %p254 = scmp.eq.s32.totalorder %s45, 0
      %p255 = por %p253, %p254
      %p256 = scmp.ne.s32.totalorder %s244, %s245
      %p257 = scmp.eq.s32.totalorder %s46, 1
      %p258 = por %p256, %p257
      %p260 = scmp.ne.s32.totalorder %s245, %s259
      %p261 = scmp.eq.s32.totalorder %s46, 0
      %p262 = por %p260, %p261
      %s264 = sadd.s32 %s263, 1
      %p267 = scmp.eq.s32.totalorder %s40, 1
      %p268 = scmp.ne.s32.totalorder %s263, %s265
      %p269 = scmp.eq.s32.totalorder %s40, 0
      %p270 = por %p268, %p269
      %p271 = scmp.ne.s32.totalorder %s263, %s265
      %p272 = scmp.eq.s32.totalorder %s45, 1
      %p273 = por %p271, %p272
      %p274 = scmp.ne.s32.totalorder %s265, %s266
      %p275 = scmp.eq.s32.totalorder %s45, 0
      %p276 = por %p274, %p275
      %p277 = scmp.ne.s32.totalorder %s265, %s266
      %p278 = scmp.eq.s32.totalorder %s46, 1
      %p279 = por %p277, %p278
      %p281 = scmp.ne.s32.totalorder %s266, %s280
      %p282 = scmp.eq.s32.totalorder %s46, 0
      %p283 = por %p281, %p282
      %s285 = sadd.s32 %s284, 1
      %p288 = scmp.eq.s32.totalorder %s40, 1
      %p289 = scmp.ne.s32.totalorder %s284, %s286
      %p290 = scmp.eq.s32.totalorder %s40, 0
      %p291 = por %p289, %p290
      %p292 = scmp.ne.s32.totalorder %s284, %s286
      %p293 = scmp.eq.s32.totalorder %s45, 1
      %p294 = por %p292, %p293
      %p295 = scmp.ne.s32.totalorder %s286, %s287
      %p296 = scmp.eq.s32.totalorder %s45, 0
      %p297 = por %p295, %p296
      %p298 = scmp.ne.s32.totalorder %s286, %s287
      %p299 = scmp.eq.s32.totalorder %s46, 1
      %p300 = por %p298, %p299
      %p302 = scmp.ne.s32.totalorder %s287, %s301
      %p303 = scmp.eq.s32.totalorder %s46, 0
      %p304 = por %p302, %p303
      %s306 = sadd.s32 %s305, 1
      %p309 = scmp.eq.s32.totalorder %s40, 1
      %p310 = scmp.ne.s32.totalorder %s305, %s307
      %p311 = scmp.eq.s32.totalorder %s40, 0
      %p312 = por %p310, %p311
      %p313 = scmp.ne.s32.totalorder %s305, %s307
      %p314 = scmp.eq.s32.totalorder %s45, 1
      %p315 = por %p313, %p314
      %p316 = scmp.ne.s32.totalorder %s307, %s308
      %p317 = scmp.eq.s32.totalorder %s45, 0
      %p318 = por %p316, %p317
      %p319 = scmp.ne.s32.totalorder %s307, %s308
      %p320 = scmp.eq.s32.totalorder %s46, 1
      %p321 = por %p319, %p320
      %p323 = scmp.ne.s32.totalorder %s308, %s322
      %p324 = scmp.eq.s32.totalorder %s46, 0
      %p325 = por %p323, %p324
      %s327 = sadd.s32 %s326, 1
      %p330 = scmp.eq.s32.totalorder %s40, 1
      %p331 = scmp.ne.s32.totalorder %s326, %s328
      %p332 = scmp.eq.s32.totalorder %s40, 0
      %p333 = por %p331, %p332
      %p334 = scmp.ne.s32.totalorder %s326, %s328
      %p335 = scmp.eq.s32.totalorder %s45, 1
      %p336 = por %p334, %p335
      %p337 = scmp.ne.s32.totalorder %s328, %s329
      %p338 = scmp.eq.s32.totalorder %s45, 0
      %p339 = por %p337, %p338
      %p340 = scmp.ne.s32.totalorder %s328, %s329
      %p341 = scmp.eq.s32.totalorder %s46, 1
      %p342 = por %p340, %p341
      %p344 = scmp.ne.s32.totalorder %s329, %s343
      %p345 = scmp.eq.s32.totalorder %s46, 0
      %p346 = por %p344, %p345
      %s348 = sadd.s32 %s347, 1
      %p351 = scmp.eq.s32.totalorder %s40, 1
      %p352 = scmp.ne.s32.totalorder %s347, %s349
      %p353 = scmp.eq.s32.totalorder %s40, 0
      %p354 = por %p352, %p353
      %p355 = scmp.ne.s32.totalorder %s347, %s349
      %p356 = scmp.eq.s32.totalorder %s45, 1
      %p357 = por %p355, %p356
      %p358 = scmp.ne.s32.totalorder %s349, %s350
      %p359 = scmp.eq.s32.totalorder %s45, 0
      %p360 = por %p358, %p359
      %p361 = scmp.ne.s32.totalorder %s349, %s350
      %p362 = scmp.eq.s32.totalorder %s46, 1
      %p363 = por %p361, %p362
      %p365 = scmp.ne.s32.totalorder %s350, %s364
      %p366 = scmp.eq.s32.totalorder %s46, 0
      %p367 = por %p365, %p366
      %s369 = sadd.s32 %s368, 1
      %p372 = scmp.eq.s32.totalorder %s40, 1
      %p373 = scmp.ne.s32.totalorder %s368, %s370
      %p374 = scmp.eq.s32.totalorder %s40, 0
      %p375 = por %p373, %p374
      %p376 = scmp.ne.s32.totalorder %s368, %s370
      %p377 = scmp.eq.s32.totalorder %s45, 1
      %p378 = por %p376, %p377
      %p379 = scmp.ne.s32.totalorder %s370, %s371
      %p380 = scmp.eq.s32.totalorder %s45, 0
      %p381 = por %p379, %p380
      %p382 = scmp.ne.s32.totalorder %s370, %s371
      %p383 = scmp.eq.s32.totalorder %s46, 1
      %p384 = por %p382, %p383
      %p386 = scmp.ne.s32.totalorder %s371, %s385
      %p387 = scmp.eq.s32.totalorder %s46, 0
      %p388 = por %p386, %p387
      %s390 = sadd.s32 %s389, 1
      %p393 = scmp.eq.s32.totalorder %s40, 1
      %p394 = scmp.ne.s32.totalorder %s389, %s391
      %p395 = scmp.eq.s32.totalorder %s40, 0
      %p396 = por %p394, %p395
      %p397 = scmp.ne.s32.totalorder %s389, %s391
      %p398 = scmp.eq.s32.totalorder %s45, 1
      %p399 = por %p397, %p398
      %p400 = scmp.ne.s32.totalorder %s391, %s392
      %p401 = scmp.eq.s32.totalorder %s45, 0
      %p402 = por %p400, %p401
      %p403 = scmp.ne.s32.totalorder %s391, %s392
      %p404 = scmp.eq.s32.totalorder %s46, 1
      %p405 = por %p403, %p404
      %p407 = scmp.ne.s32.totalorder %s392, %s406
      %p408 = scmp.eq.s32.totalorder %s46, 0
      %p409 = por %p407, %p408
      %s411 = sadd.s32 %s410, 1
      %p414 = scmp.eq.s32.totalorder %s40, 1
      %p415 = scmp.ne.s32.totalorder %s410, %s412
      %p416 = scmp.eq.s32.totalorder %s40, 0
      %p417 = por %p415, %p416
      %p418 = scmp.ne.s32.totalorder %s410, %s412
      %p419 = scmp.eq.s32.totalorder %s45, 1
      %p420 = por %p418, %p419
      %p421 = scmp.ne.s32.totalorder %s412, %s413
      %p422 = scmp.eq.s32.totalorder %s45, 0
      %p423 = por %p421, %p422
      %p424 = scmp.ne.s32.totalorder %s412, %s413
      %p425 = scmp.eq.s32.totalorder %s46, 1
      %p426 = por %p424, %p425
      %p428 = scmp.ne.s32.totalorder %s413, %s427
      %p429 = scmp.eq.s32.totalorder %s46, 0
      %p430 = por %p428, %p429
      %s432 = sadd.s32 %s431, 1
      %p435 = scmp.eq.s32.totalorder %s40, 1
      %p436 = scmp.ne.s32.totalorder %s431, %s433
      %p437 = scmp.eq.s32.totalorder %s40, 0
      %p438 = por %p436, %p437
      %p439 = scmp.ne.s32.totalorder %s431, %s433
      %p440 = scmp.eq.s32.totalorder %s45, 1
      %p441 = por %p439, %p440
      %p442 = scmp.ne.s32.totalorder %s433, %s434
      %p443 = scmp.eq.s32.totalorder %s45, 0
      %p444 = por %p442, %p443
      %p445 = scmp.ne.s32.totalorder %s433, %s434
      %p446 = scmp.eq.s32.totalorder %s46, 1
      %p447 = por %p445, %p446
      %p449 = scmp.ne.s32.totalorder %s434, %s448
      %p450 = scmp.eq.s32.totalorder %s46, 0
      %p451 = por %p449, %p450
      %s452 = ssub.s32 %s40, %s47
      %p453 = scmp.eq.s32.totalorder %s452, 0
      %s455 = sadd.s32 %s454, 1
      %s456 = scalar_select %p453, %s454, %s455
      %p459 = pneg %p453
      %p460 = scmp.eq.s32.totalorder %s40, 1
      %p461 = por %p459, %p460
      %p462 = scmp.ne.s32.totalorder %s454, %s457
      %p463 = scmp.eq.s32.totalorder %s40, 0
      %p464 = por %p462, %p463
      %p465 = scmp.ne.s32.totalorder %s454, %s457
      %p466 = scmp.eq.s32.totalorder %s45, 1
      %p467 = por %p465, %p466
      %p468 = scmp.ne.s32.totalorder %s457, %s458
      %p469 = scmp.eq.s32.totalorder %s45, 0
      %p470 = por %p468, %p469
      %p471 = scmp.ne.s32.totalorder %s457, %s458
      %p472 = scmp.eq.s32.totalorder %s46, 1
      %p473 = por %p471, %p472
      %p475 = scmp.ne.s32.totalorder %s458, %s474
      %p476 = scmp.eq.s32.totalorder %s46, 0
      %p477 = por %p475, %p476
      %p478 = scmp.le.s32.totalorder 1, %s40
      %p479 = scmp.lt.s32.totalorder %s40, 3
      %p480 = pnand %p478, %p479
      %p481 = pneg %p480
      // Predicated region
      $region9: #{pointnet_encoder_forward.1} parent=5 // pred_check
        _
      $region10: #{pointnet_encoder_forward.1} parent=5 // pred_check_branch
        %483 = sbr.rel (%p480) target = $region12
      $region11: #{pointnet_encoder_forward.1} parent=5 // pred_region
        %s484 = ssub.s32 %s40, 1
        // Predicated region
        $region13: #{pointnet_encoder_forward.1} parent=11 // pred_check
          %p485 = pneg %p87
        $region14: #{pointnet_encoder_forward.1} parent=11 // pred_check_branch
          %487 = sbr.rel (%p485) target = $region16
        $region15: #{pointnet_encoder_forward.1} parent=11 // pred_region
          %s489 = ssub.s32 512, 512
          %490 = vsyncadd [#allocation6], %s489
          %s491 = sshll.u32 [#allocation5], 4
          %s492 = int_to_ptr.vmem [resolvable:$true] %s491
          %497 = dma.hbm_to_vmem [thread:$0]  %s1, 512, %s492, [#allocation6], 64, 64, 4
        $region16: #{pointnet_encoder_forward.1} parent=11 // pred_fallthru
          _
        // Predicated region
        $region17: #{pointnet_encoder_forward.1} parent=11 // pred_check
          %p498 = pneg %p108
        $region18: #{pointnet_encoder_forward.1} parent=11 // pred_check_branch
          %500 = sbr.rel (%p498) target = $region20
        $region19: #{pointnet_encoder_forward.1} parent=11 // pred_region
          %s502 = ssub.s32 1024, 1024
          %503 = vsyncadd [#allocation6], %s502
          %s504 = sshll.u32 [#allocation7], 4
          %s505 = int_to_ptr.vmem [resolvable:$true] %s504
          %510 = dma.hbm_to_vmem [thread:$0]  %s2, 1024, %s505, [#allocation6], 128, 128, 8
        $region20: #{pointnet_encoder_forward.1} parent=11 // pred_fallthru
          _
        // Predicated region
        $region21: #{pointnet_encoder_forward.1} parent=11 // pred_check
          %p511 = pneg %p129
        $region22: #{pointnet_encoder_forward.1} parent=11 // pred_check_branch
          %513 = sbr.rel (%p511) target = $region24
        $region23: #{pointnet_encoder_forward.1} parent=11 // pred_region
          %s515 = ssub.s32 1024, 1024
          %516 = vsyncadd [#allocation9], %s515
          %s517 = sshll.u32 [#allocation8], 4
          %s518 = int_to_ptr.vmem [resolvable:$true] %s517
          %523 = dma.hbm_to_vmem [thread:$0]  %s3, 1024, %s518, [#allocation9], 64, 64, 4
        $region24: #{pointnet_encoder_forward.1} parent=11 // pred_fallthru
          _
        // Predicated region
        $region25: #{pointnet_encoder_forward.1} parent=11 // pred_check
          %p524 = pneg %p150
        $region26: #{pointnet_encoder_forward.1} parent=11 // pred_check_branch
          %526 = sbr.rel (%p524) target = $region28
        $region27: #{pointnet_encoder_forward.1} parent=11 // pred_region
          %s528 = ssub.s32 2048, 2048
          %529 = vsyncadd [#allocation9], %s528
          %s530 = sshll.u32 [#allocation10], 4
          %s531 = int_to_ptr.vmem [resolvable:$true] %s530
          %536 = dma.hbm_to_vmem [thread:$0]  %s4, 2048, %s531, [#allocation9], 128, 128, 8
        $region28: #{pointnet_encoder_forward.1} parent=11 // pred_fallthru
          _
        // Predicated region
        $region29: #{pointnet_encoder_forward.1} parent=11 // pred_check
          %p537 = pneg %p171
        $region30: #{pointnet_encoder_forward.1} parent=11 // pred_check_branch
          %539 = sbr.rel (%p537) target = $region32
        $region31: #{pointnet_encoder_forward.1} parent=11 // pred_region
          %s541 = ssub.s32 8192, 8192
          %542 = vsyncadd [#allocation12], %s541
          %s543 = sshll.u32 [#allocation11], 4
          %s544 = int_to_ptr.vmem [resolvable:$true] %s543
          %549 = dma.hbm_to_vmem [thread:$0]  %s5, 8192, %s544, [#allocation12], 64, 64, 4
        $region32: #{pointnet_encoder_forward.1} parent=11 // pred_fallthru
          _
        // Predicated region
        $region33: #{pointnet_encoder_forward.1} parent=11 // pred_check
          %p550 = pneg %p192
        $region34: #{pointnet_encoder_forward.1} parent=11 // pred_check_branch
          %552 = sbr.rel (%p550) target = $region36
        $region35: #{pointnet_encoder_forward.1} parent=11 // pred_region
          %s554 = ssub.s32 16384, 16384
          %555 = vsyncadd [#allocation12], %s554
          %s556 = sshll.u32 [#allocation13], 4
          %s557 = int_to_ptr.vmem [resolvable:$true] %s556
          %562 = dma.hbm_to_vmem [thread:$0]  %s6, 16384, %s557, [#allocation12], 128, 128, 8
        $region36: #{pointnet_encoder_forward.1} parent=11 // pred_fallthru
          _
        // Predicated region
        $region37: #{pointnet_encoder_forward.1} parent=11 // pred_check
          %p563 = pneg %p213
        $region38: #{pointnet_encoder_forward.1} parent=11 // pred_check_branch
          %565 = sbr.rel (%p563) target = $region40
        $region39: #{pointnet_encoder_forward.1} parent=11 // pred_region
          %s567 = ssub.s32 32768, 32768
          %568 = vsyncadd [#allocation15], %s567
          %s569 = sshll.u32 [#allocation14], 4
          %s570 = int_to_ptr.vmem [resolvable:$true] %s569
          %575 = dma.hbm_to_vmem [thread:$0]  %s7, 32768, %s570, [#allocation15], 512, 512, 32
        $region40: #{pointnet_encoder_forward.1} parent=11 // pred_fallthru
          _
        // Predicated region
        $region41: #{pointnet_encoder_forward.1} parent=11 // pred_check
          %p576 = pneg %p234
        $region42: #{pointnet_encoder_forward.1} parent=11 // pred_check_branch
          %578 = sbr.rel (%p576) target = $region44
        $region43: #{pointnet_encoder_forward.1} parent=11 // pred_region
          %s580 = ssub.s32 8192, 8192
          %581 = vsyncadd [#allocation15], %s580
          %s582 = sshll.u32 [#allocation16], 4
          %s583 = int_to_ptr.vmem [resolvable:$true] %s582
          %588 = dma.hbm_to_vmem [thread:$0]  %s8, 8192, %s583, [#allocation15], 128, 128, 8
        $region44: #{pointnet_encoder_forward.1} parent=11 // pred_fallthru
          _
        // Predicated region
        $region45: #{pointnet_encoder_forward.1} parent=11 // pred_check
          %p589 = pneg %p255
        $region46: #{pointnet_encoder_forward.1} parent=11 // pred_check_branch
          %591 = sbr.rel (%p589) target = $region48
        $region47: #{pointnet_encoder_forward.1} parent=11 // pred_region
          %s593 = ssub.s32 8192, 8192
          %594 = vsyncadd [#allocation18], %s593
          %s595 = sshll.u32 [#allocation17], 4
          %s596 = int_to_ptr.vmem [resolvable:$true] %s595
          %601 = dma.hbm_to_vmem [thread:$0]  %s9, 8192, %s596, [#allocation18], 256, 256, 16
        $region48: #{pointnet_encoder_forward.1} parent=11 // pred_fallthru
          _
        // Predicated region
        $region49: #{pointnet_encoder_forward.1} parent=11 // pred_check
          %p602 = pneg %p276
        $region50: #{pointnet_encoder_forward.1} parent=11 // pred_check_branch
          %604 = sbr.rel (%p602) target = $region52
        $region51: #{pointnet_encoder_forward.1} parent=11 // pred_region
          %s606 = ssub.s32 4096, 4096
          %607 = vsyncadd [#allocation18], %s606
          %s608 = sshll.u32 [#allocation19], 4
          %s609 = int_to_ptr.vmem [resolvable:$true] %s608
          %614 = dma.hbm_to_vmem [thread:$0]  %s10, 4096, %s609, [#allocation18], 128, 128, 8
        $region52: #{pointnet_encoder_forward.1} parent=11 // pred_fallthru
          _
        // Predicated region
        $region53: #{pointnet_encoder_forward.1} parent=11 // pred_check
          %p615 = pneg %p297
        $region54: #{pointnet_encoder_forward.1} parent=11 // pred_check_branch
          %617 = sbr.rel (%p615) target = $region56
        $region55: #{pointnet_encoder_forward.1} parent=11 // pred_region
          %s619 = ssub.s32 3072, 3072
          %620 = vsyncadd [#allocation21], %s619
          %s621 = sshll.u32 [#allocation20], 4
          %s622 = int_to_ptr.vmem [resolvable:$true] %s621
          %627 = dma.hbm_to_vmem [thread:$0]  %s11, 3072, %s622, [#allocation21], 128, 128, 8
        $region56: #{pointnet_encoder_forward.1} parent=11 // pred_fallthru
          _
        // Predicated region
        $region57: #{pointnet_encoder_forward.1} parent=11 // pred_check
          %p628 = pneg %p318
        $region58: #{pointnet_encoder_forward.1} parent=11 // pred_check_branch
          %630 = sbr.rel (%p628) target = $region60
        $region59: #{pointnet_encoder_forward.1} parent=11 // pred_region
          %s632 = ssub.s32 3072, 3072
          %633 = vsyncadd [#allocation21], %s632
          %s634 = sshll.u32 [#allocation22], 4
          %s635 = int_to_ptr.vmem [resolvable:$true] %s634
          %640 = dma.hbm_to_vmem [thread:$0]  %s12, 3072, %s635, [#allocation21], 128, 128, 8
        $region60: #{pointnet_encoder_forward.1} parent=11 // pred_fallthru
          _
        // Predicated region
        $region61: #{pointnet_encoder_forward.1} parent=11 // pred_check
          %p641 = pneg %p339
        $region62: #{pointnet_encoder_forward.1} parent=11 // pred_check_branch
          %643 = sbr.rel (%p641) target = $region64
        $region63: #{pointnet_encoder_forward.1} parent=11 // pred_region
          %s645 = ssub.s32 1024, 1024
          %646 = vsyncadd [#allocation24], %s645
          %s647 = sshll.u32 [#allocation23], 4
          %s648 = int_to_ptr.vmem [resolvable:$true] %s647
          %653 = dma.hbm_to_vmem [thread:$0]  %s13, 1024, %s648, [#allocation24], 128, 128, 8
        $region64: #{pointnet_encoder_forward.1} parent=11 // pred_fallthru
          _
        // Predicated region
        $region65: #{pointnet_encoder_forward.1} parent=11 // pred_check
          %p654 = pneg %p360
        $region66: #{pointnet_encoder_forward.1} parent=11 // pred_check_branch
          %656 = sbr.rel (%p654) target = $region68
        $region67: #{pointnet_encoder_forward.1} parent=11 // pred_region
          %s658 = ssub.s32 1024, 1024
          %659 = vsyncadd [#allocation24], %s658
          %s660 = sshll.u32 [#allocation25], 4
          %s661 = int_to_ptr.vmem [resolvable:$true] %s660
          %666 = dma.hbm_to_vmem [thread:$0]  %s14, 1024, %s661, [#allocation24], 128, 128, 8
        $region68: #{pointnet_encoder_forward.1} parent=11 // pred_fallthru
          _
        // Predicated region
        $region69: #{pointnet_encoder_forward.1} parent=11 // pred_check
          %p667 = pneg %p381
        $region70: #{pointnet_encoder_forward.1} parent=11 // pred_check_branch
          %669 = sbr.rel (%p667) target = $region72
        $region71: #{pointnet_encoder_forward.1} parent=11 // pred_region
          %s671 = ssub.s32 1024, 1024
          %672 = vsyncadd [#allocation27], %s671
          %s673 = sshll.u32 [#allocation26], 4
          %s674 = int_to_ptr.vmem [resolvable:$true] %s673
          %679 = dma.hbm_to_vmem [thread:$0]  %s15, 1024, %s674, [#allocation27], 64, 64, 4
        $region72: #{pointnet_encoder_forward.1} parent=11 // pred_fallthru
          _
        // Predicated region
        $region73: #{pointnet_encoder_forward.1} parent=11 // pred_check
          %p680 = pneg %p402
        $region74: #{pointnet_encoder_forward.1} parent=11 // pred_check_branch
          %682 = sbr.rel (%p680) target = $region76
        $region75: #{pointnet_encoder_forward.1} parent=11 // pred_region
          %s684 = ssub.s32 2048, 2048
          %685 = vsyncadd [#allocation27], %s684
          %s686 = sshll.u32 [#allocation28], 4
          %s687 = int_to_ptr.vmem [resolvable:$true] %s686
          %692 = dma.hbm_to_vmem [thread:$0]  %s16, 2048, %s687, [#allocation27], 128, 128, 8
        $region76: #{pointnet_encoder_forward.1} parent=11 // pred_fallthru
          _
        // Predicated region
        $region77: #{pointnet_encoder_forward.1} parent=11 // pred_check
          %p693 = pneg %p423
        $region78: #{pointnet_encoder_forward.1} parent=11 // pred_check_branch
          %695 = sbr.rel (%p693) target = $region80
        $region79: #{pointnet_encoder_forward.1} parent=11 // pred_region
          %s697 = ssub.s32 256, 256
          %698 = vsyncadd [#allocation30], %s697
          %s699 = sshll.u32 [#allocation29], 4
          %s700 = int_to_ptr.vmem [resolvable:$true] %s699
          %705 = dma.hbm_to_vmem [thread:$0]  %s17, 256, %s700, [#allocation30], 64, 64, 4
        $region80: #{pointnet_encoder_forward.1} parent=11 // pred_fallthru
          _
        // Predicated region
        $region81: #{pointnet_encoder_forward.1} parent=11 // pred_check
          %p706 = pneg %p444
        $region82: #{pointnet_encoder_forward.1} parent=11 // pred_check_branch
          %708 = sbr.rel (%p706) target = $region84
        $region83: #{pointnet_encoder_forward.1} parent=11 // pred_region
          %s710 = ssub.s32 512, 512
          %711 = vsyncadd [#allocation30], %s710
          %s712 = sshll.u32 [#allocation31], 4
          %s713 = int_to_ptr.vmem [resolvable:$true] %s712
          %718 = dma.hbm_to_vmem [thread:$0]  %s18, 512, %s713, [#allocation30], 128, 128, 8
        $region84: #{pointnet_encoder_forward.1} parent=11 // pred_fallthru
          _
      $region12: #{pointnet_encoder_forward.1} parent=5 // pred_fallthru
        _
      %p719 = scmp.lt.s32.totalorder %s40, 2
      // Predicated region
      $region85: #{pointnet_encoder_forward.1} parent=5 // pred_check
        %p720 = pneg %p719
      $region86: #{pointnet_encoder_forward.1} parent=5 // pred_check_branch
        %722 = sbr.rel (%p720) target = $region88
      $region87: #{pointnet_encoder_forward.1} parent=5 // pred_region
        // Predicated region
        $region89: #{pointnet_encoder_forward.1} parent=87 // pred_check
          %p723 = pneg %p60
        $region90: #{pointnet_encoder_forward.1} parent=87 // pred_check_branch
          %725 = sbr.rel (%p723) target = $region92
        $region91: #{pointnet_encoder_forward.1} parent=87 // pred_region
          %s726 = sand.u32 %s50, 1
          %s727 = scalar_lea.sflag [#allocation3], %s726
          %s728 = sand.u32 %s50, 1
          %s729 = smul.addr %s728, 4
          %s730 = scalar_lea.vmem [#allocation2], %s729
          %s732 = ssub.s32 64, 64
          %733 = vsyncadd %s727, %s732
          %s734 = smul.addr %s40, 64
          %s735 = scalar_lea.hbm %s0, %s734
          %s737 = sshll.u32 %s730, 4
          %s738 = int_to_ptr.vmem [resolvable:$true] %s737
          %740 = dma.hbm_to_vmem [thread:$0]  %s735, 64, %s738, %s727
        $region92: #{pointnet_encoder_forward.1} parent=87 // pred_fallthru
          _
      $region88: #{pointnet_encoder_forward.1} parent=5 // pred_fallthru
        _
      %p741 = scmp.le.s32.totalorder 1, %s40
      %p742 = scmp.lt.s32.totalorder %s40, 3
      %p743 = pnand %p741, %p742
      %p744 = pneg %p743
      // Predicated region
      $region93: #{pointnet_encoder_forward.1} parent=5 // pred_check
        _
      $region94: #{pointnet_encoder_forward.1} parent=5 // pred_check_branch
        %746 = sbr.rel (%p743) target = $region96
      $region95: #{pointnet_encoder_forward.1} parent=5 // pred_region
        %s747 = ssub.s32 %s40, 1
        %s748 = sand.u32 %s53, 1
        %s749 = scalar_lea.sflag [#allocation3], %s748
        %s750 = sand.u32 %s53, 1
        %s751 = smul.addr %s750, 4
        %s752 = scalar_lea.vmem [#allocation2], %s751
        // Predicated region
        $region97: #{pointnet_encoder_forward.1} parent=95 // pred_check
          %p753 = pneg %p66
        $region98: #{pointnet_encoder_forward.1} parent=95 // pred_check_branch
          %755 = sbr.rel (%p753) target = $region100
        $region99: #{pointnet_encoder_forward.1} parent=95 // pred_region
          %756 = dma.done %s749, 64
        $region100: #{pointnet_encoder_forward.1} parent=95 // pred_fallthru
          _
        // Predicated region
        $region101: #{pointnet_encoder_forward.1} parent=95 // pred_check
          %p757 = pneg %p87
        $region102: #{pointnet_encoder_forward.1} parent=95 // pred_check_branch
          %759 = sbr.rel (%p757) target = $region104
        $region103: #{pointnet_encoder_forward.1} parent=95 // pred_region
          %760 = dma.done [#allocation6], 512
        $region104: #{pointnet_encoder_forward.1} parent=95 // pred_fallthru
          _
        // Predicated region
        $region105: #{pointnet_encoder_forward.1} parent=95 // pred_check
          %p761 = pneg %p108
        $region106: #{pointnet_encoder_forward.1} parent=95 // pred_check_branch
          %763 = sbr.rel (%p761) target = $region108
        $region107: #{pointnet_encoder_forward.1} parent=95 // pred_region
          %764 = dma.done [#allocation6], 1024
        $region108: #{pointnet_encoder_forward.1} parent=95 // pred_fallthru
          _
        // Predicated region
        $region109: #{pointnet_encoder_forward.1} parent=95 // pred_check
          %p765 = pneg %p129
        $region110: #{pointnet_encoder_forward.1} parent=95 // pred_check_branch
          %767 = sbr.rel (%p765) target = $region112
        $region111: #{pointnet_encoder_forward.1} parent=95 // pred_region
          %768 = dma.done [#allocation9], 1024
        $region112: #{pointnet_encoder_forward.1} parent=95 // pred_fallthru
          _
        // Predicated region
        $region113: #{pointnet_encoder_forward.1} parent=95 // pred_check
          %p769 = pneg %p150
        $region114: #{pointnet_encoder_forward.1} parent=95 // pred_check_branch
          %771 = sbr.rel (%p769) target = $region116
        $region115: #{pointnet_encoder_forward.1} parent=95 // pred_region
          %772 = dma.done [#allocation9], 2048
        $region116: #{pointnet_encoder_forward.1} parent=95 // pred_fallthru
          _
        // Predicated region
        $region117: #{pointnet_encoder_forward.1} parent=95 // pred_check
          %p773 = pneg %p171
        $region118: #{pointnet_encoder_forward.1} parent=95 // pred_check_branch
          %775 = sbr.rel (%p773) target = $region120
        $region119: #{pointnet_encoder_forward.1} parent=95 // pred_region
          %776 = dma.done [#allocation12], 8192
        $region120: #{pointnet_encoder_forward.1} parent=95 // pred_fallthru
          _
        // Predicated region
        $region121: #{pointnet_encoder_forward.1} parent=95 // pred_check
          %p777 = pneg %p192
        $region122: #{pointnet_encoder_forward.1} parent=95 // pred_check_branch
          %779 = sbr.rel (%p777) target = $region124
        $region123: #{pointnet_encoder_forward.1} parent=95 // pred_region
          %780 = dma.done [#allocation12], 16384
        $region124: #{pointnet_encoder_forward.1} parent=95 // pred_fallthru
          _
        // Predicated region
        $region125: #{pointnet_encoder_forward.1} parent=95 // pred_check
          %p781 = pneg %p213
        $region126: #{pointnet_encoder_forward.1} parent=95 // pred_check_branch
          %783 = sbr.rel (%p781) target = $region128
        $region127: #{pointnet_encoder_forward.1} parent=95 // pred_region
          %784 = dma.done [#allocation15], 32768
        $region128: #{pointnet_encoder_forward.1} parent=95 // pred_fallthru
          _
        // Predicated region
        $region129: #{pointnet_encoder_forward.1} parent=95 // pred_check
          %p785 = pneg %p234
        $region130: #{pointnet_encoder_forward.1} parent=95 // pred_check_branch
          %787 = sbr.rel (%p785) target = $region132
        $region131: #{pointnet_encoder_forward.1} parent=95 // pred_region
          %788 = dma.done [#allocation15], 8192
        $region132: #{pointnet_encoder_forward.1} parent=95 // pred_fallthru
          _
        // Predicated region
        $region133: #{pointnet_encoder_forward.1} parent=95 // pred_check
          %p789 = pneg %p255
        $region134: #{pointnet_encoder_forward.1} parent=95 // pred_check_branch
          %791 = sbr.rel (%p789) target = $region136
        $region135: #{pointnet_encoder_forward.1} parent=95 // pred_region
          %792 = dma.done [#allocation18], 8192
        $region136: #{pointnet_encoder_forward.1} parent=95 // pred_fallthru
          _
        // Predicated region
        $region137: #{pointnet_encoder_forward.1} parent=95 // pred_check
          %p793 = pneg %p276
        $region138: #{pointnet_encoder_forward.1} parent=95 // pred_check_branch
          %795 = sbr.rel (%p793) target = $region140
        $region139: #{pointnet_encoder_forward.1} parent=95 // pred_region
          %796 = dma.done [#allocation18], 4096
        $region140: #{pointnet_encoder_forward.1} parent=95 // pred_fallthru
          _
        // Predicated region
        $region141: #{pointnet_encoder_forward.1} parent=95 // pred_check
          %p797 = pneg %p297
        $region142: #{pointnet_encoder_forward.1} parent=95 // pred_check_branch
          %799 = sbr.rel (%p797) target = $region144
        $region143: #{pointnet_encoder_forward.1} parent=95 // pred_region
          %800 = dma.done [#allocation21], 3072
        $region144: #{pointnet_encoder_forward.1} parent=95 // pred_fallthru
          _
        // Predicated region
        $region145: #{pointnet_encoder_forward.1} parent=95 // pred_check
          %p801 = pneg %p318
        $region146: #{pointnet_encoder_forward.1} parent=95 // pred_check_branch
          %803 = sbr.rel (%p801) target = $region148
        $region147: #{pointnet_encoder_forward.1} parent=95 // pred_region
          %804 = dma.done [#allocation21], 3072
        $region148: #{pointnet_encoder_forward.1} parent=95 // pred_fallthru
          _
        // Predicated region
        $region149: #{pointnet_encoder_forward.1} parent=95 // pred_check
          %p805 = pneg %p339
        $region150: #{pointnet_encoder_forward.1} parent=95 // pred_check_branch
          %807 = sbr.rel (%p805) target = $region152
        $region151: #{pointnet_encoder_forward.1} parent=95 // pred_region
          %808 = dma.done [#allocation24], 1024
        $region152: #{pointnet_encoder_forward.1} parent=95 // pred_fallthru
          _
        // Predicated region
        $region153: #{pointnet_encoder_forward.1} parent=95 // pred_check
          %p809 = pneg %p360
        $region154: #{pointnet_encoder_forward.1} parent=95 // pred_check_branch
          %811 = sbr.rel (%p809) target = $region156
        $region155: #{pointnet_encoder_forward.1} parent=95 // pred_region
          %812 = dma.done [#allocation24], 1024
        $region156: #{pointnet_encoder_forward.1} parent=95 // pred_fallthru
          _
        // Predicated region
        $region157: #{pointnet_encoder_forward.1} parent=95 // pred_check
          %p813 = pneg %p381
        $region158: #{pointnet_encoder_forward.1} parent=95 // pred_check_branch
          %815 = sbr.rel (%p813) target = $region160
        $region159: #{pointnet_encoder_forward.1} parent=95 // pred_region
          %816 = dma.done [#allocation27], 1024
        $region160: #{pointnet_encoder_forward.1} parent=95 // pred_fallthru
          _
        // Predicated region
        $region161: #{pointnet_encoder_forward.1} parent=95 // pred_check
          %p817 = pneg %p402
        $region162: #{pointnet_encoder_forward.1} parent=95 // pred_check_branch
          %819 = sbr.rel (%p817) target = $region164
        $region163: #{pointnet_encoder_forward.1} parent=95 // pred_region
          %820 = dma.done [#allocation27], 2048
        $region164: #{pointnet_encoder_forward.1} parent=95 // pred_fallthru
          _
        // Predicated region
        $region165: #{pointnet_encoder_forward.1} parent=95 // pred_check
          %p821 = pneg %p423
        $region166: #{pointnet_encoder_forward.1} parent=95 // pred_check_branch
          %823 = sbr.rel (%p821) target = $region168
        $region167: #{pointnet_encoder_forward.1} parent=95 // pred_region
          %824 = dma.done [#allocation30], 256
        $region168: #{pointnet_encoder_forward.1} parent=95 // pred_fallthru
          _
        // Predicated region
        $region169: #{pointnet_encoder_forward.1} parent=95 // pred_check
          %p825 = pneg %p444
        $region170: #{pointnet_encoder_forward.1} parent=95 // pred_check_branch
          %827 = sbr.rel (%p825) target = $region172
        $region171: #{pointnet_encoder_forward.1} parent=95 // pred_region
          %828 = dma.done [#allocation30], 512
        $region172: #{pointnet_encoder_forward.1} parent=95 // pred_fallthru
          _
        %s829 = sand.u32 %s53, 1
        %s830 = scalar_lea.sflag [#allocation3], %s829
        %s831 = sand.u32 %s53, 1
        %s832 = smul.addr %s831, 4
        %s833 = scalar_lea.vmem [#allocation2], %s832
        %p834 = pneg %p66
        %p835 = pneg %p63
        %p836 = pneg %p87
        %p837 = pneg %p84
        %p838 = pneg %p108
        %p839 = pneg %p105
        %p840 = pneg %p129
        %p841 = pneg %p126
        %p842 = pneg %p150
        %p843 = pneg %p147
        %p844 = pneg %p171
        %p845 = pneg %p168
        %p846 = pneg %p192
        %p847 = pneg %p189
        %p848 = pneg %p213
        %p849 = pneg %p210
        %p850 = pneg %p234
        %p851 = pneg %p231
        %p852 = pneg %p255
        %p853 = pneg %p252
        %p854 = pneg %p276
        %p855 = pneg %p273
        %p856 = pneg %p297
        %p857 = pneg %p294
        %p858 = pneg %p318
        %p859 = pneg %p315
        %p860 = pneg %p339
        %p861 = pneg %p336
        %p862 = pneg %p360
        %p863 = pneg %p357
        %p864 = pneg %p381
        %p865 = pneg %p378
        %p866 = pneg %p402
        %p867 = pneg %p399
        %p868 = pneg %p423
        %p869 = pneg %p420
        %p870 = pneg %p444
        %p871 = pneg %p441
        %p872 = pneg %p470
        %p873 = pneg %p467
        %s874 = sand.u32 %s457, 1
        %s875 = scalar_lea.sflag [#allocation4], %s874
        %s876 = sand.u32 %s457, 1
        %s877 = smul.addr %s876, 32
        %s878 = scalar_lea.vmem [#allocation32], %s877
        %v880 = vld [vmem:[%s752] sm:$0xf]
        %v881 = vld [vmem:[#allocation5] sm:$0xf]
        %v882 = vld [vmem:[#allocation5 + $0x4] sm:$0xf]
        %v883 = vld [vmem:[#allocation5 + $0x8] sm:$0xf]
        %v884 = vld [vmem:[#allocation5 + $0xc] sm:$0xf]
        %v885 = vld [vmem:[#allocation5 + $0x10] sm:$0xf]
        %v886 = vld [vmem:[#allocation5 + $0x14] sm:$0xf]
        %v887 = vld [vmem:[#allocation5 + $0x18] sm:$0xf]
        %v888 = vld [vmem:[#allocation5 + $0x1c] sm:$0xf]
        %v889 = vld [vmem:[#allocation7] sm:$0xff]
        %v890 = vld [vmem:[#allocation7 + $0x8] sm:$0xff]
        %v891 = vld [vmem:[#allocation7 + $0x10] sm:$0xff]
        %v892 = vld [vmem:[#allocation7 + $0x18] sm:$0xff]
        %v893 = vld [vmem:[#allocation7 + $0x20] sm:$0xff]
        %v894 = vld [vmem:[#allocation7 + $0x28] sm:$0xff]
        %v895 = vld [vmem:[#allocation7 + $0x30] sm:$0xff]
        %v896 = vld [vmem:[#allocation7 + $0x38] sm:$0xff]
        %898 = vset.pattern.permute.xlu0 0
        %899 = vperm.xlu0 %898, %v889
        %v900 = vpop.permute.xlu0 %899
        %903 = vset.pattern.permute.xlu0 0
        %904 = vperm.xlu0 %903, %v890
        %v905 = vpop.permute.xlu0 %904
        %908 = vset.pattern.permute.xlu0 0
        %909 = vperm.xlu0 %908, %v891
        %v910 = vpop.permute.xlu0 %909
        %913 = vset.pattern.permute.xlu0 0
        %914 = vperm.xlu0 %913, %v892
        %v915 = vpop.permute.xlu0 %914
        %918 = vset.pattern.permute.xlu0 0
        %919 = vperm.xlu0 %918, %v893
        %v920 = vpop.permute.xlu0 %919
        %923 = vset.pattern.permute.xlu0 0
        %924 = vperm.xlu0 %923, %v894
        %v925 = vpop.permute.xlu0 %924
        %928 = vset.pattern.permute.xlu0 0
        %929 = vperm.xlu0 %928, %v895
        %v930 = vpop.permute.xlu0 %929
        %933 = vset.pattern.permute.xlu0 0
        %934 = vperm.xlu0 %933, %v896
        %v935 = vpop.permute.xlu0 %934
        %v945 = vunpack.c.l.b16 %v881
        %v946 = vunpack.c.l.b16 %v882
        %v947 = vunpack.c.l.b16 %v883
        %v948 = vunpack.c.l.b16 %v884
        %v949 = vunpack.c.l.b16 %v885
        %v950 = vunpack.c.l.b16 %v886
        %v951 = vunpack.c.l.b16 %v887
        %v952 = vunpack.c.l.b16 %v888
        %v953 = vpack.c.b16 %v946, %v945
        %v954 = vpack.c.b16 %v948, %v947
        %v955 = vpack.c.b16 %v950, %v949
        %v956 = vpack.c.b16 %v952, %v951
        %vm957 = vcmask 64512
        %v959 = vsel %vm957, %v953, 0
        %v962 = vsel %vm957, %v954, 0
        %v965 = vsel %vm957, %v955, 0
        %v968 = vsel %vm957, %v956, 0
        %vm970 = vcmask 1043456
        %v972 = vsel %vm970, %v880, 0
        %974 = vmatprep.subr.bf16.mxu0 0
        %975 = vmatpush1.bf16.msra.mxu0 %v972
        %976 = vmatprep.subr.bf16.mxu0 0
        %977 = vmatpush1.bf16.msra.mxu0 0
        %978 = vmatprep.subr.bf16.mxu0 0
        %979 = vmatpush1.bf16.msra.mxu0 0
        %980 = vmatprep.subr.bf16.mxu0 0
        %981 = vmatpush1.bf16.msra.mxu0 0
        %982 = vmatprep.subr.bf16.mxu0 0
        %983 = vmatpush1.bf16.msra.mxu0 0
        %984 = vmatprep.subr.bf16.mxu0 0
        %985 = vmatpush1.bf16.msra.mxu0 0
        %986 = vmatprep.subr.bf16.mxu0 0
        %987 = vmatpush1.bf16.msra.mxu0 0
        %988 = vmatprep.subr.bf16.mxu0 0
        %989 = vmatpush1.bf16.msra.mxu0 0
        %990 = vmatprep.subr.bf16.mxu0 0
        %991 = vmatpush1.bf16.msra.mxu0 0
        %992 = vmatprep.subr.bf16.mxu0 0
        %993 = vmatpush1.bf16.msra.mxu0 0
        %994 = vmatprep.subr.bf16.mxu0 0
        %995 = vmatpush1.bf16.msra.mxu0 0
        %996 = vmatprep.subr.bf16.mxu0 0
        %997 = vmatpush1.bf16.msra.mxu0 0
        %998 = vmatprep.subr.bf16.mxu0 0
        %999 = vmatpush1.bf16.msra.mxu0 0
        %1000 = vmatprep.subr.bf16.mxu0 0
        %1001 = vmatpush1.bf16.msra.mxu0 0
        %1002 = vmatprep.subr.bf16.mxu0 0
        %1003 = vmatpush1.bf16.msra.mxu0 0
        %1004 = vmatprep.subr.bf16.mxu0 0
        %1005 = vmatpush1.bf16.msra.mxu0 0
        %1006 = vmatprep.mubr.bf16.mxu0 0
        %1007 = vmatmul.mubr.bf16.gmra.mrb[0].mxu0 %v959
        %v1008 = vpop.f32.mrb[0].mxu0
        %v1009 = vadd.f32 %v900, %v1008
        %v1010 = vpop.f32.mrb[0].mxu0
        %v1011 = vpop.f32.mrb[0].mxu0
        %v1012 = vadd.f32 %v905, %v1011
        %v1013 = vpop.f32.mrb[0].mxu0
        %1014 = vmatprep.mubr.bf16.mxu0 0
        %1015 = vmatmul.mubr.bf16.gmra.mrb[0].mxu0 %v962
        %v1016 = vpop.f32.mrb[0].mxu0
        %v1017 = vadd.f32 %v910, %v1016
        %v1018 = vpop.f32.mrb[0].mxu0
        %v1019 = vpop.f32.mrb[0].mxu0
        %v1020 = vadd.f32 %v915, %v1019
        %v1021 = vpop.f32.mrb[0].mxu0
        %1022 = vmatprep.mubr.bf16.mxu0 0
        %1023 = vmatmul.mubr.bf16.gmra.mrb[0].mxu0 %v965
        %v1024 = vpop.f32.mrb[0].mxu0
        %v1025 = vadd.f32 %v920, %v1024
        %v1026 = vpop.f32.mrb[0].mxu0
        %v1027 = vpop.f32.mrb[0].mxu0
        %v1028 = vadd.f32 %v925, %v1027
        %v1029 = vpop.f32.mrb[0].mxu0
        %1030 = vmatprep.mubr.bf16.mxu0 0
        %1031 = vmatmul.mubr.bf16.gmra.mrb[0].mxu0 %v968
        %v1032 = vpop.f32.mrb[0].mxu0
        %v1033 = vadd.f32 %v930, %v1032
        %v1034 = vpop.f32.mrb[0].mxu0
        %v1035 = vpop.f32.mrb[0].mxu0
        %v1036 = vadd.f32 %v935, %v1035
        %v1037 = vpop.f32.mrb[0].mxu0
        %1038 = vdwg.mxu0
        %v1039 = vmax.f32 %v1009, 0.0
        %v1040 = vmax.f32 %v1012, 0.0
        %v1041 = vmax.f32 %v1017, 0.0
        %v1042 = vmax.f32 %v1020, 0.0
        %v1043 = vmax.f32 %v1025, 0.0
        %v1044 = vmax.f32 %v1028, 0.0
        %v1045 = vmax.f32 %v1033, 0.0
        %v1046 = vmax.f32 %v1036, 0.0
        %v1047 = vpack.c.bf16 %v1040, %v1039
        %v1048 = vpack.c.bf16 %v1042, %v1041
        %v1049 = vpack.c.bf16 %v1044, %v1043
        %v1050 = vpack.c.bf16 %v1046, %v1045
        %v1051 = vld [vmem:[#allocation8] sm:$0xf]
        %v1052 = vld [vmem:[#allocation8 + $0x4] sm:$0xf]
        %v1053 = vld [vmem:[#allocation8 + $0x8] sm:$0xf]
        %v1054 = vld [vmem:[#allocation8 + $0xc] sm:$0xf]
        %v1055 = vld [vmem:[#allocation8 + $0x10] sm:$0xf]
        %v1056 = vld [vmem:[#allocation8 + $0x14] sm:$0xf]
        %v1057 = vld [vmem:[#allocation8 + $0x18] sm:$0xf]
        %v1058 = vld [vmem:[#allocation8 + $0x1c] sm:$0xf]
        %v1059 = vld [vmem:[#allocation8 + $0x20] sm:$0xf]
        %v1060 = vld [vmem:[#allocation8 + $0x24] sm:$0xf]
        %v1061 = vld [vmem:[#allocation8 + $0x28] sm:$0xf]
        %v1062 = vld [vmem:[#allocation8 + $0x2c] sm:$0xf]
        %v1063 = vld [vmem:[#allocation8 + $0x30] sm:$0xf]
        %v1064 = vld [vmem:[#allocation8 + $0x34] sm:$0xf]
        %v1065 = vld [vmem:[#allocation8 + $0x38] sm:$0xf]
        %v1066 = vld [vmem:[#allocation8 + $0x3c] sm:$0xf]
        %v1067 = vld [vmem:[#allocation10] sm:$0xff]
        %v1068 = vld [vmem:[#allocation10 + $0x8] sm:$0xff]
        %v1069 = vld [vmem:[#allocation10 + $0x10] sm:$0xff]
        %v1070 = vld [vmem:[#allocation10 + $0x18] sm:$0xff]
        %v1071 = vld [vmem:[#allocation10 + $0x20] sm:$0xff]
        %v1072 = vld [vmem:[#allocation10 + $0x28] sm:$0xff]
        %v1073 = vld [vmem:[#allocation10 + $0x30] sm:$0xff]
        %v1074 = vld [vmem:[#allocation10 + $0x38] sm:$0xff]
        %v1075 = vld [vmem:[#allocation10 + $0x40] sm:$0xff]
        %v1076 = vld [vmem:[#allocation10 + $0x48] sm:$0xff]
        %v1077 = vld [vmem:[#allocation10 + $0x50] sm:$0xff]
        %v1078 = vld [vmem:[#allocation10 + $0x58] sm:$0xff]
        %v1079 = vld [vmem:[#allocation10 + $0x60] sm:$0xff]
        %v1080 = vld [vmem:[#allocation10 + $0x68] sm:$0xff]
        %v1081 = vld [vmem:[#allocation10 + $0x70] sm:$0xff]
        %v1082 = vld [vmem:[#allocation10 + $0x78] sm:$0xff]
        %1084 = vset.pattern.permute.xlu0 0
        %1085 = vperm.xlu0 %1084, %v1067
        %v1086 = vpop.permute.xlu0 %1085
        %1089 = vset.pattern.permute.xlu0 0
        %1090 = vperm.xlu0 %1089, %v1068
        %v1091 = vpop.permute.xlu0 %1090
        %1094 = vset.pattern.permute.xlu0 0
        %1095 = vperm.xlu0 %1094, %v1069
        %v1096 = vpop.permute.xlu0 %1095
        %1099 = vset.pattern.permute.xlu0 0
        %1100 = vperm.xlu0 %1099, %v1070
        %v1101 = vpop.permute.xlu0 %1100
        %1104 = vset.pattern.permute.xlu0 0
        %1105 = vperm.xlu0 %1104, %v1071
        %v1106 = vpop.permute.xlu0 %1105
        %1109 = vset.pattern.permute.xlu0 0
        %1110 = vperm.xlu0 %1109, %v1072
        %v1111 = vpop.permute.xlu0 %1110
        %1114 = vset.pattern.permute.xlu0 0
        %1115 = vperm.xlu0 %1114, %v1073
        %v1116 = vpop.permute.xlu0 %1115
        %1119 = vset.pattern.permute.xlu0 0
        %1120 = vperm.xlu0 %1119, %v1074
        %v1121 = vpop.permute.xlu0 %1120
        %1124 = vset.pattern.permute.xlu0 0
        %1125 = vperm.xlu0 %1124, %v1075
        %v1126 = vpop.permute.xlu0 %1125
        %1129 = vset.pattern.permute.xlu0 0
        %1130 = vperm.xlu0 %1129, %v1076
        %v1131 = vpop.permute.xlu0 %1130
        %1134 = vset.pattern.permute.xlu0 0
        %1135 = vperm.xlu0 %1134, %v1077
        %v1136 = vpop.permute.xlu0 %1135
        %1139 = vset.pattern.permute.xlu0 0
        %1140 = vperm.xlu0 %1139, %v1078
        %v1141 = vpop.permute.xlu0 %1140
        %1144 = vset.pattern.permute.xlu0 0
        %1145 = vperm.xlu0 %1144, %v1079
        %v1146 = vpop.permute.xlu0 %1145
        %1149 = vset.pattern.permute.xlu0 0
        %1150 = vperm.xlu0 %1149, %v1080
        %v1151 = vpop.permute.xlu0 %1150
        %1154 = vset.pattern.permute.xlu0 0
        %1155 = vperm.xlu0 %1154, %v1081
        %v1156 = vpop.permute.xlu0 %1155
        %1159 = vset.pattern.permute.xlu0 0
        %1160 = vperm.xlu0 %1159, %v1082
        %v1161 = vpop.permute.xlu0 %1160
        %v1179 = vunpack.c.l.b16 %v1051
        %v1180 = vunpack.c.l.b16 %v1052
        %v1181 = vunpack.c.l.b16 %v1053
        %v1182 = vunpack.c.l.b16 %v1054
        %v1183 = vunpack.c.l.b16 %v1055
        %v1184 = vunpack.c.l.b16 %v1056
        %v1185 = vunpack.c.l.b16 %v1057
        %v1186 = vunpack.c.l.b16 %v1058
        %v1187 = vunpack.c.l.b16 %v1059
        %v1188 = vunpack.c.l.b16 %v1060
        %v1189 = vunpack.c.l.b16 %v1061
        %v1190 = vunpack.c.l.b16 %v1062
        %v1191 = vunpack.c.l.b16 %v1063
        %v1192 = vunpack.c.l.b16 %v1064
        %v1193 = vunpack.c.l.b16 %v1065
        %v1194 = vunpack.c.l.b16 %v1066
        %v1195 = vpack.c.b16 %v1180, %v1179
        %v1196 = vpack.c.b16 %v1182, %v1181
        %v1197 = vpack.c.b16 %v1184, %v1183
        %v1198 = vpack.c.b16 %v1186, %v1185
        %v1199 = vpack.c.b16 %v1188, %v1187
        %v1200 = vpack.c.b16 %v1190, %v1189
        %v1201 = vpack.c.b16 %v1192, %v1191
        %v1202 = vpack.c.b16 %v1194, %v1193
        %vm1203 = vcmask 523264
        %v1205 = vsel %vm1203, %v1195, 0
        %v1208 = vsel %vm1203, %v1196, 0
        %v1211 = vsel %vm1203, %v1197, 0
        %v1214 = vsel %vm1203, %v1198, 0
        %v1217 = vsel %vm1203, %v1199, 0
        %v1220 = vsel %vm1203, %v1200, 0
        %v1223 = vsel %vm1203, %v1201, 0
        %v1226 = vsel %vm1203, %v1202, 0
        %1228 = vmatprep.subr.bf16.mxu0 0
        %1229 = vmatpush1.bf16.msra.mxu0 %v1047
        %1230 = vmatprep.subr.bf16.mxu0 0
        %1231 = vmatpush1.bf16.msra.mxu0 %v1048
        %1232 = vmatprep.subr.bf16.mxu0 0
        %1233 = vmatpush1.bf16.msra.mxu0 %v1049
        %1234 = vmatprep.subr.bf16.mxu0 0
        %1235 = vmatpush1.bf16.msra.mxu0 %v1050
        %1236 = vmatprep.subr.bf16.mxu0 0
        %1237 = vmatpush1.bf16.msra.mxu0 0
        %1238 = vmatprep.subr.bf16.mxu0 0
        %1239 = vmatpush1.bf16.msra.mxu0 0
        %1240 = vmatprep.subr.bf16.mxu0 0
        %1241 = vmatpush1.bf16.msra.mxu0 0
        %1242 = vmatprep.subr.bf16.mxu0 0
        %1243 = vmatpush1.bf16.msra.mxu0 0
        %1244 = vmatprep.subr.bf16.mxu0 0
        %1245 = vmatpush1.bf16.msra.mxu0 0
        %1246 = vmatprep.subr.bf16.mxu0 0
        %1247 = vmatpush1.bf16.msra.mxu0 0
        %1248 = vmatprep.subr.bf16.mxu0 0
        %1249 = vmatpush1.bf16.msra.mxu0 0
        %1250 = vmatprep.subr.bf16.mxu0 0
        %1251 = vmatpush1.bf16.msra.mxu0 0
        %1252 = vmatprep.subr.bf16.mxu0 0
        %1253 = vmatpush1.bf16.msra.mxu0 0
        %1254 = vmatprep.subr.bf16.mxu0 0
        %1255 = vmatpush1.bf16.msra.mxu0 0
        %1256 = vmatprep.subr.bf16.mxu0 0
        %1257 = vmatpush1.bf16.msra.mxu0 0
        %1258 = vmatprep.subr.bf16.mxu0 0
        %1259 = vmatpush1.bf16.msra.mxu0 0
        %1260 = vmatprep.mubr.bf16.mxu0 0
        %1261 = vmatmul.mubr.bf16.gmra.mrb[0].mxu0 %v1205
        %v1262 = vpop.f32.mrb[0].mxu0
        %v1263 = vadd.f32 %v1086, %v1262
        %v1264 = vpop.f32.mrb[0].mxu0
        %v1265 = vpop.f32.mrb[0].mxu0
        %v1266 = vadd.f32 %v1091, %v1265
        %v1267 = vpop.f32.mrb[0].mxu0
        %1268 = vmatprep.mubr.bf16.mxu0 0
        %1269 = vmatmul.mubr.bf16.gmra.mrb[0].mxu0 %v1208
        %v1270 = vpop.f32.mrb[0].mxu0
        %v1271 = vadd.f32 %v1096, %v1270
        %v1272 = vpop.f32.mrb[0].mxu0
        %v1273 = vpop.f32.mrb[0].mxu0
        %v1274 = vadd.f32 %v1101, %v1273
        %v1275 = vpop.f32.mrb[0].mxu0
        %1276 = vmatprep.mubr.bf16.mxu0 0
        %1277 = vmatmul.mubr.bf16.gmra.mrb[0].mxu0 %v1211
        %v1278 = vpop.f32.mrb[0].mxu0
        %v1279 = vadd.f32 %v1106, %v1278
        %v1280 = vpop.f32.mrb[0].mxu0
        %v1281 = vpop.f32.mrb[0].mxu0
        %v1282 = vadd.f32 %v1111, %v1281
        %v1283 = vpop.f32.mrb[0].mxu0
        %1284 = vmatprep.mubr.bf16.mxu0 0
        %1285 = vmatmul.mubr.bf16.gmra.mrb[0].mxu0 %v1214
        %v1286 = vpop.f32.mrb[0].mxu0
        %v1287 = vadd.f32 %v1116, %v1286
        %v1288 = vpop.f32.mrb[0].mxu0
        %v1289 = vpop.f32.mrb[0].mxu0
        %v1290 = vadd.f32 %v1121, %v1289
        %v1291 = vpop.f32.mrb[0].mxu0
        %1292 = vmatprep.mubr.bf16.mxu0 0
        %1293 = vmatmul.mubr.bf16.gmra.mrb[0].mxu0 %v1217
        %v1294 = vpop.f32.mrb[0].mxu0
        %v1295 = vadd.f32 %v1126, %v1294
        %v1296 = vpop.f32.mrb[0].mxu0
        %v1297 = vpop.f32.mrb[0].mxu0
        %v1298 = vadd.f32 %v1131, %v1297
        %v1299 = vpop.f32.mrb[0].mxu0
        %1300 = vmatprep.mubr.bf16.mxu0 0
        %1301 = vmatmul.mubr.bf16.gmra.mrb[0].mxu0 %v1220
        %v1302 = vpop.f32.mrb[0].mxu0
        %v1303 = vadd.f32 %v1136, %v1302
        %v1304 = vpop.f32.mrb[0].mxu0
        %v1305 = vpop.f32.mrb[0].mxu0
        %v1306 = vadd.f32 %v1141, %v1305
        %v1307 = vpop.f32.mrb[0].mxu0
        %1308 = vmatprep.mubr.bf16.mxu0 0
        %1309 = vmatmul.mubr.bf16.gmra.mrb[0].mxu0 %v1223
        %v1310 = vpop.f32.mrb[0].mxu0
        %v1311 = vadd.f32 %v1146, %v1310
        %v1312 = vpop.f32.mrb[0].mxu0
        %v1313 = vpop.f32.mrb[0].mxu0
        %v1314 = vadd.f32 %v1151, %v1313
        %v1315 = vpop.f32.mrb[0].mxu0
        %1316 = vmatprep.mubr.bf16.mxu0 0
        %1317 = vmatmul.mubr.bf16.gmra.mrb[0].mxu0 %v1226
        %v1318 = vpop.f32.mrb[0].mxu0
        %v1319 = vadd.f32 %v1156, %v1318
        %v1320 = vpop.f32.mrb[0].mxu0
        %v1321 = vpop.f32.mrb[0].mxu0
        %v1322 = vadd.f32 %v1161, %v1321
        %v1323 = vpop.f32.mrb[0].mxu0
        %1324 = vdwg.mxu0
        %v1325 = vmax.f32 %v1263, 0.0
        %v1326 = vmax.f32 %v1266, 0.0
        %v1327 = vmax.f32 %v1271, 0.0
        %v1328 = vmax.f32 %v1274, 0.0
        %v1329 = vmax.f32 %v1279, 0.0
        %v1330 = vmax.f32 %v1282, 0.0
        %v1331 = vmax.f32 %v1287, 0.0
        %v1332 = vmax.f32 %v1290, 0.0
        %v1333 = vmax.f32 %v1295, 0.0
        %v1334 = vmax.f32 %v1298, 0.0
        %v1335 = vmax.f32 %v1303, 0.0
        %v1336 = vmax.f32 %v1306, 0.0
        %v1337 = vmax.f32 %v1311, 0.0
        %v1338 = vmax.f32 %v1314, 0.0
        %v1339 = vmax.f32 %v1319, 0.0
        %v1340 = vmax.f32 %v1322, 0.0
        %v1341 = vpack.c.bf16 %v1326, %v1325
        %v1342 = vpack.c.bf16 %v1328, %v1327
        %v1343 = vpack.c.bf16 %v1330, %v1329
        %v1344 = vpack.c.bf16 %v1332, %v1331
        %v1345 = vpack.c.bf16 %v1334, %v1333
        %v1346 = vpack.c.bf16 %v1336, %v1335
        %v1347 = vpack.c.bf16 %v1338, %v1337
        %v1348 = vpack.c.bf16 %v1340, %v1339
        %v1349 = vld [vmem:[#allocation11] sm:$0xf]
        %v1350 = vld [vmem:[#allocation11 + $0x4] sm:$0xf]
        %v1351 = vld [vmem:[#allocation11 + $0x8] sm:$0xf]
        %v1352 = vld [vmem:[#allocation11 + $0xc] sm:$0xf]
        %v1353 = vld [vmem:[#allocation11 + $0x10] sm:$0xf]
        %v1354 = vld [vmem:[#allocation11 + $0x14] sm:$0xf]
        %v1355 = vld [vmem:[#allocation11 + $0x18] sm:$0xf]
        %v1356 = vld [vmem:[#allocation11 + $0x1c] sm:$0xf]
        %v1357 = vld [vmem:[#allocation11 + $0x20] sm:$0xf]
        %v1358 = vld [vmem:[#allocation11 + $0x24] sm:$0xf]
        %v1359 = vld [vmem:[#allocation11 + $0x28] sm:$0xf]
        %v1360 = vld [vmem:[#allocation11 + $0x2c] sm:$0xf]
        %v1361 = vld [vmem:[#allocation11 + $0x30] sm:$0xf]
        %v1362 = vld [vmem:[#allocation11 + $0x34] sm:$0xf]
        %v1363 = vld [vmem:[#allocation11 + $0x38] sm:$0xf]
        %v1364 = vld [vmem:[#allocation11 + $0x3c] sm:$0xf]
        %v1365 = vld [vmem:[#allocation11 + $0x40] sm:$0xf]
        %v1366 = vld [vmem:[#allocation11 + $0x44] sm:$0xf]
        %v1367 = vld [vmem:[#allocation11 + $0x48] sm:$0xf]
        %v1368 = vld [vmem:[#allocation11 + $0x4c] sm:$0xf]
        %v1369 = vld [vmem:[#allocation11 + $0x50] sm:$0xf]
        %v1370 = vld [vmem:[#allocation11 + $0x54] sm:$0xf]
        %v1371 = vld [vmem:[#allocation11 + $0x58] sm:$0xf]
        %v1372 = vld [vmem:[#allocation11 + $0x5c] sm:$0xf]
        %v1373 = vld [vmem:[#allocation11 + $0x60] sm:$0xf]
        %v1374 = vld [vmem:[#allocation11 + $0x64] sm:$0xf]
        %v1375 = vld [vmem:[#allocation11 + $0x68] sm:$0xf]
        %v1376 = vld [vmem:[#allocation11 + $0x6c] sm:$0xf]
        %v1377 = vld [vmem:[#allocation11 + $0x70] sm:$0xf]
        %v1378 = vld [vmem:[#allocation11 + $0x74] sm:$0xf]
        %v1379 = vld [vmem:[#allocation11 + $0x78] sm:$0xf]
        %v1380 = vld [vmem:[#allocation11 + $0x7c] sm:$0xf]
        %v1381 = vld [vmem:[#allocation11 + $0x80] sm:$0xf]
        %v1382 = vld [vmem:[#allocation11 + $0x84] sm:$0xf]
        %v1383 = vld [vmem:[#allocation11 + $0x88] sm:$0xf]
        %v1384 = vld [vmem:[#allocation11 + $0x8c] sm:$0xf]
        %v1385 = vld [vmem:[#allocation11 + $0x90] sm:$0xf]
        %v1386 = vld [vmem:[#allocation11 + $0x94] sm:$0xf]
        %v1387 = vld [vmem:[#allocation11 + $0x98] sm:$0xf]
        %v1388 = vld [vmem:[#allocation11 + $0x9c] sm:$0xf]
        %v1389 = vld [vmem:[#allocation11 + $0xa0] sm:$0xf]
        %v1390 = vld [vmem:[#allocation11 + $0xa4] sm:$0xf]
        %v1391 = vld [vmem:[#allocation11 + $0xa8] sm:$0xf]
        %v1392 = vld [vmem:[#allocation11 + $0xac] sm:$0xf]
        %v1393 = vld [vmem:[#allocation11 + $0xb0] sm:$0xf]
        %v1394 = vld [vmem:[#allocation11 + $0xb4] sm:$0xf]
        %v1395 = vld [vmem:[#allocation11 + $0xb8] sm:$0xf]
        %v1396 = vld [vmem:[#allocation11 + $0xbc] sm:$0xf]
        %v1397 = vld [vmem:[#allocation11 + $0xc0] sm:$0xf]
        %v1398 = vld [vmem:[#allocation11 + $0xc4] sm:$0xf]
        %v1399 = vld [vmem:[#allocation11 + $0xc8] sm:$0xf]
        %v1400 = vld [vmem:[#allocation11 + $0xcc] sm:$0xf]
        %v1401 = vld [vmem:[#allocation11 + $0xd0] sm:$0xf]
        %v1402 = vld [vmem:[#allocation11 + $0xd4] sm:$0xf]
        %v1403 = vld [vmem:[#allocation11 + $0xd8] sm:$0xf]
        %v1404 = vld [vmem:[#allocation11 + $0xdc] sm:$0xf]
        %v1405 = vld [vmem:[#allocation11 + $0xe0] sm:$0xf]
        %v1406 = vld [vmem:[#allocation11 + $0xe4] sm:$0xf]
        %v1407 = vld [vmem:[#allocation11 + $0xe8] sm:$0xf]
        %v1408 = vld [vmem:[#allocation11 + $0xec] sm:$0xf]
        %v1409 = vld [vmem:[#allocation11 + $0xf0] sm:$0xf]
        %v1410 = vld [vmem:[#allocation11 + $0xf4] sm:$0xf]
        %v1411 = vld [vmem:[#allocation11 + $0xf8] sm:$0xf]
        %v1412 = vld [vmem:[#allocation11 + $0xfc] sm:$0xf]
        %v1413 = vld [vmem:[#allocation11 + $0x100] sm:$0xf]
        %v1414 = vld [vmem:[#allocation11 + $0x104] sm:$0xf]
        %v1415 = vld [vmem:[#allocation11 + $0x108] sm:$0xf]
        %v1416 = vld [vmem:[#allocation11 + $0x10c] sm:$0xf]
        %v1417 = vld [vmem:[#allocation11 + $0x110] sm:$0xf]
        %v1418 = vld [vmem:[#allocation11 + $0x114] sm:$0xf]
        %v1419 = vld [vmem:[#allocation11 + $0x118] sm:$0xf]
        %v1420 = vld [vmem:[#allocation11 + $0x11c] sm:$0xf]
        %v1421 = vld [vmem:[#allocation11 + $0x120] sm:$0xf]
        %v1422 = vld [vmem:[#allocation11 + $0x124] sm:$0xf]
        %v1423 = vld [vmem:[#allocation11 + $0x128] sm:$0xf]
        %v1424 = vld [vmem:[#allocation11 + $0x12c] sm:$0xf]
        %v1425 = vld [vmem:[#allocation11 + $0x130] sm:$0xf]
        %v1426 = vld [vmem:[#allocation11 + $0x134] sm:$0xf]
        %v1427 = vld [vmem:[#allocation11 + $0x138] sm:$0xf]
        %v1428 = vld [vmem:[#allocation11 + $0x13c] sm:$0xf]
        %v1429 = vld [vmem:[#allocation11 + $0x140] sm:$0xf]
        %v1430 = vld [vmem:[#allocation11 + $0x144] sm:$0xf]
        %v1431 = vld [vmem:[#allocation11 + $0x148] sm:$0xf]
        %v1432 = vld [vmem:[#allocation11 + $0x14c] sm:$0xf]
        %v1433 = vld [vmem:[#allocation11 + $0x150] sm:$0xf]
        %v1434 = vld [vmem:[#allocation11 + $0x154] sm:$0xf]
        %v1435 = vld [vmem:[#allocation11 + $0x158] sm:$0xf]
        %v1436 = vld [vmem:[#allocation11 + $0x15c] sm:$0xf]
        %v1437 = vld [vmem:[#allocation11 + $0x160] sm:$0xf]
        %v1438 = vld [vmem:[#allocation11 + $0x164] sm:$0xf]
        %v1439 = vld [vmem:[#allocation11 + $0x168] sm:$0xf]
        %v1440 = vld [vmem:[#allocation11 + $0x16c] sm:$0xf]
        %v1441 = vld [vmem:[#allocation11 + $0x170] sm:$0xf]
        %v1442 = vld [vmem:[#allocation11 + $0x174] sm:$0xf]
        %v1443 = vld [vmem:[#allocation11 + $0x178] sm:$0xf]
        %v1444 = vld [vmem:[#allocation11 + $0x17c] sm:$0xf]
        %v1445 = vld [vmem:[#allocation11 + $0x180] sm:$0xf]
        %v1446 = vld [vmem:[#allocation11 + $0x184] sm:$0xf]
        %v1447 = vld [vmem:[#allocation11 + $0x188] sm:$0xf]
        %v1448 = vld [vmem:[#allocation11 + $0x18c] sm:$0xf]
        %v1449 = vld [vmem:[#allocation11 + $0x190] sm:$0xf]
        %v1450 = vld [vmem:[#allocation11 + $0x194] sm:$0xf]
        %v1451 = vld [vmem:[#allocation11 + $0x198] sm:$0xf]
        %v1452 = vld [vmem:[#allocation11 + $0x19c] sm:$0xf]
        %v1453 = vld [vmem:[#allocation11 + $0x1a0] sm:$0xf]
        %v1454 = vld [vmem:[#allocation11 + $0x1a4] sm:$0xf]
        %v1455 = vld [vmem:[#allocation11 + $0x1a8] sm:$0xf]
        %v1456 = vld [vmem:[#allocation11 + $0x1ac] sm:$0xf]
        %v1457 = vld [vmem:[#allocation11 + $0x1b0] sm:$0xf]
        %v1458 = vld [vmem:[#allocation11 + $0x1b4] sm:$0xf]
        %v1459 = vld [vmem:[#allocation11 + $0x1b8] sm:$0xf]
        %v1460 = vld [vmem:[#allocation11 + $0x1bc] sm:$0xf]
        %v1461 = vld [vmem:[#allocation11 + $0x1c0] sm:$0xf]
        %v1462 = vld [vmem:[#allocation11 + $0x1c4] sm:$0xf]
        %v1463 = vld [vmem:[#allocation11 + $0x1c8] sm:$0xf]
        %v1464 = vld [vmem:[#allocation11 + $0x1cc] sm:$0xf]
        %v1465 = vld [vmem:[#allocation11 + $0x1d0] sm:$0xf]
        %v1466 = vld [vmem:[#allocation11 + $0x1d4] sm:$0xf]
        %v1467 = vld [vmem:[#allocation11 + $0x1d8] sm:$0xf]
        %v1468 = vld [vmem:[#allocation11 + $0x1dc] sm:$0xf]
        %v1469 = vld [vmem:[#allocation11 + $0x1e0] sm:$0xf]
        %v1470 = vld [vmem:[#allocation11 + $0x1e4] sm:$0xf]
        %v1471 = vld [vmem:[#allocation11 + $0x1e8] sm:$0xf]
        %v1472 = vld [vmem:[#allocation11 + $0x1ec] sm:$0xf]
        %v1473 = vld [vmem:[#allocation11 + $0x1f0] sm:$0xf]
        %v1474 = vld [vmem:[#allocation11 + $0x1f4] sm:$0xf]
        %v1475 = vld [vmem:[#allocation11 + $0x1f8] sm:$0xf]
        %v1476 = vld [vmem:[#allocation11 + $0x1fc] sm:$0xf]
        %v1477 = vld [vmem:[#allocation13] sm:$0xff]
        %v1478 = vld [vmem:[#allocation13 + $0x8] sm:$0xff]
        %v1479 = vld [vmem:[#allocation13 + $0x10] sm:$0xff]
        %v1480 = vld [vmem:[#allocation13 + $0x18] sm:$0xff]
        %v1481 = vld [vmem:[#allocation13 + $0x20] sm:$0xff]
        %v1482 = vld [vmem:[#allocation13 + $0x28] sm:$0xff]
        %v1483 = vld [vmem:[#allocation13 + $0x30] sm:$0xff]
        %v1484 = vld [vmem:[#allocation13 + $0x38] sm:$0xff]
        %v1485 = vld [vmem:[#allocation13 + $0x40] sm:$0xff]
        %v1486 = vld [vmem:[#allocation13 + $0x48] sm:$0xff]
        %v1487 = vld [vmem:[#allocation13 + $0x50] sm:$0xff]
        %v1488 = vld [vmem:[#allocation13 + $0x58] sm:$0xff]
        %v1489 = vld [vmem:[#allocation13 + $0x60] sm:$0xff]
        %v1490 = vld [vmem:[#allocation13 + $0x68] sm:$0xff]
        %v1491 = vld [vmem:[#allocation13 + $0x70] sm:$0xff]
        %v1492 = vld [vmem:[#allocation13 + $0x78] sm:$0xff]
        %v1493 = vld [vmem:[#allocation13 + $0x80] sm:$0xff]
        %v1494 = vld [vmem:[#allocation13 + $0x88] sm:$0xff]
        %v1495 = vld [vmem:[#allocation13 + $0x90] sm:$0xff]
        %v1496 = vld [vmem:[#allocation13 + $0x98] sm:$0xff]
        %v1497 = vld [vmem:[#allocation13 + $0xa0] sm:$0xff]
        %v1498 = vld [vmem:[#allocation13 + $0xa8] sm:$0xff]
        %v1499 = vld [vmem:[#allocation13 + $0xb0] sm:$0xff]
        %v1500 = vld [vmem:[#allocation13 + $0xb8] sm:$0xff]
        %v1501 = vld [vmem:[#allocation13 + $0xc0] sm:$0xff]
        %v1502 = vld [vmem:[#allocation13 + $0xc8] sm:$0xff]
        %v1503 = vld [vmem:[#allocation13 + $0xd0] sm:$0xff]
        %v1504 = vld [vmem:[#allocation13 + $0xd8] sm:$0xff]
        %v1505 = vld [vmem:[#allocation13 + $0xe0] sm:$0xff]
        %v1506 = vld [vmem:[#allocation13 + $0xe8] sm:$0xff]
        %v1507 = vld [vmem:[#allocation13 + $0xf0] sm:$0xff]
        %v1508 = vld [vmem:[#allocation13 + $0xf8] sm:$0xff]
        %v1509 = vld [vmem:[#allocation13 + $0x100] sm:$0xff]
        %v1510 = vld [vmem:[#allocation13 + $0x108] sm:$0xff]
        %v1511 = vld [vmem:[#allocation13 + $0x110] sm:$0xff]
        %v1512 = vld [vmem:[#allocation13 + $0x118] sm:$0xff]
        %v1513 = vld [vmem:[#allocation13 + $0x120] sm:$0xff]
        %v1514 = vld [vmem:[#allocation13 + $0x128] sm:$0xff]
        %v1515 = vld [vmem:[#allocation13 + $0x130] sm:$0xff]
        %v1516 = vld [vmem:[#allocation13 + $0x138] sm:$0xff]
        %v1517 = vld [vmem:[#allocation13 + $0x140] sm:$0xff]
        %v1518 = vld [vmem:[#allocation13 + $0x148] sm:$0xff]
        %v1519 = vld [vmem:[#allocation13 + $0x150] sm:$0xff]
        %v1520 = vld [vmem:[#allocation13 + $0x158] sm:$0xff]
        %v1521 = vld [vmem:[#allocation13 + $0x160] sm:$0xff]
        %v1522 = vld [vmem:[#allocation13 + $0x168] sm:$0xff]
        %v1523 = vld [vmem:[#allocation13 + $0x170] sm:$0xff]
        %v1524 = vld [vmem:[#allocation13 + $0x178] sm:$0xff]
        %v1525 = vld [vmem:[#allocation13 + $0x180] sm:$0xff]
        %v1526 = vld [vmem:[#allocation13 + $0x188] sm:$0xff]
        %v1527 = vld [vmem:[#allocation13 + $0x190] sm:$0xff]
        %v1528 = vld [vmem:[#allocation13 + $0x198] sm:$0xff]
        %v1529 = vld [vmem:[#allocation13 + $0x1a0] sm:$0xff]
        %v1530 = vld [vmem:[#allocation13 + $0x1a8] sm:$0xff]
        %v1531 = vld [vmem:[#allocation13 + $0x1b0] sm:$0xff]
        %v1532 = vld [vmem:[#allocation13 + $0x1b8] sm:$0xff]
        %v1533 = vld [vmem:[#allocation13 + $0x1c0] sm:$0xff]
        %v1534 = vld [vmem:[#allocation13 + $0x1c8] sm:$0xff]
        %v1535 = vld [vmem:[#allocation13 + $0x1d0] sm:$0xff]
        %v1536 = vld [vmem:[#allocation13 + $0x1d8] sm:$0xff]
        %v1537 = vld [vmem:[#allocation13 + $0x1e0] sm:$0xff]
        %v1538 = vld [vmem:[#allocation13 + $0x1e8] sm:$0xff]
        %v1539 = vld [vmem:[#allocation13 + $0x1f0] sm:$0xff]
        %v1540 = vld [vmem:[#allocation13 + $0x1f8] sm:$0xff]
        %v1541 = vld [vmem:[#allocation13 + $0x200] sm:$0xff]
        %v1542 = vld [vmem:[#allocation13 + $0x208] sm:$0xff]
        %v1543 = vld [vmem:[#allocation13 + $0x210] sm:$0xff]
        %v1544 = vld [vmem:[#allocation13 + $0x218] sm:$0xff]
        %v1545 = vld [vmem:[#allocation13 + $0x220] sm:$0xff]
        %v1546 = vld [vmem:[#allocation13 + $0x228] sm:$0xff]
        %v1547 = vld [vmem:[#allocation13 + $0x230] sm:$0xff]
        %v1548 = vld [vmem:[#allocation13 + $0x238] sm:$0xff]
        %v1549 = vld [vmem:[#allocation13 + $0x240] sm:$0xff]
        %v1550 = vld [vmem:[#allocation13 + $0x248] sm:$0xff]
        %v1551 = vld [vmem:[#allocation13 + $0x250] sm:$0xff]
        %v1552 = vld [vmem:[#allocation13 + $0x258] sm:$0xff]
        %v1553 = vld [vmem:[#allocation13 + $0x260] sm:$0xff]
        %v1554 = vld [vmem:[#allocation13 + $0x268] sm:$0xff]
        %v1555 = vld [vmem:[#allocation13 + $0x270] sm:$0xff]
        %v1556 = vld [vmem:[#allocation13 + $0x278] sm:$0xff]
        %v1557 = vld [vmem:[#allocation13 + $0x280] sm:$0xff]
        %v1558 = vld [vmem:[#allocation13 + $0x288] sm:$0xff]
        %v1559 = vld [vmem:[#allocation13 + $0x290] sm:$0xff]
        %v1560 = vld [vmem:[#allocation13 + $0x298] sm:$0xff]
        %v1561 = vld [vmem:[#allocation13 + $0x2a0] sm:$0xff]
        %v1562 = vld [vmem:[#allocation13 + $0x2a8] sm:$0xff]
        %v1563 = vld [vmem:[#allocation13 + $0x2b0] sm:$0xff]
        %v1564 = vld [vmem:[#allocation13 + $0x2b8] sm:$0xff]
        %v1565 = vld [vmem:[#allocation13 + $0x2c0] sm:$0xff]
        %v1566 = vld [vmem:[#allocation13 + $0x2c8] sm:$0xff]
        %v1567 = vld [vmem:[#allocation13 + $0x2d0] sm:$0xff]
        %v1568 = vld [vmem:[#allocation13 + $0x2d8] sm:$0xff]
        %v1569 = vld [vmem:[#allocation13 + $0x2e0] sm:$0xff]
        %v1570 = vld [vmem:[#allocation13 + $0x2e8] sm:$0xff]
        %v1571 = vld [vmem:[#allocation13 + $0x2f0] sm:$0xff]
        %v1572 = vld [vmem:[#allocation13 + $0x2f8] sm:$0xff]
        %v1573 = vld [vmem:[#allocation13 + $0x300] sm:$0xff]
        %v1574 = vld [vmem:[#allocation13 + $0x308] sm:$0xff]
        %v1575 = vld [vmem:[#allocation13 + $0x310] sm:$0xff]
        %v1576 = vld [vmem:[#allocation13 + $0x318] sm:$0xff]
        %v1577 = vld [vmem:[#allocation13 + $0x320] sm:$0xff]
        %v1578 = vld [vmem:[#allocation13 + $0x328] sm:$0xff]
        %v1579 = vld [vmem:[#allocation13 + $0x330] sm:$0xff]
        %v1580 = vld [vmem:[#allocation13 + $0x338] sm:$0xff]
        %v1581 = vld [vmem:[#allocation13 + $0x340] sm:$0xff]
        %v1582 = vld [vmem:[#allocation13 + $0x348] sm:$0xff]
        %v1583 = vld [vmem:[#allocation13 + $0x350] sm:$0xff]
        %v1584 = vld [vmem:[#allocation13 + $0x358] sm:$0xff]
        %v1585 = vld [vmem:[#allocation13 + $0x360] sm:$0xff]
        %v1586 = vld [vmem:[#allocation13 + $0x368] sm:$0xff]
        %v1587 = vld [vmem:[#allocation13 + $0x370] sm:$0xff]
        %v1588 = vld [vmem:[#allocation13 + $0x378] sm:$0xff]
        %v1589 = vld [vmem:[#allocation13 + $0x380] sm:$0xff]
        %v1590 = vld [vmem:[#allocation13 + $0x388] sm:$0xff]
        %v1591 = vld [vmem:[#allocation13 + $0x390] sm:$0xff]
        %v1592 = vld [vmem:[#allocation13 + $0x398] sm:$0xff]
        %v1593 = vld [vmem:[#allocation13 + $0x3a0] sm:$0xff]
        %v1594 = vld [vmem:[#allocation13 + $0x3a8] sm:$0xff]
        %v1595 = vld [vmem:[#allocation13 + $0x3b0] sm:$0xff]
        %v1596 = vld [vmem:[#allocation13 + $0x3b8] sm:$0xff]
        %v1597 = vld [vmem:[#allocation13 + $0x3c0] sm:$0xff]
        %v1598 = vld [vmem:[#allocation13 + $0x3c8] sm:$0xff]
        %v1599 = vld [vmem:[#allocation13 + $0x3d0] sm:$0xff]
        %v1600 = vld [vmem:[#allocation13 + $0x3d8] sm:$0xff]
        %v1601 = vld [vmem:[#allocation13 + $0x3e0] sm:$0xff]
        %v1602 = vld [vmem:[#allocation13 + $0x3e8] sm:$0xff]
        %v1603 = vld [vmem:[#allocation13 + $0x3f0] sm:$0xff]
        %v1604 = vld [vmem:[#allocation13 + $0x3f8] sm:$0xff]
        %1606 = vset.pattern.permute.xlu0 0
        %1607 = vperm.xlu0 %1606, %v1477
        %v1608 = vpop.permute.xlu0 %1607
        %1611 = vset.pattern.permute.xlu0 0
        %1612 = vperm.xlu0 %1611, %v1478
        %v1613 = vpop.permute.xlu0 %1612
        %1616 = vset.pattern.permute.xlu0 0
        %1617 = vperm.xlu0 %1616, %v1479
        %v1618 = vpop.permute.xlu0 %1617
        %1621 = vset.pattern.permute.xlu0 0
        %1622 = vperm.xlu0 %1621, %v1480
        %v1623 = vpop.permute.xlu0 %1622
        %1626 = vset.pattern.permute.xlu0 0
        %1627 = vperm.xlu0 %1626, %v1481
        %v1628 = vpop.permute.xlu0 %1627
        %1631 = vset.pattern.permute.xlu0 0
        %1632 = vperm.xlu0 %1631, %v1482
        %v1633 = vpop.permute.xlu0 %1632
        %1636 = vset.pattern.permute.xlu0 0
        %1637 = vperm.xlu0 %1636, %v1483
        %v1638 = vpop.permute.xlu0 %1637
        %1641 = vset.pattern.permute.xlu0 0
        %1642 = vperm.xlu0 %1641, %v1484
        %v1643 = vpop.permute.xlu0 %1642
        %1646 = vset.pattern.permute.xlu0 0
        %1647 = vperm.xlu0 %1646, %v1485
        %v1648 = vpop.permute.xlu0 %1647
        %1651 = vset.pattern.permute.xlu0 0
        %1652 = vperm.xlu0 %1651, %v1486
        %v1653 = vpop.permute.xlu0 %1652
        %1656 = vset.pattern.permute.xlu0 0
        %1657 = vperm.xlu0 %1656, %v1487
        %v1658 = vpop.permute.xlu0 %1657
        %1661 = vset.pattern.permute.xlu0 0
        %1662 = vperm.xlu0 %1661, %v1488
        %v1663 = vpop.permute.xlu0 %1662
        %1666 = vset.pattern.permute.xlu0 0
        %1667 = vperm.xlu0 %1666, %v1489
        %v1668 = vpop.permute.xlu0 %1667
        %1671 = vset.pattern.permute.xlu0 0
        %1672 = vperm.xlu0 %1671, %v1490
        %v1673 = vpop.permute.xlu0 %1672
        %1676 = vset.pattern.permute.xlu0 0
        %1677 = vperm.xlu0 %1676, %v1491
        %v1678 = vpop.permute.xlu0 %1677
        %1681 = vset.pattern.permute.xlu0 0
        %1682 = vperm.xlu0 %1681, %v1492
        %v1683 = vpop.permute.xlu0 %1682
        %1686 = vset.pattern.permute.xlu0 0
        %1687 = vperm.xlu0 %1686, %v1493
        %v1688 = vpop.permute.xlu0 %1687
        %1691 = vset.pattern.permute.xlu0 0
        %1692 = vperm.xlu0 %1691, %v1494
        %v1693 = vpop.permute.xlu0 %1692
        %1696 = vset.pattern.permute.xlu0 0
        %1697 = vperm.xlu0 %1696, %v1495
        %v1698 = vpop.permute.xlu0 %1697
        %1701 = vset.pattern.permute.xlu0 0
        %1702 = vperm.xlu0 %1701, %v1496
        %v1703 = vpop.permute.xlu0 %1702
        %1706 = vset.pattern.permute.xlu0 0
        %1707 = vperm.xlu0 %1706, %v1497
        %v1708 = vpop.permute.xlu0 %1707
        %1711 = vset.pattern.permute.xlu0 0
        %1712 = vperm.xlu0 %1711, %v1498
        %v1713 = vpop.permute.xlu0 %1712
        %1716 = vset.pattern.permute.xlu0 0
        %1717 = vperm.xlu0 %1716, %v1499
        %v1718 = vpop.permute.xlu0 %1717
        %1721 = vset.pattern.permute.xlu0 0
        %1722 = vperm.xlu0 %1721, %v1500
        %v1723 = vpop.permute.xlu0 %1722
        %1726 = vset.pattern.permute.xlu0 0
        %1727 = vperm.xlu0 %1726, %v1501
        %v1728 = vpop.permute.xlu0 %1727
        %1731 = vset.pattern.permute.xlu0 0
        %1732 = vperm.xlu0 %1731, %v1502
        %v1733 = vpop.permute.xlu0 %1732
        %1736 = vset.pattern.permute.xlu0 0
        %1737 = vperm.xlu0 %1736, %v1503
        %v1738 = vpop.permute.xlu0 %1737
        %1741 = vset.pattern.permute.xlu0 0
        %1742 = vperm.xlu0 %1741, %v1504
        %v1743 = vpop.permute.xlu0 %1742
        %1746 = vset.pattern.permute.xlu0 0
        %1747 = vperm.xlu0 %1746, %v1505
        %v1748 = vpop.permute.xlu0 %1747
        %1751 = vset.pattern.permute.xlu0 0
        %1752 = vperm.xlu0 %1751, %v1506
        %v1753 = vpop.permute.xlu0 %1752
        %1756 = vset.pattern.permute.xlu0 0
        %1757 = vperm.xlu0 %1756, %v1507
        %v1758 = vpop.permute.xlu0 %1757
        %1761 = vset.pattern.permute.xlu0 0
        %1762 = vperm.xlu0 %1761, %v1508
        %v1763 = vpop.permute.xlu0 %1762
        %1766 = vset.pattern.permute.xlu0 0
        %1767 = vperm.xlu0 %1766, %v1509
        %v1768 = vpop.permute.xlu0 %1767
        %1771 = vset.pattern.permute.xlu0 0
        %1772 = vperm.xlu0 %1771, %v1510
        %v1773 = vpop.permute.xlu0 %1772
        %1776 = vset.pattern.permute.xlu0 0
        %1777 = vperm.xlu0 %1776, %v1511
        %v1778 = vpop.permute.xlu0 %1777
        %1781 = vset.pattern.permute.xlu0 0
        %1782 = vperm.xlu0 %1781, %v1512
        %v1783 = vpop.permute.xlu0 %1782
        %1786 = vset.pattern.permute.xlu0 0
        %1787 = vperm.xlu0 %1786, %v1513
        %v1788 = vpop.permute.xlu0 %1787
        %1791 = vset.pattern.permute.xlu0 0
        %1792 = vperm.xlu0 %1791, %v1514
        %v1793 = vpop.permute.xlu0 %1792
        %1796 = vset.pattern.permute.xlu0 0
        %1797 = vperm.xlu0 %1796, %v1515
        %v1798 = vpop.permute.xlu0 %1797
        %1801 = vset.pattern.permute.xlu0 0
        %1802 = vperm.xlu0 %1801, %v1516
        %v1803 = vpop.permute.xlu0 %1802
        %1806 = vset.pattern.permute.xlu0 0
        %1807 = vperm.xlu0 %1806, %v1517
        %v1808 = vpop.permute.xlu0 %1807
        %1811 = vset.pattern.permute.xlu0 0
        %1812 = vperm.xlu0 %1811, %v1518
        %v1813 = vpop.permute.xlu0 %1812
        %1816 = vset.pattern.permute.xlu0 0
        %1817 = vperm.xlu0 %1816, %v1519
        %v1818 = vpop.permute.xlu0 %1817
        %1821 = vset.pattern.permute.xlu0 0
        %1822 = vperm.xlu0 %1821, %v1520
        %v1823 = vpop.permute.xlu0 %1822
        %1826 = vset.pattern.permute.xlu0 0
        %1827 = vperm.xlu0 %1826, %v1521
        %v1828 = vpop.permute.xlu0 %1827
        %1831 = vset.pattern.permute.xlu0 0
        %1832 = vperm.xlu0 %1831, %v1522
        %v1833 = vpop.permute.xlu0 %1832
        %1836 = vset.pattern.permute.xlu0 0
        %1837 = vperm.xlu0 %1836, %v1523
        %v1838 = vpop.permute.xlu0 %1837
        %1841 = vset.pattern.permute.xlu0 0
        %1842 = vperm.xlu0 %1841, %v1524
        %v1843 = vpop.permute.xlu0 %1842
        %1846 = vset.pattern.permute.xlu0 0
        %1847 = vperm.xlu0 %1846, %v1525
        %v1848 = vpop.permute.xlu0 %1847
        %1851 = vset.pattern.permute.xlu0 0
        %1852 = vperm.xlu0 %1851, %v1526
        %v1853 = vpop.permute.xlu0 %1852
        %1856 = vset.pattern.permute.xlu0 0
        %1857 = vperm.xlu0 %1856, %v1527
        %v1858 = vpop.permute.xlu0 %1857
        %1861 = vset.pattern.permute.xlu0 0
        %1862 = vperm.xlu0 %1861, %v1528
        %v1863 = vpop.permute.xlu0 %1862
        %1866 = vset.pattern.permute.xlu0 0
        %1867 = vperm.xlu0 %1866, %v1529
        %v1868 = vpop.permute.xlu0 %1867
        %1871 = vset.pattern.permute.xlu0 0
        %1872 = vperm.xlu0 %1871, %v1530
        %v1873 = vpop.permute.xlu0 %1872
        %1876 = vset.pattern.permute.xlu0 0
        %1877 = vperm.xlu0 %1876, %v1531
        %v1878 = vpop.permute.xlu0 %1877
        %1881 = vset.pattern.permute.xlu0 0
        %1882 = vperm.xlu0 %1881, %v1532
        %v1883 = vpop.permute.xlu0 %1882
        %1886 = vset.pattern.permute.xlu0 0
        %1887 = vperm.xlu0 %1886, %v1533
        %v1888 = vpop.permute.xlu0 %1887
        %1891 = vset.pattern.permute.xlu0 0
        %1892 = vperm.xlu0 %1891, %v1534
        %v1893 = vpop.permute.xlu0 %1892
        %1896 = vset.pattern.permute.xlu0 0
        %1897 = vperm.xlu0 %1896, %v1535
        %v1898 = vpop.permute.xlu0 %1897
        %1901 = vset.pattern.permute.xlu0 0
        %1902 = vperm.xlu0 %1901, %v1536
        %v1903 = vpop.permute.xlu0 %1902
        %1906 = vset.pattern.permute.xlu0 0
        %1907 = vperm.xlu0 %1906, %v1537
        %v1908 = vpop.permute.xlu0 %1907
        %1911 = vset.pattern.permute.xlu0 0
        %1912 = vperm.xlu0 %1911, %v1538
        %v1913 = vpop.permute.xlu0 %1912
        %1916 = vset.pattern.permute.xlu0 0
        %1917 = vperm.xlu0 %1916, %v1539
        %v1918 = vpop.permute.xlu0 %1917
        %1921 = vset.pattern.permute.xlu0 0
        %1922 = vperm.xlu0 %1921, %v1540
        %v1923 = vpop.permute.xlu0 %1922
        %1926 = vset.pattern.permute.xlu0 0
        %1927 = vperm.xlu0 %1926, %v1541
        %v1928 = vpop.permute.xlu0 %1927
        %1931 = vset.pattern.permute.xlu0 0
        %1932 = vperm.xlu0 %1931, %v1542
        %v1933 = vpop.permute.xlu0 %1932
        %1936 = vset.pattern.permute.xlu0 0
        %1937 = vperm.xlu0 %1936, %v1543
        %v1938 = vpop.permute.xlu0 %1937
        %1941 = vset.pattern.permute.xlu0 0
        %1942 = vperm.xlu0 %1941, %v1544
        %v1943 = vpop.permute.xlu0 %1942
        %1946 = vset.pattern.permute.xlu0 0
        %1947 = vperm.xlu0 %1946, %v1545
        %v1948 = vpop.permute.xlu0 %1947
        %1951 = vset.pattern.permute.xlu0 0
        %1952 = vperm.xlu0 %1951, %v1546
        %v1953 = vpop.permute.xlu0 %1952
        %1956 = vset.pattern.permute.xlu0 0
        %1957 = vperm.xlu0 %1956, %v1547
        %v1958 = vpop.permute.xlu0 %1957
        %1961 = vset.pattern.permute.xlu0 0
        %1962 = vperm.xlu0 %1961, %v1548
        %v1963 = vpop.permute.xlu0 %1962
        %1966 = vset.pattern.permute.xlu0 0
        %1967 = vperm.xlu0 %1966, %v1549
        %v1968 = vpop.permute.xlu0 %1967
        %1971 = vset.pattern.permute.xlu0 0
        %1972 = vperm.xlu0 %1971, %v1550
        %v1973 = vpop.permute.xlu0 %1972
        %1976 = vset.pattern.permute.xlu0 0
        %1977 = vperm.xlu0 %1976, %v1551
        %v1978 = vpop.permute.xlu0 %1977
        %1981 = vset.pattern.permute.xlu0 0
        %1982 = vperm.xlu0 %1981, %v1552
        %v1983 = vpop.permute.xlu0 %1982
        %1986 = vset.pattern.permute.xlu0 0
        %1987 = vperm.xlu0 %1986, %v1553
        %v1988 = vpop.permute.xlu0 %1987
        %1991 = vset.pattern.permute.xlu0 0
        %1992 = vperm.xlu0 %1991, %v1554
        %v1993 = vpop.permute.xlu0 %1992
        %1996 = vset.pattern.permute.xlu0 0
        %1997 = vperm.xlu0 %1996, %v1555
        %v1998 = vpop.permute.xlu0 %1997
        %2001 = vset.pattern.permute.xlu0 0
        %2002 = vperm.xlu0 %2001, %v1556
        %v2003 = vpop.permute.xlu0 %2002
        %2006 = vset.pattern.permute.xlu0 0
        %2007 = vperm.xlu0 %2006, %v1557
        %v2008 = vpop.permute.xlu0 %2007
        %2011 = vset.pattern.permute.xlu0 0
        %2012 = vperm.xlu0 %2011, %v1558
        %v2013 = vpop.permute.xlu0 %2012
        %2016 = vset.pattern.permute.xlu0 0
        %2017 = vperm.xlu0 %2016, %v1559
        %v2018 = vpop.permute.xlu0 %2017
        %2021 = vset.pattern.permute.xlu0 0
        %2022 = vperm.xlu0 %2021, %v1560
        %v2023 = vpop.permute.xlu0 %2022
        %2026 = vset.pattern.permute.xlu0 0
        %2027 = vperm.xlu0 %2026, %v1561
        %v2028 = vpop.permute.xlu0 %2027
        %2031 = vset.pattern.permute.xlu0 0
        %2032 = vperm.xlu0 %2031, %v1562
        %v2033 = vpop.permute.xlu0 %2032
        %2036 = vset.pattern.permute.xlu0 0
        %2037 = vperm.xlu0 %2036, %v1563
        %v2038 = vpop.permute.xlu0 %2037
        %2041 = vset.pattern.permute.xlu0 0
        %2042 = vperm.xlu0 %2041, %v1564
        %v2043 = vpop.permute.xlu0 %2042
        %2046 = vset.pattern.permute.xlu0 0
        %2047 = vperm.xlu0 %2046, %v1565
        %v2048 = vpop.permute.xlu0 %2047
        %2051 = vset.pattern.permute.xlu0 0
        %2052 = vperm.xlu0 %2051, %v1566
        %v2053 = vpop.permute.xlu0 %2052
        %2056 = vset.pattern.permute.xlu0 0
        %2057 = vperm.xlu0 %2056, %v1567
        %v2058 = vpop.permute.xlu0 %2057
        %2061 = vset.pattern.permute.xlu0 0
        %2062 = vperm.xlu0 %2061, %v1568
        %v2063 = vpop.permute.xlu0 %2062
        %2066 = vset.pattern.permute.xlu0 0
        %2067 = vperm.xlu0 %2066, %v1569
        %v2068 = vpop.permute.xlu0 %2067
        %2071 = vset.pattern.permute.xlu0 0
        %2072 = vperm.xlu0 %2071, %v1570
        %v2073 = vpop.permute.xlu0 %2072
        %2076 = vset.pattern.permute.xlu0 0
        %2077 = vperm.xlu0 %2076, %v1571
        %v2078 = vpop.permute.xlu0 %2077
        %2081 = vset.pattern.permute.xlu0 0
        %2082 = vperm.xlu0 %2081, %v1572
        %v2083 = vpop.permute.xlu0 %2082
        %2086 = vset.pattern.permute.xlu0 0
        %2087 = vperm.xlu0 %2086, %v1573
        %v2088 = vpop.permute.xlu0 %2087
        %2091 = vset.pattern.permute.xlu0 0
        %2092 = vperm.xlu0 %2091, %v1574
        %v2093 = vpop.permute.xlu0 %2092
        %2096 = vset.pattern.permute.xlu0 0
        %2097 = vperm.xlu0 %2096, %v1575
        %v2098 = vpop.permute.xlu0 %2097
        %2101 = vset.pattern.permute.xlu0 0
        %2102 = vperm.xlu0 %2101, %v1576
        %v2103 = vpop.permute.xlu0 %2102
        %2106 = vset.pattern.permute.xlu0 0
        %2107 = vperm.xlu0 %2106, %v1577
        %v2108 = vpop.permute.xlu0 %2107
        %2111 = vset.pattern.permute.xlu0 0
        %2112 = vperm.xlu0 %2111, %v1578
        %v2113 = vpop.permute.xlu0 %2112
        %2116 = vset.pattern.permute.xlu0 0
        %2117 = vperm.xlu0 %2116, %v1579
        %v2118 = vpop.permute.xlu0 %2117
        %2121 = vset.pattern.permute.xlu0 0
        %2122 = vperm.xlu0 %2121, %v1580
        %v2123 = vpop.permute.xlu0 %2122
        %2126 = vset.pattern.permute.xlu0 0
        %2127 = vperm.xlu0 %2126, %v1581
        %v2128 = vpop.permute.xlu0 %2127
        %2131 = vset.pattern.permute.xlu0 0
        %2132 = vperm.xlu0 %2131, %v1582
        %v2133 = vpop.permute.xlu0 %2132
        %2136 = vset.pattern.permute.xlu0 0
        %2137 = vperm.xlu0 %2136, %v1583
        %v2138 = vpop.permute.xlu0 %2137
        %2141 = vset.pattern.permute.xlu0 0
        %2142 = vperm.xlu0 %2141, %v1584
        %v2143 = vpop.permute.xlu0 %2142
        %2146 = vset.pattern.permute.xlu0 0
        %2147 = vperm.xlu0 %2146, %v1585
        %v2148 = vpop.permute.xlu0 %2147
        %2151 = vset.pattern.permute.xlu0 0
        %2152 = vperm.xlu0 %2151, %v1586
        %v2153 = vpop.permute.xlu0 %2152
        %2156 = vset.pattern.permute.xlu0 0
        %2157 = vperm.xlu0 %2156, %v1587
        %v2158 = vpop.permute.xlu0 %2157
        %2161 = vset.pattern.permute.xlu0 0
        %2162 = vperm.xlu0 %2161, %v1588
        %v2163 = vpop.permute.xlu0 %2162
        %2166 = vset.pattern.permute.xlu0 0
        %2167 = vperm.xlu0 %2166, %v1589
        %v2168 = vpop.permute.xlu0 %2167
        %2171 = vset.pattern.permute.xlu0 0
        %2172 = vperm.xlu0 %2171, %v1590
        %v2173 = vpop.permute.xlu0 %2172
        %2176 = vset.pattern.permute.xlu0 0
        %2177 = vperm.xlu0 %2176, %v1591
        %v2178 = vpop.permute.xlu0 %2177
        %2181 = vset.pattern.permute.xlu0 0
        %2182 = vperm.xlu0 %2181, %v1592
        %v2183 = vpop.permute.xlu0 %2182
        %2186 = vset.pattern.permute.xlu0 0
        %2187 = vperm.xlu0 %2186, %v1593
        %v2188 = vpop.permute.xlu0 %2187
        %2191 = vset.pattern.permute.xlu0 0
        %2192 = vperm.xlu0 %2191, %v1594
        %v2193 = vpop.permute.xlu0 %2192
        %2196 = vset.pattern.permute.xlu0 0
        %2197 = vperm.xlu0 %2196, %v1595
        %v2198 = vpop.permute.xlu0 %2197
        %2201 = vset.pattern.permute.xlu0 0
        %2202 = vperm.xlu0 %2201, %v1596
        %v2203 = vpop.permute.xlu0 %2202
        %2206 = vset.pattern.permute.xlu0 0
        %2207 = vperm.xlu0 %2206, %v1597
        %v2208 = vpop.permute.xlu0 %2207
        %2211 = vset.pattern.permute.xlu0 0
        %2212 = vperm.xlu0 %2211, %v1598
        %v2213 = vpop.permute.xlu0 %2212
        %2216 = vset.pattern.permute.xlu0 0
        %2217 = vperm.xlu0 %2216, %v1599
        %v2218 = vpop.permute.xlu0 %2217
        %2221 = vset.pattern.permute.xlu0 0
        %2222 = vperm.xlu0 %2221, %v1600
        %v2223 = vpop.permute.xlu0 %2222
        %2226 = vset.pattern.permute.xlu0 0
        %2227 = vperm.xlu0 %2226, %v1601
        %v2228 = vpop.permute.xlu0 %2227
        %2231 = vset.pattern.permute.xlu0 0
        %2232 = vperm.xlu0 %2231, %v1602
        %v2233 = vpop.permute.xlu0 %2232
        %2236 = vset.pattern.permute.xlu0 0
        %2237 = vperm.xlu0 %2236, %v1603
        %v2238 = vpop.permute.xlu0 %2237
        %2241 = vset.pattern.permute.xlu0 0
        %2242 = vperm.xlu0 %2241, %v1604
        %v2243 = vpop.permute.xlu0 %2242
        %v2373 = vunpack.c.l.b16 %v1349
        %v2374 = vunpack.c.l.b16 %v1350
        %v2375 = vunpack.c.l.b16 %v1351
        %v2376 = vunpack.c.l.b16 %v1352
        %v2377 = vunpack.c.l.b16 %v1353
        %v2378 = vunpack.c.l.b16 %v1354
        %v2379 = vunpack.c.l.b16 %v1355
        %v2380 = vunpack.c.l.b16 %v1356
        %v2381 = vunpack.c.l.b16 %v1357
        %v2382 = vunpack.c.l.b16 %v1358
        %v2383 = vunpack.c.l.b16 %v1359
        %v2384 = vunpack.c.l.b16 %v1360
        %v2385 = vunpack.c.l.b16 %v1361
        %v2386 = vunpack.c.l.b16 %v1362
        %v2387 = vunpack.c.l.b16 %v1363
        %v2388 = vunpack.c.l.b16 %v1364
        %v2389 = vunpack.c.l.b16 %v1365
        %v2390 = vunpack.c.l.b16 %v1366
        %v2391 = vunpack.c.l.b16 %v1367
        %v2392 = vunpack.c.l.b16 %v1368
        %v2393 = vunpack.c.l.b16 %v1369
        %v2394 = vunpack.c.l.b16 %v1370
        %v2395 = vunpack.c.l.b16 %v1371
        %v2396 = vunpack.c.l.b16 %v1372
        %v2397 = vunpack.c.l.b16 %v1373
        %v2398 = vunpack.c.l.b16 %v1374
        %v2399 = vunpack.c.l.b16 %v1375
        %v2400 = vunpack.c.l.b16 %v1376
        %v2401 = vunpack.c.l.b16 %v1377
        %v2402 = vunpack.c.l.b16 %v1378
        %v2403 = vunpack.c.l.b16 %v1379
        %v2404 = vunpack.c.l.b16 %v1380
        %v2405 = vunpack.c.l.b16 %v1381
        %v2406 = vunpack.c.l.b16 %v1382
        %v2407 = vunpack.c.l.b16 %v1383
        %v2408 = vunpack.c.l.b16 %v1384
        %v2409 = vunpack.c.l.b16 %v1385
        %v2410 = vunpack.c.l.b16 %v1386
        %v2411 = vunpack.c.l.b16 %v1387
        %v2412 = vunpack.c.l.b16 %v1388
        %v2413 = vunpack.c.l.b16 %v1389
        %v2414 = vunpack.c.l.b16 %v1390
        %v2415 = vunpack.c.l.b16 %v1391
        %v2416 = vunpack.c.l.b16 %v1392
        %v2417 = vunpack.c.l.b16 %v1393
        %v2418 = vunpack.c.l.b16 %v1394
        %v2419 = vunpack.c.l.b16 %v1395
        %v2420 = vunpack.c.l.b16 %v1396
        %v2421 = vunpack.c.l.b16 %v1397
        %v2422 = vunpack.c.l.b16 %v1398
        %v2423 = vunpack.c.l.b16 %v1399
        %v2424 = vunpack.c.l.b16 %v1400
        %v2425 = vunpack.c.l.b16 %v1401
        %v2426 = vunpack.c.l.b16 %v1402
        %v2427 = vunpack.c.l.b16 %v1403
        %v2428 = vunpack.c.l.b16 %v1404
        %v2429 = vunpack.c.l.b16 %v1405
        %v2430 = vunpack.c.l.b16 %v1406
        %v2431 = vunpack.c.l.b16 %v1407
        %v2432 = vunpack.c.l.b16 %v1408
        %v2433 = vunpack.c.l.b16 %v1409
        %v2434 = vunpack.c.l.b16 %v1410
        %v2435 = vunpack.c.l.b16 %v1411
        %v2436 = vunpack.c.l.b16 %v1412
        %v2437 = vunpack.c.l.b16 %v1413
        %v2438 = vunpack.c.l.b16 %v1414
        %v2439 = vunpack.c.l.b16 %v1415
        %v2440 = vunpack.c.l.b16 %v1416
        %v2441 = vunpack.c.l.b16 %v1417
        %v2442 = vunpack.c.l.b16 %v1418
        %v2443 = vunpack.c.l.b16 %v1419
        %v2444 = vunpack.c.l.b16 %v1420
        %v2445 = vunpack.c.l.b16 %v1421
        %v2446 = vunpack.c.l.b16 %v1422
        %v2447 = vunpack.c.l.b16 %v1423
        %v2448 = vunpack.c.l.b16 %v1424
        %v2449 = vunpack.c.l.b16 %v1425
        %v2450 = vunpack.c.l.b16 %v1426
        %v2451 = vunpack.c.l.b16 %v1427
        %v2452 = vunpack.c.l.b16 %v1428
        %v2453 = vunpack.c.l.b16 %v1429
        %v2454 = vunpack.c.l.b16 %v1430
        %v2455 = vunpack.c.l.b16 %v1431
        %v2456 = vunpack.c.l.b16 %v1432
        %v2457 = vunpack.c.l.b16 %v1433
        %v2458 = vunpack.c.l.b16 %v1434
        %v2459 = vunpack.c.l.b16 %v1435
        %v2460 = vunpack.c.l.b16 %v1436
        %v2461 = vunpack.c.l.b16 %v1437
        %v2462 = vunpack.c.l.b16 %v1438
        %v2463 = vunpack.c.l.b16 %v1439
        %v2464 = vunpack.c.l.b16 %v1440
        %v2465 = vunpack.c.l.b16 %v1441
        %v2466 = vunpack.c.l.b16 %v1442
        %v2467 = vunpack.c.l.b16 %v1443
        %v2468 = vunpack.c.l.b16 %v1444
        %v2469 = vunpack.c.l.b16 %v1445
        %v2470 = vunpack.c.l.b16 %v1446
        %v2471 = vunpack.c.l.b16 %v1447
        %v2472 = vunpack.c.l.b16 %v1448
        %v2473 = vunpack.c.l.b16 %v1449
        %v2474 = vunpack.c.l.b16 %v1450
        %v2475 = vunpack.c.l.b16 %v1451
        %v2476 = vunpack.c.l.b16 %v1452
        %v2477 = vunpack.c.l.b16 %v1453
        %v2478 = vunpack.c.l.b16 %v1454
        %v2479 = vunpack.c.l.b16 %v1455
        %v2480 = vunpack.c.l.b16 %v1456
        %v2481 = vunpack.c.l.b16 %v1457
        %v2482 = vunpack.c.l.b16 %v1458
        %v2483 = vunpack.c.l.b16 %v1459
        %v2484 = vunpack.c.l.b16 %v1460
        %v2485 = vunpack.c.l.b16 %v1461
        %v2486 = vunpack.c.l.b16 %v1462
        %v2487 = vunpack.c.l.b16 %v1463
        %v2488 = vunpack.c.l.b16 %v1464
        %v2489 = vunpack.c.l.b16 %v1465
        %v2490 = vunpack.c.l.b16 %v1466
        %v2491 = vunpack.c.l.b16 %v1467
        %v2492 = vunpack.c.l.b16 %v1468
        %v2493 = vunpack.c.l.b16 %v1469
        %v2494 = vunpack.c.l.b16 %v1470
        %v2495 = vunpack.c.l.b16 %v1471
        %v2496 = vunpack.c.l.b16 %v1472
        %v2497 = vunpack.c.l.b16 %v1473
        %v2498 = vunpack.c.l.b16 %v1474
        %v2499 = vunpack.c.l.b16 %v1475
        %v2500 = vunpack.c.l.b16 %v1476
        %v2501 = vpack.c.b16 %v2374, %v2373
        %v2502 = vpack.c.b16 %v2376, %v2375
        %v2503 = vpack.c.b16 %v2378, %v2377
        %v2504 = vpack.c.b16 %v2380, %v2379
        %v2505 = vpack.c.b16 %v2382, %v2381
        %v2506 = vpack.c.b16 %v2384, %v2383
        %v2507 = vpack.c.b16 %v2386, %v2385
        %v2508 = vpack.c.b16 %v2388, %v2387
        %v2509 = vpack.c.b16 %v2390, %v2389
        %v2510 = vpack.c.b16 %v2392, %v2391
        %v2511 = vpack.c.b16 %v2394, %v2393
        %v2512 = vpack.c.b16 %v2396, %v2395
        %v2513 = vpack.c.b16 %v2398, %v2397
        %v2514 = vpack.c.b16 %v2400, %v2399
        %v2515 = vpack.c.b16 %v2402, %v2401
        %v2516 = vpack.c.b16 %v2404, %v2403
        %v2517 = vpack.c.b16 %v2406, %v2405
        %v2518 = vpack.c.b16 %v2408, %v2407
        %v2519 = vpack.c.b16 %v2410, %v2409
        %v2520 = vpack.c.b16 %v2412, %v2411
        %v2521 = vpack.c.b16 %v2414, %v2413
        %v2522 = vpack.c.b16 %v2416, %v2415
        %v2523 = vpack.c.b16 %v2418, %v2417
        %v2524 = vpack.c.b16 %v2420, %v2419
        %v2525 = vpack.c.b16 %v2422, %v2421
        %v2526 = vpack.c.b16 %v2424, %v2423
        %v2527 = vpack.c.b16 %v2426, %v2425
        %v2528 = vpack.c.b16 %v2428, %v2427
        %v2529 = vpack.c.b16 %v2430, %v2429
        %v2530 = vpack.c.b16 %v2432, %v2431
        %v2531 = vpack.c.b16 %v2434, %v2433
        %v2532 = vpack.c.b16 %v2436, %v2435
        %v2533 = vpack.c.b16 %v2438, %v2437
        %v2534 = vpack.c.b16 %v2440, %v2439
        %v2535 = vpack.c.b16 %v2442, %v2441
        %v2536 = vpack.c.b16 %v2444, %v2443
        %v2537 = vpack.c.b16 %v2446, %v2445
        %v2538 = vpack.c.b16 %v2448, %v2447
        %v2539 = vpack.c.b16 %v2450, %v2449
        %v2540 = vpack.c.b16 %v2452, %v2451
        %v2541 = vpack.c.b16 %v2454, %v2453
        %v2542 = vpack.c.b16 %v2456, %v2455
        %v2543 = vpack.c.b16 %v2458, %v2457
        %v2544 = vpack.c.b16 %v2460, %v2459
        %v2545 = vpack.c.b16 %v2462, %v2461
        %v2546 = vpack.c.b16 %v2464, %v2463
        %v2547 = vpack.c.b16 %v2466, %v2465
        %v2548 = vpack.c.b16 %v2468, %v2467
        %v2549 = vpack.c.b16 %v2470, %v2469
        %v2550 = vpack.c.b16 %v2472, %v2471
        %v2551 = vpack.c.b16 %v2474, %v2473
        %v2552 = vpack.c.b16 %v2476, %v2475
        %v2553 = vpack.c.b16 %v2478, %v2477
        %v2554 = vpack.c.b16 %v2480, %v2479
        %v2555 = vpack.c.b16 %v2482, %v2481
        %v2556 = vpack.c.b16 %v2484, %v2483
        %v2557 = vpack.c.b16 %v2486, %v2485
        %v2558 = vpack.c.b16 %v2488, %v2487
        %v2559 = vpack.c.b16 %v2490, %v2489
        %v2560 = vpack.c.b16 %v2492, %v2491
        %v2561 = vpack.c.b16 %v2494, %v2493
        %v2562 = vpack.c.b16 %v2496, %v2495
        %v2563 = vpack.c.b16 %v2498, %v2497
        %v2564 = vpack.c.b16 %v2500, %v2499
        %2629 = vmatprep.subr.bf16.mxu0 0
        %2630 = vmatpush1.bf16.msra.mxu0 %v1341
        %2631 = vmatprep.subr.bf16.mxu0 0
        %2632 = vmatpush1.bf16.msra.mxu0 %v1342
        %2633 = vmatprep.subr.bf16.mxu0 0
        %2634 = vmatpush1.bf16.msra.mxu0 %v1343
        %2635 = vmatprep.subr.bf16.mxu0 0
        %2636 = vmatpush1.bf16.msra.mxu0 %v1344
        %2637 = vmatprep.subr.bf16.mxu0 0
        %2638 = vmatpush1.bf16.msra.mxu0 %v1345
        %2639 = vmatprep.subr.bf16.mxu0 0
        %2640 = vmatpush1.bf16.msra.mxu0 %v1346
        %2641 = vmatprep.subr.bf16.mxu0 0
        %2642 = vmatpush1.bf16.msra.mxu0 %v1347
        %2643 = vmatprep.subr.bf16.mxu0 0
        %2644 = vmatpush1.bf16.msra.mxu0 %v1348
        %2645 = vmatprep.subr.bf16.mxu0 0
        %2646 = vmatpush1.bf16.msra.mxu0 0
        %2647 = vmatprep.subr.bf16.mxu0 0
        %2648 = vmatpush1.bf16.msra.mxu0 0
        %2649 = vmatprep.subr.bf16.mxu0 0
        %2650 = vmatpush1.bf16.msra.mxu0 0
        %2651 = vmatprep.subr.bf16.mxu0 0
        %2652 = vmatpush1.bf16.msra.mxu0 0
        %2653 = vmatprep.subr.bf16.mxu0 0
        %2654 = vmatpush1.bf16.msra.mxu0 0
        %2655 = vmatprep.subr.bf16.mxu0 0
        %2656 = vmatpush1.bf16.msra.mxu0 0
        %2657 = vmatprep.subr.bf16.mxu0 0
        %2658 = vmatpush1.bf16.msra.mxu0 0
        %2659 = vmatprep.subr.bf16.mxu0 0
        %2660 = vmatpush1.bf16.msra.mxu0 0
        %2661 = vmatprep.mubr.bf16.mxu0 0
        %2662 = vmatmul.mubr.bf16.gmra.mrb[0].mxu0 %v2501
        %v2663 = vpop.f32.mrb[0].mxu0
        %v2664 = vadd.f32 %v1608, %v2663
        %v2665 = vpop.f32.mrb[0].mxu0
        %v2666 = vpop.f32.mrb[0].mxu0
        %v2667 = vadd.f32 %v1613, %v2666
        %v2668 = vpop.f32.mrb[0].mxu0
        %2669 = vmatprep.mubr.bf16.mxu0 0
        %2670 = vmatmul.mubr.bf16.gmra.mrb[0].mxu0 %v2502
        %v2671 = vpop.f32.mrb[0].mxu0
        %v2672 = vadd.f32 %v1618, %v2671
        %v2673 = vpop.f32.mrb[0].mxu0
        %v2674 = vpop.f32.mrb[0].mxu0
        %v2675 = vadd.f32 %v1623, %v2674
        %v2676 = vpop.f32.mrb[0].mxu0
        %2677 = vmatprep.mubr.bf16.mxu0 0
        %2678 = vmatmul.mubr.bf16.gmra.mrb[0].mxu0 %v2503
        %v2679 = vpop.f32.mrb[0].mxu0
        %v2680 = vadd.f32 %v1628, %v2679
        %v2681 = vpop.f32.mrb[0].mxu0
        %v2682 = vpop.f32.mrb[0].mxu0
        %v2683 = vadd.f32 %v1633, %v2682
        %v2684 = vpop.f32.mrb[0].mxu0
        %2685 = vmatprep.mubr.bf16.mxu0 0
        %2686 = vmatmul.mubr.bf16.gmra.mrb[0].mxu0 %v2504
        %v2687 = vpop.f32.mrb[0].mxu0
        %v2688 = vadd.f32 %v1638, %v2687
        %v2689 = vpop.f32.mrb[0].mxu0
        %v2690 = vpop.f32.mrb[0].mxu0
        %v2691 = vadd.f32 %v1643, %v2690
        %v2692 = vpop.f32.mrb[0].mxu0
        %2693 = vmatprep.mubr.bf16.mxu0 0
        %2694 = vmatmul.mubr.bf16.gmra.mrb[0].mxu0 %v2505
        %v2695 = vpop.f32.mrb[0].mxu0
        %v2696 = vadd.f32 %v1648, %v2695
        %v2697 = vpop.f32.mrb[0].mxu0
        %v2698 = vpop.f32.mrb[0].mxu0
        %v2699 = vadd.f32 %v1653, %v2698
        %v2700 = vpop.f32.mrb[0].mxu0
        %2701 = vmatprep.mubr.bf16.mxu0 0
        %2702 = vmatmul.mubr.bf16.gmra.mrb[0].mxu0 %v2506
        %v2703 = vpop.f32.mrb[0].mxu0
        %v2704 = vadd.f32 %v1658, %v2703
        %v2705 = vpop.f32.mrb[0].mxu0
        %v2706 = vpop.f32.mrb[0].mxu0
        %v2707 = vadd.f32 %v1663, %v2706
        %v2708 = vpop.f32.mrb[0].mxu0
        %2709 = vmatprep.mubr.bf16.mxu0 0
        %2710 = vmatmul.mubr.bf16.gmra.mrb[0].mxu0 %v2507
        %v2711 = vpop.f32.mrb[0].mxu0
        %v2712 = vadd.f32 %v1668, %v2711
        %v2713 = vpop.f32.mrb[0].mxu0
        %v2714 = vpop.f32.mrb[0].mxu0
        %v2715 = vadd.f32 %v1673, %v2714
        %v2716 = vpop.f32.mrb[0].mxu0
        %2717 = vmatprep.mubr.bf16.mxu0 0
        %2718 = vmatmul.mubr.bf16.gmra.mrb[0].mxu0 %v2508
        %v2719 = vpop.f32.mrb[0].mxu0
        %v2720 = vadd.f32 %v1678, %v2719
        %v2721 = vpop.f32.mrb[0].mxu0
        %v2722 = vpop.f32.mrb[0].mxu0
        %v2723 = vadd.f32 %v1683, %v2722
        %v2724 = vpop.f32.mrb[0].mxu0
        %2725 = vmatprep.mubr.bf16.mxu0 0
        %2726 = vmatmul.mubr.bf16.gmra.mrb[0].mxu0 %v2509
        %v2727 = vpop.f32.mrb[0].mxu0
        %v2728 = vadd.f32 %v1688, %v2727
        %v2729 = vpop.f32.mrb[0].mxu0
        %v2730 = vpop.f32.mrb[0].mxu0
        %v2731 = vadd.f32 %v1693, %v2730
        %v2732 = vpop.f32.mrb[0].mxu0
        %2733 = vmatprep.mubr.bf16.mxu0 0
        %2734 = vmatmul.mubr.bf16.gmra.mrb[0].mxu0 %v2510
        %v2735 = vpop.f32.mrb[0].mxu0
        %v2736 = vadd.f32 %v1698, %v2735
        %v2737 = vpop.f32.mrb[0].mxu0
        %v2738 = vpop.f32.mrb[0].mxu0
        %v2739 = vadd.f32 %v1703, %v2738
        %v2740 = vpop.f32.mrb[0].mxu0
        %2741 = vmatprep.mubr.bf16.mxu0 0
        %2742 = vmatmul.mubr.bf16.gmra.mrb[0].mxu0 %v2511
        %v2743 = vpop.f32.mrb[0].mxu0
        %v2744 = vadd.f32 %v1708, %v2743
        %v2745 = vpop.f32.mrb[0].mxu0
        %v2746 = vpop.f32.mrb[0].mxu0
        %v2747 = vadd.f32 %v1713, %v2746
        %v2748 = vpop.f32.mrb[0].mxu0
        %2749 = vmatprep.mubr.bf16.mxu0 0
        %2750 = vmatmul.mubr.bf16.gmra.mrb[0].mxu0 %v2512
        %v2751 = vpop.f32.mrb[0].mxu0
        %v2752 = vadd.f32 %v1718, %v2751
        %v2753 = vpop.f32.mrb[0].mxu0
        %v2754 = vpop.f32.mrb[0].mxu0
        %v2755 = vadd.f32 %v1723, %v2754
        %v2756 = vpop.f32.mrb[0].mxu0
        %2757 = vmatprep.mubr.bf16.mxu0 0
        %2758 = vmatmul.mubr.bf16.gmra.mrb[0].mxu0 %v2513
        %v2759 = vpop.f32.mrb[0].mxu0
        %v2760 = vadd.f32 %v1728, %v2759
        %v2761 = vpop.f32.mrb[0].mxu0
        %v2762 = vpop.f32.mrb[0].mxu0
        %v2763 = vadd.f32 %v1733, %v2762
        %v2764 = vpop.f32.mrb[0].mxu0
        %2765 = vmatprep.mubr.bf16.mxu0 0
        %2766 = vmatmul.mubr.bf16.gmra.mrb[0].mxu0 %v2514
        %v2767 = vpop.f32.mrb[0].mxu0
        %v2768 = vadd.f32 %v1738, %v2767
        %v2769 = vpop.f32.mrb[0].mxu0
        %v2770 = vpop.f32.mrb[0].mxu0
        %v2771 = vadd.f32 %v1743, %v2770
        %v2772 = vpop.f32.mrb[0].mxu0
        %2773 = vmatprep.mubr.bf16.mxu0 0
        %2774 = vmatmul.mubr.bf16.gmra.mrb[0].mxu0 %v2515
        %v2775 = vpop.f32.mrb[0].mxu0
        %v2776 = vadd.f32 %v1748, %v2775
        %v2777 = vpop.f32.mrb[0].mxu0
        %v2778 = vpop.f32.mrb[0].mxu0
        %v2779 = vadd.f32 %v1753, %v2778
        %v2780 = vpop.f32.mrb[0].mxu0
        %2781 = vmatprep.mubr.bf16.mxu0 0
        %2782 = vmatmul.mubr.bf16.gmra.mrb[0].mxu0 %v2516
        %v2783 = vpop.f32.mrb[0].mxu0
        %v2784 = vadd.f32 %v1758, %v2783
        %v2785 = vpop.f32.mrb[0].mxu0
        %v2786 = vpop.f32.mrb[0].mxu0
        %v2787 = vadd.f32 %v1763, %v2786
        %v2788 = vpop.f32.mrb[0].mxu0
        %2789 = vmatprep.mubr.bf16.mxu0 0
        %2790 = vmatmul.mubr.bf16.gmra.mrb[0].mxu0 %v2517
        %v2791 = vpop.f32.mrb[0].mxu0
        %v2792 = vadd.f32 %v1768, %v2791
        %v2793 = vpop.f32.mrb[0].mxu0
        %v2794 = vpop.f32.mrb[0].mxu0
        %v2795 = vadd.f32 %v1773, %v2794
        %v2796 = vpop.f32.mrb[0].mxu0
        %2797 = vmatprep.mubr.bf16.mxu0 0
        %2798 = vmatmul.mubr.bf16.gmra.mrb[0].mxu0 %v2518
        %v2799 = vpop.f32.mrb[0].mxu0
        %v2800 = vadd.f32 %v1778, %v2799
        %v2801 = vpop.f32.mrb[0].mxu0
        %v2802 = vpop.f32.mrb[0].mxu0
        %v2803 = vadd.f32 %v1783, %v2802
        %v2804 = vpop.f32.mrb[0].mxu0
        %2805 = vmatprep.mubr.bf16.mxu0 0
        %2806 = vmatmul.mubr.bf16.gmra.mrb[0].mxu0 %v2519
        %v2807 = vpop.f32.mrb[0].mxu0
        %v2808 = vadd.f32 %v1788, %v2807
        %v2809 = vpop.f32.mrb[0].mxu0
        %v2810 = vpop.f32.mrb[0].mxu0
        %v2811 = vadd.f32 %v1793, %v2810
        %v2812 = vpop.f32.mrb[0].mxu0
        %2813 = vmatprep.mubr.bf16.mxu0 0
        %2814 = vmatmul.mubr.bf16.gmra.mrb[0].mxu0 %v2520
        %v2815 = vpop.f32.mrb[0].mxu0
        %v2816 = vadd.f32 %v1798, %v2815
        %v2817 = vpop.f32.mrb[0].mxu0
        %v2818 = vpop.f32.mrb[0].mxu0
        %v2819 = vadd.f32 %v1803, %v2818
        %v2820 = vpop.f32.mrb[0].mxu0
        %2821 = vmatprep.mubr.bf16.mxu0 0
        %2822 = vmatmul.mubr.bf16.gmra.mrb[0].mxu0 %v2521
        %v2823 = vpop.f32.mrb[0].mxu0
        %v2824 = vadd.f32 %v1808, %v2823
        %v2825 = vpop.f32.mrb[0].mxu0
        %v2826 = vpop.f32.mrb[0].mxu0
        %v2827 = vadd.f32 %v1813, %v2826
        %v2828 = vpop.f32.mrb[0].mxu0
        %2829 = vmatprep.mubr.bf16.mxu0 0
        %2830 = vmatmul.mubr.bf16.gmra.mrb[0].mxu0 %v2522
        %v2831 = vpop.f32.mrb[0].mxu0
        %v2832 = vadd.f32 %v1818, %v2831
        %v2833 = vpop.f32.mrb[0].mxu0
        %v2834 = vpop.f32.mrb[0].mxu0
        %v2835 = vadd.f32 %v1823, %v2834
        %v2836 = vpop.f32.mrb[0].mxu0
        %2837 = vmatprep.mubr.bf16.mxu0 0
        %2838 = vmatmul.mubr.bf16.gmra.mrb[0].mxu0 %v2523
        %v2839 = vpop.f32.mrb[0].mxu0
        %v2840 = vadd.f32 %v1828, %v2839
        %v2841 = vpop.f32.mrb[0].mxu0
        %v2842 = vpop.f32.mrb[0].mxu0
        %v2843 = vadd.f32 %v1833, %v2842
        %v2844 = vpop.f32.mrb[0].mxu0
        %2845 = vmatprep.mubr.bf16.mxu0 0
        %2846 = vmatmul.mubr.bf16.gmra.mrb[0].mxu0 %v2524
        %v2847 = vpop.f32.mrb[0].mxu0
        %v2848 = vadd.f32 %v1838, %v2847
        %v2849 = vpop.f32.mrb[0].mxu0
        %v2850 = vpop.f32.mrb[0].mxu0
        %v2851 = vadd.f32 %v1843, %v2850
        %v2852 = vpop.f32.mrb[0].mxu0
        %2853 = vmatprep.mubr.bf16.mxu0 0
        %2854 = vmatmul.mubr.bf16.gmra.mrb[0].mxu0 %v2525
        %v2855 = vpop.f32.mrb[0].mxu0
        %v2856 = vadd.f32 %v1848, %v2855
        %v2857 = vpop.f32.mrb[0].mxu0
        %v2858 = vpop.f32.mrb[0].mxu0
        %v2859 = vadd.f32 %v1853, %v2858
        %v2860 = vpop.f32.mrb[0].mxu0
        %2861 = vmatprep.mubr.bf16.mxu0 0
        %2862 = vmatmul.mubr.bf16.gmra.mrb[0].mxu0 %v2526
        %v2863 = vpop.f32.mrb[0].mxu0
        %v2864 = vadd.f32 %v1858, %v2863
        %v2865 = vpop.f32.mrb[0].mxu0
        %v2866 = vpop.f32.mrb[0].mxu0
        %v2867 = vadd.f32 %v1863, %v2866
        %v2868 = vpop.f32.mrb[0].mxu0
        %2869 = vmatprep.mubr.bf16.mxu0 0
        %2870 = vmatmul.mubr.bf16.gmra.mrb[0].mxu0 %v2527
        %v2871 = vpop.f32.mrb[0].mxu0
        %v2872 = vadd.f32 %v1868, %v2871
        %v2873 = vpop.f32.mrb[0].mxu0
        %v2874 = vpop.f32.mrb[0].mxu0
        %v2875 = vadd.f32 %v1873, %v2874
        %v2876 = vpop.f32.mrb[0].mxu0
        %2877 = vmatprep.mubr.bf16.mxu0 0
        %2878 = vmatmul.mubr.bf16.gmra.mrb[0].mxu0 %v2528
        %v2879 = vpop.f32.mrb[0].mxu0
        %v2880 = vadd.f32 %v1878, %v2879
        %v2881 = vpop.f32.mrb[0].mxu0
        %v2882 = vpop.f32.mrb[0].mxu0
        %v2883 = vadd.f32 %v1883, %v2882
        %v2884 = vpop.f32.mrb[0].mxu0
        %2885 = vmatprep.mubr.bf16.mxu0 0
        %2886 = vmatmul.mubr.bf16.gmra.mrb[0].mxu0 %v2529
        %v2887 = vpop.f32.mrb[0].mxu0
        %v2888 = vadd.f32 %v1888, %v2887
        %v2889 = vpop.f32.mrb[0].mxu0
        %v2890 = vpop.f32.mrb[0].mxu0
        %v2891 = vadd.f32 %v1893, %v2890
        %v2892 = vpop.f32.mrb[0].mxu0
        %2893 = vmatprep.mubr.bf16.mxu0 0
        %2894 = vmatmul.mubr.bf16.gmra.mrb[0].mxu0 %v2530
        %v2895 = vpop.f32.mrb[0].mxu0
        %v2896 = vadd.f32 %v1898, %v2895
        %v2897 = vpop.f32.mrb[0].mxu0
        %v2898 = vpop.f32.mrb[0].mxu0
        %v2899 = vadd.f32 %v1903, %v2898
        %v2900 = vpop.f32.mrb[0].mxu0
        %2901 = vmatprep.mubr.bf16.mxu0 0
        %2902 = vmatmul.mubr.bf16.gmra.mrb[0].mxu0 %v2531
        %v2903 = vpop.f32.mrb[0].mxu0
        %v2904 = vadd.f32 %v1908, %v2903
        %v2905 = vpop.f32.mrb[0].mxu0
        %v2906 = vpop.f32.mrb[0].mxu0
        %v2907 = vadd.f32 %v1913, %v2906
        %v2908 = vpop.f32.mrb[0].mxu0
        %2909 = vmatprep.mubr.bf16.mxu0 0
        %2910 = vmatmul.mubr.bf16.gmra.mrb[0].mxu0 %v2532
        %v2911 = vpop.f32.mrb[0].mxu0
        %v2912 = vadd.f32 %v1918, %v2911
        %v2913 = vpop.f32.mrb[0].mxu0
        %v2914 = vpop.f32.mrb[0].mxu0
        %v2915 = vadd.f32 %v1923, %v2914
        %v2916 = vpop.f32.mrb[0].mxu0
        %2917 = vmatprep.mubr.bf16.mxu0 0
        %2918 = vmatmul.mubr.bf16.gmra.mrb[0].mxu0 %v2533
        %v2919 = vpop.f32.mrb[0].mxu0
        %v2920 = vadd.f32 %v1928, %v2919
        %v2921 = vpop.f32.mrb[0].mxu0
        %v2922 = vpop.f32.mrb[0].mxu0
        %v2923 = vadd.f32 %v1933, %v2922
        %v2924 = vpop.f32.mrb[0].mxu0
        %2925 = vmatprep.mubr.bf16.mxu0 0
        %2926 = vmatmul.mubr.bf16.gmra.mrb[0].mxu0 %v2534
        %v2927 = vpop.f32.mrb[0].mxu0
        %v2928 = vadd.f32 %v1938, %v2927
        %v2929 = vpop.f32.mrb[0].mxu0
        %v2930 = vpop.f32.mrb[0].mxu0
        %v2931 = vadd.f32 %v1943, %v2930
        %v2932 = vpop.f32.mrb[0].mxu0
        %2933 = vmatprep.mubr.bf16.mxu0 0
        %2934 = vmatmul.mubr.bf16.gmra.mrb[0].mxu0 %v2535
        %v2935 = vpop.f32.mrb[0].mxu0
        %v2936 = vadd.f32 %v1948, %v2935
        %v2937 = vpop.f32.mrb[0].mxu0
        %v2938 = vpop.f32.mrb[0].mxu0
        %v2939 = vadd.f32 %v1953, %v2938
        %v2940 = vpop.f32.mrb[0].mxu0
        %2941 = vmatprep.mubr.bf16.mxu0 0
        %2942 = vmatmul.mubr.bf16.gmra.mrb[0].mxu0 %v2536
        %v2943 = vpop.f32.mrb[0].mxu0
        %v2944 = vadd.f32 %v1958, %v2943
        %v2945 = vpop.f32.mrb[0].mxu0
        %v2946 = vpop.f32.mrb[0].mxu0
        %v2947 = vadd.f32 %v1963, %v2946
        %v2948 = vpop.f32.mrb[0].mxu0
        %2949 = vmatprep.mubr.bf16.mxu0 0
        %2950 = vmatmul.mubr.bf16.gmra.mrb[0].mxu0 %v2537
        %v2951 = vpop.f32.mrb[0].mxu0
        %v2952 = vadd.f32 %v1968, %v2951
        %v2953 = vpop.f32.mrb[0].mxu0
        %v2954 = vpop.f32.mrb[0].mxu0
        %v2955 = vadd.f32 %v1973, %v2954
        %v2956 = vpop.f32.mrb[0].mxu0
        %2957 = vmatprep.mubr.bf16.mxu0 0
        %2958 = vmatmul.mubr.bf16.gmra.mrb[0].mxu0 %v2538
        %v2959 = vpop.f32.mrb[0].mxu0
        %v2960 = vadd.f32 %v1978, %v2959
        %v2961 = vpop.f32.mrb[0].mxu0
        %v2962 = vpop.f32.mrb[0].mxu0
        %v2963 = vadd.f32 %v1983, %v2962
        %v2964 = vpop.f32.mrb[0].mxu0
        %2965 = vmatprep.mubr.bf16.mxu0 0
        %2966 = vmatmul.mubr.bf16.gmra.mrb[0].mxu0 %v2539
        %v2967 = vpop.f32.mrb[0].mxu0
        %v2968 = vadd.f32 %v1988, %v2967
        %v2969 = vpop.f32.mrb[0].mxu0
        %v2970 = vpop.f32.mrb[0].mxu0
        %v2971 = vadd.f32 %v1993, %v2970
        %v2972 = vpop.f32.mrb[0].mxu0
        %2973 = vmatprep.mubr.bf16.mxu0 0
        %2974 = vmatmul.mubr.bf16.gmra.mrb[0].mxu0 %v2540
        %v2975 = vpop.f32.mrb[0].mxu0
        %v2976 = vadd.f32 %v1998, %v2975
        %v2977 = vpop.f32.mrb[0].mxu0
        %v2978 = vpop.f32.mrb[0].mxu0
        %v2979 = vadd.f32 %v2003, %v2978
        %v2980 = vpop.f32.mrb[0].mxu0
        %2981 = vmatprep.mubr.bf16.mxu0 0
        %2982 = vmatmul.mubr.bf16.gmra.mrb[0].mxu0 %v2541
        %v2983 = vpop.f32.mrb[0].mxu0
        %v2984 = vadd.f32 %v2008, %v2983
        %v2985 = vpop.f32.mrb[0].mxu0
        %v2986 = vpop.f32.mrb[0].mxu0
        %v2987 = vadd.f32 %v2013, %v2986
        %v2988 = vpop.f32.mrb[0].mxu0
        %2989 = vmatprep.mubr.bf16.mxu0 0
        %2990 = vmatmul.mubr.bf16.gmra.mrb[0].mxu0 %v2542
        %v2991 = vpop.f32.mrb[0].mxu0
        %v2992 = vadd.f32 %v2018, %v2991
        %v2993 = vpop.f32.mrb[0].mxu0
        %v2994 = vpop.f32.mrb[0].mxu0
        %v2995 = vadd.f32 %v2023, %v2994
        %v2996 = vpop.f32.mrb[0].mxu0
        %2997 = vmatprep.mubr.bf16.mxu0 0
        %2998 = vmatmul.mubr.bf16.gmra.mrb[0].mxu0 %v2543
        %v2999 = vpop.f32.mrb[0].mxu0
        %v3000 = vadd.f32 %v2028, %v2999
        %v3001 = vpop.f32.mrb[0].mxu0
        %v3002 = vpop.f32.mrb[0].mxu0
        %v3003 = vadd.f32 %v2033, %v3002
        %v3004 = vpop.f32.mrb[0].mxu0
        %3005 = vmatprep.mubr.bf16.mxu0 0
        %3006 = vmatmul.mubr.bf16.gmra.mrb[0].mxu0 %v2544
        %v3007 = vpop.f32.mrb[0].mxu0
        %v3008 = vadd.f32 %v2038, %v3007
        %v3009 = vpop.f32.mrb[0].mxu0
        %v3010 = vpop.f32.mrb[0].mxu0
        %v3011 = vadd.f32 %v2043, %v3010
        %v3012 = vpop.f32.mrb[0].mxu0
        %3013 = vmatprep.mubr.bf16.mxu0 0
        %3014 = vmatmul.mubr.bf16.gmra.mrb[0].mxu0 %v2545
        %v3015 = vpop.f32.mrb[0].mxu0
        %v3016 = vadd.f32 %v2048, %v3015
        %v3017 = vpop.f32.mrb[0].mxu0
        %v3018 = vpop.f32.mrb[0].mxu0
        %v3019 = vadd.f32 %v2053, %v3018
        %v3020 = vpop.f32.mrb[0].mxu0
        %3021 = vmatprep.mubr.bf16.mxu0 0
        %3022 = vmatmul.mubr.bf16.gmra.mrb[0].mxu0 %v2546
        %v3023 = vpop.f32.mrb[0].mxu0
        %v3024 = vadd.f32 %v2058, %v3023
        %v3025 = vpop.f32.mrb[0].mxu0
        %v3026 = vpop.f32.mrb[0].mxu0
        %v3027 = vadd.f32 %v2063, %v3026
        %v3028 = vpop.f32.mrb[0].mxu0
        %3029 = vmatprep.mubr.bf16.mxu0 0
        %3030 = vmatmul.mubr.bf16.gmra.mrb[0].mxu0 %v2547
        %v3031 = vpop.f32.mrb[0].mxu0
        %v3032 = vadd.f32 %v2068, %v3031
        %v3033 = vpop.f32.mrb[0].mxu0
        %v3034 = vpop.f32.mrb[0].mxu0
        %v3035 = vadd.f32 %v2073, %v3034
        %v3036 = vpop.f32.mrb[0].mxu0
        %3037 = vmatprep.mubr.bf16.mxu0 0
        %3038 = vmatmul.mubr.bf16.gmra.mrb[0].mxu0 %v2548
        %v3039 = vpop.f32.mrb[0].mxu0
        %v3040 = vadd.f32 %v2078, %v3039
        %v3041 = vpop.f32.mrb[0].mxu0
        %v3042 = vpop.f32.mrb[0].mxu0
        %v3043 = vadd.f32 %v2083, %v3042
        %v3044 = vpop.f32.mrb[0].mxu0
        %3045 = vmatprep.mubr.bf16.mxu0 0
        %3046 = vmatmul.mubr.bf16.gmra.mrb[0].mxu0 %v2549
        %v3047 = vpop.f32.mrb[0].mxu0
        %v3048 = vadd.f32 %v2088, %v3047
        %v3049 = vpop.f32.mrb[0].mxu0
        %v3050 = vpop.f32.mrb[0].mxu0
        %v3051 = vadd.f32 %v2093, %v3050
        %v3052 = vpop.f32.mrb[0].mxu0
        %3053 = vmatprep.mubr.bf16.mxu0 0
        %3054 = vmatmul.mubr.bf16.gmra.mrb[0].mxu0 %v2550
        %v3055 = vpop.f32.mrb[0].mxu0
        %v3056 = vadd.f32 %v2098, %v3055
        %v3057 = vpop.f32.mrb[0].mxu0
        %v3058 = vpop.f32.mrb[0].mxu0
        %v3059 = vadd.f32 %v2103, %v3058
        %v3060 = vpop.f32.mrb[0].mxu0
        %3061 = vmatprep.mubr.bf16.mxu0 0
        %3062 = vmatmul.mubr.bf16.gmra.mrb[0].mxu0 %v2551
        %v3063 = vpop.f32.mrb[0].mxu0
        %v3064 = vadd.f32 %v2108, %v3063
        %v3065 = vpop.f32.mrb[0].mxu0
        %v3066 = vpop.f32.mrb[0].mxu0
        %v3067 = vadd.f32 %v2113, %v3066
        %v3068 = vpop.f32.mrb[0].mxu0
        %3069 = vmatprep.mubr.bf16.mxu0 0
        %3070 = vmatmul.mubr.bf16.gmra.mrb[0].mxu0 %v2552
        %v3071 = vpop.f32.mrb[0].mxu0
        %v3072 = vadd.f32 %v2118, %v3071
        %v3073 = vpop.f32.mrb[0].mxu0
        %v3074 = vpop.f32.mrb[0].mxu0
        %v3075 = vadd.f32 %v2123, %v3074
        %v3076 = vpop.f32.mrb[0].mxu0
        %3077 = vmatprep.mubr.bf16.mxu0 0
        %3078 = vmatmul.mubr.bf16.gmra.mrb[0].mxu0 %v2553
        %v3079 = vpop.f32.mrb[0].mxu0
        %v3080 = vadd.f32 %v2128, %v3079
        %v3081 = vpop.f32.mrb[0].mxu0
        %v3082 = vpop.f32.mrb[0].mxu0
        %v3083 = vadd.f32 %v2133, %v3082
        %v3084 = vpop.f32.mrb[0].mxu0
        %3085 = vmatprep.mubr.bf16.mxu0 0
        %3086 = vmatmul.mubr.bf16.gmra.mrb[0].mxu0 %v2554
        %v3087 = vpop.f32.mrb[0].mxu0
        %v3088 = vadd.f32 %v2138, %v3087
        %v3089 = vpop.f32.mrb[0].mxu0
        %v3090 = vpop.f32.mrb[0].mxu0
        %v3091 = vadd.f32 %v2143, %v3090
        %v3092 = vpop.f32.mrb[0].mxu0
        %3093 = vmatprep.mubr.bf16.mxu0 0
        %3094 = vmatmul.mubr.bf16.gmra.mrb[0].mxu0 %v2555
        %v3095 = vpop.f32.mrb[0].mxu0
        %v3096 = vadd.f32 %v2148, %v3095
        %v3097 = vpop.f32.mrb[0].mxu0
        %v3098 = vpop.f32.mrb[0].mxu0
        %v3099 = vadd.f32 %v2153, %v3098
        %v3100 = vpop.f32.mrb[0].mxu0
        %3101 = vmatprep.mubr.bf16.mxu0 0
        %3102 = vmatmul.mubr.bf16.gmra.mrb[0].mxu0 %v2556
        %v3103 = vpop.f32.mrb[0].mxu0
        %v3104 = vadd.f32 %v2158, %v3103
        %v3105 = vpop.f32.mrb[0].mxu0
        %v3106 = vpop.f32.mrb[0].mxu0
        %v3107 = vadd.f32 %v2163, %v3106
        %v3108 = vpop.f32.mrb[0].mxu0
        %3109 = vmatprep.mubr.bf16.mxu0 0
        %3110 = vmatmul.mubr.bf16.gmra.mrb[0].mxu0 %v2557
        %v3111 = vpop.f32.mrb[0].mxu0
        %v3112 = vadd.f32 %v2168, %v3111
        %v3113 = vpop.f32.mrb[0].mxu0
        %v3114 = vpop.f32.mrb[0].mxu0
        %v3115 = vadd.f32 %v2173, %v3114
        %v3116 = vpop.f32.mrb[0].mxu0
        %3117 = vmatprep.mubr.bf16.mxu0 0
        %3118 = vmatmul.mubr.bf16.gmra.mrb[0].mxu0 %v2558
        %v3119 = vpop.f32.mrb[0].mxu0
        %v3120 = vadd.f32 %v2178, %v3119
        %v3121 = vpop.f32.mrb[0].mxu0
        %v3122 = vpop.f32.mrb[0].mxu0
        %v3123 = vadd.f32 %v2183, %v3122
        %v3124 = vpop.f32.mrb[0].mxu0
        %3125 = vmatprep.mubr.bf16.mxu0 0
        %3126 = vmatmul.mubr.bf16.gmra.mrb[0].mxu0 %v2559
        %v3127 = vpop.f32.mrb[0].mxu0
        %v3128 = vadd.f32 %v2188, %v3127
        %v3129 = vpop.f32.mrb[0].mxu0
        %v3130 = vpop.f32.mrb[0].mxu0
        %v3131 = vadd.f32 %v2193, %v3130
        %v3132 = vpop.f32.mrb[0].mxu0
        %3133 = vmatprep.mubr.bf16.mxu0 0
        %3134 = vmatmul.mubr.bf16.gmra.mrb[0].mxu0 %v2560
        %v3135 = vpop.f32.mrb[0].mxu0
        %v3136 = vadd.f32 %v2198, %v3135
        %v3137 = vpop.f32.mrb[0].mxu0
        %v3138 = vpop.f32.mrb[0].mxu0
        %v3139 = vadd.f32 %v2203, %v3138
        %v3140 = vpop.f32.mrb[0].mxu0
        %3141 = vmatprep.mubr.bf16.mxu0 0
        %3142 = vmatmul.mubr.bf16.gmra.mrb[0].mxu0 %v2561
        %v3143 = vpop.f32.mrb[0].mxu0
        %v3144 = vadd.f32 %v2208, %v3143
        %v3145 = vpop.f32.mrb[0].mxu0
        %v3146 = vpop.f32.mrb[0].mxu0
        %v3147 = vadd.f32 %v2213, %v3146
        %v3148 = vpop.f32.mrb[0].mxu0
        %3149 = vmatprep.mubr.bf16.mxu0 0
        %3150 = vmatmul.mubr.bf16.gmra.mrb[0].mxu0 %v2562
        %v3151 = vpop.f32.mrb[0].mxu0
        %v3152 = vadd.f32 %v2218, %v3151
        %v3153 = vpop.f32.mrb[0].mxu0
        %v3154 = vpop.f32.mrb[0].mxu0
        %v3155 = vadd.f32 %v2223, %v3154
        %v3156 = vpop.f32.mrb[0].mxu0
        %3157 = vmatprep.mubr.bf16.mxu0 0
        %3158 = vmatmul.mubr.bf16.gmra.mrb[0].mxu0 %v2563
        %v3159 = vpop.f32.mrb[0].mxu0
        %v3160 = vadd.f32 %v2228, %v3159
        %v3161 = vpop.f32.mrb[0].mxu0
        %v3162 = vpop.f32.mrb[0].mxu0
        %v3163 = vadd.f32 %v2233, %v3162
        %v3164 = vpop.f32.mrb[0].mxu0
        %3165 = vmatprep.mubr.bf16.mxu0 0
        %3166 = vmatmul.mubr.bf16.gmra.mrb[0].mxu0 %v2564
        %v3167 = vpop.f32.mrb[0].mxu0
        %v3168 = vadd.f32 %v2238, %v3167
        %v3169 = vpop.f32.mrb[0].mxu0
        %v3170 = vpop.f32.mrb[0].mxu0
        %v3171 = vadd.f32 %v2243, %v3170
        %v3172 = vpop.f32.mrb[0].mxu0
        %3173 = vdwg.mxu0
        %v3174 = vmax.f32 %v2664, 0.0
        %v3175 = vmax.f32 %v2667, 0.0
        %v3176 = vmax.f32 %v2672, 0.0
        %v3177 = vmax.f32 %v2675, 0.0
        %v3178 = vmax.f32 %v2680, 0.0
        %v3179 = vmax.f32 %v2683, 0.0
        %v3180 = vmax.f32 %v2688, 0.0
        %v3181 = vmax.f32 %v2691, 0.0
        %v3182 = vmax.f32 %v2696, 0.0
        %v3183 = vmax.f32 %v2699, 0.0
        %v3184 = vmax.f32 %v2704, 0.0
        %v3185 = vmax.f32 %v2707, 0.0
        %v3186 = vmax.f32 %v2712, 0.0
        %v3187 = vmax.f32 %v2715, 0.0
        %v3188 = vmax.f32 %v2720, 0.0
        %v3189 = vmax.f32 %v2723, 0.0
        %v3190 = vmax.f32 %v2728, 0.0
        %v3191 = vmax.f32 %v2731, 0.0
        %v3192 = vmax.f32 %v2736, 0.0
        %v3193 = vmax.f32 %v2739, 0.0
        %v3194 = vmax.f32 %v2744, 0.0
        %v3195 = vmax.f32 %v2747, 0.0
        %v3196 = vmax.f32 %v2752, 0.0
        %v3197 = vmax.f32 %v2755, 0.0
        %v3198 = vmax.f32 %v2760, 0.0
        %v3199 = vmax.f32 %v2763, 0.0
        %v3200 = vmax.f32 %v2768, 0.0
        %v3201 = vmax.f32 %v2771, 0.0
        %v3202 = vmax.f32 %v2776, 0.0
        %v3203 = vmax.f32 %v2779, 0.0
        %v3204 = vmax.f32 %v2784, 0.0
        %v3205 = vmax.f32 %v2787, 0.0
        %v3206 = vmax.f32 %v2792, 0.0
        %v3207 = vmax.f32 %v2795, 0.0
        %v3208 = vmax.f32 %v2800, 0.0
        %v3209 = vmax.f32 %v2803, 0.0
        %v3210 = vmax.f32 %v2808, 0.0
        %v3211 = vmax.f32 %v2811, 0.0
        %v3212 = vmax.f32 %v2816, 0.0
        %v3213 = vmax.f32 %v2819, 0.0
        %v3214 = vmax.f32 %v2824, 0.0
        %v3215 = vmax.f32 %v2827, 0.0
        %v3216 = vmax.f32 %v2832, 0.0
        %v3217 = vmax.f32 %v2835, 0.0
        %v3218 = vmax.f32 %v2840, 0.0
        %v3219 = vmax.f32 %v2843, 0.0
        %v3220 = vmax.f32 %v2848, 0.0
        %v3221 = vmax.f32 %v2851, 0.0
        %v3222 = vmax.f32 %v2856, 0.0
        %v3223 = vmax.f32 %v2859, 0.0
        %v3224 = vmax.f32 %v2864, 0.0
        %v3225 = vmax.f32 %v2867, 0.0
        %v3226 = vmax.f32 %v2872, 0.0
        %v3227 = vmax.f32 %v2875, 0.0
        %v3228 = vmax.f32 %v2880, 0.0
        %v3229 = vmax.f32 %v2883, 0.0
        %v3230 = vmax.f32 %v2888, 0.0
        %v3231 = vmax.f32 %v2891, 0.0
        %v3232 = vmax.f32 %v2896, 0.0
        %v3233 = vmax.f32 %v2899, 0.0
        %v3234 = vmax.f32 %v2904, 0.0
        %v3235 = vmax.f32 %v2907, 0.0
        %v3236 = vmax.f32 %v2912, 0.0
        %v3237 = vmax.f32 %v2915, 0.0
        %v3238 = vmax.f32 %v2920, 0.0
        %v3239 = vmax.f32 %v2923, 0.0
        %v3240 = vmax.f32 %v2928, 0.0
        %v3241 = vmax.f32 %v2931, 0.0
        %v3242 = vmax.f32 %v2936, 0.0
        %v3243 = vmax.f32 %v2939, 0.0
        %v3244 = vmax.f32 %v2944, 0.0
        %v3245 = vmax.f32 %v2947, 0.0
        %v3246 = vmax.f32 %v2952, 0.0
        %v3247 = vmax.f32 %v2955, 0.0
        %v3248 = vmax.f32 %v2960, 0.0
        %v3249 = vmax.f32 %v2963, 0.0
        %v3250 = vmax.f32 %v2968, 0.0
        %v3251 = vmax.f32 %v2971, 0.0
        %v3252 = vmax.f32 %v2976, 0.0
        %v3253 = vmax.f32 %v2979, 0.0
        %v3254 = vmax.f32 %v2984, 0.0
        %v3255 = vmax.f32 %v2987, 0.0
        %v3256 = vmax.f32 %v2992, 0.0
        %v3257 = vmax.f32 %v2995, 0.0
        %v3258 = vmax.f32 %v3000, 0.0
        %v3259 = vmax.f32 %v3003, 0.0
        %v3260 = vmax.f32 %v3008, 0.0
        %v3261 = vmax.f32 %v3011, 0.0
        %v3262 = vmax.f32 %v3016, 0.0
        %v3263 = vmax.f32 %v3019, 0.0
        %v3264 = vmax.f32 %v3024, 0.0
        %v3265 = vmax.f32 %v3027, 0.0
        %v3266 = vmax.f32 %v3032, 0.0
        %v3267 = vmax.f32 %v3035, 0.0
        %v3268 = vmax.f32 %v3040, 0.0
        %v3269 = vmax.f32 %v3043, 0.0
        %v3270 = vmax.f32 %v3048, 0.0
        %v3271 = vmax.f32 %v3051, 0.0
        %v3272 = vmax.f32 %v3056, 0.0
        %v3273 = vmax.f32 %v3059, 0.0
        %v3274 = vmax.f32 %v3064, 0.0
        %v3275 = vmax.f32 %v3067, 0.0
        %v3276 = vmax.f32 %v3072, 0.0
        %v3277 = vmax.f32 %v3075, 0.0
        %v3278 = vmax.f32 %v3080, 0.0
        %v3279 = vmax.f32 %v3083, 0.0
        %v3280 = vmax.f32 %v3088, 0.0
        %v3281 = vmax.f32 %v3091, 0.0
        %v3282 = vmax.f32 %v3096, 0.0
        %v3283 = vmax.f32 %v3099, 0.0
        %v3284 = vmax.f32 %v3104, 0.0
        %v3285 = vmax.f32 %v3107, 0.0
        %v3286 = vmax.f32 %v3112, 0.0
        %v3287 = vmax.f32 %v3115, 0.0
        %v3288 = vmax.f32 %v3120, 0.0
        %v3289 = vmax.f32 %v3123, 0.0
        %v3290 = vmax.f32 %v3128, 0.0
        %v3291 = vmax.f32 %v3131, 0.0
        %v3292 = vmax.f32 %v3136, 0.0
        %v3293 = vmax.f32 %v3139, 0.0
        %v3294 = vmax.f32 %v3144, 0.0
        %v3295 = vmax.f32 %v3147, 0.0
        %v3296 = vmax.f32 %v3152, 0.0
        %v3297 = vmax.f32 %v3155, 0.0
        %v3298 = vmax.f32 %v3160, 0.0
        %v3299 = vmax.f32 %v3163, 0.0
        %v3300 = vmax.f32 %v3168, 0.0
        %v3301 = vmax.f32 %v3171, 0.0
        %3302 = vmax.xlane.f32.xlu0 %v3174
        %v3303 = vpop.xlane.xlu0 %3302
        %3304 = vmax.xlane.f32.xlu0 %v3175
        %v3305 = vpop.xlane.xlu0 %3304
        %3306 = vmax.xlane.f32.xlu0 %v3176
        %v3307 = vpop.xlane.xlu0 %3306
        %3308 = vmax.xlane.f32.xlu0 %v3177
        %v3309 = vpop.xlane.xlu0 %3308
        %3310 = vmax.xlane.f32.xlu0 %v3178
        %v3311 = vpop.xlane.xlu0 %3310
        %3312 = vmax.xlane.f32.xlu0 %v3179
        %v3313 = vpop.xlane.xlu0 %3312
        %3314 = vmax.xlane.f32.xlu0 %v3180
        %v3315 = vpop.xlane.xlu0 %3314
        %3316 = vmax.xlane.f32.xlu0 %v3181
        %v3317 = vpop.xlane.xlu0 %3316
        %3318 = vmax.xlane.f32.xlu0 %v3182
        %v3319 = vpop.xlane.xlu0 %3318
        %3320 = vmax.xlane.f32.xlu0 %v3183
        %v3321 = vpop.xlane.xlu0 %3320
        %3322 = vmax.xlane.f32.xlu0 %v3184
        %v3323 = vpop.xlane.xlu0 %3322
        %3324 = vmax.xlane.f32.xlu0 %v3185
        %v3325 = vpop.xlane.xlu0 %3324
        %3326 = vmax.xlane.f32.xlu0 %v3186
        %v3327 = vpop.xlane.xlu0 %3326
        %3328 = vmax.xlane.f32.xlu0 %v3187
        %v3329 = vpop.xlane.xlu0 %3328
        %3330 = vmax.xlane.f32.xlu0 %v3188
        %v3331 = vpop.xlane.xlu0 %3330
        %3332 = vmax.xlane.f32.xlu0 %v3189
        %v3333 = vpop.xlane.xlu0 %3332
        %3334 = vmax.xlane.f32.xlu0 %v3190
        %v3335 = vpop.xlane.xlu0 %3334
        %3336 = vmax.xlane.f32.xlu0 %v3191
        %v3337 = vpop.xlane.xlu0 %3336
        %3338 = vmax.xlane.f32.xlu0 %v3192
        %v3339 = vpop.xlane.xlu0 %3338
        %3340 = vmax.xlane.f32.xlu0 %v3193
        %v3341 = vpop.xlane.xlu0 %3340
        %3342 = vmax.xlane.f32.xlu0 %v3194
        %v3343 = vpop.xlane.xlu0 %3342
        %3344 = vmax.xlane.f32.xlu0 %v3195
        %v3345 = vpop.xlane.xlu0 %3344
        %3346 = vmax.xlane.f32.xlu0 %v3196
        %v3347 = vpop.xlane.xlu0 %3346
        %3348 = vmax.xlane.f32.xlu0 %v3197
        %v3349 = vpop.xlane.xlu0 %3348
        %3350 = vmax.xlane.f32.xlu0 %v3198
        %v3351 = vpop.xlane.xlu0 %3350
        %3352 = vmax.xlane.f32.xlu0 %v3199
        %v3353 = vpop.xlane.xlu0 %3352
        %3354 = vmax.xlane.f32.xlu0 %v3200
        %v3355 = vpop.xlane.xlu0 %3354
        %3356 = vmax.xlane.f32.xlu0 %v3201
        %v3357 = vpop.xlane.xlu0 %3356
        %3358 = vmax.xlane.f32.xlu0 %v3202
        %v3359 = vpop.xlane.xlu0 %3358
        %3360 = vmax.xlane.f32.xlu0 %v3203
        %v3361 = vpop.xlane.xlu0 %3360
        %3362 = vmax.xlane.f32.xlu0 %v3204
        %v3363 = vpop.xlane.xlu0 %3362
        %3364 = vmax.xlane.f32.xlu0 %v3205
        %v3365 = vpop.xlane.xlu0 %3364
        %3366 = vmax.xlane.f32.xlu0 %v3206
        %v3367 = vpop.xlane.xlu0 %3366
        %3368 = vmax.xlane.f32.xlu0 %v3207
        %v3369 = vpop.xlane.xlu0 %3368
        %3370 = vmax.xlane.f32.xlu0 %v3208
        %v3371 = vpop.xlane.xlu0 %3370
        %3372 = vmax.xlane.f32.xlu0 %v3209
        %v3373 = vpop.xlane.xlu0 %3372
        %3374 = vmax.xlane.f32.xlu0 %v3210
        %v3375 = vpop.xlane.xlu0 %3374
        %3376 = vmax.xlane.f32.xlu0 %v3211
        %v3377 = vpop.xlane.xlu0 %3376
        %3378 = vmax.xlane.f32.xlu0 %v3212
        %v3379 = vpop.xlane.xlu0 %3378
        %3380 = vmax.xlane.f32.xlu0 %v3213
        %v3381 = vpop.xlane.xlu0 %3380
        %3382 = vmax.xlane.f32.xlu0 %v3214
        %v3383 = vpop.xlane.xlu0 %3382
        %3384 = vmax.xlane.f32.xlu0 %v3215
        %v3385 = vpop.xlane.xlu0 %3384
        %3386 = vmax.xlane.f32.xlu0 %v3216
        %v3387 = vpop.xlane.xlu0 %3386
        %3388 = vmax.xlane.f32.xlu0 %v3217
        %v3389 = vpop.xlane.xlu0 %3388
        %3390 = vmax.xlane.f32.xlu0 %v3218
        %v3391 = vpop.xlane.xlu0 %3390
        %3392 = vmax.xlane.f32.xlu0 %v3219
        %v3393 = vpop.xlane.xlu0 %3392
        %3394 = vmax.xlane.f32.xlu0 %v3220
        %v3395 = vpop.xlane.xlu0 %3394
        %3396 = vmax.xlane.f32.xlu0 %v3221
        %v3397 = vpop.xlane.xlu0 %3396
        %3398 = vmax.xlane.f32.xlu0 %v3222
        %v3399 = vpop.xlane.xlu0 %3398
        %3400 = vmax.xlane.f32.xlu0 %v3223
        %v3401 = vpop.xlane.xlu0 %3400
        %3402 = vmax.xlane.f32.xlu0 %v3224
        %v3403 = vpop.xlane.xlu0 %3402
        %3404 = vmax.xlane.f32.xlu0 %v3225
        %v3405 = vpop.xlane.xlu0 %3404
        %3406 = vmax.xlane.f32.xlu0 %v3226
        %v3407 = vpop.xlane.xlu0 %3406
        %3408 = vmax.xlane.f32.xlu0 %v3227
        %v3409 = vpop.xlane.xlu0 %3408
        %3410 = vmax.xlane.f32.xlu0 %v3228
        %v3411 = vpop.xlane.xlu0 %3410
        %3412 = vmax.xlane.f32.xlu0 %v3229
        %v3413 = vpop.xlane.xlu0 %3412
        %3414 = vmax.xlane.f32.xlu0 %v3230
        %v3415 = vpop.xlane.xlu0 %3414
        %3416 = vmax.xlane.f32.xlu0 %v3231
        %v3417 = vpop.xlane.xlu0 %3416
        %3418 = vmax.xlane.f32.xlu0 %v3232
        %v3419 = vpop.xlane.xlu0 %3418
        %3420 = vmax.xlane.f32.xlu0 %v3233
        %v3421 = vpop.xlane.xlu0 %3420
        %3422 = vmax.xlane.f32.xlu0 %v3234
        %v3423 = vpop.xlane.xlu0 %3422
        %3424 = vmax.xlane.f32.xlu0 %v3235
        %v3425 = vpop.xlane.xlu0 %3424
        %3426 = vmax.xlane.f32.xlu0 %v3236
        %v3427 = vpop.xlane.xlu0 %3426
        %3428 = vmax.xlane.f32.xlu0 %v3237
        %v3429 = vpop.xlane.xlu0 %3428
        %3430 = vmax.xlane.f32.xlu0 %v3238
        %v3431 = vpop.xlane.xlu0 %3430
        %3432 = vmax.xlane.f32.xlu0 %v3239
        %v3433 = vpop.xlane.xlu0 %3432
        %3434 = vmax.xlane.f32.xlu0 %v3240
        %v3435 = vpop.xlane.xlu0 %3434
        %3436 = vmax.xlane.f32.xlu0 %v3241
        %v3437 = vpop.xlane.xlu0 %3436
        %3438 = vmax.xlane.f32.xlu0 %v3242
        %v3439 = vpop.xlane.xlu0 %3438
        %3440 = vmax.xlane.f32.xlu0 %v3243
        %v3441 = vpop.xlane.xlu0 %3440
        %3442 = vmax.xlane.f32.xlu0 %v3244
        %v3443 = vpop.xlane.xlu0 %3442
        %3444 = vmax.xlane.f32.xlu0 %v3245
        %v3445 = vpop.xlane.xlu0 %3444
        %3446 = vmax.xlane.f32.xlu0 %v3246
        %v3447 = vpop.xlane.xlu0 %3446
        %3448 = vmax.xlane.f32.xlu0 %v3247
        %v3449 = vpop.xlane.xlu0 %3448
        %3450 = vmax.xlane.f32.xlu0 %v3248
        %v3451 = vpop.xlane.xlu0 %3450
        %3452 = vmax.xlane.f32.xlu0 %v3249
        %v3453 = vpop.xlane.xlu0 %3452
        %3454 = vmax.xlane.f32.xlu0 %v3250
        %v3455 = vpop.xlane.xlu0 %3454
        %3456 = vmax.xlane.f32.xlu0 %v3251
        %v3457 = vpop.xlane.xlu0 %3456
        %3458 = vmax.xlane.f32.xlu0 %v3252
        %v3459 = vpop.xlane.xlu0 %3458
        %3460 = vmax.xlane.f32.xlu0 %v3253
        %v3461 = vpop.xlane.xlu0 %3460
        %3462 = vmax.xlane.f32.xlu0 %v3254
        %v3463 = vpop.xlane.xlu0 %3462
        %3464 = vmax.xlane.f32.xlu0 %v3255
        %v3465 = vpop.xlane.xlu0 %3464
        %3466 = vmax.xlane.f32.xlu0 %v3256
        %v3467 = vpop.xlane.xlu0 %3466
        %3468 = vmax.xlane.f32.xlu0 %v3257
        %v3469 = vpop.xlane.xlu0 %3468
        %3470 = vmax.xlane.f32.xlu0 %v3258
        %v3471 = vpop.xlane.xlu0 %3470
        %3472 = vmax.xlane.f32.xlu0 %v3259
        %v3473 = vpop.xlane.xlu0 %3472
        %3474 = vmax.xlane.f32.xlu0 %v3260
        %v3475 = vpop.xlane.xlu0 %3474
        %3476 = vmax.xlane.f32.xlu0 %v3261
        %v3477 = vpop.xlane.xlu0 %3476
        %3478 = vmax.xlane.f32.xlu0 %v3262
        %v3479 = vpop.xlane.xlu0 %3478
        %3480 = vmax.xlane.f32.xlu0 %v3263
        %v3481 = vpop.xlane.xlu0 %3480
        %3482 = vmax.xlane.f32.xlu0 %v3264
        %v3483 = vpop.xlane.xlu0 %3482
        %3484 = vmax.xlane.f32.xlu0 %v3265
        %v3485 = vpop.xlane.xlu0 %3484
        %3486 = vmax.xlane.f32.xlu0 %v3266
        %v3487 = vpop.xlane.xlu0 %3486
        %3488 = vmax.xlane.f32.xlu0 %v3267
        %v3489 = vpop.xlane.xlu0 %3488
        %3490 = vmax.xlane.f32.xlu0 %v3268
        %v3491 = vpop.xlane.xlu0 %3490
        %3492 = vmax.xlane.f32.xlu0 %v3269
        %v3493 = vpop.xlane.xlu0 %3492
        %3494 = vmax.xlane.f32.xlu0 %v3270
        %v3495 = vpop.xlane.xlu0 %3494
        %3496 = vmax.xlane.f32.xlu0 %v3271
        %v3497 = vpop.xlane.xlu0 %3496
        %3498 = vmax.xlane.f32.xlu0 %v3272
        %v3499 = vpop.xlane.xlu0 %3498
        %3500 = vmax.xlane.f32.xlu0 %v3273
        %v3501 = vpop.xlane.xlu0 %3500
        %3502 = vmax.xlane.f32.xlu0 %v3274
        %v3503 = vpop.xlane.xlu0 %3502
        %3504 = vmax.xlane.f32.xlu0 %v3275
        %v3505 = vpop.xlane.xlu0 %3504
        %3506 = vmax.xlane.f32.xlu0 %v3276
        %v3507 = vpop.xlane.xlu0 %3506
        %3508 = vmax.xlane.f32.xlu0 %v3277
        %v3509 = vpop.xlane.xlu0 %3508
        %3510 = vmax.xlane.f32.xlu0 %v3278
        %v3511 = vpop.xlane.xlu0 %3510
        %3512 = vmax.xlane.f32.xlu0 %v3279
        %v3513 = vpop.xlane.xlu0 %3512
        %3514 = vmax.xlane.f32.xlu0 %v3280
        %v3515 = vpop.xlane.xlu0 %3514
        %3516 = vmax.xlane.f32.xlu0 %v3281
        %v3517 = vpop.xlane.xlu0 %3516
        %3518 = vmax.xlane.f32.xlu0 %v3282
        %v3519 = vpop.xlane.xlu0 %3518
        %3520 = vmax.xlane.f32.xlu0 %v3283
        %v3521 = vpop.xlane.xlu0 %3520
        %3522 = vmax.xlane.f32.xlu0 %v3284
        %v3523 = vpop.xlane.xlu0 %3522
        %3524 = vmax.xlane.f32.xlu0 %v3285
        %v3525 = vpop.xlane.xlu0 %3524
        %3526 = vmax.xlane.f32.xlu0 %v3286
        %v3527 = vpop.xlane.xlu0 %3526
        %3528 = vmax.xlane.f32.xlu0 %v3287
        %v3529 = vpop.xlane.xlu0 %3528
        %3530 = vmax.xlane.f32.xlu0 %v3288
        %v3531 = vpop.xlane.xlu0 %3530
        %3532 = vmax.xlane.f32.xlu0 %v3289
        %v3533 = vpop.xlane.xlu0 %3532
        %3534 = vmax.xlane.f32.xlu0 %v3290
        %v3535 = vpop.xlane.xlu0 %3534
        %3536 = vmax.xlane.f32.xlu0 %v3291
        %v3537 = vpop.xlane.xlu0 %3536
        %3538 = vmax.xlane.f32.xlu0 %v3292
        %v3539 = vpop.xlane.xlu0 %3538
        %3540 = vmax.xlane.f32.xlu0 %v3293
        %v3541 = vpop.xlane.xlu0 %3540
        %3542 = vmax.xlane.f32.xlu0 %v3294
        %v3543 = vpop.xlane.xlu0 %3542
        %3544 = vmax.xlane.f32.xlu0 %v3295
        %v3545 = vpop.xlane.xlu0 %3544
        %3546 = vmax.xlane.f32.xlu0 %v3296
        %v3547 = vpop.xlane.xlu0 %3546
        %3548 = vmax.xlane.f32.xlu0 %v3297
        %v3549 = vpop.xlane.xlu0 %3548
        %3550 = vmax.xlane.f32.xlu0 %v3298
        %v3551 = vpop.xlane.xlu0 %3550
        %3552 = vmax.xlane.f32.xlu0 %v3299
        %v3553 = vpop.xlane.xlu0 %3552
        %3554 = vmax.xlane.f32.xlu0 %v3300
        %v3555 = vpop.xlane.xlu0 %3554
        %3556 = vmax.xlane.f32.xlu0 %v3301
        %v3557 = vpop.xlane.xlu0 %3556
        %v3558 = vpack.c.bf16 %v3305, %v3303
        %v3559 = vpack.c.bf16 %v3309, %v3307
        %v3560 = vpack.c.bf16 %v3313, %v3311
        %v3561 = vpack.c.bf16 %v3317, %v3315
        %v3562 = vpack.c.bf16 %v3321, %v3319
        %v3563 = vpack.c.bf16 %v3325, %v3323
        %v3564 = vpack.c.bf16 %v3329, %v3327
        %v3565 = vpack.c.bf16 %v3333, %v3331
        %v3566 = vpack.c.bf16 %v3337, %v3335
        %v3567 = vpack.c.bf16 %v3341, %v3339
        %v3568 = vpack.c.bf16 %v3345, %v3343
        %v3569 = vpack.c.bf16 %v3349, %v3347
        %v3570 = vpack.c.bf16 %v3353, %v3351
        %v3571 = vpack.c.bf16 %v3357, %v3355
        %v3572 = vpack.c.bf16 %v3361, %v3359
        %v3573 = vpack.c.bf16 %v3365, %v3363
        %v3574 = vpack.c.bf16 %v3369, %v3367
        %v3575 = vpack.c.bf16 %v3373, %v3371
        %v3576 = vpack.c.bf16 %v3377, %v3375
        %v3577 = vpack.c.bf16 %v3381, %v3379
        %v3578 = vpack.c.bf16 %v3385, %v3383
        %v3579 = vpack.c.bf16 %v3389, %v3387
        %v3580 = vpack.c.bf16 %v3393, %v3391
        %v3581 = vpack.c.bf16 %v3397, %v3395
        %v3582 = vpack.c.bf16 %v3401, %v3399
        %v3583 = vpack.c.bf16 %v3405, %v3403
        %v3584 = vpack.c.bf16 %v3409, %v3407
        %v3585 = vpack.c.bf16 %v3413, %v3411
        %v3586 = vpack.c.bf16 %v3417, %v3415
        %v3587 = vpack.c.bf16 %v3421, %v3419
        %v3588 = vpack.c.bf16 %v3425, %v3423
        %v3589 = vpack.c.bf16 %v3429, %v3427
        %v3590 = vpack.c.bf16 %v3433, %v3431
        %v3591 = vpack.c.bf16 %v3437, %v3435
        %v3592 = vpack.c.bf16 %v3441, %v3439
        %v3593 = vpack.c.bf16 %v3445, %v3443
        %v3594 = vpack.c.bf16 %v3449, %v3447
        %v3595 = vpack.c.bf16 %v3453, %v3451
        %v3596 = vpack.c.bf16 %v3457, %v3455
        %v3597 = vpack.c.bf16 %v3461, %v3459
        %v3598 = vpack.c.bf16 %v3465, %v3463
        %v3599 = vpack.c.bf16 %v3469, %v3467
        %v3600 = vpack.c.bf16 %v3473, %v3471
        %v3601 = vpack.c.bf16 %v3477, %v3475
        %v3602 = vpack.c.bf16 %v3481, %v3479
        %v3603 = vpack.c.bf16 %v3485, %v3483
        %v3604 = vpack.c.bf16 %v3489, %v3487
        %v3605 = vpack.c.bf16 %v3493, %v3491
        %v3606 = vpack.c.bf16 %v3497, %v3495
        %v3607 = vpack.c.bf16 %v3501, %v3499
        %v3608 = vpack.c.bf16 %v3505, %v3503
        %v3609 = vpack.c.bf16 %v3509, %v3507
        %v3610 = vpack.c.bf16 %v3513, %v3511
        %v3611 = vpack.c.bf16 %v3517, %v3515
        %v3612 = vpack.c.bf16 %v3521, %v3519
        %v3613 = vpack.c.bf16 %v3525, %v3523
        %v3614 = vpack.c.bf16 %v3529, %v3527
        %v3615 = vpack.c.bf16 %v3533, %v3531
        %v3616 = vpack.c.bf16 %v3537, %v3535
        %v3617 = vpack.c.bf16 %v3541, %v3539
        %v3618 = vpack.c.bf16 %v3545, %v3543
        %v3619 = vpack.c.bf16 %v3549, %v3547
        %v3620 = vpack.c.bf16 %v3553, %v3551
        %v3621 = vpack.c.bf16 %v3557, %v3555
        %v3622 = vld [vmem:[#allocation14] sm:$0xff]
        %v3623 = vld [vmem:[#allocation14 + $0x8] sm:$0xff]
        %v3624 = vld [vmem:[#allocation14 + $0x10] sm:$0xff]
        %v3625 = vld [vmem:[#allocation14 + $0x18] sm:$0xff]
        %v3626 = vld [vmem:[#allocation14 + $0x20] sm:$0xff]
        %v3627 = vld [vmem:[#allocation14 + $0x28] sm:$0xff]
        %v3628 = vld [vmem:[#allocation14 + $0x30] sm:$0xff]
        %v3629 = vld [vmem:[#allocation14 + $0x38] sm:$0xff]
        %v3630 = vld [vmem:[#allocation14 + $0x40] sm:$0xff]
        %v3631 = vld [vmem:[#allocation14 + $0x48] sm:$0xff]
        %v3632 = vld [vmem:[#allocation14 + $0x50] sm:$0xff]
        %v3633 = vld [vmem:[#allocation14 + $0x58] sm:$0xff]
        %v3634 = vld [vmem:[#allocation14 + $0x60] sm:$0xff]
        %v3635 = vld [vmem:[#allocation14 + $0x68] sm:$0xff]
        %v3636 = vld [vmem:[#allocation14 + $0x70] sm:$0xff]
        %v3637 = vld [vmem:[#allocation14 + $0x78] sm:$0xff]
        %v3638 = vld [vmem:[#allocation14 + $0x80] sm:$0xff]
        %v3639 = vld [vmem:[#allocation14 + $0x88] sm:$0xff]
        %v3640 = vld [vmem:[#allocation14 + $0x90] sm:$0xff]
        %v3641 = vld [vmem:[#allocation14 + $0x98] sm:$0xff]
        %v3642 = vld [vmem:[#allocation14 + $0xa0] sm:$0xff]
        %v3643 = vld [vmem:[#allocation14 + $0xa8] sm:$0xff]
        %v3644 = vld [vmem:[#allocation14 + $0xb0] sm:$0xff]
        %v3645 = vld [vmem:[#allocation14 + $0xb8] sm:$0xff]
        %v3646 = vld [vmem:[#allocation14 + $0xc0] sm:$0xff]
        %v3647 = vld [vmem:[#allocation14 + $0xc8] sm:$0xff]
        %v3648 = vld [vmem:[#allocation14 + $0xd0] sm:$0xff]
        %v3649 = vld [vmem:[#allocation14 + $0xd8] sm:$0xff]
        %v3650 = vld [vmem:[#allocation14 + $0xe0] sm:$0xff]
        %v3651 = vld [vmem:[#allocation14 + $0xe8] sm:$0xff]
        %v3652 = vld [vmem:[#allocation14 + $0xf0] sm:$0xff]
        %v3653 = vld [vmem:[#allocation14 + $0xf8] sm:$0xff]
        %v3654 = vld [vmem:[#allocation14 + $0x100] sm:$0xff]
        %v3655 = vld [vmem:[#allocation14 + $0x108] sm:$0xff]
        %v3656 = vld [vmem:[#allocation14 + $0x110] sm:$0xff]
        %v3657 = vld [vmem:[#allocation14 + $0x118] sm:$0xff]
        %v3658 = vld [vmem:[#allocation14 + $0x120] sm:$0xff]
        %v3659 = vld [vmem:[#allocation14 + $0x128] sm:$0xff]
        %v3660 = vld [vmem:[#allocation14 + $0x130] sm:$0xff]
        %v3661 = vld [vmem:[#allocation14 + $0x138] sm:$0xff]
        %v3662 = vld [vmem:[#allocation14 + $0x140] sm:$0xff]
        %v3663 = vld [vmem:[#allocation14 + $0x148] sm:$0xff]
        %v3664 = vld [vmem:[#allocation14 + $0x150] sm:$0xff]
        %v3665 = vld [vmem:[#allocation14 + $0x158] sm:$0xff]
        %v3666 = vld [vmem:[#allocation14 + $0x160] sm:$0xff]
        %v3667 = vld [vmem:[#allocation14 + $0x168] sm:$0xff]
        %v3668 = vld [vmem:[#allocation14 + $0x170] sm:$0xff]
        %v3669 = vld [vmem:[#allocation14 + $0x178] sm:$0xff]
        %v3670 = vld [vmem:[#allocation14 + $0x180] sm:$0xff]
        %v3671 = vld [vmem:[#allocation14 + $0x188] sm:$0xff]
        %v3672 = vld [vmem:[#allocation14 + $0x190] sm:$0xff]
        %v3673 = vld [vmem:[#allocation14 + $0x198] sm:$0xff]
        %v3674 = vld [vmem:[#allocation14 + $0x1a0] sm:$0xff]
        %v3675 = vld [vmem:[#allocation14 + $0x1a8] sm:$0xff]
        %v3676 = vld [vmem:[#allocation14 + $0x1b0] sm:$0xff]
        %v3677 = vld [vmem:[#allocation14 + $0x1b8] sm:$0xff]
        %v3678 = vld [vmem:[#allocation14 + $0x1c0] sm:$0xff]
        %v3679 = vld [vmem:[#allocation14 + $0x1c8] sm:$0xff]
        %v3680 = vld [vmem:[#allocation14 + $0x1d0] sm:$0xff]
        %v3681 = vld [vmem:[#allocation14 + $0x1d8] sm:$0xff]
        %v3682 = vld [vmem:[#allocation14 + $0x1e0] sm:$0xff]
        %v3683 = vld [vmem:[#allocation14 + $0x1e8] sm:$0xff]
        %v3684 = vld [vmem:[#allocation14 + $0x1f0] sm:$0xff]
        %v3685 = vld [vmem:[#allocation14 + $0x1f8] sm:$0xff]
        %v3686 = vld [vmem:[#allocation14 + $0x200] sm:$0xff]
        %v3687 = vld [vmem:[#allocation14 + $0x208] sm:$0xff]
        %v3688 = vld [vmem:[#allocation14 + $0x210] sm:$0xff]
        %v3689 = vld [vmem:[#allocation14 + $0x218] sm:$0xff]
        %v3690 = vld [vmem:[#allocation14 + $0x220] sm:$0xff]
        %v3691 = vld [vmem:[#allocation14 + $0x228] sm:$0xff]
        %v3692 = vld [vmem:[#allocation14 + $0x230] sm:$0xff]
        %v3693 = vld [vmem:[#allocation14 + $0x238] sm:$0xff]
        %v3694 = vld [vmem:[#allocation14 + $0x240] sm:$0xff]
        %v3695 = vld [vmem:[#allocation14 + $0x248] sm:$0xff]
        %v3696 = vld [vmem:[#allocation14 + $0x250] sm:$0xff]
        %v3697 = vld [vmem:[#allocation14 + $0x258] sm:$0xff]
        %v3698 = vld [vmem:[#allocation14 + $0x260] sm:$0xff]
        %v3699 = vld [vmem:[#allocation14 + $0x268] sm:$0xff]
        %v3700 = vld [vmem:[#allocation14 + $0x270] sm:$0xff]
        %v3701 = vld [vmem:[#allocation14 + $0x278] sm:$0xff]
        %v3702 = vld [vmem:[#allocation14 + $0x280] sm:$0xff]
        %v3703 = vld [vmem:[#allocation14 + $0x288] sm:$0xff]
        %v3704 = vld [vmem:[#allocation14 + $0x290] sm:$0xff]
        %v3705 = vld [vmem:[#allocation14 + $0x298] sm:$0xff]
        %v3706 = vld [vmem:[#allocation14 + $0x2a0] sm:$0xff]
        %v3707 = vld [vmem:[#allocation14 + $0x2a8] sm:$0xff]
        %v3708 = vld [vmem:[#allocation14 + $0x2b0] sm:$0xff]
        %v3709 = vld [vmem:[#allocation14 + $0x2b8] sm:$0xff]
        %v3710 = vld [vmem:[#allocation14 + $0x2c0] sm:$0xff]
        %v3711 = vld [vmem:[#allocation14 + $0x2c8] sm:$0xff]
        %v3712 = vld [vmem:[#allocation14 + $0x2d0] sm:$0xff]
        %v3713 = vld [vmem:[#allocation14 + $0x2d8] sm:$0xff]
        %v3714 = vld [vmem:[#allocation14 + $0x2e0] sm:$0xff]
        %v3715 = vld [vmem:[#allocation14 + $0x2e8] sm:$0xff]
        %v3716 = vld [vmem:[#allocation14 + $0x2f0] sm:$0xff]
        %v3717 = vld [vmem:[#allocation14 + $0x2f8] sm:$0xff]
        %v3718 = vld [vmem:[#allocation14 + $0x300] sm:$0xff]
        %v3719 = vld [vmem:[#allocation14 + $0x308] sm:$0xff]
        %v3720 = vld [vmem:[#allocation14 + $0x310] sm:$0xff]
        %v3721 = vld [vmem:[#allocation14 + $0x318] sm:$0xff]
        %v3722 = vld [vmem:[#allocation14 + $0x320] sm:$0xff]
        %v3723 = vld [vmem:[#allocation14 + $0x328] sm:$0xff]
        %v3724 = vld [vmem:[#allocation14 + $0x330] sm:$0xff]
        %v3725 = vld [vmem:[#allocation14 + $0x338] sm:$0xff]
        %v3726 = vld [vmem:[#allocation14 + $0x340] sm:$0xff]
        %v3727 = vld [vmem:[#allocation14 + $0x348] sm:$0xff]
        %v3728 = vld [vmem:[#allocation14 + $0x350] sm:$0xff]
        %v3729 = vld [vmem:[#allocation14 + $0x358] sm:$0xff]
        %v3730 = vld [vmem:[#allocation14 + $0x360] sm:$0xff]
        %v3731 = vld [vmem:[#allocation14 + $0x368] sm:$0xff]
        %v3732 = vld [vmem:[#allocation14 + $0x370] sm:$0xff]
        %v3733 = vld [vmem:[#allocation14 + $0x378] sm:$0xff]
        %v3734 = vld [vmem:[#allocation14 + $0x380] sm:$0xff]
        %v3735 = vld [vmem:[#allocation14 + $0x388] sm:$0xff]
        %v3736 = vld [vmem:[#allocation14 + $0x390] sm:$0xff]
        %v3737 = vld [vmem:[#allocation14 + $0x398] sm:$0xff]
        %v3738 = vld [vmem:[#allocation14 + $0x3a0] sm:$0xff]
        %v3739 = vld [vmem:[#allocation14 + $0x3a8] sm:$0xff]
        %v3740 = vld [vmem:[#allocation14 + $0x3b0] sm:$0xff]
        %v3741 = vld [vmem:[#allocation14 + $0x3b8] sm:$0xff]
        %v3742 = vld [vmem:[#allocation14 + $0x3c0] sm:$0xff]
        %v3743 = vld [vmem:[#allocation14 + $0x3c8] sm:$0xff]
        %v3744 = vld [vmem:[#allocation14 + $0x3d0] sm:$0xff]
        %v3745 = vld [vmem:[#allocation14 + $0x3d8] sm:$0xff]
        %v3746 = vld [vmem:[#allocation14 + $0x3e0] sm:$0xff]
        %v3747 = vld [vmem:[#allocation14 + $0x3e8] sm:$0xff]
        %v3748 = vld [vmem:[#allocation14 + $0x3f0] sm:$0xff]
        %v3749 = vld [vmem:[#allocation14 + $0x3f8] sm:$0xff]
        %v3750 = vld [vmem:[#allocation14 + $0x400] sm:$0xff]
        %v3751 = vld [vmem:[#allocation14 + $0x408] sm:$0xff]
        %v3752 = vld [vmem:[#allocation14 + $0x410] sm:$0xff]
        %v3753 = vld [vmem:[#allocation14 + $0x418] sm:$0xff]
        %v3754 = vld [vmem:[#allocation14 + $0x420] sm:$0xff]
        %v3755 = vld [vmem:[#allocation14 + $0x428] sm:$0xff]
        %v3756 = vld [vmem:[#allocation14 + $0x430] sm:$0xff]
        %v3757 = vld [vmem:[#allocation14 + $0x438] sm:$0xff]
        %v3758 = vld [vmem:[#allocation14 + $0x440] sm:$0xff]
        %v3759 = vld [vmem:[#allocation14 + $0x448] sm:$0xff]
        %v3760 = vld [vmem:[#allocation14 + $0x450] sm:$0xff]
        %v3761 = vld [vmem:[#allocation14 + $0x458] sm:$0xff]
        %v3762 = vld [vmem:[#allocation14 + $0x460] sm:$0xff]
        %v3763 = vld [vmem:[#allocation14 + $0x468] sm:$0xff]
        %v3764 = vld [vmem:[#allocation14 + $0x470] sm:$0xff]
        %v3765 = vld [vmem:[#allocation14 + $0x478] sm:$0xff]
        %v3766 = vld [vmem:[#allocation14 + $0x480] sm:$0xff]
        %v3767 = vld [vmem:[#allocation14 + $0x488] sm:$0xff]
        %v3768 = vld [vmem:[#allocation14 + $0x490] sm:$0xff]
        %v3769 = vld [vmem:[#allocation14 + $0x498] sm:$0xff]
        %v3770 = vld [vmem:[#allocation14 + $0x4a0] sm:$0xff]
        %v3771 = vld [vmem:[#allocation14 + $0x4a8] sm:$0xff]
        %v3772 = vld [vmem:[#allocation14 + $0x4b0] sm:$0xff]
        %v3773 = vld [vmem:[#allocation14 + $0x4b8] sm:$0xff]
        %v3774 = vld [vmem:[#allocation14 + $0x4c0] sm:$0xff]
        %v3775 = vld [vmem:[#allocation14 + $0x4c8] sm:$0xff]
        %v3776 = vld [vmem:[#allocation14 + $0x4d0] sm:$0xff]
        %v3777 = vld [vmem:[#allocation14 + $0x4d8] sm:$0xff]
        %v3778 = vld [vmem:[#allocation14 + $0x4e0] sm:$0xff]
        %v3779 = vld [vmem:[#allocation14 + $0x4e8] sm:$0xff]
        %v3780 = vld [vmem:[#allocation14 + $0x4f0] sm:$0xff]
        %v3781 = vld [vmem:[#allocation14 + $0x4f8] sm:$0xff]
        %v3782 = vld [vmem:[#allocation14 + $0x500] sm:$0xff]
        %v3783 = vld [vmem:[#allocation14 + $0x508] sm:$0xff]
        %v3784 = vld [vmem:[#allocation14 + $0x510] sm:$0xff]
        %v3785 = vld [vmem:[#allocation14 + $0x518] sm:$0xff]
        %v3786 = vld [vmem:[#allocation14 + $0x520] sm:$0xff]
        %v3787 = vld [vmem:[#allocation14 + $0x528] sm:$0xff]
        %v3788 = vld [vmem:[#allocation14 + $0x530] sm:$0xff]
        %v3789 = vld [vmem:[#allocation14 + $0x538] sm:$0xff]
        %v3790 = vld [vmem:[#allocation14 + $0x540] sm:$0xff]
        %v3791 = vld [vmem:[#allocation14 + $0x548] sm:$0xff]
        %v3792 = vld [vmem:[#allocation14 + $0x550] sm:$0xff]
        %v3793 = vld [vmem:[#allocation14 + $0x558] sm:$0xff]
        %v3794 = vld [vmem:[#allocation14 + $0x560] sm:$0xff]
        %v3795 = vld [vmem:[#allocation14 + $0x568] sm:$0xff]
        %v3796 = vld [vmem:[#allocation14 + $0x570] sm:$0xff]
        %v3797 = vld [vmem:[#allocation14 + $0x578] sm:$0xff]
        %v3798 = vld [vmem:[#allocation14 + $0x580] sm:$0xff]
        %v3799 = vld [vmem:[#allocation14 + $0x588] sm:$0xff]
        %v3800 = vld [vmem:[#allocation14 + $0x590] sm:$0xff]
        %v3801 = vld [vmem:[#allocation14 + $0x598] sm:$0xff]
        %v3802 = vld [vmem:[#allocation14 + $0x5a0] sm:$0xff]
        %v3803 = vld [vmem:[#allocation14 + $0x5a8] sm:$0xff]
        %v3804 = vld [vmem:[#allocation14 + $0x5b0] sm:$0xff]
        %v3805 = vld [vmem:[#allocation14 + $0x5b8] sm:$0xff]
        %v3806 = vld [vmem:[#allocation14 + $0x5c0] sm:$0xff]
        %v3807 = vld [vmem:[#allocation14 + $0x5c8] sm:$0xff]
        %v3808 = vld [vmem:[#allocation14 + $0x5d0] sm:$0xff]
        %v3809 = vld [vmem:[#allocation14 + $0x5d8] sm:$0xff]
        %v3810 = vld [vmem:[#allocation14 + $0x5e0] sm:$0xff]
        %v3811 = vld [vmem:[#allocation14 + $0x5e8] sm:$0xff]
        %v3812 = vld [vmem:[#allocation14 + $0x5f0] sm:$0xff]
        %v3813 = vld [vmem:[#allocation14 + $0x5f8] sm:$0xff]
        %v3814 = vld [vmem:[#allocation14 + $0x600] sm:$0xff]
        %v3815 = vld [vmem:[#allocation14 + $0x608] sm:$0xff]
        %v3816 = vld [vmem:[#allocation14 + $0x610] sm:$0xff]
        %v3817 = vld [vmem:[#allocation14 + $0x618] sm:$0xff]
        %v3818 = vld [vmem:[#allocation14 + $0x620] sm:$0xff]
        %v3819 = vld [vmem:[#allocation14 + $0x628] sm:$0xff]
        %v3820 = vld [vmem:[#allocation14 + $0x630] sm:$0xff]
        %v3821 = vld [vmem:[#allocation14 + $0x638] sm:$0xff]
        %v3822 = vld [vmem:[#allocation14 + $0x640] sm:$0xff]
        %v3823 = vld [vmem:[#allocation14 + $0x648] sm:$0xff]
        %v3824 = vld [vmem:[#allocation14 + $0x650] sm:$0xff]
        %v3825 = vld [vmem:[#allocation14 + $0x658] sm:$0xff]
        %v3826 = vld [vmem:[#allocation14 + $0x660] sm:$0xff]
        %v3827 = vld [vmem:[#allocation14 + $0x668] sm:$0xff]
        %v3828 = vld [vmem:[#allocation14 + $0x670] sm:$0xff]
        %v3829 = vld [vmem:[#allocation14 + $0x678] sm:$0xff]
        %v3830 = vld [vmem:[#allocation14 + $0x680] sm:$0xff]
        %v3831 = vld [vmem:[#allocation14 + $0x688] sm:$0xff]
        %v3832 = vld [vmem:[#allocation14 + $0x690] sm:$0xff]
        %v3833 = vld [vmem:[#allocation14 + $0x698] sm:$0xff]
        %v3834 = vld [vmem:[#allocation14 + $0x6a0] sm:$0xff]
        %v3835 = vld [vmem:[#allocation14 + $0x6a8] sm:$0xff]
        %v3836 = vld [vmem:[#allocation14 + $0x6b0] sm:$0xff]
        %v3837 = vld [vmem:[#allocation14 + $0x6b8] sm:$0xff]
        %v3838 = vld [vmem:[#allocation14 + $0x6c0] sm:$0xff]
        %v3839 = vld [vmem:[#allocation14 + $0x6c8] sm:$0xff]
        %v3840 = vld [vmem:[#allocation14 + $0x6d0] sm:$0xff]
        %v3841 = vld [vmem:[#allocation14 + $0x6d8] sm:$0xff]
        %v3842 = vld [vmem:[#allocation14 + $0x6e0] sm:$0xff]
        %v3843 = vld [vmem:[#allocation14 + $0x6e8] sm:$0xff]
        %v3844 = vld [vmem:[#allocation14 + $0x6f0] sm:$0xff]
        %v3845 = vld [vmem:[#allocation14 + $0x6f8] sm:$0xff]
        %v3846 = vld [vmem:[#allocation14 + $0x700] sm:$0xff]
        %v3847 = vld [vmem:[#allocation14 + $0x708] sm:$0xff]
        %v3848 = vld [vmem:[#allocation14 + $0x710] sm:$0xff]
        %v3849 = vld [vmem:[#allocation14 + $0x718] sm:$0xff]
        %v3850 = vld [vmem:[#allocation14 + $0x720] sm:$0xff]
        %v3851 = vld [vmem:[#allocation14 + $0x728] sm:$0xff]
        %v3852 = vld [vmem:[#allocation14 + $0x730] sm:$0xff]
        %v3853 = vld [vmem:[#allocation14 + $0x738] sm:$0xff]
        %v3854 = vld [vmem:[#allocation14 + $0x740] sm:$0xff]
        %v3855 = vld [vmem:[#allocation14 + $0x748] sm:$0xff]
        %v3856 = vld [vmem:[#allocation14 + $0x750] sm:$0xff]
        %v3857 = vld [vmem:[#allocation14 + $0x758] sm:$0xff]
        %v3858 = vld [vmem:[#allocation14 + $0x760] sm:$0xff]
        %v3859 = vld [vmem:[#allocation14 + $0x768] sm:$0xff]
        %v3860 = vld [vmem:[#allocation14 + $0x770] sm:$0xff]
        %v3861 = vld [vmem:[#allocation14 + $0x778] sm:$0xff]
        %v3862 = vld [vmem:[#allocation14 + $0x780] sm:$0xff]
        %v3863 = vld [vmem:[#allocation14 + $0x788] sm:$0xff]
        %v3864 = vld [vmem:[#allocation14 + $0x790] sm:$0xff]
        %v3865 = vld [vmem:[#allocation14 + $0x798] sm:$0xff]
        %v3866 = vld [vmem:[#allocation14 + $0x7a0] sm:$0xff]
        %v3867 = vld [vmem:[#allocation14 + $0x7a8] sm:$0xff]
        %v3868 = vld [vmem:[#allocation14 + $0x7b0] sm:$0xff]
        %v3869 = vld [vmem:[#allocation14 + $0x7b8] sm:$0xff]
        %v3870 = vld [vmem:[#allocation14 + $0x7c0] sm:$0xff]
        %v3871 = vld [vmem:[#allocation14 + $0x7c8] sm:$0xff]
        %v3872 = vld [vmem:[#allocation14 + $0x7d0] sm:$0xff]
        %v3873 = vld [vmem:[#allocation14 + $0x7d8] sm:$0xff]
        %v3874 = vld [vmem:[#allocation14 + $0x7e0] sm:$0xff]
        %v3875 = vld [vmem:[#allocation14 + $0x7e8] sm:$0xff]
        %v3876 = vld [vmem:[#allocation14 + $0x7f0] sm:$0xff]
        %v3877 = vld [vmem:[#allocation14 + $0x7f8] sm:$0xff]
        %v3878 = vld [vmem:[#allocation16] sm:$0xff]
        %v3879 = vld [vmem:[#allocation16 + $0x8] sm:$0xff]
        %v3880 = vld [vmem:[#allocation16 + $0x10] sm:$0xff]
        %v3881 = vld [vmem:[#allocation16 + $0x18] sm:$0xff]
        %v3882 = vld [vmem:[#allocation16 + $0x20] sm:$0xff]
        %v3883 = vld [vmem:[#allocation16 + $0x28] sm:$0xff]
        %v3884 = vld [vmem:[#allocation16 + $0x30] sm:$0xff]
        %v3885 = vld [vmem:[#allocation16 + $0x38] sm:$0xff]
        %v3886 = vld [vmem:[#allocation16 + $0x40] sm:$0xff]
        %v3887 = vld [vmem:[#allocation16 + $0x48] sm:$0xff]
        %v3888 = vld [vmem:[#allocation16 + $0x50] sm:$0xff]
        %v3889 = vld [vmem:[#allocation16 + $0x58] sm:$0xff]
        %v3890 = vld [vmem:[#allocation16 + $0x60] sm:$0xff]
        %v3891 = vld [vmem:[#allocation16 + $0x68] sm:$0xff]
        %v3892 = vld [vmem:[#allocation16 + $0x70] sm:$0xff]
        %v3893 = vld [vmem:[#allocation16 + $0x78] sm:$0xff]
        %v3894 = vld [vmem:[#allocation16 + $0x80] sm:$0xff]
        %v3895 = vld [vmem:[#allocation16 + $0x88] sm:$0xff]
        %v3896 = vld [vmem:[#allocation16 + $0x90] sm:$0xff]
        %v3897 = vld [vmem:[#allocation16 + $0x98] sm:$0xff]
        %v3898 = vld [vmem:[#allocation16 + $0xa0] sm:$0xff]
        %v3899 = vld [vmem:[#allocation16 + $0xa8] sm:$0xff]
        %v3900 = vld [vmem:[#allocation16 + $0xb0] sm:$0xff]
        %v3901 = vld [vmem:[#allocation16 + $0xb8] sm:$0xff]
        %v3902 = vld [vmem:[#allocation16 + $0xc0] sm:$0xff]
        %v3903 = vld [vmem:[#allocation16 + $0xc8] sm:$0xff]
        %v3904 = vld [vmem:[#allocation16 + $0xd0] sm:$0xff]
        %v3905 = vld [vmem:[#allocation16 + $0xd8] sm:$0xff]
        %v3906 = vld [vmem:[#allocation16 + $0xe0] sm:$0xff]
        %v3907 = vld [vmem:[#allocation16 + $0xe8] sm:$0xff]
        %v3908 = vld [vmem:[#allocation16 + $0xf0] sm:$0xff]
        %v3909 = vld [vmem:[#allocation16 + $0xf8] sm:$0xff]
        %v3910 = vld [vmem:[#allocation16 + $0x100] sm:$0xff]
        %v3911 = vld [vmem:[#allocation16 + $0x108] sm:$0xff]
        %v3912 = vld [vmem:[#allocation16 + $0x110] sm:$0xff]
        %v3913 = vld [vmem:[#allocation16 + $0x118] sm:$0xff]
        %v3914 = vld [vmem:[#allocation16 + $0x120] sm:$0xff]
        %v3915 = vld [vmem:[#allocation16 + $0x128] sm:$0xff]
        %v3916 = vld [vmem:[#allocation16 + $0x130] sm:$0xff]
        %v3917 = vld [vmem:[#allocation16 + $0x138] sm:$0xff]
        %v3918 = vld [vmem:[#allocation16 + $0x140] sm:$0xff]
        %v3919 = vld [vmem:[#allocation16 + $0x148] sm:$0xff]
        %v3920 = vld [vmem:[#allocation16 + $0x150] sm:$0xff]
        %v3921 = vld [vmem:[#allocation16 + $0x158] sm:$0xff]
        %v3922 = vld [vmem:[#allocation16 + $0x160] sm:$0xff]
        %v3923 = vld [vmem:[#allocation16 + $0x168] sm:$0xff]
        %v3924 = vld [vmem:[#allocation16 + $0x170] sm:$0xff]
        %v3925 = vld [vmem:[#allocation16 + $0x178] sm:$0xff]
        %v3926 = vld [vmem:[#allocation16 + $0x180] sm:$0xff]
        %v3927 = vld [vmem:[#allocation16 + $0x188] sm:$0xff]
        %v3928 = vld [vmem:[#allocation16 + $0x190] sm:$0xff]
        %v3929 = vld [vmem:[#allocation16 + $0x198] sm:$0xff]
        %v3930 = vld [vmem:[#allocation16 + $0x1a0] sm:$0xff]
        %v3931 = vld [vmem:[#allocation16 + $0x1a8] sm:$0xff]
        %v3932 = vld [vmem:[#allocation16 + $0x1b0] sm:$0xff]
        %v3933 = vld [vmem:[#allocation16 + $0x1b8] sm:$0xff]
        %v3934 = vld [vmem:[#allocation16 + $0x1c0] sm:$0xff]
        %v3935 = vld [vmem:[#allocation16 + $0x1c8] sm:$0xff]
        %v3936 = vld [vmem:[#allocation16 + $0x1d0] sm:$0xff]
        %v3937 = vld [vmem:[#allocation16 + $0x1d8] sm:$0xff]
        %v3938 = vld [vmem:[#allocation16 + $0x1e0] sm:$0xff]
        %v3939 = vld [vmem:[#allocation16 + $0x1e8] sm:$0xff]
        %v3940 = vld [vmem:[#allocation16 + $0x1f0] sm:$0xff]
        %v3941 = vld [vmem:[#allocation16 + $0x1f8] sm:$0xff]
        %3943 = vset.pattern.permute.xlu0 0
        %3944 = vperm.xlu0 %3943, %v3878
        %v3945 = vpop.permute.xlu0 %3944
        %3948 = vset.pattern.permute.xlu0 0
        %3949 = vperm.xlu0 %3948, %v3879
        %v3950 = vpop.permute.xlu0 %3949
        %3953 = vset.pattern.permute.xlu0 0
        %3954 = vperm.xlu0 %3953, %v3880
        %v3955 = vpop.permute.xlu0 %3954
        %3958 = vset.pattern.permute.xlu0 0
        %3959 = vperm.xlu0 %3958, %v3881
        %v3960 = vpop.permute.xlu0 %3959
        %3963 = vset.pattern.permute.xlu0 0
        %3964 = vperm.xlu0 %3963, %v3882
        %v3965 = vpop.permute.xlu0 %3964
        %3968 = vset.pattern.permute.xlu0 0
        %3969 = vperm.xlu0 %3968, %v3883
        %v3970 = vpop.permute.xlu0 %3969
        %3973 = vset.pattern.permute.xlu0 0
        %3974 = vperm.xlu0 %3973, %v3884
        %v3975 = vpop.permute.xlu0 %3974
        %3978 = vset.pattern.permute.xlu0 0
        %3979 = vperm.xlu0 %3978, %v3885
        %v3980 = vpop.permute.xlu0 %3979
        %3983 = vset.pattern.permute.xlu0 0
        %3984 = vperm.xlu0 %3983, %v3886
        %v3985 = vpop.permute.xlu0 %3984
        %3988 = vset.pattern.permute.xlu0 0
        %3989 = vperm.xlu0 %3988, %v3887
        %v3990 = vpop.permute.xlu0 %3989
        %3993 = vset.pattern.permute.xlu0 0
        %3994 = vperm.xlu0 %3993, %v3888
        %v3995 = vpop.permute.xlu0 %3994
        %3998 = vset.pattern.permute.xlu0 0
        %3999 = vperm.xlu0 %3998, %v3889
        %v4000 = vpop.permute.xlu0 %3999
        %4003 = vset.pattern.permute.xlu0 0
        %4004 = vperm.xlu0 %4003, %v3890
        %v4005 = vpop.permute.xlu0 %4004
        %4008 = vset.pattern.permute.xlu0 0
        %4009 = vperm.xlu0 %4008, %v3891
        %v4010 = vpop.permute.xlu0 %4009
        %4013 = vset.pattern.permute.xlu0 0
        %4014 = vperm.xlu0 %4013, %v3892
        %v4015 = vpop.permute.xlu0 %4014
        %4018 = vset.pattern.permute.xlu0 0
        %4019 = vperm.xlu0 %4018, %v3893
        %v4020 = vpop.permute.xlu0 %4019
        %4023 = vset.pattern.permute.xlu0 0
        %4024 = vperm.xlu0 %4023, %v3894
        %v4025 = vpop.permute.xlu0 %4024
        %4028 = vset.pattern.permute.xlu0 0
        %4029 = vperm.xlu0 %4028, %v3895
        %v4030 = vpop.permute.xlu0 %4029
        %4033 = vset.pattern.permute.xlu0 0
        %4034 = vperm.xlu0 %4033, %v3896
        %v4035 = vpop.permute.xlu0 %4034
        %4038 = vset.pattern.permute.xlu0 0
        %4039 = vperm.xlu0 %4038, %v3897
        %v4040 = vpop.permute.xlu0 %4039
        %4043 = vset.pattern.permute.xlu0 0
        %4044 = vperm.xlu0 %4043, %v3898
        %v4045 = vpop.permute.xlu0 %4044
        %4048 = vset.pattern.permute.xlu0 0
        %4049 = vperm.xlu0 %4048, %v3899
        %v4050 = vpop.permute.xlu0 %4049
        %4053 = vset.pattern.permute.xlu0 0
        %4054 = vperm.xlu0 %4053, %v3900
        %v4055 = vpop.permute.xlu0 %4054
        %4058 = vset.pattern.permute.xlu0 0
        %4059 = vperm.xlu0 %4058, %v3901
        %v4060 = vpop.permute.xlu0 %4059
        %4063 = vset.pattern.permute.xlu0 0
        %4064 = vperm.xlu0 %4063, %v3902
        %v4065 = vpop.permute.xlu0 %4064
        %4068 = vset.pattern.permute.xlu0 0
        %4069 = vperm.xlu0 %4068, %v3903
        %v4070 = vpop.permute.xlu0 %4069
        %4073 = vset.pattern.permute.xlu0 0
        %4074 = vperm.xlu0 %4073, %v3904
        %v4075 = vpop.permute.xlu0 %4074
        %4078 = vset.pattern.permute.xlu0 0
        %4079 = vperm.xlu0 %4078, %v3905
        %v4080 = vpop.permute.xlu0 %4079
        %4083 = vset.pattern.permute.xlu0 0
        %4084 = vperm.xlu0 %4083, %v3906
        %v4085 = vpop.permute.xlu0 %4084
        %4088 = vset.pattern.permute.xlu0 0
        %4089 = vperm.xlu0 %4088, %v3907
        %v4090 = vpop.permute.xlu0 %4089
        %4093 = vset.pattern.permute.xlu0 0
        %4094 = vperm.xlu0 %4093, %v3908
        %v4095 = vpop.permute.xlu0 %4094
        %4098 = vset.pattern.permute.xlu0 0
        %4099 = vperm.xlu0 %4098, %v3909
        %v4100 = vpop.permute.xlu0 %4099
        %4103 = vset.pattern.permute.xlu0 0
        %4104 = vperm.xlu0 %4103, %v3910
        %v4105 = vpop.permute.xlu0 %4104
        %4108 = vset.pattern.permute.xlu0 0
        %4109 = vperm.xlu0 %4108, %v3911
        %v4110 = vpop.permute.xlu0 %4109
        %4113 = vset.pattern.permute.xlu0 0
        %4114 = vperm.xlu0 %4113, %v3912
        %v4115 = vpop.permute.xlu0 %4114
        %4118 = vset.pattern.permute.xlu0 0
        %4119 = vperm.xlu0 %4118, %v3913
        %v4120 = vpop.permute.xlu0 %4119
        %4123 = vset.pattern.permute.xlu0 0
        %4124 = vperm.xlu0 %4123, %v3914
        %v4125 = vpop.permute.xlu0 %4124
        %4128 = vset.pattern.permute.xlu0 0
        %4129 = vperm.xlu0 %4128, %v3915
        %v4130 = vpop.permute.xlu0 %4129
        %4133 = vset.pattern.permute.xlu0 0
        %4134 = vperm.xlu0 %4133, %v3916
        %v4135 = vpop.permute.xlu0 %4134
        %4138 = vset.pattern.permute.xlu0 0
        %4139 = vperm.xlu0 %4138, %v3917
        %v4140 = vpop.permute.xlu0 %4139
        %4143 = vset.pattern.permute.xlu0 0
        %4144 = vperm.xlu0 %4143, %v3918
        %v4145 = vpop.permute.xlu0 %4144
        %4148 = vset.pattern.permute.xlu0 0
        %4149 = vperm.xlu0 %4148, %v3919
        %v4150 = vpop.permute.xlu0 %4149
        %4153 = vset.pattern.permute.xlu0 0
        %4154 = vperm.xlu0 %4153, %v3920
        %v4155 = vpop.permute.xlu0 %4154
        %4158 = vset.pattern.permute.xlu0 0
        %4159 = vperm.xlu0 %4158, %v3921
        %v4160 = vpop.permute.xlu0 %4159
        %4163 = vset.pattern.permute.xlu0 0
        %4164 = vperm.xlu0 %4163, %v3922
        %v4165 = vpop.permute.xlu0 %4164
        %4168 = vset.pattern.permute.xlu0 0
        %4169 = vperm.xlu0 %4168, %v3923
        %v4170 = vpop.permute.xlu0 %4169
        %4173 = vset.pattern.permute.xlu0 0
        %4174 = vperm.xlu0 %4173, %v3924
        %v4175 = vpop.permute.xlu0 %4174
        %4178 = vset.pattern.permute.xlu0 0
        %4179 = vperm.xlu0 %4178, %v3925
        %v4180 = vpop.permute.xlu0 %4179
        %4183 = vset.pattern.permute.xlu0 0
        %4184 = vperm.xlu0 %4183, %v3926
        %v4185 = vpop.permute.xlu0 %4184
        %4188 = vset.pattern.permute.xlu0 0
        %4189 = vperm.xlu0 %4188, %v3927
        %v4190 = vpop.permute.xlu0 %4189
        %4193 = vset.pattern.permute.xlu0 0
        %4194 = vperm.xlu0 %4193, %v3928
        %v4195 = vpop.permute.xlu0 %4194
        %4198 = vset.pattern.permute.xlu0 0
        %4199 = vperm.xlu0 %4198, %v3929
        %v4200 = vpop.permute.xlu0 %4199
        %4203 = vset.pattern.permute.xlu0 0
        %4204 = vperm.xlu0 %4203, %v3930
        %v4205 = vpop.permute.xlu0 %4204
        %4208 = vset.pattern.permute.xlu0 0
        %4209 = vperm.xlu0 %4208, %v3931
        %v4210 = vpop.permute.xlu0 %4209
        %4213 = vset.pattern.permute.xlu0 0
        %4214 = vperm.xlu0 %4213, %v3932
        %v4215 = vpop.permute.xlu0 %4214
        %4218 = vset.pattern.permute.xlu0 0
        %4219 = vperm.xlu0 %4218, %v3933
        %v4220 = vpop.permute.xlu0 %4219
        %4223 = vset.pattern.permute.xlu0 0
        %4224 = vperm.xlu0 %4223, %v3934
        %v4225 = vpop.permute.xlu0 %4224
        %4228 = vset.pattern.permute.xlu0 0
        %4229 = vperm.xlu0 %4228, %v3935
        %v4230 = vpop.permute.xlu0 %4229
        %4233 = vset.pattern.permute.xlu0 0
        %4234 = vperm.xlu0 %4233, %v3936
        %v4235 = vpop.permute.xlu0 %4234
        %4238 = vset.pattern.permute.xlu0 0
        %4239 = vperm.xlu0 %4238, %v3937
        %v4240 = vpop.permute.xlu0 %4239
        %4243 = vset.pattern.permute.xlu0 0
        %4244 = vperm.xlu0 %4243, %v3938
        %v4245 = vpop.permute.xlu0 %4244
        %4248 = vset.pattern.permute.xlu0 0
        %4249 = vperm.xlu0 %4248, %v3939
        %v4250 = vpop.permute.xlu0 %4249
        %4253 = vset.pattern.permute.xlu0 0
        %4254 = vperm.xlu0 %4253, %v3940
        %v4255 = vpop.permute.xlu0 %4254
        %4258 = vset.pattern.permute.xlu0 0
        %4259 = vperm.xlu0 %4258, %v3941
        %v4260 = vpop.permute.xlu0 %4259
        %v4518 = vunpack.c.l.b16 %v3622
        %v4519 = vunpack.c.h.b16 %v3622
        %v4520 = vunpack.c.l.b16 %v3623
        %v4521 = vunpack.c.h.b16 %v3623
        %v4522 = vunpack.c.l.b16 %v3624
        %v4523 = vunpack.c.h.b16 %v3624
        %v4524 = vunpack.c.l.b16 %v3625
        %v4525 = vunpack.c.h.b16 %v3625
        %v4526 = vunpack.c.l.b16 %v3626
        %v4527 = vunpack.c.h.b16 %v3626
        %v4528 = vunpack.c.l.b16 %v3627
        %v4529 = vunpack.c.h.b16 %v3627
        %v4530 = vunpack.c.l.b16 %v3628
        %v4531 = vunpack.c.h.b16 %v3628
        %v4532 = vunpack.c.l.b16 %v3629
        %v4533 = vunpack.c.h.b16 %v3629
        %v4534 = vunpack.c.l.b16 %v3630
        %v4535 = vunpack.c.h.b16 %v3630
        %v4536 = vunpack.c.l.b16 %v3631
        %v4537 = vunpack.c.h.b16 %v3631
        %v4538 = vunpack.c.l.b16 %v3632
        %v4539 = vunpack.c.h.b16 %v3632
        %v4540 = vunpack.c.l.b16 %v3633
        %v4541 = vunpack.c.h.b16 %v3633
        %v4542 = vunpack.c.l.b16 %v3634
        %v4543 = vunpack.c.h.b16 %v3634
        %v4544 = vunpack.c.l.b16 %v3635
        %v4545 = vunpack.c.h.b16 %v3635
        %v4546 = vunpack.c.l.b16 %v3636
        %v4547 = vunpack.c.h.b16 %v3636
        %v4548 = vunpack.c.l.b16 %v3637
        %v4549 = vunpack.c.h.b16 %v3637
        %v4550 = vunpack.c.l.b16 %v3638
        %v4551 = vunpack.c.h.b16 %v3638
        %v4552 = vunpack.c.l.b16 %v3639
        %v4553 = vunpack.c.h.b16 %v3639
        %v4554 = vunpack.c.l.b16 %v3640
        %v4555 = vunpack.c.h.b16 %v3640
        %v4556 = vunpack.c.l.b16 %v3641
        %v4557 = vunpack.c.h.b16 %v3641
        %v4558 = vunpack.c.l.b16 %v3642
        %v4559 = vunpack.c.h.b16 %v3642
        %v4560 = vunpack.c.l.b16 %v3643
        %v4561 = vunpack.c.h.b16 %v3643
        %v4562 = vunpack.c.l.b16 %v3644
        %v4563 = vunpack.c.h.b16 %v3644
        %v4564 = vunpack.c.l.b16 %v3645
        %v4565 = vunpack.c.h.b16 %v3645
        %v4566 = vunpack.c.l.b16 %v3646
        %v4567 = vunpack.c.h.b16 %v3646
        %v4568 = vunpack.c.l.b16 %v3647
        %v4569 = vunpack.c.h.b16 %v3647
        %v4570 = vunpack.c.l.b16 %v3648
        %v4571 = vunpack.c.h.b16 %v3648
        %v4572 = vunpack.c.l.b16 %v3649
        %v4573 = vunpack.c.h.b16 %v3649
        %v4574 = vunpack.c.l.b16 %v3650
        %v4575 = vunpack.c.h.b16 %v3650
        %v4576 = vunpack.c.l.b16 %v3651
        %v4577 = vunpack.c.h.b16 %v3651
        %v4578 = vunpack.c.l.b16 %v3652
        %v4579 = vunpack.c.h.b16 %v3652
        %v4580 = vunpack.c.l.b16 %v3653
        %v4581 = vunpack.c.h.b16 %v3653
        %v4582 = vunpack.c.l.b16 %v3654
        %v4583 = vunpack.c.h.b16 %v3654
        %v4584 = vunpack.c.l.b16 %v3655
        %v4585 = vunpack.c.h.b16 %v3655
        %v4586 = vunpack.c.l.b16 %v3656
        %v4587 = vunpack.c.h.b16 %v3656
        %v4588 = vunpack.c.l.b16 %v3657
        %v4589 = vunpack.c.h.b16 %v3657
        %v4590 = vunpack.c.l.b16 %v3658
        %v4591 = vunpack.c.h.b16 %v3658
        %v4592 = vunpack.c.l.b16 %v3659
        %v4593 = vunpack.c.h.b16 %v3659
        %v4594 = vunpack.c.l.b16 %v3660
        %v4595 = vunpack.c.h.b16 %v3660
        %v4596 = vunpack.c.l.b16 %v3661
        %v4597 = vunpack.c.h.b16 %v3661
        %v4598 = vunpack.c.l.b16 %v3662
        %v4599 = vunpack.c.h.b16 %v3662
        %v4600 = vunpack.c.l.b16 %v3663
        %v4601 = vunpack.c.h.b16 %v3663
        %v4602 = vunpack.c.l.b16 %v3664
        %v4603 = vunpack.c.h.b16 %v3664
        %v4604 = vunpack.c.l.b16 %v3665
        %v4605 = vunpack.c.h.b16 %v3665
        %v4606 = vunpack.c.l.b16 %v3666
        %v4607 = vunpack.c.h.b16 %v3666
        %v4608 = vunpack.c.l.b16 %v3667
        %v4609 = vunpack.c.h.b16 %v3667
        %v4610 = vunpack.c.l.b16 %v3668
        %v4611 = vunpack.c.h.b16 %v3668
        %v4612 = vunpack.c.l.b16 %v3669
        %v4613 = vunpack.c.h.b16 %v3669
        %v4614 = vunpack.c.l.b16 %v3670
        %v4615 = vunpack.c.h.b16 %v3670
        %v4616 = vunpack.c.l.b16 %v3671
        %v4617 = vunpack.c.h.b16 %v3671
        %v4618 = vunpack.c.l.b16 %v3672
        %v4619 = vunpack.c.h.b16 %v3672
        %v4620 = vunpack.c.l.b16 %v3673
        %v4621 = vunpack.c.h.b16 %v3673
        %v4622 = vunpack.c.l.b16 %v3674
        %v4623 = vunpack.c.h.b16 %v3674
        %v4624 = vunpack.c.l.b16 %v3675
        %v4625 = vunpack.c.h.b16 %v3675
        %v4626 = vunpack.c.l.b16 %v3676
        %v4627 = vunpack.c.h.b16 %v3676
        %v4628 = vunpack.c.l.b16 %v3677
        %v4629 = vunpack.c.h.b16 %v3677
        %v4630 = vunpack.c.l.b16 %v3678
        %v4631 = vunpack.c.h.b16 %v3678
        %v4632 = vunpack.c.l.b16 %v3679
        %v4633 = vunpack.c.h.b16 %v3679
        %v4634 = vunpack.c.l.b16 %v3680
        %v4635 = vunpack.c.h.b16 %v3680
        %v4636 = vunpack.c.l.b16 %v3681
        %v4637 = vunpack.c.h.b16 %v3681
        %v4638 = vunpack.c.l.b16 %v3682
        %v4639 = vunpack.c.h.b16 %v3682
        %v4640 = vunpack.c.l.b16 %v3683
        %v4641 = vunpack.c.h.b16 %v3683
        %v4642 = vunpack.c.l.b16 %v3684
        %v4643 = vunpack.c.h.b16 %v3684
        %v4644 = vunpack.c.l.b16 %v3685
        %v4645 = vunpack.c.h.b16 %v3685
        %v4646 = vunpack.c.l.b16 %v3686
        %v4647 = vunpack.c.h.b16 %v3686
        %v4648 = vunpack.c.l.b16 %v3687
        %v4649 = vunpack.c.h.b16 %v3687
        %v4650 = vunpack.c.l.b16 %v3688
        %v4651 = vunpack.c.h.b16 %v3688
        %v4652 = vunpack.c.l.b16 %v3689
        %v4653 = vunpack.c.h.b16 %v3689
        %v4654 = vunpack.c.l.b16 %v3690
        %v4655 = vunpack.c.h.b16 %v3690
        %v4656 = vunpack.c.l.b16 %v3691
        %v4657 = vunpack.c.h.b16 %v3691
        %v4658 = vunpack.c.l.b16 %v3692
        %v4659 = vunpack.c.h.b16 %v3692
        %v4660 = vunpack.c.l.b16 %v3693
        %v4661 = vunpack.c.h.b16 %v3693
        %v4662 = vunpack.c.l.b16 %v3694
        %v4663 = vunpack.c.h.b16 %v3694
        %v4664 = vunpack.c.l.b16 %v3695
        %v4665 = vunpack.c.h.b16 %v3695
        %v4666 = vunpack.c.l.b16 %v3696
        %v4667 = vunpack.c.h.b16 %v3696
        %v4668 = vunpack.c.l.b16 %v3697
        %v4669 = vunpack.c.h.b16 %v3697
        %v4670 = vunpack.c.l.b16 %v3698
        %v4671 = vunpack.c.h.b16 %v3698
        %v4672 = vunpack.c.l.b16 %v3699
        %v4673 = vunpack.c.h.b16 %v3699
        %v4674 = vunpack.c.l.b16 %v3700
        %v4675 = vunpack.c.h.b16 %v3700
        %v4676 = vunpack.c.l.b16 %v3701
        %v4677 = vunpack.c.h.b16 %v3701
        %v4678 = vunpack.c.l.b16 %v3702
        %v4679 = vunpack.c.h.b16 %v3702
        %v4680 = vunpack.c.l.b16 %v3703
        %v4681 = vunpack.c.h.b16 %v3703
        %v4682 = vunpack.c.l.b16 %v3704
        %v4683 = vunpack.c.h.b16 %v3704
        %v4684 = vunpack.c.l.b16 %v3705
        %v4685 = vunpack.c.h.b16 %v3705
        %v4686 = vunpack.c.l.b16 %v3706
        %v4687 = vunpack.c.h.b16 %v3706
        %v4688 = vunpack.c.l.b16 %v3707
        %v4689 = vunpack.c.h.b16 %v3707
        %v4690 = vunpack.c.l.b16 %v3708
        %v4691 = vunpack.c.h.b16 %v3708
        %v4692 = vunpack.c.l.b16 %v3709
        %v4693 = vunpack.c.h.b16 %v3709
        %v4694 = vunpack.c.l.b16 %v3710
        %v4695 = vunpack.c.h.b16 %v3710
        %v4696 = vunpack.c.l.b16 %v3711
        %v4697 = vunpack.c.h.b16 %v3711
        %v4698 = vunpack.c.l.b16 %v3712
        %v4699 = vunpack.c.h.b16 %v3712
        %v4700 = vunpack.c.l.b16 %v3713
        %v4701 = vunpack.c.h.b16 %v3713
        %v4702 = vunpack.c.l.b16 %v3714
        %v4703 = vunpack.c.h.b16 %v3714
        %v4704 = vunpack.c.l.b16 %v3715
        %v4705 = vunpack.c.h.b16 %v3715
        %v4706 = vunpack.c.l.b16 %v3716
        %v4707 = vunpack.c.h.b16 %v3716
        %v4708 = vunpack.c.l.b16 %v3717
        %v4709 = vunpack.c.h.b16 %v3717
        %v4710 = vunpack.c.l.b16 %v3718
        %v4711 = vunpack.c.h.b16 %v3718
        %v4712 = vunpack.c.l.b16 %v3719
        %v4713 = vunpack.c.h.b16 %v3719
        %v4714 = vunpack.c.l.b16 %v3720
        %v4715 = vunpack.c.h.b16 %v3720
        %v4716 = vunpack.c.l.b16 %v3721
        %v4717 = vunpack.c.h.b16 %v3721
        %v4718 = vunpack.c.l.b16 %v3722
        %v4719 = vunpack.c.h.b16 %v3722
        %v4720 = vunpack.c.l.b16 %v3723
        %v4721 = vunpack.c.h.b16 %v3723
        %v4722 = vunpack.c.l.b16 %v3724
        %v4723 = vunpack.c.h.b16 %v3724
        %v4724 = vunpack.c.l.b16 %v3725
        %v4725 = vunpack.c.h.b16 %v3725
        %v4726 = vunpack.c.l.b16 %v3726
        %v4727 = vunpack.c.h.b16 %v3726
        %v4728 = vunpack.c.l.b16 %v3727
        %v4729 = vunpack.c.h.b16 %v3727
        %v4730 = vunpack.c.l.b16 %v3728
        %v4731 = vunpack.c.h.b16 %v3728
        %v4732 = vunpack.c.l.b16 %v3729
        %v4733 = vunpack.c.h.b16 %v3729
        %v4734 = vunpack.c.l.b16 %v3730
        %v4735 = vunpack.c.h.b16 %v3730
        %v4736 = vunpack.c.l.b16 %v3731
        %v4737 = vunpack.c.h.b16 %v3731
        %v4738 = vunpack.c.l.b16 %v3732
        %v4739 = vunpack.c.h.b16 %v3732
        %v4740 = vunpack.c.l.b16 %v3733
        %v4741 = vunpack.c.h.b16 %v3733
        %v4742 = vunpack.c.l.b16 %v3734
        %v4743 = vunpack.c.h.b16 %v3734
        %v4744 = vunpack.c.l.b16 %v3735
        %v4745 = vunpack.c.h.b16 %v3735
        %v4746 = vunpack.c.l.b16 %v3736
        %v4747 = vunpack.c.h.b16 %v3736
        %v4748 = vunpack.c.l.b16 %v3737
        %v4749 = vunpack.c.h.b16 %v3737
        %v4750 = vunpack.c.l.b16 %v3738
        %v4751 = vunpack.c.h.b16 %v3738
        %v4752 = vunpack.c.l.b16 %v3739
        %v4753 = vunpack.c.h.b16 %v3739
        %v4754 = vunpack.c.l.b16 %v3740
        %v4755 = vunpack.c.h.b16 %v3740
        %v4756 = vunpack.c.l.b16 %v3741
        %v4757 = vunpack.c.h.b16 %v3741
        %v4758 = vunpack.c.l.b16 %v3742
        %v4759 = vunpack.c.h.b16 %v3742
        %v4760 = vunpack.c.l.b16 %v3743
        %v4761 = vunpack.c.h.b16 %v3743
        %v4762 = vunpack.c.l.b16 %v3744
        %v4763 = vunpack.c.h.b16 %v3744
        %v4764 = vunpack.c.l.b16 %v3745
        %v4765 = vunpack.c.h.b16 %v3745
        %v4766 = vunpack.c.l.b16 %v3746
        %v4767 = vunpack.c.h.b16 %v3746
        %v4768 = vunpack.c.l.b16 %v3747
        %v4769 = vunpack.c.h.b16 %v3747
        %v4770 = vunpack.c.l.b16 %v3748
        %v4771 = vunpack.c.h.b16 %v3748
        %v4772 = vunpack.c.l.b16 %v3749
        %v4773 = vunpack.c.h.b16 %v3749
        %v4774 = vunpack.c.l.b16 %v3750
        %v4775 = vunpack.c.h.b16 %v3750
        %v4776 = vunpack.c.l.b16 %v3751
        %v4777 = vunpack.c.h.b16 %v3751
        %v4778 = vunpack.c.l.b16 %v3752
        %v4779 = vunpack.c.h.b16 %v3752
        %v4780 = vunpack.c.l.b16 %v3753
        %v4781 = vunpack.c.h.b16 %v3753
        %v4782 = vunpack.c.l.b16 %v3754
        %v4783 = vunpack.c.h.b16 %v3754
        %v4784 = vunpack.c.l.b16 %v3755
        %v4785 = vunpack.c.h.b16 %v3755
        %v4786 = vunpack.c.l.b16 %v3756
        %v4787 = vunpack.c.h.b16 %v3756
        %v4788 = vunpack.c.l.b16 %v3757
        %v4789 = vunpack.c.h.b16 %v3757
        %v4790 = vunpack.c.l.b16 %v3758
        %v4791 = vunpack.c.h.b16 %v3758
        %v4792 = vunpack.c.l.b16 %v3759
        %v4793 = vunpack.c.h.b16 %v3759
        %v4794 = vunpack.c.l.b16 %v3760
        %v4795 = vunpack.c.h.b16 %v3760
        %v4796 = vunpack.c.l.b16 %v3761
        %v4797 = vunpack.c.h.b16 %v3761
        %v4798 = vunpack.c.l.b16 %v3762
        %v4799 = vunpack.c.h.b16 %v3762
        %v4800 = vunpack.c.l.b16 %v3763
        %v4801 = vunpack.c.h.b16 %v3763
        %v4802 = vunpack.c.l.b16 %v3764
        %v4803 = vunpack.c.h.b16 %v3764
        %v4804 = vunpack.c.l.b16 %v3765
        %v4805 = vunpack.c.h.b16 %v3765
        %v4806 = vunpack.c.l.b16 %v3766
        %v4807 = vunpack.c.h.b16 %v3766
        %v4808 = vunpack.c.l.b16 %v3767
        %v4809 = vunpack.c.h.b16 %v3767
        %v4810 = vunpack.c.l.b16 %v3768
        %v4811 = vunpack.c.h.b16 %v3768
        %v4812 = vunpack.c.l.b16 %v3769
        %v4813 = vunpack.c.h.b16 %v3769
        %v4814 = vunpack.c.l.b16 %v3770
        %v4815 = vunpack.c.h.b16 %v3770
        %v4816 = vunpack.c.l.b16 %v3771
        %v4817 = vunpack.c.h.b16 %v3771
        %v4818 = vunpack.c.l.b16 %v3772
        %v4819 = vunpack.c.h.b16 %v3772
        %v4820 = vunpack.c.l.b16 %v3773
        %v4821 = vunpack.c.h.b16 %v3773
        %v4822 = vunpack.c.l.b16 %v3774
        %v4823 = vunpack.c.h.b16 %v3774
        %v4824 = vunpack.c.l.b16 %v3775
        %v4825 = vunpack.c.h.b16 %v3775
        %v4826 = vunpack.c.l.b16 %v3776
        %v4827 = vunpack.c.h.b16 %v3776
        %v4828 = vunpack.c.l.b16 %v3777
        %v4829 = vunpack.c.h.b16 %v3777
        %v4830 = vunpack.c.l.b16 %v3778
        %v4831 = vunpack.c.h.b16 %v3778
        %v4832 = vunpack.c.l.b16 %v3779
        %v4833 = vunpack.c.h.b16 %v3779
        %v4834 = vunpack.c.l.b16 %v3780
        %v4835 = vunpack.c.h.b16 %v3780
        %v4836 = vunpack.c.l.b16 %v3781
        %v4837 = vunpack.c.h.b16 %v3781
        %v4838 = vunpack.c.l.b16 %v3782
        %v4839 = vunpack.c.h.b16 %v3782
        %v4840 = vunpack.c.l.b16 %v3783
        %v4841 = vunpack.c.h.b16 %v3783
        %v4842 = vunpack.c.l.b16 %v3784
        %v4843 = vunpack.c.h.b16 %v3784
        %v4844 = vunpack.c.l.b16 %v3785
        %v4845 = vunpack.c.h.b16 %v3785
        %v4846 = vunpack.c.l.b16 %v3786
        %v4847 = vunpack.c.h.b16 %v3786
        %v4848 = vunpack.c.l.b16 %v3787
        %v4849 = vunpack.c.h.b16 %v3787
        %v4850 = vunpack.c.l.b16 %v3788
        %v4851 = vunpack.c.h.b16 %v3788
        %v4852 = vunpack.c.l.b16 %v3789
        %v4853 = vunpack.c.h.b16 %v3789
        %v4854 = vunpack.c.l.b16 %v3790
        %v4855 = vunpack.c.h.b16 %v3790
        %v4856 = vunpack.c.l.b16 %v3791
        %v4857 = vunpack.c.h.b16 %v3791
        %v4858 = vunpack.c.l.b16 %v3792
        %v4859 = vunpack.c.h.b16 %v3792
        %v4860 = vunpack.c.l.b16 %v3793
        %v4861 = vunpack.c.h.b16 %v3793
        %v4862 = vunpack.c.l.b16 %v3794
        %v4863 = vunpack.c.h.b16 %v3794
        %v4864 = vunpack.c.l.b16 %v3795
        %v4865 = vunpack.c.h.b16 %v3795
        %v4866 = vunpack.c.l.b16 %v3796
        %v4867 = vunpack.c.h.b16 %v3796
        %v4868 = vunpack.c.l.b16 %v3797
        %v4869 = vunpack.c.h.b16 %v3797
        %v4870 = vunpack.c.l.b16 %v3798
        %v4871 = vunpack.c.h.b16 %v3798
        %v4872 = vunpack.c.l.b16 %v3799
        %v4873 = vunpack.c.h.b16 %v3799
        %v4874 = vunpack.c.l.b16 %v3800
        %v4875 = vunpack.c.h.b16 %v3800
        %v4876 = vunpack.c.l.b16 %v3801
        %v4877 = vunpack.c.h.b16 %v3801
        %v4878 = vunpack.c.l.b16 %v3802
        %v4879 = vunpack.c.h.b16 %v3802
        %v4880 = vunpack.c.l.b16 %v3803
        %v4881 = vunpack.c.h.b16 %v3803
        %v4882 = vunpack.c.l.b16 %v3804
        %v4883 = vunpack.c.h.b16 %v3804
        %v4884 = vunpack.c.l.b16 %v3805
        %v4885 = vunpack.c.h.b16 %v3805
        %v4886 = vunpack.c.l.b16 %v3806
        %v4887 = vunpack.c.h.b16 %v3806
        %v4888 = vunpack.c.l.b16 %v3807
        %v4889 = vunpack.c.h.b16 %v3807
        %v4890 = vunpack.c.l.b16 %v3808
        %v4891 = vunpack.c.h.b16 %v3808
        %v4892 = vunpack.c.l.b16 %v3809
        %v4893 = vunpack.c.h.b16 %v3809
        %v4894 = vunpack.c.l.b16 %v3810
        %v4895 = vunpack.c.h.b16 %v3810
        %v4896 = vunpack.c.l.b16 %v3811
        %v4897 = vunpack.c.h.b16 %v3811
        %v4898 = vunpack.c.l.b16 %v3812
        %v4899 = vunpack.c.h.b16 %v3812
        %v4900 = vunpack.c.l.b16 %v3813
        %v4901 = vunpack.c.h.b16 %v3813
        %v4902 = vunpack.c.l.b16 %v3814
        %v4903 = vunpack.c.h.b16 %v3814
        %v4904 = vunpack.c.l.b16 %v3815
        %v4905 = vunpack.c.h.b16 %v3815
        %v4906 = vunpack.c.l.b16 %v3816
        %v4907 = vunpack.c.h.b16 %v3816
        %v4908 = vunpack.c.l.b16 %v3817
        %v4909 = vunpack.c.h.b16 %v3817
        %v4910 = vunpack.c.l.b16 %v3818
        %v4911 = vunpack.c.h.b16 %v3818
        %v4912 = vunpack.c.l.b16 %v3819
        %v4913 = vunpack.c.h.b16 %v3819
        %v4914 = vunpack.c.l.b16 %v3820
        %v4915 = vunpack.c.h.b16 %v3820
        %v4916 = vunpack.c.l.b16 %v3821
        %v4917 = vunpack.c.h.b16 %v3821
        %v4918 = vunpack.c.l.b16 %v3822
        %v4919 = vunpack.c.h.b16 %v3822
        %v4920 = vunpack.c.l.b16 %v3823
        %v4921 = vunpack.c.h.b16 %v3823
        %v4922 = vunpack.c.l.b16 %v3824
        %v4923 = vunpack.c.h.b16 %v3824
        %v4924 = vunpack.c.l.b16 %v3825
        %v4925 = vunpack.c.h.b16 %v3825
        %v4926 = vunpack.c.l.b16 %v3826
        %v4927 = vunpack.c.h.b16 %v3826
        %v4928 = vunpack.c.l.b16 %v3827
        %v4929 = vunpack.c.h.b16 %v3827
        %v4930 = vunpack.c.l.b16 %v3828
        %v4931 = vunpack.c.h.b16 %v3828
        %v4932 = vunpack.c.l.b16 %v3829
        %v4933 = vunpack.c.h.b16 %v3829
        %v4934 = vunpack.c.l.b16 %v3830
        %v4935 = vunpack.c.h.b16 %v3830
        %v4936 = vunpack.c.l.b16 %v3831
        %v4937 = vunpack.c.h.b16 %v3831
        %v4938 = vunpack.c.l.b16 %v3832
        %v4939 = vunpack.c.h.b16 %v3832
        %v4940 = vunpack.c.l.b16 %v3833
        %v4941 = vunpack.c.h.b16 %v3833
        %v4942 = vunpack.c.l.b16 %v3834
        %v4943 = vunpack.c.h.b16 %v3834
        %v4944 = vunpack.c.l.b16 %v3835
        %v4945 = vunpack.c.h.b16 %v3835
        %v4946 = vunpack.c.l.b16 %v3836
        %v4947 = vunpack.c.h.b16 %v3836
        %v4948 = vunpack.c.l.b16 %v3837
        %v4949 = vunpack.c.h.b16 %v3837
        %v4950 = vunpack.c.l.b16 %v3838
        %v4951 = vunpack.c.h.b16 %v3838
        %v4952 = vunpack.c.l.b16 %v3839
        %v4953 = vunpack.c.h.b16 %v3839
        %v4954 = vunpack.c.l.b16 %v3840
        %v4955 = vunpack.c.h.b16 %v3840
        %v4956 = vunpack.c.l.b16 %v3841
        %v4957 = vunpack.c.h.b16 %v3841
        %v4958 = vunpack.c.l.b16 %v3842
        %v4959 = vunpack.c.h.b16 %v3842
        %v4960 = vunpack.c.l.b16 %v3843
        %v4961 = vunpack.c.h.b16 %v3843
        %v4962 = vunpack.c.l.b16 %v3844
        %v4963 = vunpack.c.h.b16 %v3844
        %v4964 = vunpack.c.l.b16 %v3845
        %v4965 = vunpack.c.h.b16 %v3845
        %v4966 = vunpack.c.l.b16 %v3846
        %v4967 = vunpack.c.h.b16 %v3846
        %v4968 = vunpack.c.l.b16 %v3847
        %v4969 = vunpack.c.h.b16 %v3847
        %v4970 = vunpack.c.l.b16 %v3848
        %v4971 = vunpack.c.h.b16 %v3848
        %v4972 = vunpack.c.l.b16 %v3849
        %v4973 = vunpack.c.h.b16 %v3849
        %v4974 = vunpack.c.l.b16 %v3850
        %v4975 = vunpack.c.h.b16 %v3850
        %v4976 = vunpack.c.l.b16 %v3851
        %v4977 = vunpack.c.h.b16 %v3851
        %v4978 = vunpack.c.l.b16 %v3852
        %v4979 = vunpack.c.h.b16 %v3852
        %v4980 = vunpack.c.l.b16 %v3853
        %v4981 = vunpack.c.h.b16 %v3853
        %v4982 = vunpack.c.l.b16 %v3854
        %v4983 = vunpack.c.h.b16 %v3854
        %v4984 = vunpack.c.l.b16 %v3855
        %v4985 = vunpack.c.h.b16 %v3855
        %v4986 = vunpack.c.l.b16 %v3856
        %v4987 = vunpack.c.h.b16 %v3856
        %v4988 = vunpack.c.l.b16 %v3857
        %v4989 = vunpack.c.h.b16 %v3857
        %v4990 = vunpack.c.l.b16 %v3858
        %v4991 = vunpack.c.h.b16 %v3858
        %v4992 = vunpack.c.l.b16 %v3859
        %v4993 = vunpack.c.h.b16 %v3859
        %v4994 = vunpack.c.l.b16 %v3860
        %v4995 = vunpack.c.h.b16 %v3860
        %v4996 = vunpack.c.l.b16 %v3861
        %v4997 = vunpack.c.h.b16 %v3861
        %v4998 = vunpack.c.l.b16 %v3862
        %v4999 = vunpack.c.h.b16 %v3862
        %v5000 = vunpack.c.l.b16 %v3863
        %v5001 = vunpack.c.h.b16 %v3863
        %v5002 = vunpack.c.l.b16 %v3864
        %v5003 = vunpack.c.h.b16 %v3864
        %v5004 = vunpack.c.l.b16 %v3865
        %v5005 = vunpack.c.h.b16 %v3865
        %v5006 = vunpack.c.l.b16 %v3866
        %v5007 = vunpack.c.h.b16 %v3866
        %v5008 = vunpack.c.l.b16 %v3867
        %v5009 = vunpack.c.h.b16 %v3867
        %v5010 = vunpack.c.l.b16 %v3868
        %v5011 = vunpack.c.h.b16 %v3868
        %v5012 = vunpack.c.l.b16 %v3869
        %v5013 = vunpack.c.h.b16 %v3869
        %v5014 = vunpack.c.l.b16 %v3870
        %v5015 = vunpack.c.h.b16 %v3870
        %v5016 = vunpack.c.l.b16 %v3871
        %v5017 = vunpack.c.h.b16 %v3871
        %v5018 = vunpack.c.l.b16 %v3872
        %v5019 = vunpack.c.h.b16 %v3872
        %v5020 = vunpack.c.l.b16 %v3873
        %v5021 = vunpack.c.h.b16 %v3873
        %v5022 = vunpack.c.l.b16 %v3874
        %v5023 = vunpack.c.h.b16 %v3874
        %v5024 = vunpack.c.l.b16 %v3875
        %v5025 = vunpack.c.h.b16 %v3875
        %v5026 = vunpack.c.l.b16 %v3876
        %v5027 = vunpack.c.h.b16 %v3876
        %v5028 = vunpack.c.l.b16 %v3877
        %v5029 = vunpack.c.h.b16 %v3877
        %v5030 = vpack.c.b16 %v4526, %v4518
        %v5031 = vpack.c.b16 %v4527, %v4519
        %v5032 = vpack.c.b16 %v4528, %v4520
        %v5033 = vpack.c.b16 %v4529, %v4521
        %v5034 = vpack.c.b16 %v4530, %v4522
        %v5035 = vpack.c.b16 %v4531, %v4523
        %v5036 = vpack.c.b16 %v4532, %v4524
        %v5037 = vpack.c.b16 %v4533, %v4525
        %v5038 = vpack.c.b16 %v4542, %v4534
        %v5039 = vpack.c.b16 %v4543, %v4535
        %v5040 = vpack.c.b16 %v4544, %v4536
        %v5041 = vpack.c.b16 %v4545, %v4537
        %v5042 = vpack.c.b16 %v4546, %v4538
        %v5043 = vpack.c.b16 %v4547, %v4539
        %v5044 = vpack.c.b16 %v4548, %v4540
        %v5045 = vpack.c.b16 %v4549, %v4541
        %v5046 = vpack.c.b16 %v4558, %v4550
        %v5047 = vpack.c.b16 %v4559, %v4551
        %v5048 = vpack.c.b16 %v4560, %v4552
        %v5049 = vpack.c.b16 %v4561, %v4553
        %v5050 = vpack.c.b16 %v4562, %v4554
        %v5051 = vpack.c.b16 %v4563, %v4555
        %v5052 = vpack.c.b16 %v4564, %v4556
        %v5053 = vpack.c.b16 %v4565, %v4557
        %v5054 = vpack.c.b16 %v4574, %v4566
        %v5055 = vpack.c.b16 %v4575, %v4567
        %v5056 = vpack.c.b16 %v4576, %v4568
        %v5057 = vpack.c.b16 %v4577, %v4569
        %v5058 = vpack.c.b16 %v4578, %v4570
        %v5059 = vpack.c.b16 %v4579, %v4571
        %v5060 = vpack.c.b16 %v4580, %v4572
        %v5061 = vpack.c.b16 %v4581, %v4573
        %v5062 = vpack.c.b16 %v4590, %v4582
        %v5063 = vpack.c.b16 %v4591, %v4583
        %v5064 = vpack.c.b16 %v4592, %v4584
        %v5065 = vpack.c.b16 %v4593, %v4585
        %v5066 = vpack.c.b16 %v4594, %v4586
        %v5067 = vpack.c.b16 %v4595, %v4587
        %v5068 = vpack.c.b16 %v4596, %v4588
        %v5069 = vpack.c.b16 %v4597, %v4589
        %v5070 = vpack.c.b16 %v4606, %v4598
        %v5071 = vpack.c.b16 %v4607, %v4599
        %v5072 = vpack.c.b16 %v4608, %v4600
        %v5073 = vpack.c.b16 %v4609, %v4601
        %v5074 = vpack.c.b16 %v4610, %v4602
        %v5075 = vpack.c.b16 %v4611, %v4603
        %v5076 = vpack.c.b16 %v4612, %v4604
        %v5077 = vpack.c.b16 %v4613, %v4605
        %v5078 = vpack.c.b16 %v4622, %v4614
        %v5079 = vpack.c.b16 %v4623, %v4615
        %v5080 = vpack.c.b16 %v4624, %v4616
        %v5081 = vpack.c.b16 %v4625, %v4617
        %v5082 = vpack.c.b16 %v4626, %v4618
        %v5083 = vpack.c.b16 %v4627, %v4619
        %v5084 = vpack.c.b16 %v4628, %v4620
        %v5085 = vpack.c.b16 %v4629, %v4621
        %v5086 = vpack.c.b16 %v4638, %v4630
        %v5087 = vpack.c.b16 %v4639, %v4631
        %v5088 = vpack.c.b16 %v4640, %v4632
        %v5089 = vpack.c.b16 %v4641, %v4633
        %v5090 = vpack.c.b16 %v4642, %v4634
        %v5091 = vpack.c.b16 %v4643, %v4635
        %v5092 = vpack.c.b16 %v4644, %v4636
        %v5093 = vpack.c.b16 %v4645, %v4637
        %v5094 = vpack.c.b16 %v4654, %v4646
        %v5095 = vpack.c.b16 %v4655, %v4647
        %v5096 = vpack.c.b16 %v4656, %v4648
        %v5097 = vpack.c.b16 %v4657, %v4649
        %v5098 = vpack.c.b16 %v4658, %v4650
        %v5099 = vpack.c.b16 %v4659, %v4651
        %v5100 = vpack.c.b16 %v4660, %v4652
        %v5101 = vpack.c.b16 %v4661, %v4653
        %v5102 = vpack.c.b16 %v4670, %v4662
        %v5103 = vpack.c.b16 %v4671, %v4663
        %v5104 = vpack.c.b16 %v4672, %v4664
        %v5105 = vpack.c.b16 %v4673, %v4665
        %v5106 = vpack.c.b16 %v4674, %v4666
        %v5107 = vpack.c.b16 %v4675, %v4667
        %v5108 = vpack.c.b16 %v4676, %v4668
        %v5109 = vpack.c.b16 %v4677, %v4669
        %v5110 = vpack.c.b16 %v4686, %v4678
        %v5111 = vpack.c.b16 %v4687, %v4679
        %v5112 = vpack.c.b16 %v4688, %v4680
        %v5113 = vpack.c.b16 %v4689, %v4681
        %v5114 = vpack.c.b16 %v4690, %v4682
        %v5115 = vpack.c.b16 %v4691, %v4683
        %v5116 = vpack.c.b16 %v4692, %v4684
        %v5117 = vpack.c.b16 %v4693, %v4685
        %v5118 = vpack.c.b16 %v4702, %v4694
        %v5119 = vpack.c.b16 %v4703, %v4695
        %v5120 = vpack.c.b16 %v4704, %v4696
        %v5121 = vpack.c.b16 %v4705, %v4697
        %v5122 = vpack.c.b16 %v4706, %v4698
        %v5123 = vpack.c.b16 %v4707, %v4699
        %v5124 = vpack.c.b16 %v4708, %v4700
        %v5125 = vpack.c.b16 %v4709, %v4701
        %v5126 = vpack.c.b16 %v4718, %v4710
        %v5127 = vpack.c.b16 %v4719, %v4711
        %v5128 = vpack.c.b16 %v4720, %v4712
        %v5129 = vpack.c.b16 %v4721, %v4713
        %v5130 = vpack.c.b16 %v4722, %v4714
        %v5131 = vpack.c.b16 %v4723, %v4715
        %v5132 = vpack.c.b16 %v4724, %v4716
        %v5133 = vpack.c.b16 %v4725, %v4717
        %v5134 = vpack.c.b16 %v4734, %v4726
        %v5135 = vpack.c.b16 %v4735, %v4727
        %v5136 = vpack.c.b16 %v4736, %v4728
        %v5137 = vpack.c.b16 %v4737, %v4729
        %v5138 = vpack.c.b16 %v4738, %v4730
        %v5139 = vpack.c.b16 %v4739, %v4731
        %v5140 = vpack.c.b16 %v4740, %v4732
        %v5141 = vpack.c.b16 %v4741, %v4733
        %v5142 = vpack.c.b16 %v4750, %v4742
        %v5143 = vpack.c.b16 %v4751, %v4743
        %v5144 = vpack.c.b16 %v4752, %v4744
        %v5145 = vpack.c.b16 %v4753, %v4745
        %v5146 = vpack.c.b16 %v4754, %v4746
        %v5147 = vpack.c.b16 %v4755, %v4747
        %v5148 = vpack.c.b16 %v4756, %v4748
        %v5149 = vpack.c.b16 %v4757, %v4749
        %v5150 = vpack.c.b16 %v4766, %v4758
        %v5151 = vpack.c.b16 %v4767, %v4759
        %v5152 = vpack.c.b16 %v4768, %v4760
        %v5153 = vpack.c.b16 %v4769, %v4761
        %v5154 = vpack.c.b16 %v4770, %v4762
        %v5155 = vpack.c.b16 %v4771, %v4763
        %v5156 = vpack.c.b16 %v4772, %v4764
        %v5157 = vpack.c.b16 %v4773, %v4765
        %v5158 = vpack.c.b16 %v4782, %v4774
        %v5159 = vpack.c.b16 %v4783, %v4775
        %v5160 = vpack.c.b16 %v4784, %v4776
        %v5161 = vpack.c.b16 %v4785, %v4777
        %v5162 = vpack.c.b16 %v4786, %v4778
        %v5163 = vpack.c.b16 %v4787, %v4779
        %v5164 = vpack.c.b16 %v4788, %v4780
        %v5165 = vpack.c.b16 %v4789, %v4781
        %v5166 = vpack.c.b16 %v4798, %v4790
        %v5167 = vpack.c.b16 %v4799, %v4791
        %v5168 = vpack.c.b16 %v4800, %v4792
        %v5169 = vpack.c.b16 %v4801, %v4793
        %v5170 = vpack.c.b16 %v4802, %v4794
        %v5171 = vpack.c.b16 %v4803, %v4795
        %v5172 = vpack.c.b16 %v4804, %v4796
        %v5173 = vpack.c.b16 %v4805, %v4797
        %v5174 = vpack.c.b16 %v4814, %v4806
        %v5175 = vpack.c.b16 %v4815, %v4807
        %v5176 = vpack.c.b16 %v4816, %v4808
        %v5177 = vpack.c.b16 %v4817, %v4809
        %v5178 = vpack.c.b16 %v4818, %v4810
        %v5179 = vpack.c.b16 %v4819, %v4811
        %v5180 = vpack.c.b16 %v4820, %v4812
        %v5181 = vpack.c.b16 %v4821, %v4813
        %v5182 = vpack.c.b16 %v4830, %v4822
        %v5183 = vpack.c.b16 %v4831, %v4823
        %v5184 = vpack.c.b16 %v4832, %v4824
        %v5185 = vpack.c.b16 %v4833, %v4825
        %v5186 = vpack.c.b16 %v4834, %v4826
        %v5187 = vpack.c.b16 %v4835, %v4827
        %v5188 = vpack.c.b16 %v4836, %v4828
        %v5189 = vpack.c.b16 %v4837, %v4829
        %v5190 = vpack.c.b16 %v4846, %v4838
        %v5191 = vpack.c.b16 %v4847, %v4839
        %v5192 = vpack.c.b16 %v4848, %v4840
        %v5193 = vpack.c.b16 %v4849, %v4841
        %v5194 = vpack.c.b16 %v4850, %v4842
        %v5195 = vpack.c.b16 %v4851, %v4843
        %v5196 = vpack.c.b16 %v4852, %v4844
        %v5197 = vpack.c.b16 %v4853, %v4845
        %v5198 = vpack.c.b16 %v4862, %v4854
        %v5199 = vpack.c.b16 %v4863, %v4855
        %v5200 = vpack.c.b16 %v4864, %v4856
        %v5201 = vpack.c.b16 %v4865, %v4857
        %v5202 = vpack.c.b16 %v4866, %v4858
        %v5203 = vpack.c.b16 %v4867, %v4859
        %v5204 = vpack.c.b16 %v4868, %v4860
        %v5205 = vpack.c.b16 %v4869, %v4861
        %v5206 = vpack.c.b16 %v4878, %v4870
        %v5207 = vpack.c.b16 %v4879, %v4871
        %v5208 = vpack.c.b16 %v4880, %v4872
        %v5209 = vpack.c.b16 %v4881, %v4873
        %v5210 = vpack.c.b16 %v4882, %v4874
        %v5211 = vpack.c.b16 %v4883, %v4875
        %v5212 = vpack.c.b16 %v4884, %v4876
        %v5213 = vpack.c.b16 %v4885, %v4877
        %v5214 = vpack.c.b16 %v4894, %v4886
        %v5215 = vpack.c.b16 %v4895, %v4887
        %v5216 = vpack.c.b16 %v4896, %v4888
        %v5217 = vpack.c.b16 %v4897, %v4889
        %v5218 = vpack.c.b16 %v4898, %v4890
        %v5219 = vpack.c.b16 %v4899, %v4891
        %v5220 = vpack.c.b16 %v4900, %v4892
        %v5221 = vpack.c.b16 %v4901, %v4893
        %v5222 = vpack.c.b16 %v4910, %v4902
        %v5223 = vpack.c.b16 %v4911, %v4903
        %v5224 = vpack.c.b16 %v4912, %v4904
        %v5225 = vpack.c.b16 %v4913, %v4905
        %v5226 = vpack.c.b16 %v4914, %v4906
        %v5227 = vpack.c.b16 %v4915, %v4907
        %v5228 = vpack.c.b16 %v4916, %v4908
        %v5229 = vpack.c.b16 %v4917, %v4909
        %v5230 = vpack.c.b16 %v4926, %v4918
        %v5231 = vpack.c.b16 %v4927, %v4919
        %v5232 = vpack.c.b16 %v4928, %v4920
        %v5233 = vpack.c.b16 %v4929, %v4921
        %v5234 = vpack.c.b16 %v4930, %v4922
        %v5235 = vpack.c.b16 %v4931, %v4923
        %v5236 = vpack.c.b16 %v4932, %v4924
        %v5237 = vpack.c.b16 %v4933, %v4925
        %v5238 = vpack.c.b16 %v4942, %v4934
        %v5239 = vpack.c.b16 %v4943, %v4935
        %v5240 = vpack.c.b16 %v4944, %v4936
        %v5241 = vpack.c.b16 %v4945, %v4937
        %v5242 = vpack.c.b16 %v4946, %v4938
        %v5243 = vpack.c.b16 %v4947, %v4939
        %v5244 = vpack.c.b16 %v4948, %v4940
        %v5245 = vpack.c.b16 %v4949, %v4941
        %v5246 = vpack.c.b16 %v4958, %v4950
        %v5247 = vpack.c.b16 %v4959, %v4951
        %v5248 = vpack.c.b16 %v4960, %v4952
        %v5249 = vpack.c.b16 %v4961, %v4953
        %v5250 = vpack.c.b16 %v4962, %v4954
        %v5251 = vpack.c.b16 %v4963, %v4955
        %v5252 = vpack.c.b16 %v4964, %v4956
        %v5253 = vpack.c.b16 %v4965, %v4957
        %v5254 = vpack.c.b16 %v4974, %v4966
        %v5255 = vpack.c.b16 %v4975, %v4967
        %v5256 = vpack.c.b16 %v4976, %v4968
        %v5257 = vpack.c.b16 %v4977, %v4969
        %v5258 = vpack.c.b16 %v4978, %v4970
        %v5259 = vpack.c.b16 %v4979, %v4971
        %v5260 = vpack.c.b16 %v4980, %v4972
        %v5261 = vpack.c.b16 %v4981, %v4973
        %v5262 = vpack.c.b16 %v4990, %v4982
        %v5263 = vpack.c.b16 %v4991, %v4983
        %v5264 = vpack.c.b16 %v4992, %v4984
        %v5265 = vpack.c.b16 %v4993, %v4985
        %v5266 = vpack.c.b16 %v4994, %v4986
        %v5267 = vpack.c.b16 %v4995, %v4987
        %v5268 = vpack.c.b16 %v4996, %v4988
        %v5269 = vpack.c.b16 %v4997, %v4989
        %v5270 = vpack.c.b16 %v5006, %v4998
        %v5271 = vpack.c.b16 %v5007, %v4999
        %v5272 = vpack.c.b16 %v5008, %v5000
        %v5273 = vpack.c.b16 %v5009, %v5001
        %v5274 = vpack.c.b16 %v5010, %v5002
        %v5275 = vpack.c.b16 %v5011, %v5003
        %v5276 = vpack.c.b16 %v5012, %v5004
        %v5277 = vpack.c.b16 %v5013, %v5005
        %v5278 = vpack.c.b16 %v5022, %v5014
        %v5279 = vpack.c.b16 %v5023, %v5015
        %v5280 = vpack.c.b16 %v5024, %v5016
        %v5281 = vpack.c.b16 %v5025, %v5017
        %v5282 = vpack.c.b16 %v5026, %v5018
        %v5283 = vpack.c.b16 %v5027, %v5019
        %v5284 = vpack.c.b16 %v5028, %v5020
        %v5285 = vpack.c.b16 %v5029, %v5021
        %5542 = vmatprep.subr.bf16.mxu0 0
        %5543 = vmatpush1.bf16.msra.mxu0 %v3558
        %5544 = vmatprep.subr.bf16.mxu0 0
        %5545 = vmatpush1.bf16.msra.mxu0 %v3559
        %5546 = vmatprep.subr.bf16.mxu0 0
        %5547 = vmatpush1.bf16.msra.mxu0 %v3560
        %5548 = vmatprep.subr.bf16.mxu0 0
        %5549 = vmatpush1.bf16.msra.mxu0 %v3561
        %5550 = vmatprep.subr.bf16.mxu0 0
        %5551 = vmatpush1.bf16.msra.mxu0 %v3562
        %5552 = vmatprep.subr.bf16.mxu0 0
        %5553 = vmatpush1.bf16.msra.mxu0 %v3563
        %5554 = vmatprep.subr.bf16.mxu0 0
        %5555 = vmatpush1.bf16.msra.mxu0 %v3564
        %5556 = vmatprep.subr.bf16.mxu0 0
        %5557 = vmatpush1.bf16.msra.mxu0 %v3565
        %5558 = vmatprep.subr.bf16.mxu0 0
        %5559 = vmatpush1.bf16.msra.mxu0 %v3566
        %5560 = vmatprep.subr.bf16.mxu0 0
        %5561 = vmatpush1.bf16.msra.mxu0 %v3567
        %5562 = vmatprep.subr.bf16.mxu0 0
        %5563 = vmatpush1.bf16.msra.mxu0 %v3568
        %5564 = vmatprep.subr.bf16.mxu0 0
        %5565 = vmatpush1.bf16.msra.mxu0 %v3569
        %5566 = vmatprep.subr.bf16.mxu0 0
        %5567 = vmatpush1.bf16.msra.mxu0 %v3570
        %5568 = vmatprep.subr.bf16.mxu0 0
        %5569 = vmatpush1.bf16.msra.mxu0 %v3571
        %5570 = vmatprep.subr.bf16.mxu0 0
        %5571 = vmatpush1.bf16.msra.mxu0 %v3572
        %5572 = vmatprep.subr.bf16.mxu0 0
        %5573 = vmatpush1.bf16.msra.mxu0 %v3573
        %5574 = vmatprep.mubr.bf16.mxu0 %v5031
        %5575 = vmatmul.mubr.bf16.gmra.mrb[0].mxu0 %v5030
        %v5576 = vpop.f32.mrb[0].mxu0
        %v5577 = vadd.f32 %v3945, %v5576
        %v5578 = vpop.f32.mrb[0].mxu0
        %v5579 = vpop.f32.mrb[0].mxu0
        %v5580 = vadd.f32 %v3950, %v5579
        %v5581 = vpop.f32.mrb[0].mxu0
        %5582 = vmatprep.mubr.bf16.mxu0 %v5039
        %5583 = vmatmul.mubr.bf16.gmra.mrb[0].mxu0 %v5038
        %v5584 = vpop.f32.mrb[0].mxu0
        %v5585 = vadd.f32 %v3955, %v5584
        %v5586 = vpop.f32.mrb[0].mxu0
        %v5587 = vpop.f32.mrb[0].mxu0
        %v5588 = vadd.f32 %v3960, %v5587
        %v5589 = vpop.f32.mrb[0].mxu0
        %5590 = vmatprep.mubr.bf16.mxu0 %v5047
        %5591 = vmatmul.mubr.bf16.gmra.mrb[0].mxu0 %v5046
        %v5592 = vpop.f32.mrb[0].mxu0
        %v5593 = vadd.f32 %v3965, %v5592
        %v5594 = vpop.f32.mrb[0].mxu0
        %v5595 = vpop.f32.mrb[0].mxu0
        %v5596 = vadd.f32 %v3970, %v5595
        %v5597 = vpop.f32.mrb[0].mxu0
        %5598 = vmatprep.mubr.bf16.mxu0 %v5055
        %5599 = vmatmul.mubr.bf16.gmra.mrb[0].mxu0 %v5054
        %v5600 = vpop.f32.mrb[0].mxu0
        %v5601 = vadd.f32 %v3975, %v5600
        %v5602 = vpop.f32.mrb[0].mxu0
        %v5603 = vpop.f32.mrb[0].mxu0
        %v5604 = vadd.f32 %v3980, %v5603
        %v5605 = vpop.f32.mrb[0].mxu0
        %5606 = vmatprep.mubr.bf16.mxu0 %v5063
        %5607 = vmatmul.mubr.bf16.gmra.mrb[0].mxu0 %v5062
        %v5608 = vpop.f32.mrb[0].mxu0
        %v5609 = vadd.f32 %v3985, %v5608
        %v5610 = vpop.f32.mrb[0].mxu0
        %v5611 = vpop.f32.mrb[0].mxu0
        %v5612 = vadd.f32 %v3990, %v5611
        %v5613 = vpop.f32.mrb[0].mxu0
        %5614 = vmatprep.mubr.bf16.mxu0 %v5071
        %5615 = vmatmul.mubr.bf16.gmra.mrb[0].mxu0 %v5070
        %v5616 = vpop.f32.mrb[0].mxu0
        %v5617 = vadd.f32 %v3995, %v5616
        %v5618 = vpop.f32.mrb[0].mxu0
        %v5619 = vpop.f32.mrb[0].mxu0
        %v5620 = vadd.f32 %v4000, %v5619
        %v5621 = vpop.f32.mrb[0].mxu0
        %5622 = vmatprep.mubr.bf16.mxu0 %v5079
        %5623 = vmatmul.mubr.bf16.gmra.mrb[0].mxu0 %v5078
        %v5624 = vpop.f32.mrb[0].mxu0
        %v5625 = vadd.f32 %v4005, %v5624
        %v5626 = vpop.f32.mrb[0].mxu0
        %v5627 = vpop.f32.mrb[0].mxu0
        %v5628 = vadd.f32 %v4010, %v5627
        %v5629 = vpop.f32.mrb[0].mxu0
        %5630 = vmatprep.mubr.bf16.mxu0 %v5087
        %5631 = vmatmul.mubr.bf16.gmra.mrb[0].mxu0 %v5086
        %v5632 = vpop.f32.mrb[0].mxu0
        %v5633 = vadd.f32 %v4015, %v5632
        %v5634 = vpop.f32.mrb[0].mxu0
        %v5635 = vpop.f32.mrb[0].mxu0
        %v5636 = vadd.f32 %v4020, %v5635
        %v5637 = vpop.f32.mrb[0].mxu0
        %5638 = vmatprep.mubr.bf16.mxu0 %v5095
        %5639 = vmatmul.mubr.bf16.gmra.mrb[0].mxu0 %v5094
        %v5640 = vpop.f32.mrb[0].mxu0
        %v5641 = vadd.f32 %v4025, %v5640
        %v5642 = vpop.f32.mrb[0].mxu0
        %v5643 = vpop.f32.mrb[0].mxu0
        %v5644 = vadd.f32 %v4030, %v5643
        %v5645 = vpop.f32.mrb[0].mxu0
        %5646 = vmatprep.mubr.bf16.mxu0 %v5103
        %5647 = vmatmul.mubr.bf16.gmra.mrb[0].mxu0 %v5102
        %v5648 = vpop.f32.mrb[0].mxu0
        %v5649 = vadd.f32 %v4035, %v5648
        %v5650 = vpop.f32.mrb[0].mxu0
        %v5651 = vpop.f32.mrb[0].mxu0
        %v5652 = vadd.f32 %v4040, %v5651
        %v5653 = vpop.f32.mrb[0].mxu0
        %5654 = vmatprep.mubr.bf16.mxu0 %v5111
        %5655 = vmatmul.mubr.bf16.gmra.mrb[0].mxu0 %v5110
        %v5656 = vpop.f32.mrb[0].mxu0
        %v5657 = vadd.f32 %v4045, %v5656
        %v5658 = vpop.f32.mrb[0].mxu0
        %v5659 = vpop.f32.mrb[0].mxu0
        %v5660 = vadd.f32 %v4050, %v5659
        %v5661 = vpop.f32.mrb[0].mxu0
        %5662 = vmatprep.mubr.bf16.mxu0 %v5119
        %5663 = vmatmul.mubr.bf16.gmra.mrb[0].mxu0 %v5118
        %v5664 = vpop.f32.mrb[0].mxu0
        %v5665 = vadd.f32 %v4055, %v5664
        %v5666 = vpop.f32.mrb[0].mxu0
        %v5667 = vpop.f32.mrb[0].mxu0
        %v5668 = vadd.f32 %v4060, %v5667
        %v5669 = vpop.f32.mrb[0].mxu0
        %5670 = vmatprep.mubr.bf16.mxu0 %v5127
        %5671 = vmatmul.mubr.bf16.gmra.mrb[0].mxu0 %v5126
        %v5672 = vpop.f32.mrb[0].mxu0
        %v5673 = vadd.f32 %v4065, %v5672
        %v5674 = vpop.f32.mrb[0].mxu0
        %v5675 = vpop.f32.mrb[0].mxu0
        %v5676 = vadd.f32 %v4070, %v5675
        %v5677 = vpop.f32.mrb[0].mxu0
        %5678 = vmatprep.mubr.bf16.mxu0 %v5135
        %5679 = vmatmul.mubr.bf16.gmra.mrb[0].mxu0 %v5134
        %v5680 = vpop.f32.mrb[0].mxu0
        %v5681 = vadd.f32 %v4075, %v5680
        %v5682 = vpop.f32.mrb[0].mxu0
        %v5683 = vpop.f32.mrb[0].mxu0
        %v5684 = vadd.f32 %v4080, %v5683
        %v5685 = vpop.f32.mrb[0].mxu0
        %5686 = vmatprep.mubr.bf16.mxu0 %v5143
        %5687 = vmatmul.mubr.bf16.gmra.mrb[0].mxu0 %v5142
        %v5688 = vpop.f32.mrb[0].mxu0
        %v5689 = vadd.f32 %v4085, %v5688
        %v5690 = vpop.f32.mrb[0].mxu0
        %v5691 = vpop.f32.mrb[0].mxu0
        %v5692 = vadd.f32 %v4090, %v5691
        %v5693 = vpop.f32.mrb[0].mxu0
        %5694 = vmatprep.mubr.bf16.mxu0 %v5151
        %5695 = vmatmul.mubr.bf16.gmra.mrb[0].mxu0 %v5150
        %v5696 = vpop.f32.mrb[0].mxu0
        %v5697 = vadd.f32 %v4095, %v5696
        %v5698 = vpop.f32.mrb[0].mxu0
        %v5699 = vpop.f32.mrb[0].mxu0
        %v5700 = vadd.f32 %v4100, %v5699
        %v5701 = vpop.f32.mrb[0].mxu0
        %5702 = vmatprep.mubr.bf16.mxu0 %v5159
        %5703 = vmatmul.mubr.bf16.gmra.mrb[0].mxu0 %v5158
        %v5704 = vpop.f32.mrb[0].mxu0
        %v5705 = vadd.f32 %v4105, %v5704
        %v5706 = vpop.f32.mrb[0].mxu0
        %v5707 = vpop.f32.mrb[0].mxu0
        %v5708 = vadd.f32 %v4110, %v5707
        %v5709 = vpop.f32.mrb[0].mxu0
        %5710 = vmatprep.mubr.bf16.mxu0 %v5167
        %5711 = vmatmul.mubr.bf16.gmra.mrb[0].mxu0 %v5166
        %v5712 = vpop.f32.mrb[0].mxu0
        %v5713 = vadd.f32 %v4115, %v5712
        %v5714 = vpop.f32.mrb[0].mxu0
        %v5715 = vpop.f32.mrb[0].mxu0
        %v5716 = vadd.f32 %v4120, %v5715
        %v5717 = vpop.f32.mrb[0].mxu0
        %5718 = vmatprep.mubr.bf16.mxu0 %v5175
        %5719 = vmatmul.mubr.bf16.gmra.mrb[0].mxu0 %v5174
        %v5720 = vpop.f32.mrb[0].mxu0
        %v5721 = vadd.f32 %v4125, %v5720
        %v5722 = vpop.f32.mrb[0].mxu0
        %v5723 = vpop.f32.mrb[0].mxu0
        %v5724 = vadd.f32 %v4130, %v5723
        %v5725 = vpop.f32.mrb[0].mxu0
        %5726 = vmatprep.mubr.bf16.mxu0 %v5183
        %5727 = vmatmul.mubr.bf16.gmra.mrb[0].mxu0 %v5182
        %v5728 = vpop.f32.mrb[0].mxu0
        %v5729 = vadd.f32 %v4135, %v5728
        %v5730 = vpop.f32.mrb[0].mxu0
        %v5731 = vpop.f32.mrb[0].mxu0
        %v5732 = vadd.f32 %v4140, %v5731
        %v5733 = vpop.f32.mrb[0].mxu0
        %5734 = vmatprep.mubr.bf16.mxu0 %v5191
        %5735 = vmatmul.mubr.bf16.gmra.mrb[0].mxu0 %v5190
        %v5736 = vpop.f32.mrb[0].mxu0
        %v5737 = vadd.f32 %v4145, %v5736
        %v5738 = vpop.f32.mrb[0].mxu0
        %v5739 = vpop.f32.mrb[0].mxu0
        %v5740 = vadd.f32 %v4150, %v5739
        %v5741 = vpop.f32.mrb[0].mxu0
        %5742 = vmatprep.mubr.bf16.mxu0 %v5199
        %5743 = vmatmul.mubr.bf16.gmra.mrb[0].mxu0 %v5198
        %v5744 = vpop.f32.mrb[0].mxu0
        %v5745 = vadd.f32 %v4155, %v5744
        %v5746 = vpop.f32.mrb[0].mxu0
        %v5747 = vpop.f32.mrb[0].mxu0
        %v5748 = vadd.f32 %v4160, %v5747
        %v5749 = vpop.f32.mrb[0].mxu0
        %5750 = vmatprep.mubr.bf16.mxu0 %v5207
        %5751 = vmatmul.mubr.bf16.gmra.mrb[0].mxu0 %v5206
        %v5752 = vpop.f32.mrb[0].mxu0
        %v5753 = vadd.f32 %v4165, %v5752
        %v5754 = vpop.f32.mrb[0].mxu0
        %v5755 = vpop.f32.mrb[0].mxu0
        %v5756 = vadd.f32 %v4170, %v5755
        %v5757 = vpop.f32.mrb[0].mxu0
        %5758 = vmatprep.mubr.bf16.mxu0 %v5215
        %5759 = vmatmul.mubr.bf16.gmra.mrb[0].mxu0 %v5214
        %v5760 = vpop.f32.mrb[0].mxu0
        %v5761 = vadd.f32 %v4175, %v5760
        %v5762 = vpop.f32.mrb[0].mxu0
        %v5763 = vpop.f32.mrb[0].mxu0
        %v5764 = vadd.f32 %v4180, %v5763
        %v5765 = vpop.f32.mrb[0].mxu0
        %5766 = vmatprep.mubr.bf16.mxu0 %v5223
        %5767 = vmatmul.mubr.bf16.gmra.mrb[0].mxu0 %v5222
        %v5768 = vpop.f32.mrb[0].mxu0
        %v5769 = vadd.f32 %v4185, %v5768
        %v5770 = vpop.f32.mrb[0].mxu0
        %v5771 = vpop.f32.mrb[0].mxu0
        %v5772 = vadd.f32 %v4190, %v5771
        %v5773 = vpop.f32.mrb[0].mxu0
        %5774 = vmatprep.mubr.bf16.mxu0 %v5231
        %5775 = vmatmul.mubr.bf16.gmra.mrb[0].mxu0 %v5230
        %v5776 = vpop.f32.mrb[0].mxu0
        %v5777 = vadd.f32 %v4195, %v5776
        %v5778 = vpop.f32.mrb[0].mxu0
        %v5779 = vpop.f32.mrb[0].mxu0
        %v5780 = vadd.f32 %v4200, %v5779
        %v5781 = vpop.f32.mrb[0].mxu0
        %5782 = vmatprep.mubr.bf16.mxu0 %v5239
        %5783 = vmatmul.mubr.bf16.gmra.mrb[0].mxu0 %v5238
        %v5784 = vpop.f32.mrb[0].mxu0
        %v5785 = vadd.f32 %v4205, %v5784
        %v5786 = vpop.f32.mrb[0].mxu0
        %v5787 = vpop.f32.mrb[0].mxu0
        %v5788 = vadd.f32 %v4210, %v5787
        %v5789 = vpop.f32.mrb[0].mxu0
        %5790 = vmatprep.mubr.bf16.mxu0 %v5247
        %5791 = vmatmul.mubr.bf16.gmra.mrb[0].mxu0 %v5246
        %v5792 = vpop.f32.mrb[0].mxu0
        %v5793 = vadd.f32 %v4215, %v5792
        %v5794 = vpop.f32.mrb[0].mxu0
        %v5795 = vpop.f32.mrb[0].mxu0
        %v5796 = vadd.f32 %v4220, %v5795
        %v5797 = vpop.f32.mrb[0].mxu0
        %5798 = vmatprep.mubr.bf16.mxu0 %v5255
        %5799 = vmatmul.mubr.bf16.gmra.mrb[0].mxu0 %v5254
        %v5800 = vpop.f32.mrb[0].mxu0
        %v5801 = vadd.f32 %v4225, %v5800
        %v5802 = vpop.f32.mrb[0].mxu0
        %v5803 = vpop.f32.mrb[0].mxu0
        %v5804 = vadd.f32 %v4230, %v5803
        %v5805 = vpop.f32.mrb[0].mxu0
        %5806 = vmatprep.mubr.bf16.mxu0 %v5263
        %5807 = vmatmul.mubr.bf16.gmra.mrb[0].mxu0 %v5262
        %v5808 = vpop.f32.mrb[0].mxu0
        %v5809 = vadd.f32 %v4235, %v5808
        %v5810 = vpop.f32.mrb[0].mxu0
        %v5811 = vpop.f32.mrb[0].mxu0
        %v5812 = vadd.f32 %v4240, %v5811
        %v5813 = vpop.f32.mrb[0].mxu0
        %5814 = vmatprep.mubr.bf16.mxu0 %v5271
        %5815 = vmatmul.mubr.bf16.gmra.mrb[0].mxu0 %v5270
        %v5816 = vpop.f32.mrb[0].mxu0
        %v5817 = vadd.f32 %v4245, %v5816
        %v5818 = vpop.f32.mrb[0].mxu0
        %v5819 = vpop.f32.mrb[0].mxu0
        %v5820 = vadd.f32 %v4250, %v5819
        %v5821 = vpop.f32.mrb[0].mxu0
        %5822 = vmatprep.mubr.bf16.mxu0 %v5279
        %5823 = vmatmul.mubr.bf16.gmra.mrb[0].mxu0 %v5278
        %v5824 = vpop.f32.mrb[0].mxu0
        %v5825 = vadd.f32 %v4255, %v5824
        %v5826 = vpop.f32.mrb[0].mxu0
        %v5827 = vpop.f32.mrb[0].mxu0
        %v5828 = vadd.f32 %v4260, %v5827
        %v5829 = vpop.f32.mrb[0].mxu0
        %5830 = vdwg.mxu0
        %5831 = vmatprep.subr.bf16.mxu0 0
        %5832 = vmatpush1.bf16.msra.mxu0 %v3574
        %5833 = vmatprep.subr.bf16.mxu0 0
        %5834 = vmatpush1.bf16.msra.mxu0 %v3575
        %5835 = vmatprep.subr.bf16.mxu0 0
        %5836 = vmatpush1.bf16.msra.mxu0 %v3576
        %5837 = vmatprep.subr.bf16.mxu0 0
        %5838 = vmatpush1.bf16.msra.mxu0 %v3577
        %5839 = vmatprep.subr.bf16.mxu0 0
        %5840 = vmatpush1.bf16.msra.mxu0 %v3578
        %5841 = vmatprep.subr.bf16.mxu0 0
        %5842 = vmatpush1.bf16.msra.mxu0 %v3579
        %5843 = vmatprep.subr.bf16.mxu0 0
        %5844 = vmatpush1.bf16.msra.mxu0 %v3580
        %5845 = vmatprep.subr.bf16.mxu0 0
        %5846 = vmatpush1.bf16.msra.mxu0 %v3581
        %5847 = vmatprep.subr.bf16.mxu0 0
        %5848 = vmatpush1.bf16.msra.mxu0 %v3582
        %5849 = vmatprep.subr.bf16.mxu0 0
        %5850 = vmatpush1.bf16.msra.mxu0 %v3583
        %5851 = vmatprep.subr.bf16.mxu0 0
        %5852 = vmatpush1.bf16.msra.mxu0 %v3584
        %5853 = vmatprep.subr.bf16.mxu0 0
        %5854 = vmatpush1.bf16.msra.mxu0 %v3585
        %5855 = vmatprep.subr.bf16.mxu0 0
        %5856 = vmatpush1.bf16.msra.mxu0 %v3586
        %5857 = vmatprep.subr.bf16.mxu0 0
        %5858 = vmatpush1.bf16.msra.mxu0 %v3587
        %5859 = vmatprep.subr.bf16.mxu0 0
        %5860 = vmatpush1.bf16.msra.mxu0 %v3588
        %5861 = vmatprep.subr.bf16.mxu0 0
        %5862 = vmatpush1.bf16.msra.mxu0 %v3589
        %5863 = vmatprep.mubr.bf16.mxu0 %v5033
        %5864 = vmatmul.mubr.bf16.gmra.mrb[0].mxu0 %v5032
        %v5865 = vpop.f32.mrb[0].mxu0
        %v5866 = vadd.f32 %v5577, %v5865
        %v5867 = vpop.f32.mrb[0].mxu0
        %v5868 = vpop.f32.mrb[0].mxu0
        %v5869 = vadd.f32 %v5580, %v5868
        %v5870 = vpop.f32.mrb[0].mxu0
        %5871 = vmatprep.mubr.bf16.mxu0 %v5041
        %5872 = vmatmul.mubr.bf16.gmra.mrb[0].mxu0 %v5040
        %v5873 = vpop.f32.mrb[0].mxu0
        %v5874 = vadd.f32 %v5585, %v5873
        %v5875 = vpop.f32.mrb[0].mxu0
        %v5876 = vpop.f32.mrb[0].mxu0
        %v5877 = vadd.f32 %v5588, %v5876
        %v5878 = vpop.f32.mrb[0].mxu0
        %5879 = vmatprep.mubr.bf16.mxu0 %v5049
        %5880 = vmatmul.mubr.bf16.gmra.mrb[0].mxu0 %v5048
        %v5881 = vpop.f32.mrb[0].mxu0
        %v5882 = vadd.f32 %v5593, %v5881
        %v5883 = vpop.f32.mrb[0].mxu0
        %v5884 = vpop.f32.mrb[0].mxu0
        %v5885 = vadd.f32 %v5596, %v5884
        %v5886 = vpop.f32.mrb[0].mxu0
        %5887 = vmatprep.mubr.bf16.mxu0 %v5057
        %5888 = vmatmul.mubr.bf16.gmra.mrb[0].mxu0 %v5056
        %v5889 = vpop.f32.mrb[0].mxu0
        %v5890 = vadd.f32 %v5601, %v5889
        %v5891 = vpop.f32.mrb[0].mxu0
        %v5892 = vpop.f32.mrb[0].mxu0
        %v5893 = vadd.f32 %v5604, %v5892
        %v5894 = vpop.f32.mrb[0].mxu0
        %5895 = vmatprep.mubr.bf16.mxu0 %v5065
        %5896 = vmatmul.mubr.bf16.gmra.mrb[0].mxu0 %v5064
        %v5897 = vpop.f32.mrb[0].mxu0
        %v5898 = vadd.f32 %v5609, %v5897
        %v5899 = vpop.f32.mrb[0].mxu0
        %v5900 = vpop.f32.mrb[0].mxu0
        %v5901 = vadd.f32 %v5612, %v5900
        %v5902 = vpop.f32.mrb[0].mxu0
        %5903 = vmatprep.mubr.bf16.mxu0 %v5073
        %5904 = vmatmul.mubr.bf16.gmra.mrb[0].mxu0 %v5072
        %v5905 = vpop.f32.mrb[0].mxu0
        %v5906 = vadd.f32 %v5617, %v5905
        %v5907 = vpop.f32.mrb[0].mxu0
        %v5908 = vpop.f32.mrb[0].mxu0
        %v5909 = vadd.f32 %v5620, %v5908
        %v5910 = vpop.f32.mrb[0].mxu0
        %5911 = vmatprep.mubr.bf16.mxu0 %v5081
        %5912 = vmatmul.mubr.bf16.gmra.mrb[0].mxu0 %v5080
        %v5913 = vpop.f32.mrb[0].mxu0
        %v5914 = vadd.f32 %v5625, %v5913
        %v5915 = vpop.f32.mrb[0].mxu0
        %v5916 = vpop.f32.mrb[0].mxu0
        %v5917 = vadd.f32 %v5628, %v5916
        %v5918 = vpop.f32.mrb[0].mxu0
        %5919 = vmatprep.mubr.bf16.mxu0 %v5089
        %5920 = vmatmul.mubr.bf16.gmra.mrb[0].mxu0 %v5088
        %v5921 = vpop.f32.mrb[0].mxu0
        %v5922 = vadd.f32 %v5633, %v5921
        %v5923 = vpop.f32.mrb[0].mxu0
        %v5924 = vpop.f32.mrb[0].mxu0
        %v5925 = vadd.f32 %v5636, %v5924
        %v5926 = vpop.f32.mrb[0].mxu0
        %5927 = vmatprep.mubr.bf16.mxu0 %v5097
        %5928 = vmatmul.mubr.bf16.gmra.mrb[0].mxu0 %v5096
        %v5929 = vpop.f32.mrb[0].mxu0
        %v5930 = vadd.f32 %v5641, %v5929
        %v5931 = vpop.f32.mrb[0].mxu0
        %v5932 = vpop.f32.mrb[0].mxu0
        %v5933 = vadd.f32 %v5644, %v5932
        %v5934 = vpop.f32.mrb[0].mxu0
        %5935 = vmatprep.mubr.bf16.mxu0 %v5105
        %5936 = vmatmul.mubr.bf16.gmra.mrb[0].mxu0 %v5104
        %v5937 = vpop.f32.mrb[0].mxu0
        %v5938 = vadd.f32 %v5649, %v5937
        %v5939 = vpop.f32.mrb[0].mxu0
        %v5940 = vpop.f32.mrb[0].mxu0
        %v5941 = vadd.f32 %v5652, %v5940
        %v5942 = vpop.f32.mrb[0].mxu0
        %5943 = vmatprep.mubr.bf16.mxu0 %v5113
        %5944 = vmatmul.mubr.bf16.gmra.mrb[0].mxu0 %v5112
        %v5945 = vpop.f32.mrb[0].mxu0
        %v5946 = vadd.f32 %v5657, %v5945
        %v5947 = vpop.f32.mrb[0].mxu0
        %v5948 = vpop.f32.mrb[0].mxu0
        %v5949 = vadd.f32 %v5660, %v5948
        %v5950 = vpop.f32.mrb[0].mxu0
        %5951 = vmatprep.mubr.bf16.mxu0 %v5121
        %5952 = vmatmul.mubr.bf16.gmra.mrb[0].mxu0 %v5120
        %v5953 = vpop.f32.mrb[0].mxu0
        %v5954 = vadd.f32 %v5665, %v5953
        %v5955 = vpop.f32.mrb[0].mxu0
        %v5956 = vpop.f32.mrb[0].mxu0
        %v5957 = vadd.f32 %v5668, %v5956
        %v5958 = vpop.f32.mrb[0].mxu0
        %5959 = vmatprep.mubr.bf16.mxu0 %v5129
        %5960 = vmatmul.mubr.bf16.gmra.mrb[0].mxu0 %v5128
        %v5961 = vpop.f32.mrb[0].mxu0
        %v5962 = vadd.f32 %v5673, %v5961
        %v5963 = vpop.f32.mrb[0].mxu0
        %v5964 = vpop.f32.mrb[0].mxu0
        %v5965 = vadd.f32 %v5676, %v5964
        %v5966 = vpop.f32.mrb[0].mxu0
        %5967 = vmatprep.mubr.bf16.mxu0 %v5137
        %5968 = vmatmul.mubr.bf16.gmra.mrb[0].mxu0 %v5136
        %v5969 = vpop.f32.mrb[0].mxu0
        %v5970 = vadd.f32 %v5681, %v5969
        %v5971 = vpop.f32.mrb[0].mxu0
        %v5972 = vpop.f32.mrb[0].mxu0
        %v5973 = vadd.f32 %v5684, %v5972
        %v5974 = vpop.f32.mrb[0].mxu0
        %5975 = vmatprep.mubr.bf16.mxu0 %v5145
        %5976 = vmatmul.mubr.bf16.gmra.mrb[0].mxu0 %v5144
        %v5977 = vpop.f32.mrb[0].mxu0
        %v5978 = vadd.f32 %v5689, %v5977
        %v5979 = vpop.f32.mrb[0].mxu0
        %v5980 = vpop.f32.mrb[0].mxu0
        %v5981 = vadd.f32 %v5692, %v5980
        %v5982 = vpop.f32.mrb[0].mxu0
        %5983 = vmatprep.mubr.bf16.mxu0 %v5153
        %5984 = vmatmul.mubr.bf16.gmra.mrb[0].mxu0 %v5152
        %v5985 = vpop.f32.mrb[0].mxu0
        %v5986 = vadd.f32 %v5697, %v5985
        %v5987 = vpop.f32.mrb[0].mxu0
        %v5988 = vpop.f32.mrb[0].mxu0
        %v5989 = vadd.f32 %v5700, %v5988
        %v5990 = vpop.f32.mrb[0].mxu0
        %5991 = vmatprep.mubr.bf16.mxu0 %v5161
        %5992 = vmatmul.mubr.bf16.gmra.mrb[0].mxu0 %v5160
        %v5993 = vpop.f32.mrb[0].mxu0
        %v5994 = vadd.f32 %v5705, %v5993
        %v5995 = vpop.f32.mrb[0].mxu0
        %v5996 = vpop.f32.mrb[0].mxu0
        %v5997 = vadd.f32 %v5708, %v5996
        %v5998 = vpop.f32.mrb[0].mxu0
        %5999 = vmatprep.mubr.bf16.mxu0 %v5169
        %6000 = vmatmul.mubr.bf16.gmra.mrb[0].mxu0 %v5168
        %v6001 = vpop.f32.mrb[0].mxu0
        %v6002 = vadd.f32 %v5713, %v6001
        %v6003 = vpop.f32.mrb[0].mxu0
        %v6004 = vpop.f32.mrb[0].mxu0
        %v6005 = vadd.f32 %v5716, %v6004
        %v6006 = vpop.f32.mrb[0].mxu0
        %6007 = vmatprep.mubr.bf16.mxu0 %v5177
        %6008 = vmatmul.mubr.bf16.gmra.mrb[0].mxu0 %v5176
        %v6009 = vpop.f32.mrb[0].mxu0
        %v6010 = vadd.f32 %v5721, %v6009
        %v6011 = vpop.f32.mrb[0].mxu0
        %v6012 = vpop.f32.mrb[0].mxu0
        %v6013 = vadd.f32 %v5724, %v6012
        %v6014 = vpop.f32.mrb[0].mxu0
        %6015 = vmatprep.mubr.bf16.mxu0 %v5185
        %6016 = vmatmul.mubr.bf16.gmra.mrb[0].mxu0 %v5184
        %v6017 = vpop.f32.mrb[0].mxu0
        %v6018 = vadd.f32 %v5729, %v6017
        %v6019 = vpop.f32.mrb[0].mxu0
        %v6020 = vpop.f32.mrb[0].mxu0
        %v6021 = vadd.f32 %v5732, %v6020
        %v6022 = vpop.f32.mrb[0].mxu0
        %6023 = vmatprep.mubr.bf16.mxu0 %v5193
        %6024 = vmatmul.mubr.bf16.gmra.mrb[0].mxu0 %v5192
        %v6025 = vpop.f32.mrb[0].mxu0
        %v6026 = vadd.f32 %v5737, %v6025
        %v6027 = vpop.f32.mrb[0].mxu0
        %v6028 = vpop.f32.mrb[0].mxu0
        %v6029 = vadd.f32 %v5740, %v6028
        %v6030 = vpop.f32.mrb[0].mxu0
        %6031 = vmatprep.mubr.bf16.mxu0 %v5201
        %6032 = vmatmul.mubr.bf16.gmra.mrb[0].mxu0 %v5200
        %v6033 = vpop.f32.mrb[0].mxu0
        %v6034 = vadd.f32 %v5745, %v6033
        %v6035 = vpop.f32.mrb[0].mxu0
        %v6036 = vpop.f32.mrb[0].mxu0
        %v6037 = vadd.f32 %v5748, %v6036
        %v6038 = vpop.f32.mrb[0].mxu0
        %6039 = vmatprep.mubr.bf16.mxu0 %v5209
        %6040 = vmatmul.mubr.bf16.gmra.mrb[0].mxu0 %v5208
        %v6041 = vpop.f32.mrb[0].mxu0
        %v6042 = vadd.f32 %v5753, %v6041
        %v6043 = vpop.f32.mrb[0].mxu0
        %v6044 = vpop.f32.mrb[0].mxu0
        %v6045 = vadd.f32 %v5756, %v6044
        %v6046 = vpop.f32.mrb[0].mxu0
        %6047 = vmatprep.mubr.bf16.mxu0 %v5217
        %6048 = vmatmul.mubr.bf16.gmra.mrb[0].mxu0 %v5216
        %v6049 = vpop.f32.mrb[0].mxu0
        %v6050 = vadd.f32 %v5761, %v6049
        %v6051 = vpop.f32.mrb[0].mxu0
        %v6052 = vpop.f32.mrb[0].mxu0
        %v6053 = vadd.f32 %v5764, %v6052
        %v6054 = vpop.f32.mrb[0].mxu0
        %6055 = vmatprep.mubr.bf16.mxu0 %v5225
        %6056 = vmatmul.mubr.bf16.gmra.mrb[0].mxu0 %v5224
        %v6057 = vpop.f32.mrb[0].mxu0
        %v6058 = vadd.f32 %v5769, %v6057
        %v6059 = vpop.f32.mrb[0].mxu0
        %v6060 = vpop.f32.mrb[0].mxu0
        %v6061 = vadd.f32 %v5772, %v6060
        %v6062 = vpop.f32.mrb[0].mxu0
        %6063 = vmatprep.mubr.bf16.mxu0 %v5233
        %6064 = vmatmul.mubr.bf16.gmra.mrb[0].mxu0 %v5232
        %v6065 = vpop.f32.mrb[0].mxu0
        %v6066 = vadd.f32 %v5777, %v6065
        %v6067 = vpop.f32.mrb[0].mxu0
        %v6068 = vpop.f32.mrb[0].mxu0
        %v6069 = vadd.f32 %v5780, %v6068
        %v6070 = vpop.f32.mrb[0].mxu0
        %6071 = vmatprep.mubr.bf16.mxu0 %v5241
        %6072 = vmatmul.mubr.bf16.gmra.mrb[0].mxu0 %v5240
        %v6073 = vpop.f32.mrb[0].mxu0
        %v6074 = vadd.f32 %v5785, %v6073
        %v6075 = vpop.f32.mrb[0].mxu0
        %v6076 = vpop.f32.mrb[0].mxu0
        %v6077 = vadd.f32 %v5788, %v6076
        %v6078 = vpop.f32.mrb[0].mxu0
        %6079 = vmatprep.mubr.bf16.mxu0 %v5249
        %6080 = vmatmul.mubr.bf16.gmra.mrb[0].mxu0 %v5248
        %v6081 = vpop.f32.mrb[0].mxu0
        %v6082 = vadd.f32 %v5793, %v6081
        %v6083 = vpop.f32.mrb[0].mxu0
        %v6084 = vpop.f32.mrb[0].mxu0
        %v6085 = vadd.f32 %v5796, %v6084
        %v6086 = vpop.f32.mrb[0].mxu0
        %6087 = vmatprep.mubr.bf16.mxu0 %v5257
        %6088 = vmatmul.mubr.bf16.gmra.mrb[0].mxu0 %v5256
        %v6089 = vpop.f32.mrb[0].mxu0
        %v6090 = vadd.f32 %v5801, %v6089
        %v6091 = vpop.f32.mrb[0].mxu0
        %v6092 = vpop.f32.mrb[0].mxu0
        %v6093 = vadd.f32 %v5804, %v6092
        %v6094 = vpop.f32.mrb[0].mxu0
        %6095 = vmatprep.mubr.bf16.mxu0 %v5265
        %6096 = vmatmul.mubr.bf16.gmra.mrb[0].mxu0 %v5264
        %v6097 = vpop.f32.mrb[0].mxu0
        %v6098 = vadd.f32 %v5809, %v6097
        %v6099 = vpop.f32.mrb[0].mxu0
        %v6100 = vpop.f32.mrb[0].mxu0
        %v6101 = vadd.f32 %v5812, %v6100
        %v6102 = vpop.f32.mrb[0].mxu0
        %6103 = vmatprep.mubr.bf16.mxu0 %v5273
        %6104 = vmatmul.mubr.bf16.gmra.mrb[0].mxu0 %v5272
        %v6105 = vpop.f32.mrb[0].mxu0
        %v6106 = vadd.f32 %v5817, %v6105
        %v6107 = vpop.f32.mrb[0].mxu0
        %v6108 = vpop.f32.mrb[0].mxu0
        %v6109 = vadd.f32 %v5820, %v6108
        %v6110 = vpop.f32.mrb[0].mxu0
        %6111 = vmatprep.mubr.bf16.mxu0 %v5281
        %6112 = vmatmul.mubr.bf16.gmra.mrb[0].mxu0 %v5280
        %v6113 = vpop.f32.mrb[0].mxu0
        %v6114 = vadd.f32 %v5825, %v6113
        %v6115 = vpop.f32.mrb[0].mxu0
        %v6116 = vpop.f32.mrb[0].mxu0
        %v6117 = vadd.f32 %v5828, %v6116
        %v6118 = vpop.f32.mrb[0].mxu0
        %6119 = vdwg.mxu0
        %6120 = vmatprep.subr.bf16.mxu0 0
        %6121 = vmatpush1.bf16.msra.mxu0 %v3590
        %6122 = vmatprep.subr.bf16.mxu0 0
        %6123 = vmatpush1.bf16.msra.mxu0 %v3591
        %6124 = vmatprep.subr.bf16.mxu0 0
        %6125 = vmatpush1.bf16.msra.mxu0 %v3592
        %6126 = vmatprep.subr.bf16.mxu0 0
        %6127 = vmatpush1.bf16.msra.mxu0 %v3593
        %6128 = vmatprep.subr.bf16.mxu0 0
        %6129 = vmatpush1.bf16.msra.mxu0 %v3594
        %6130 = vmatprep.subr.bf16.mxu0 0
        %6131 = vmatpush1.bf16.msra.mxu0 %v3595
        %6132 = vmatprep.subr.bf16.mxu0 0
        %6133 = vmatpush1.bf16.msra.mxu0 %v3596
        %6134 = vmatprep.subr.bf16.mxu0 0
        %6135 = vmatpush1.bf16.msra.mxu0 %v3597
        %6136 = vmatprep.subr.bf16.mxu0 0
        %6137 = vmatpush1.bf16.msra.mxu0 %v3598
        %6138 = vmatprep.subr.bf16.mxu0 0
        %6139 = vmatpush1.bf16.msra.mxu0 %v3599
        %6140 = vmatprep.subr.bf16.mxu0 0
        %6141 = vmatpush1.bf16.msra.mxu0 %v3600
        %6142 = vmatprep.subr.bf16.mxu0 0
        %6143 = vmatpush1.bf16.msra.mxu0 %v3601
        %6144 = vmatprep.subr.bf16.mxu0 0
        %6145 = vmatpush1.bf16.msra.mxu0 %v3602
        %6146 = vmatprep.subr.bf16.mxu0 0
        %6147 = vmatpush1.bf16.msra.mxu0 %v3603
        %6148 = vmatprep.subr.bf16.mxu0 0
        %6149 = vmatpush1.bf16.msra.mxu0 %v3604
        %6150 = vmatprep.subr.bf16.mxu0 0
        %6151 = vmatpush1.bf16.msra.mxu0 %v3605
        %6152 = vmatprep.mubr.bf16.mxu0 %v5035
        %6153 = vmatmul.mubr.bf16.gmra.mrb[0].mxu0 %v5034
        %v6154 = vpop.f32.mrb[0].mxu0
        %v6155 = vadd.f32 %v5866, %v6154
        %v6156 = vpop.f32.mrb[0].mxu0
        %v6157 = vpop.f32.mrb[0].mxu0
        %v6158 = vadd.f32 %v5869, %v6157
        %v6159 = vpop.f32.mrb[0].mxu0
        %6160 = vmatprep.mubr.bf16.mxu0 %v5043
        %6161 = vmatmul.mubr.bf16.gmra.mrb[0].mxu0 %v5042
        %v6162 = vpop.f32.mrb[0].mxu0
        %v6163 = vadd.f32 %v5874, %v6162
        %v6164 = vpop.f32.mrb[0].mxu0
        %v6165 = vpop.f32.mrb[0].mxu0
        %v6166 = vadd.f32 %v5877, %v6165
        %v6167 = vpop.f32.mrb[0].mxu0
        %6168 = vmatprep.mubr.bf16.mxu0 %v5051
        %6169 = vmatmul.mubr.bf16.gmra.mrb[0].mxu0 %v5050
        %v6170 = vpop.f32.mrb[0].mxu0
        %v6171 = vadd.f32 %v5882, %v6170
        %v6172 = vpop.f32.mrb[0].mxu0
        %v6173 = vpop.f32.mrb[0].mxu0
        %v6174 = vadd.f32 %v5885, %v6173
        %v6175 = vpop.f32.mrb[0].mxu0
        %6176 = vmatprep.mubr.bf16.mxu0 %v5059
        %6177 = vmatmul.mubr.bf16.gmra.mrb[0].mxu0 %v5058
        %v6178 = vpop.f32.mrb[0].mxu0
        %v6179 = vadd.f32 %v5890, %v6178
        %v6180 = vpop.f32.mrb[0].mxu0
        %v6181 = vpop.f32.mrb[0].mxu0
        %v6182 = vadd.f32 %v5893, %v6181
        %v6183 = vpop.f32.mrb[0].mxu0
        %6184 = vmatprep.mubr.bf16.mxu0 %v5067
        %6185 = vmatmul.mubr.bf16.gmra.mrb[0].mxu0 %v5066
        %v6186 = vpop.f32.mrb[0].mxu0
        %v6187 = vadd.f32 %v5898, %v6186
        %v6188 = vpop.f32.mrb[0].mxu0
        %v6189 = vpop.f32.mrb[0].mxu0
        %v6190 = vadd.f32 %v5901, %v6189
        %v6191 = vpop.f32.mrb[0].mxu0
        %6192 = vmatprep.mubr.bf16.mxu0 %v5075
        %6193 = vmatmul.mubr.bf16.gmra.mrb[0].mxu0 %v5074
        %v6194 = vpop.f32.mrb[0].mxu0
        %v6195 = vadd.f32 %v5906, %v6194
        %v6196 = vpop.f32.mrb[0].mxu0
        %v6197 = vpop.f32.mrb[0].mxu0
        %v6198 = vadd.f32 %v5909, %v6197
        %v6199 = vpop.f32.mrb[0].mxu0
        %6200 = vmatprep.mubr.bf16.mxu0 %v5083
        %6201 = vmatmul.mubr.bf16.gmra.mrb[0].mxu0 %v5082
        %v6202 = vpop.f32.mrb[0].mxu0
        %v6203 = vadd.f32 %v5914, %v6202
        %v6204 = vpop.f32.mrb[0].mxu0
        %v6205 = vpop.f32.mrb[0].mxu0
        %v6206 = vadd.f32 %v5917, %v6205
        %v6207 = vpop.f32.mrb[0].mxu0
        %6208 = vmatprep.mubr.bf16.mxu0 %v5091
        %6209 = vmatmul.mubr.bf16.gmra.mrb[0].mxu0 %v5090
        %v6210 = vpop.f32.mrb[0].mxu0
        %v6211 = vadd.f32 %v5922, %v6210
        %v6212 = vpop.f32.mrb[0].mxu0
        %v6213 = vpop.f32.mrb[0].mxu0
        %v6214 = vadd.f32 %v5925, %v6213
        %v6215 = vpop.f32.mrb[0].mxu0
        %6216 = vmatprep.mubr.bf16.mxu0 %v5099
        %6217 = vmatmul.mubr.bf16.gmra.mrb[0].mxu0 %v5098
        %v6218 = vpop.f32.mrb[0].mxu0
        %v6219 = vadd.f32 %v5930, %v6218
        %v6220 = vpop.f32.mrb[0].mxu0
        %v6221 = vpop.f32.mrb[0].mxu0
        %v6222 = vadd.f32 %v5933, %v6221
        %v6223 = vpop.f32.mrb[0].mxu0
        %6224 = vmatprep.mubr.bf16.mxu0 %v5107
        %6225 = vmatmul.mubr.bf16.gmra.mrb[0].mxu0 %v5106
        %v6226 = vpop.f32.mrb[0].mxu0
        %v6227 = vadd.f32 %v5938, %v6226
        %v6228 = vpop.f32.mrb[0].mxu0
        %v6229 = vpop.f32.mrb[0].mxu0
        %v6230 = vadd.f32 %v5941, %v6229
        %v6231 = vpop.f32.mrb[0].mxu0
        %6232 = vmatprep.mubr.bf16.mxu0 %v5115
        %6233 = vmatmul.mubr.bf16.gmra.mrb[0].mxu0 %v5114
        %v6234 = vpop.f32.mrb[0].mxu0
        %v6235 = vadd.f32 %v5946, %v6234
        %v6236 = vpop.f32.mrb[0].mxu0
        %v6237 = vpop.f32.mrb[0].mxu0
        %v6238 = vadd.f32 %v5949, %v6237
        %v6239 = vpop.f32.mrb[0].mxu0
        %6240 = vmatprep.mubr.bf16.mxu0 %v5123
        %6241 = vmatmul.mubr.bf16.gmra.mrb[0].mxu0 %v5122
        %v6242 = vpop.f32.mrb[0].mxu0
        %v6243 = vadd.f32 %v5954, %v6242
        %v6244 = vpop.f32.mrb[0].mxu0
        %v6245 = vpop.f32.mrb[0].mxu0
        %v6246 = vadd.f32 %v5957, %v6245
        %v6247 = vpop.f32.mrb[0].mxu0
        %6248 = vmatprep.mubr.bf16.mxu0 %v5131
        %6249 = vmatmul.mubr.bf16.gmra.mrb[0].mxu0 %v5130
        %v6250 = vpop.f32.mrb[0].mxu0
        %v6251 = vadd.f32 %v5962, %v6250
        %v6252 = vpop.f32.mrb[0].mxu0
        %v6253 = vpop.f32.mrb[0].mxu0
        %v6254 = vadd.f32 %v5965, %v6253
        %v6255 = vpop.f32.mrb[0].mxu0
        %6256 = vmatprep.mubr.bf16.mxu0 %v5139
        %6257 = vmatmul.mubr.bf16.gmra.mrb[0].mxu0 %v5138
        %v6258 = vpop.f32.mrb[0].mxu0
        %v6259 = vadd.f32 %v5970, %v6258
        %v6260 = vpop.f32.mrb[0].mxu0
        %v6261 = vpop.f32.mrb[0].mxu0
        %v6262 = vadd.f32 %v5973, %v6261
        %v6263 = vpop.f32.mrb[0].mxu0
        %6264 = vmatprep.mubr.bf16.mxu0 %v5147
        %6265 = vmatmul.mubr.bf16.gmra.mrb[0].mxu0 %v5146
        %v6266 = vpop.f32.mrb[0].mxu0
        %v6267 = vadd.f32 %v5978, %v6266
        %v6268 = vpop.f32.mrb[0].mxu0
        %v6269 = vpop.f32.mrb[0].mxu0
        %v6270 = vadd.f32 %v5981, %v6269
        %v6271 = vpop.f32.mrb[0].mxu0
        %6272 = vmatprep.mubr.bf16.mxu0 %v5155
        %6273 = vmatmul.mubr.bf16.gmra.mrb[0].mxu0 %v5154
        %v6274 = vpop.f32.mrb[0].mxu0
        %v6275 = vadd.f32 %v5986, %v6274
        %v6276 = vpop.f32.mrb[0].mxu0
        %v6277 = vpop.f32.mrb[0].mxu0
        %v6278 = vadd.f32 %v5989, %v6277
        %v6279 = vpop.f32.mrb[0].mxu0
        %6280 = vmatprep.mubr.bf16.mxu0 %v5163
        %6281 = vmatmul.mubr.bf16.gmra.mrb[0].mxu0 %v5162
        %v6282 = vpop.f32.mrb[0].mxu0
        %v6283 = vadd.f32 %v5994, %v6282
        %v6284 = vpop.f32.mrb[0].mxu0
        %v6285 = vpop.f32.mrb[0].mxu0
        %v6286 = vadd.f32 %v5997, %v6285
        %v6287 = vpop.f32.mrb[0].mxu0
        %6288 = vmatprep.mubr.bf16.mxu0 %v5171
        %6289 = vmatmul.mubr.bf16.gmra.mrb[0].mxu0 %v5170
        %v6290 = vpop.f32.mrb[0].mxu0
        %v6291 = vadd.f32 %v6002, %v6290
        %v6292 = vpop.f32.mrb[0].mxu0
        %v6293 = vpop.f32.mrb[0].mxu0
        %v6294 = vadd.f32 %v6005, %v6293
        %v6295 = vpop.f32.mrb[0].mxu0
        %6296 = vmatprep.mubr.bf16.mxu0 %v5179
        %6297 = vmatmul.mubr.bf16.gmra.mrb[0].mxu0 %v5178
        %v6298 = vpop.f32.mrb[0].mxu0
        %v6299 = vadd.f32 %v6010, %v6298
        %v6300 = vpop.f32.mrb[0].mxu0
        %v6301 = vpop.f32.mrb[0].mxu0
        %v6302 = vadd.f32 %v6013, %v6301
        %v6303 = vpop.f32.mrb[0].mxu0
        %6304 = vmatprep.mubr.bf16.mxu0 %v5187
        %6305 = vmatmul.mubr.bf16.gmra.mrb[0].mxu0 %v5186
        %v6306 = vpop.f32.mrb[0].mxu0
        %v6307 = vadd.f32 %v6018, %v6306
        %v6308 = vpop.f32.mrb[0].mxu0
        %v6309 = vpop.f32.mrb[0].mxu0
        %v6310 = vadd.f32 %v6021, %v6309
        %v6311 = vpop.f32.mrb[0].mxu0
        %6312 = vmatprep.mubr.bf16.mxu0 %v5195
        %6313 = vmatmul.mubr.bf16.gmra.mrb[0].mxu0 %v5194
        %v6314 = vpop.f32.mrb[0].mxu0
        %v6315 = vadd.f32 %v6026, %v6314
        %v6316 = vpop.f32.mrb[0].mxu0
        %v6317 = vpop.f32.mrb[0].mxu0
        %v6318 = vadd.f32 %v6029, %v6317
        %v6319 = vpop.f32.mrb[0].mxu0
        %6320 = vmatprep.mubr.bf16.mxu0 %v5203
        %6321 = vmatmul.mubr.bf16.gmra.mrb[0].mxu0 %v5202
        %v6322 = vpop.f32.mrb[0].mxu0
        %v6323 = vadd.f32 %v6034, %v6322
        %v6324 = vpop.f32.mrb[0].mxu0
        %v6325 = vpop.f32.mrb[0].mxu0
        %v6326 = vadd.f32 %v6037, %v6325
        %v6327 = vpop.f32.mrb[0].mxu0
        %6328 = vmatprep.mubr.bf16.mxu0 %v5211
        %6329 = vmatmul.mubr.bf16.gmra.mrb[0].mxu0 %v5210
        %v6330 = vpop.f32.mrb[0].mxu0
        %v6331 = vadd.f32 %v6042, %v6330
        %v6332 = vpop.f32.mrb[0].mxu0
        %v6333 = vpop.f32.mrb[0].mxu0
        %v6334 = vadd.f32 %v6045, %v6333
        %v6335 = vpop.f32.mrb[0].mxu0
        %6336 = vmatprep.mubr.bf16.mxu0 %v5219
        %6337 = vmatmul.mubr.bf16.gmra.mrb[0].mxu0 %v5218
        %v6338 = vpop.f32.mrb[0].mxu0
        %v6339 = vadd.f32 %v6050, %v6338
        %v6340 = vpop.f32.mrb[0].mxu0
        %v6341 = vpop.f32.mrb[0].mxu0
        %v6342 = vadd.f32 %v6053, %v6341
        %v6343 = vpop.f32.mrb[0].mxu0
        %6344 = vmatprep.mubr.bf16.mxu0 %v5227
        %6345 = vmatmul.mubr.bf16.gmra.mrb[0].mxu0 %v5226
        %v6346 = vpop.f32.mrb[0].mxu0
        %v6347 = vadd.f32 %v6058, %v6346
        %v6348 = vpop.f32.mrb[0].mxu0
        %v6349 = vpop.f32.mrb[0].mxu0
        %v6350 = vadd.f32 %v6061, %v6349
        %v6351 = vpop.f32.mrb[0].mxu0
        %6352 = vmatprep.mubr.bf16.mxu0 %v5235
        %6353 = vmatmul.mubr.bf16.gmra.mrb[0].mxu0 %v5234
        %v6354 = vpop.f32.mrb[0].mxu0
        %v6355 = vadd.f32 %v6066, %v6354
        %v6356 = vpop.f32.mrb[0].mxu0
        %v6357 = vpop.f32.mrb[0].mxu0
        %v6358 = vadd.f32 %v6069, %v6357
        %v6359 = vpop.f32.mrb[0].mxu0
        %6360 = vmatprep.mubr.bf16.mxu0 %v5243
        %6361 = vmatmul.mubr.bf16.gmra.mrb[0].mxu0 %v5242
        %v6362 = vpop.f32.mrb[0].mxu0
        %v6363 = vadd.f32 %v6074, %v6362
        %v6364 = vpop.f32.mrb[0].mxu0
        %v6365 = vpop.f32.mrb[0].mxu0
        %v6366 = vadd.f32 %v6077, %v6365
        %v6367 = vpop.f32.mrb[0].mxu0
        %6368 = vmatprep.mubr.bf16.mxu0 %v5251
        %6369 = vmatmul.mubr.bf16.gmra.mrb[0].mxu0 %v5250
        %v6370 = vpop.f32.mrb[0].mxu0
        %v6371 = vadd.f32 %v6082, %v6370
        %v6372 = vpop.f32.mrb[0].mxu0
        %v6373 = vpop.f32.mrb[0].mxu0
        %v6374 = vadd.f32 %v6085, %v6373
        %v6375 = vpop.f32.mrb[0].mxu0
        %6376 = vmatprep.mubr.bf16.mxu0 %v5259
        %6377 = vmatmul.mubr.bf16.gmra.mrb[0].mxu0 %v5258
        %v6378 = vpop.f32.mrb[0].mxu0
        %v6379 = vadd.f32 %v6090, %v6378
        %v6380 = vpop.f32.mrb[0].mxu0
        %v6381 = vpop.f32.mrb[0].mxu0
        %v6382 = vadd.f32 %v6093, %v6381
        %v6383 = vpop.f32.mrb[0].mxu0
        %6384 = vmatprep.mubr.bf16.mxu0 %v5267
        %6385 = vmatmul.mubr.bf16.gmra.mrb[0].mxu0 %v5266
        %v6386 = vpop.f32.mrb[0].mxu0
        %v6387 = vadd.f32 %v6098, %v6386
        %v6388 = vpop.f32.mrb[0].mxu0
        %v6389 = vpop.f32.mrb[0].mxu0
        %v6390 = vadd.f32 %v6101, %v6389
        %v6391 = vpop.f32.mrb[0].mxu0
        %6392 = vmatprep.mubr.bf16.mxu0 %v5275
        %6393 = vmatmul.mubr.bf16.gmra.mrb[0].mxu0 %v5274
        %v6394 = vpop.f32.mrb[0].mxu0
        %v6395 = vadd.f32 %v6106, %v6394
        %v6396 = vpop.f32.mrb[0].mxu0
        %v6397 = vpop.f32.mrb[0].mxu0
        %v6398 = vadd.f32 %v6109, %v6397
        %v6399 = vpop.f32.mrb[0].mxu0
        %6400 = vmatprep.mubr.bf16.mxu0 %v5283
        %6401 = vmatmul.mubr.bf16.gmra.mrb[0].mxu0 %v5282
        %v6402 = vpop.f32.mrb[0].mxu0
        %v6403 = vadd.f32 %v6114, %v6402
        %v6404 = vpop.f32.mrb[0].mxu0
        %v6405 = vpop.f32.mrb[0].mxu0
        %v6406 = vadd.f32 %v6117, %v6405
        %v6407 = vpop.f32.mrb[0].mxu0
        %6408 = vdwg.mxu0
        %6409 = vmatprep.subr.bf16.mxu0 0
        %6410 = vmatpush1.bf16.msra.mxu0 %v3606
        %6411 = vmatprep.subr.bf16.mxu0 0
        %6412 = vmatpush1.bf16.msra.mxu0 %v3607
        %6413 = vmatprep.subr.bf16.mxu0 0
        %6414 = vmatpush1.bf16.msra.mxu0 %v3608
        %6415 = vmatprep.subr.bf16.mxu0 0
        %6416 = vmatpush1.bf16.msra.mxu0 %v3609
        %6417 = vmatprep.subr.bf16.mxu0 0
        %6418 = vmatpush1.bf16.msra.mxu0 %v3610
        %6419 = vmatprep.subr.bf16.mxu0 0
        %6420 = vmatpush1.bf16.msra.mxu0 %v3611
        %6421 = vmatprep.subr.bf16.mxu0 0
        %6422 = vmatpush1.bf16.msra.mxu0 %v3612
        %6423 = vmatprep.subr.bf16.mxu0 0
        %6424 = vmatpush1.bf16.msra.mxu0 %v3613
        %6425 = vmatprep.subr.bf16.mxu0 0
        %6426 = vmatpush1.bf16.msra.mxu0 %v3614
        %6427 = vmatprep.subr.bf16.mxu0 0
        %6428 = vmatpush1.bf16.msra.mxu0 %v3615
        %6429 = vmatprep.subr.bf16.mxu0 0
        %6430 = vmatpush1.bf16.msra.mxu0 %v3616
        %6431 = vmatprep.subr.bf16.mxu0 0
        %6432 = vmatpush1.bf16.msra.mxu0 %v3617
        %6433 = vmatprep.subr.bf16.mxu0 0
        %6434 = vmatpush1.bf16.msra.mxu0 %v3618
        %6435 = vmatprep.subr.bf16.mxu0 0
        %6436 = vmatpush1.bf16.msra.mxu0 %v3619
        %6437 = vmatprep.subr.bf16.mxu0 0
        %6438 = vmatpush1.bf16.msra.mxu0 %v3620
        %6439 = vmatprep.subr.bf16.mxu0 0
        %6440 = vmatpush1.bf16.msra.mxu0 %v3621
        %6441 = vmatprep.mubr.bf16.mxu0 %v5037
        %6442 = vmatmul.mubr.bf16.gmra.mrb[0].mxu0 %v5036
        %v6443 = vpop.f32.mrb[0].mxu0
        %v6444 = vadd.f32 %v6155, %v6443
        %v6445 = vpop.f32.mrb[0].mxu0
        %v6446 = vpop.f32.mrb[0].mxu0
        %v6447 = vadd.f32 %v6158, %v6446
        %v6448 = vpop.f32.mrb[0].mxu0
        %6449 = vmatprep.mubr.bf16.mxu0 %v5045
        %6450 = vmatmul.mubr.bf16.gmra.mrb[0].mxu0 %v5044
        %v6451 = vpop.f32.mrb[0].mxu0
        %v6452 = vadd.f32 %v6163, %v6451
        %v6453 = vpop.f32.mrb[0].mxu0
        %v6454 = vpop.f32.mrb[0].mxu0
        %v6455 = vadd.f32 %v6166, %v6454
        %v6456 = vpop.f32.mrb[0].mxu0
        %6457 = vmatprep.mubr.bf16.mxu0 %v5053
        %6458 = vmatmul.mubr.bf16.gmra.mrb[0].mxu0 %v5052
        %v6459 = vpop.f32.mrb[0].mxu0
        %v6460 = vadd.f32 %v6171, %v6459
        %v6461 = vpop.f32.mrb[0].mxu0
        %v6462 = vpop.f32.mrb[0].mxu0
        %v6463 = vadd.f32 %v6174, %v6462
        %v6464 = vpop.f32.mrb[0].mxu0
        %6465 = vmatprep.mubr.bf16.mxu0 %v5061
        %6466 = vmatmul.mubr.bf16.gmra.mrb[0].mxu0 %v5060
        %v6467 = vpop.f32.mrb[0].mxu0
        %v6468 = vadd.f32 %v6179, %v6467
        %v6469 = vpop.f32.mrb[0].mxu0
        %v6470 = vpop.f32.mrb[0].mxu0
        %v6471 = vadd.f32 %v6182, %v6470
        %v6472 = vpop.f32.mrb[0].mxu0
        %6473 = vmatprep.mubr.bf16.mxu0 %v5069
        %6474 = vmatmul.mubr.bf16.gmra.mrb[0].mxu0 %v5068
        %v6475 = vpop.f32.mrb[0].mxu0
        %v6476 = vadd.f32 %v6187, %v6475
        %v6477 = vpop.f32.mrb[0].mxu0
        %v6478 = vpop.f32.mrb[0].mxu0
        %v6479 = vadd.f32 %v6190, %v6478
        %v6480 = vpop.f32.mrb[0].mxu0
        %6481 = vmatprep.mubr.bf16.mxu0 %v5077
        %6482 = vmatmul.mubr.bf16.gmra.mrb[0].mxu0 %v5076
        %v6483 = vpop.f32.mrb[0].mxu0
        %v6484 = vadd.f32 %v6195, %v6483
        %v6485 = vpop.f32.mrb[0].mxu0
        %v6486 = vpop.f32.mrb[0].mxu0
        %v6487 = vadd.f32 %v6198, %v6486
        %v6488 = vpop.f32.mrb[0].mxu0
        %6489 = vmatprep.mubr.bf16.mxu0 %v5085
        %6490 = vmatmul.mubr.bf16.gmra.mrb[0].mxu0 %v5084
        %v6491 = vpop.f32.mrb[0].mxu0
        %v6492 = vadd.f32 %v6203, %v6491
        %v6493 = vpop.f32.mrb[0].mxu0
        %v6494 = vpop.f32.mrb[0].mxu0
        %v6495 = vadd.f32 %v6206, %v6494
        %v6496 = vpop.f32.mrb[0].mxu0
        %6497 = vmatprep.mubr.bf16.mxu0 %v5093
        %6498 = vmatmul.mubr.bf16.gmra.mrb[0].mxu0 %v5092
        %v6499 = vpop.f32.mrb[0].mxu0
        %v6500 = vadd.f32 %v6211, %v6499
        %v6501 = vpop.f32.mrb[0].mxu0
        %v6502 = vpop.f32.mrb[0].mxu0
        %v6503 = vadd.f32 %v6214, %v6502
        %v6504 = vpop.f32.mrb[0].mxu0
        %6505 = vmatprep.mubr.bf16.mxu0 %v5101
        %6506 = vmatmul.mubr.bf16.gmra.mrb[0].mxu0 %v5100
        %v6507 = vpop.f32.mrb[0].mxu0
        %v6508 = vadd.f32 %v6219, %v6507
        %v6509 = vpop.f32.mrb[0].mxu0
        %v6510 = vpop.f32.mrb[0].mxu0
        %v6511 = vadd.f32 %v6222, %v6510
        %v6512 = vpop.f32.mrb[0].mxu0
        %6513 = vmatprep.mubr.bf16.mxu0 %v5109
        %6514 = vmatmul.mubr.bf16.gmra.mrb[0].mxu0 %v5108
        %v6515 = vpop.f32.mrb[0].mxu0
        %v6516 = vadd.f32 %v6227, %v6515
        %v6517 = vpop.f32.mrb[0].mxu0
        %v6518 = vpop.f32.mrb[0].mxu0
        %v6519 = vadd.f32 %v6230, %v6518
        %v6520 = vpop.f32.mrb[0].mxu0
        %6521 = vmatprep.mubr.bf16.mxu0 %v5117
        %6522 = vmatmul.mubr.bf16.gmra.mrb[0].mxu0 %v5116
        %v6523 = vpop.f32.mrb[0].mxu0
        %v6524 = vadd.f32 %v6235, %v6523
        %v6525 = vpop.f32.mrb[0].mxu0
        %v6526 = vpop.f32.mrb[0].mxu0
        %v6527 = vadd.f32 %v6238, %v6526
        %v6528 = vpop.f32.mrb[0].mxu0
        %6529 = vmatprep.mubr.bf16.mxu0 %v5125
        %6530 = vmatmul.mubr.bf16.gmra.mrb[0].mxu0 %v5124
        %v6531 = vpop.f32.mrb[0].mxu0
        %v6532 = vadd.f32 %v6243, %v6531
        %v6533 = vpop.f32.mrb[0].mxu0
        %v6534 = vpop.f32.mrb[0].mxu0
        %v6535 = vadd.f32 %v6246, %v6534
        %v6536 = vpop.f32.mrb[0].mxu0
        %6537 = vmatprep.mubr.bf16.mxu0 %v5133
        %6538 = vmatmul.mubr.bf16.gmra.mrb[0].mxu0 %v5132
        %v6539 = vpop.f32.mrb[0].mxu0
        %v6540 = vadd.f32 %v6251, %v6539
        %v6541 = vpop.f32.mrb[0].mxu0
        %v6542 = vpop.f32.mrb[0].mxu0
        %v6543 = vadd.f32 %v6254, %v6542
        %v6544 = vpop.f32.mrb[0].mxu0
        %6545 = vmatprep.mubr.bf16.mxu0 %v5141
        %6546 = vmatmul.mubr.bf16.gmra.mrb[0].mxu0 %v5140
        %v6547 = vpop.f32.mrb[0].mxu0
        %v6548 = vadd.f32 %v6259, %v6547
        %v6549 = vpop.f32.mrb[0].mxu0
        %v6550 = vpop.f32.mrb[0].mxu0
        %v6551 = vadd.f32 %v6262, %v6550
        %v6552 = vpop.f32.mrb[0].mxu0
        %6553 = vmatprep.mubr.bf16.mxu0 %v5149
        %6554 = vmatmul.mubr.bf16.gmra.mrb[0].mxu0 %v5148
        %v6555 = vpop.f32.mrb[0].mxu0
        %v6556 = vadd.f32 %v6267, %v6555
        %v6557 = vpop.f32.mrb[0].mxu0
        %v6558 = vpop.f32.mrb[0].mxu0
        %v6559 = vadd.f32 %v6270, %v6558
        %v6560 = vpop.f32.mrb[0].mxu0
        %6561 = vmatprep.mubr.bf16.mxu0 %v5157
        %6562 = vmatmul.mubr.bf16.gmra.mrb[0].mxu0 %v5156
        %v6563 = vpop.f32.mrb[0].mxu0
        %v6564 = vadd.f32 %v6275, %v6563
        %v6565 = vpop.f32.mrb[0].mxu0
        %v6566 = vpop.f32.mrb[0].mxu0
        %v6567 = vadd.f32 %v6278, %v6566
        %v6568 = vpop.f32.mrb[0].mxu0
        %6569 = vmatprep.mubr.bf16.mxu0 %v5165
        %6570 = vmatmul.mubr.bf16.gmra.mrb[0].mxu0 %v5164
        %v6571 = vpop.f32.mrb[0].mxu0
        %v6572 = vadd.f32 %v6283, %v6571
        %v6573 = vpop.f32.mrb[0].mxu0
        %v6574 = vpop.f32.mrb[0].mxu0
        %v6575 = vadd.f32 %v6286, %v6574
        %v6576 = vpop.f32.mrb[0].mxu0
        %6577 = vmatprep.mubr.bf16.mxu0 %v5173
        %6578 = vmatmul.mubr.bf16.gmra.mrb[0].mxu0 %v5172
        %v6579 = vpop.f32.mrb[0].mxu0
        %v6580 = vadd.f32 %v6291, %v6579
        %v6581 = vpop.f32.mrb[0].mxu0
        %v6582 = vpop.f32.mrb[0].mxu0
        %v6583 = vadd.f32 %v6294, %v6582
        %v6584 = vpop.f32.mrb[0].mxu0
        %6585 = vmatprep.mubr.bf16.mxu0 %v5181
        %6586 = vmatmul.mubr.bf16.gmra.mrb[0].mxu0 %v5180
        %v6587 = vpop.f32.mrb[0].mxu0
        %v6588 = vadd.f32 %v6299, %v6587
        %v6589 = vpop.f32.mrb[0].mxu0
        %v6590 = vpop.f32.mrb[0].mxu0
        %v6591 = vadd.f32 %v6302, %v6590
        %v6592 = vpop.f32.mrb[0].mxu0
        %6593 = vmatprep.mubr.bf16.mxu0 %v5189
        %6594 = vmatmul.mubr.bf16.gmra.mrb[0].mxu0 %v5188
        %v6595 = vpop.f32.mrb[0].mxu0
        %v6596 = vadd.f32 %v6307, %v6595
        %v6597 = vpop.f32.mrb[0].mxu0
        %v6598 = vpop.f32.mrb[0].mxu0
        %v6599 = vadd.f32 %v6310, %v6598
        %v6600 = vpop.f32.mrb[0].mxu0
        %6601 = vmatprep.mubr.bf16.mxu0 %v5197
        %6602 = vmatmul.mubr.bf16.gmra.mrb[0].mxu0 %v5196
        %v6603 = vpop.f32.mrb[0].mxu0
        %v6604 = vadd.f32 %v6315, %v6603
        %v6605 = vpop.f32.mrb[0].mxu0
        %v6606 = vpop.f32.mrb[0].mxu0
        %v6607 = vadd.f32 %v6318, %v6606
        %v6608 = vpop.f32.mrb[0].mxu0
        %6609 = vmatprep.mubr.bf16.mxu0 %v5205
        %6610 = vmatmul.mubr.bf16.gmra.mrb[0].mxu0 %v5204
        %v6611 = vpop.f32.mrb[0].mxu0
        %v6612 = vadd.f32 %v6323, %v6611
        %v6613 = vpop.f32.mrb[0].mxu0
        %v6614 = vpop.f32.mrb[0].mxu0
        %v6615 = vadd.f32 %v6326, %v6614
        %v6616 = vpop.f32.mrb[0].mxu0
        %6617 = vmatprep.mubr.bf16.mxu0 %v5213
        %6618 = vmatmul.mubr.bf16.gmra.mrb[0].mxu0 %v5212
        %v6619 = vpop.f32.mrb[0].mxu0
        %v6620 = vadd.f32 %v6331, %v6619
        %v6621 = vpop.f32.mrb[0].mxu0
        %v6622 = vpop.f32.mrb[0].mxu0
        %v6623 = vadd.f32 %v6334, %v6622
        %v6624 = vpop.f32.mrb[0].mxu0
        %6625 = vmatprep.mubr.bf16.mxu0 %v5221
        %6626 = vmatmul.mubr.bf16.gmra.mrb[0].mxu0 %v5220
        %v6627 = vpop.f32.mrb[0].mxu0
        %v6628 = vadd.f32 %v6339, %v6627
        %v6629 = vpop.f32.mrb[0].mxu0
        %v6630 = vpop.f32.mrb[0].mxu0
        %v6631 = vadd.f32 %v6342, %v6630
        %v6632 = vpop.f32.mrb[0].mxu0
        %6633 = vmatprep.mubr.bf16.mxu0 %v5229
        %6634 = vmatmul.mubr.bf16.gmra.mrb[0].mxu0 %v5228
        %v6635 = vpop.f32.mrb[0].mxu0
        %v6636 = vadd.f32 %v6347, %v6635
        %v6637 = vpop.f32.mrb[0].mxu0
        %v6638 = vpop.f32.mrb[0].mxu0
        %v6639 = vadd.f32 %v6350, %v6638
        %v6640 = vpop.f32.mrb[0].mxu0
        %6641 = vmatprep.mubr.bf16.mxu0 %v5237
        %6642 = vmatmul.mubr.bf16.gmra.mrb[0].mxu0 %v5236
        %v6643 = vpop.f32.mrb[0].mxu0
        %v6644 = vadd.f32 %v6355, %v6643
        %v6645 = vpop.f32.mrb[0].mxu0
        %v6646 = vpop.f32.mrb[0].mxu0
        %v6647 = vadd.f32 %v6358, %v6646
        %v6648 = vpop.f32.mrb[0].mxu0
        %6649 = vmatprep.mubr.bf16.mxu0 %v5245
        %6650 = vmatmul.mubr.bf16.gmra.mrb[0].mxu0 %v5244
        %v6651 = vpop.f32.mrb[0].mxu0
        %v6652 = vadd.f32 %v6363, %v6651
        %v6653 = vpop.f32.mrb[0].mxu0
        %v6654 = vpop.f32.mrb[0].mxu0
        %v6655 = vadd.f32 %v6366, %v6654
        %v6656 = vpop.f32.mrb[0].mxu0
        %6657 = vmatprep.mubr.bf16.mxu0 %v5253
        %6658 = vmatmul.mubr.bf16.gmra.mrb[0].mxu0 %v5252
        %v6659 = vpop.f32.mrb[0].mxu0
        %v6660 = vadd.f32 %v6371, %v6659
        %v6661 = vpop.f32.mrb[0].mxu0
        %v6662 = vpop.f32.mrb[0].mxu0
        %v6663 = vadd.f32 %v6374, %v6662
        %v6664 = vpop.f32.mrb[0].mxu0
        %6665 = vmatprep.mubr.bf16.mxu0 %v5261
        %6666 = vmatmul.mubr.bf16.gmra.mrb[0].mxu0 %v5260
        %v6667 = vpop.f32.mrb[0].mxu0
        %v6668 = vadd.f32 %v6379, %v6667
        %v6669 = vpop.f32.mrb[0].mxu0
        %v6670 = vpop.f32.mrb[0].mxu0
        %v6671 = vadd.f32 %v6382, %v6670
        %v6672 = vpop.f32.mrb[0].mxu0
        %6673 = vmatprep.mubr.bf16.mxu0 %v5269
        %6674 = vmatmul.mubr.bf16.gmra.mrb[0].mxu0 %v5268
        %v6675 = vpop.f32.mrb[0].mxu0
        %v6676 = vadd.f32 %v6387, %v6675
        %v6677 = vpop.f32.mrb[0].mxu0
        %v6678 = vpop.f32.mrb[0].mxu0
        %v6679 = vadd.f32 %v6390, %v6678
        %v6680 = vpop.f32.mrb[0].mxu0
        %6681 = vmatprep.mubr.bf16.mxu0 %v5277
        %6682 = vmatmul.mubr.bf16.gmra.mrb[0].mxu0 %v5276
        %v6683 = vpop.f32.mrb[0].mxu0
        %v6684 = vadd.f32 %v6395, %v6683
        %v6685 = vpop.f32.mrb[0].mxu0
        %v6686 = vpop.f32.mrb[0].mxu0
        %v6687 = vadd.f32 %v6398, %v6686
        %v6688 = vpop.f32.mrb[0].mxu0
        %6689 = vmatprep.mubr.bf16.mxu0 %v5285
        %6690 = vmatmul.mubr.bf16.gmra.mrb[0].mxu0 %v5284
        %v6691 = vpop.f32.mrb[0].mxu0
        %v6692 = vadd.f32 %v6403, %v6691
        %v6693 = vpop.f32.mrb[0].mxu0
        %v6694 = vpop.f32.mrb[0].mxu0
        %v6695 = vadd.f32 %v6406, %v6694
        %v6696 = vpop.f32.mrb[0].mxu0
        %6697 = vdwg.mxu0
        %v6698 = vmax.f32 %v6444, 0.0
        %v6699 = vmax.f32 %v6447, 0.0
        %v6700 = vmax.f32 %v6452, 0.0
        %v6701 = vmax.f32 %v6455, 0.0
        %v6702 = vmax.f32 %v6460, 0.0
        %v6703 = vmax.f32 %v6463, 0.0
        %v6704 = vmax.f32 %v6468, 0.0
        %v6705 = vmax.f32 %v6471, 0.0
        %v6706 = vmax.f32 %v6476, 0.0
        %v6707 = vmax.f32 %v6479, 0.0
        %v6708 = vmax.f32 %v6484, 0.0
        %v6709 = vmax.f32 %v6487, 0.0
        %v6710 = vmax.f32 %v6492, 0.0
        %v6711 = vmax.f32 %v6495, 0.0
        %v6712 = vmax.f32 %v6500, 0.0
        %v6713 = vmax.f32 %v6503, 0.0
        %v6714 = vmax.f32 %v6508, 0.0
        %v6715 = vmax.f32 %v6511, 0.0
        %v6716 = vmax.f32 %v6516, 0.0
        %v6717 = vmax.f32 %v6519, 0.0
        %v6718 = vmax.f32 %v6524, 0.0
        %v6719 = vmax.f32 %v6527, 0.0
        %v6720 = vmax.f32 %v6532, 0.0
        %v6721 = vmax.f32 %v6535, 0.0
        %v6722 = vmax.f32 %v6540, 0.0
        %v6723 = vmax.f32 %v6543, 0.0
        %v6724 = vmax.f32 %v6548, 0.0
        %v6725 = vmax.f32 %v6551, 0.0
        %v6726 = vmax.f32 %v6556, 0.0
        %v6727 = vmax.f32 %v6559, 0.0
        %v6728 = vmax.f32 %v6564, 0.0
        %v6729 = vmax.f32 %v6567, 0.0
        %v6730 = vmax.f32 %v6572, 0.0
        %v6731 = vmax.f32 %v6575, 0.0
        %v6732 = vmax.f32 %v6580, 0.0
        %v6733 = vmax.f32 %v6583, 0.0
        %v6734 = vmax.f32 %v6588, 0.0
        %v6735 = vmax.f32 %v6591, 0.0
        %v6736 = vmax.f32 %v6596, 0.0
        %v6737 = vmax.f32 %v6599, 0.0
        %v6738 = vmax.f32 %v6604, 0.0
        %v6739 = vmax.f32 %v6607, 0.0
        %v6740 = vmax.f32 %v6612, 0.0
        %v6741 = vmax.f32 %v6615, 0.0
        %v6742 = vmax.f32 %v6620, 0.0
        %v6743 = vmax.f32 %v6623, 0.0
        %v6744 = vmax.f32 %v6628, 0.0
        %v6745 = vmax.f32 %v6631, 0.0
        %v6746 = vmax.f32 %v6636, 0.0
        %v6747 = vmax.f32 %v6639, 0.0
        %v6748 = vmax.f32 %v6644, 0.0
        %v6749 = vmax.f32 %v6647, 0.0
        %v6750 = vmax.f32 %v6652, 0.0
        %v6751 = vmax.f32 %v6655, 0.0
        %v6752 = vmax.f32 %v6660, 0.0
        %v6753 = vmax.f32 %v6663, 0.0
        %v6754 = vmax.f32 %v6668, 0.0
        %v6755 = vmax.f32 %v6671, 0.0
        %v6756 = vmax.f32 %v6676, 0.0
        %v6757 = vmax.f32 %v6679, 0.0
        %v6758 = vmax.f32 %v6684, 0.0
        %v6759 = vmax.f32 %v6687, 0.0
        %v6760 = vmax.f32 %v6692, 0.0
        %v6761 = vmax.f32 %v6695, 0.0
        %v6762 = vpack.c.bf16 %v6699, %v6698
        %v6763 = vpack.c.bf16 %v6701, %v6700
        %v6764 = vpack.c.bf16 %v6703, %v6702
        %v6765 = vpack.c.bf16 %v6705, %v6704
        %v6766 = vpack.c.bf16 %v6707, %v6706
        %v6767 = vpack.c.bf16 %v6709, %v6708
        %v6768 = vpack.c.bf16 %v6711, %v6710
        %v6769 = vpack.c.bf16 %v6713, %v6712
        %v6770 = vpack.c.bf16 %v6715, %v6714
        %v6771 = vpack.c.bf16 %v6717, %v6716
        %v6772 = vpack.c.bf16 %v6719, %v6718
        %v6773 = vpack.c.bf16 %v6721, %v6720
        %v6774 = vpack.c.bf16 %v6723, %v6722
        %v6775 = vpack.c.bf16 %v6725, %v6724
        %v6776 = vpack.c.bf16 %v6727, %v6726
        %v6777 = vpack.c.bf16 %v6729, %v6728
        %v6778 = vpack.c.bf16 %v6731, %v6730
        %v6779 = vpack.c.bf16 %v6733, %v6732
        %v6780 = vpack.c.bf16 %v6735, %v6734
        %v6781 = vpack.c.bf16 %v6737, %v6736
        %v6782 = vpack.c.bf16 %v6739, %v6738
        %v6783 = vpack.c.bf16 %v6741, %v6740
        %v6784 = vpack.c.bf16 %v6743, %v6742
        %v6785 = vpack.c.bf16 %v6745, %v6744
        %v6786 = vpack.c.bf16 %v6747, %v6746
        %v6787 = vpack.c.bf16 %v6749, %v6748
        %v6788 = vpack.c.bf16 %v6751, %v6750
        %v6789 = vpack.c.bf16 %v6753, %v6752
        %v6790 = vpack.c.bf16 %v6755, %v6754
        %v6791 = vpack.c.bf16 %v6757, %v6756
        %v6792 = vpack.c.bf16 %v6759, %v6758
        %v6793 = vpack.c.bf16 %v6761, %v6760
        %v6794 = vld [vmem:[#allocation17] sm:$0xff]
        %v6795 = vld [vmem:[#allocation17 + $0x8] sm:$0xff]
        %v6796 = vld [vmem:[#allocation17 + $0x10] sm:$0xff]
        %v6797 = vld [vmem:[#allocation17 + $0x18] sm:$0xff]
        %v6798 = vld [vmem:[#allocation17 + $0x20] sm:$0xff]
        %v6799 = vld [vmem:[#allocation17 + $0x28] sm:$0xff]
        %v6800 = vld [vmem:[#allocation17 + $0x30] sm:$0xff]
        %v6801 = vld [vmem:[#allocation17 + $0x38] sm:$0xff]
        %v6802 = vld [vmem:[#allocation17 + $0x40] sm:$0xff]
        %v6803 = vld [vmem:[#allocation17 + $0x48] sm:$0xff]
        %v6804 = vld [vmem:[#allocation17 + $0x50] sm:$0xff]
        %v6805 = vld [vmem:[#allocation17 + $0x58] sm:$0xff]
        %v6806 = vld [vmem:[#allocation17 + $0x60] sm:$0xff]
        %v6807 = vld [vmem:[#allocation17 + $0x68] sm:$0xff]
        %v6808 = vld [vmem:[#allocation17 + $0x70] sm:$0xff]
        %v6809 = vld [vmem:[#allocation17 + $0x78] sm:$0xff]
        %v6810 = vld [vmem:[#allocation17 + $0x80] sm:$0xff]
        %v6811 = vld [vmem:[#allocation17 + $0x88] sm:$0xff]
        %v6812 = vld [vmem:[#allocation17 + $0x90] sm:$0xff]
        %v6813 = vld [vmem:[#allocation17 + $0x98] sm:$0xff]
        %v6814 = vld [vmem:[#allocation17 + $0xa0] sm:$0xff]
        %v6815 = vld [vmem:[#allocation17 + $0xa8] sm:$0xff]
        %v6816 = vld [vmem:[#allocation17 + $0xb0] sm:$0xff]
        %v6817 = vld [vmem:[#allocation17 + $0xb8] sm:$0xff]
        %v6818 = vld [vmem:[#allocation17 + $0xc0] sm:$0xff]
        %v6819 = vld [vmem:[#allocation17 + $0xc8] sm:$0xff]
        %v6820 = vld [vmem:[#allocation17 + $0xd0] sm:$0xff]
        %v6821 = vld [vmem:[#allocation17 + $0xd8] sm:$0xff]
        %v6822 = vld [vmem:[#allocation17 + $0xe0] sm:$0xff]
        %v6823 = vld [vmem:[#allocation17 + $0xe8] sm:$0xff]
        %v6824 = vld [vmem:[#allocation17 + $0xf0] sm:$0xff]
        %v6825 = vld [vmem:[#allocation17 + $0xf8] sm:$0xff]
        %v6826 = vld [vmem:[#allocation17 + $0x100] sm:$0xff]
        %v6827 = vld [vmem:[#allocation17 + $0x108] sm:$0xff]
        %v6828 = vld [vmem:[#allocation17 + $0x110] sm:$0xff]
        %v6829 = vld [vmem:[#allocation17 + $0x118] sm:$0xff]
        %v6830 = vld [vmem:[#allocation17 + $0x120] sm:$0xff]
        %v6831 = vld [vmem:[#allocation17 + $0x128] sm:$0xff]
        %v6832 = vld [vmem:[#allocation17 + $0x130] sm:$0xff]
        %v6833 = vld [vmem:[#allocation17 + $0x138] sm:$0xff]
        %v6834 = vld [vmem:[#allocation17 + $0x140] sm:$0xff]
        %v6835 = vld [vmem:[#allocation17 + $0x148] sm:$0xff]
        %v6836 = vld [vmem:[#allocation17 + $0x150] sm:$0xff]
        %v6837 = vld [vmem:[#allocation17 + $0x158] sm:$0xff]
        %v6838 = vld [vmem:[#allocation17 + $0x160] sm:$0xff]
        %v6839 = vld [vmem:[#allocation17 + $0x168] sm:$0xff]
        %v6840 = vld [vmem:[#allocation17 + $0x170] sm:$0xff]
        %v6841 = vld [vmem:[#allocation17 + $0x178] sm:$0xff]
        %v6842 = vld [vmem:[#allocation17 + $0x180] sm:$0xff]
        %v6843 = vld [vmem:[#allocation17 + $0x188] sm:$0xff]
        %v6844 = vld [vmem:[#allocation17 + $0x190] sm:$0xff]
        %v6845 = vld [vmem:[#allocation17 + $0x198] sm:$0xff]
        %v6846 = vld [vmem:[#allocation17 + $0x1a0] sm:$0xff]
        %v6847 = vld [vmem:[#allocation17 + $0x1a8] sm:$0xff]
        %v6848 = vld [vmem:[#allocation17 + $0x1b0] sm:$0xff]
        %v6849 = vld [vmem:[#allocation17 + $0x1b8] sm:$0xff]
        %v6850 = vld [vmem:[#allocation17 + $0x1c0] sm:$0xff]
        %v6851 = vld [vmem:[#allocation17 + $0x1c8] sm:$0xff]
        %v6852 = vld [vmem:[#allocation17 + $0x1d0] sm:$0xff]
        %v6853 = vld [vmem:[#allocation17 + $0x1d8] sm:$0xff]
        %v6854 = vld [vmem:[#allocation17 + $0x1e0] sm:$0xff]
        %v6855 = vld [vmem:[#allocation17 + $0x1e8] sm:$0xff]
        %v6856 = vld [vmem:[#allocation17 + $0x1f0] sm:$0xff]
        %v6857 = vld [vmem:[#allocation17 + $0x1f8] sm:$0xff]
        %v6858 = vld [vmem:[#allocation19] sm:$0xff]
        %v6859 = vld [vmem:[#allocation19 + $0x8] sm:$0xff]
        %v6860 = vld [vmem:[#allocation19 + $0x10] sm:$0xff]
        %v6861 = vld [vmem:[#allocation19 + $0x18] sm:$0xff]
        %v6862 = vld [vmem:[#allocation19 + $0x20] sm:$0xff]
        %v6863 = vld [vmem:[#allocation19 + $0x28] sm:$0xff]
        %v6864 = vld [vmem:[#allocation19 + $0x30] sm:$0xff]
        %v6865 = vld [vmem:[#allocation19 + $0x38] sm:$0xff]
        %v6866 = vld [vmem:[#allocation19 + $0x40] sm:$0xff]
        %v6867 = vld [vmem:[#allocation19 + $0x48] sm:$0xff]
        %v6868 = vld [vmem:[#allocation19 + $0x50] sm:$0xff]
        %v6869 = vld [vmem:[#allocation19 + $0x58] sm:$0xff]
        %v6870 = vld [vmem:[#allocation19 + $0x60] sm:$0xff]
        %v6871 = vld [vmem:[#allocation19 + $0x68] sm:$0xff]
        %v6872 = vld [vmem:[#allocation19 + $0x70] sm:$0xff]
        %v6873 = vld [vmem:[#allocation19 + $0x78] sm:$0xff]
        %v6874 = vld [vmem:[#allocation19 + $0x80] sm:$0xff]
        %v6875 = vld [vmem:[#allocation19 + $0x88] sm:$0xff]
        %v6876 = vld [vmem:[#allocation19 + $0x90] sm:$0xff]
        %v6877 = vld [vmem:[#allocation19 + $0x98] sm:$0xff]
        %v6878 = vld [vmem:[#allocation19 + $0xa0] sm:$0xff]
        %v6879 = vld [vmem:[#allocation19 + $0xa8] sm:$0xff]
        %v6880 = vld [vmem:[#allocation19 + $0xb0] sm:$0xff]
        %v6881 = vld [vmem:[#allocation19 + $0xb8] sm:$0xff]
        %v6882 = vld [vmem:[#allocation19 + $0xc0] sm:$0xff]
        %v6883 = vld [vmem:[#allocation19 + $0xc8] sm:$0xff]
        %v6884 = vld [vmem:[#allocation19 + $0xd0] sm:$0xff]
        %v6885 = vld [vmem:[#allocation19 + $0xd8] sm:$0xff]
        %v6886 = vld [vmem:[#allocation19 + $0xe0] sm:$0xff]
        %v6887 = vld [vmem:[#allocation19 + $0xe8] sm:$0xff]
        %v6888 = vld [vmem:[#allocation19 + $0xf0] sm:$0xff]
        %v6889 = vld [vmem:[#allocation19 + $0xf8] sm:$0xff]
        %6891 = vset.pattern.permute.xlu0 0
        %6892 = vperm.xlu0 %6891, %v6858
        %v6893 = vpop.permute.xlu0 %6892
        %6896 = vset.pattern.permute.xlu0 0
        %6897 = vperm.xlu0 %6896, %v6859
        %v6898 = vpop.permute.xlu0 %6897
        %6901 = vset.pattern.permute.xlu0 0
        %6902 = vperm.xlu0 %6901, %v6860
        %v6903 = vpop.permute.xlu0 %6902
        %6906 = vset.pattern.permute.xlu0 0
        %6907 = vperm.xlu0 %6906, %v6861
        %v6908 = vpop.permute.xlu0 %6907
        %6911 = vset.pattern.permute.xlu0 0
        %6912 = vperm.xlu0 %6911, %v6862
        %v6913 = vpop.permute.xlu0 %6912
        %6916 = vset.pattern.permute.xlu0 0
        %6917 = vperm.xlu0 %6916, %v6863
        %v6918 = vpop.permute.xlu0 %6917
        %6921 = vset.pattern.permute.xlu0 0
        %6922 = vperm.xlu0 %6921, %v6864
        %v6923 = vpop.permute.xlu0 %6922
        %6926 = vset.pattern.permute.xlu0 0
        %6927 = vperm.xlu0 %6926, %v6865
        %v6928 = vpop.permute.xlu0 %6927
        %6931 = vset.pattern.permute.xlu0 0
        %6932 = vperm.xlu0 %6931, %v6866
        %v6933 = vpop.permute.xlu0 %6932
        %6936 = vset.pattern.permute.xlu0 0
        %6937 = vperm.xlu0 %6936, %v6867
        %v6938 = vpop.permute.xlu0 %6937
        %6941 = vset.pattern.permute.xlu0 0
        %6942 = vperm.xlu0 %6941, %v6868
        %v6943 = vpop.permute.xlu0 %6942
        %6946 = vset.pattern.permute.xlu0 0
        %6947 = vperm.xlu0 %6946, %v6869
        %v6948 = vpop.permute.xlu0 %6947
        %6951 = vset.pattern.permute.xlu0 0
        %6952 = vperm.xlu0 %6951, %v6870
        %v6953 = vpop.permute.xlu0 %6952
        %6956 = vset.pattern.permute.xlu0 0
        %6957 = vperm.xlu0 %6956, %v6871
        %v6958 = vpop.permute.xlu0 %6957
        %6961 = vset.pattern.permute.xlu0 0
        %6962 = vperm.xlu0 %6961, %v6872
        %v6963 = vpop.permute.xlu0 %6962
        %6966 = vset.pattern.permute.xlu0 0
        %6967 = vperm.xlu0 %6966, %v6873
        %v6968 = vpop.permute.xlu0 %6967
        %6971 = vset.pattern.permute.xlu0 0
        %6972 = vperm.xlu0 %6971, %v6874
        %v6973 = vpop.permute.xlu0 %6972
        %6976 = vset.pattern.permute.xlu0 0
        %6977 = vperm.xlu0 %6976, %v6875
        %v6978 = vpop.permute.xlu0 %6977
        %6981 = vset.pattern.permute.xlu0 0
        %6982 = vperm.xlu0 %6981, %v6876
        %v6983 = vpop.permute.xlu0 %6982
        %6986 = vset.pattern.permute.xlu0 0
        %6987 = vperm.xlu0 %6986, %v6877
        %v6988 = vpop.permute.xlu0 %6987
        %6991 = vset.pattern.permute.xlu0 0
        %6992 = vperm.xlu0 %6991, %v6878
        %v6993 = vpop.permute.xlu0 %6992
        %6996 = vset.pattern.permute.xlu0 0
        %6997 = vperm.xlu0 %6996, %v6879
        %v6998 = vpop.permute.xlu0 %6997
        %7001 = vset.pattern.permute.xlu0 0
        %7002 = vperm.xlu0 %7001, %v6880
        %v7003 = vpop.permute.xlu0 %7002
        %7006 = vset.pattern.permute.xlu0 0
        %7007 = vperm.xlu0 %7006, %v6881
        %v7008 = vpop.permute.xlu0 %7007
        %7011 = vset.pattern.permute.xlu0 0
        %7012 = vperm.xlu0 %7011, %v6882
        %v7013 = vpop.permute.xlu0 %7012
        %7016 = vset.pattern.permute.xlu0 0
        %7017 = vperm.xlu0 %7016, %v6883
        %v7018 = vpop.permute.xlu0 %7017
        %7021 = vset.pattern.permute.xlu0 0
        %7022 = vperm.xlu0 %7021, %v6884
        %v7023 = vpop.permute.xlu0 %7022
        %7026 = vset.pattern.permute.xlu0 0
        %7027 = vperm.xlu0 %7026, %v6885
        %v7028 = vpop.permute.xlu0 %7027
        %7031 = vset.pattern.permute.xlu0 0
        %7032 = vperm.xlu0 %7031, %v6886
        %v7033 = vpop.permute.xlu0 %7032
        %7036 = vset.pattern.permute.xlu0 0
        %7037 = vperm.xlu0 %7036, %v6887
        %v7038 = vpop.permute.xlu0 %7037
        %7041 = vset.pattern.permute.xlu0 0
        %7042 = vperm.xlu0 %7041, %v6888
        %v7043 = vpop.permute.xlu0 %7042
        %7046 = vset.pattern.permute.xlu0 0
        %7047 = vperm.xlu0 %7046, %v6889
        %v7048 = vpop.permute.xlu0 %7047
        %v7114 = vunpack.c.l.b16 %v6794
        %v7115 = vunpack.c.h.b16 %v6794
        %v7116 = vunpack.c.l.b16 %v6795
        %v7117 = vunpack.c.h.b16 %v6795
        %v7118 = vunpack.c.l.b16 %v6796
        %v7119 = vunpack.c.h.b16 %v6796
        %v7120 = vunpack.c.l.b16 %v6797
        %v7121 = vunpack.c.h.b16 %v6797
        %v7122 = vunpack.c.l.b16 %v6798
        %v7123 = vunpack.c.h.b16 %v6798
        %v7124 = vunpack.c.l.b16 %v6799
        %v7125 = vunpack.c.h.b16 %v6799
        %v7126 = vunpack.c.l.b16 %v6800
        %v7127 = vunpack.c.h.b16 %v6800
        %v7128 = vunpack.c.l.b16 %v6801
        %v7129 = vunpack.c.h.b16 %v6801
        %v7130 = vunpack.c.l.b16 %v6802
        %v7131 = vunpack.c.h.b16 %v6802
        %v7132 = vunpack.c.l.b16 %v6803
        %v7133 = vunpack.c.h.b16 %v6803
        %v7134 = vunpack.c.l.b16 %v6804
        %v7135 = vunpack.c.h.b16 %v6804
        %v7136 = vunpack.c.l.b16 %v6805
        %v7137 = vunpack.c.h.b16 %v6805
        %v7138 = vunpack.c.l.b16 %v6806
        %v7139 = vunpack.c.h.b16 %v6806
        %v7140 = vunpack.c.l.b16 %v6807
        %v7141 = vunpack.c.h.b16 %v6807
        %v7142 = vunpack.c.l.b16 %v6808
        %v7143 = vunpack.c.h.b16 %v6808
        %v7144 = vunpack.c.l.b16 %v6809
        %v7145 = vunpack.c.h.b16 %v6809
        %v7146 = vunpack.c.l.b16 %v6810
        %v7147 = vunpack.c.h.b16 %v6810
        %v7148 = vunpack.c.l.b16 %v6811
        %v7149 = vunpack.c.h.b16 %v6811
        %v7150 = vunpack.c.l.b16 %v6812
        %v7151 = vunpack.c.h.b16 %v6812
        %v7152 = vunpack.c.l.b16 %v6813
        %v7153 = vunpack.c.h.b16 %v6813
        %v7154 = vunpack.c.l.b16 %v6814
        %v7155 = vunpack.c.h.b16 %v6814
        %v7156 = vunpack.c.l.b16 %v6815
        %v7157 = vunpack.c.h.b16 %v6815
        %v7158 = vunpack.c.l.b16 %v6816
        %v7159 = vunpack.c.h.b16 %v6816
        %v7160 = vunpack.c.l.b16 %v6817
        %v7161 = vunpack.c.h.b16 %v6817
        %v7162 = vunpack.c.l.b16 %v6818
        %v7163 = vunpack.c.h.b16 %v6818
        %v7164 = vunpack.c.l.b16 %v6819
        %v7165 = vunpack.c.h.b16 %v6819
        %v7166 = vunpack.c.l.b16 %v6820
        %v7167 = vunpack.c.h.b16 %v6820
        %v7168 = vunpack.c.l.b16 %v6821
        %v7169 = vunpack.c.h.b16 %v6821
        %v7170 = vunpack.c.l.b16 %v6822
        %v7171 = vunpack.c.h.b16 %v6822
        %v7172 = vunpack.c.l.b16 %v6823
        %v7173 = vunpack.c.h.b16 %v6823
        %v7174 = vunpack.c.l.b16 %v6824
        %v7175 = vunpack.c.h.b16 %v6824
        %v7176 = vunpack.c.l.b16 %v6825
        %v7177 = vunpack.c.h.b16 %v6825
        %v7178 = vunpack.c.l.b16 %v6826
        %v7179 = vunpack.c.h.b16 %v6826
        %v7180 = vunpack.c.l.b16 %v6827
        %v7181 = vunpack.c.h.b16 %v6827
        %v7182 = vunpack.c.l.b16 %v6828
        %v7183 = vunpack.c.h.b16 %v6828
        %v7184 = vunpack.c.l.b16 %v6829
        %v7185 = vunpack.c.h.b16 %v6829
        %v7186 = vunpack.c.l.b16 %v6830
        %v7187 = vunpack.c.h.b16 %v6830
        %v7188 = vunpack.c.l.b16 %v6831
        %v7189 = vunpack.c.h.b16 %v6831
        %v7190 = vunpack.c.l.b16 %v6832
        %v7191 = vunpack.c.h.b16 %v6832
        %v7192 = vunpack.c.l.b16 %v6833
        %v7193 = vunpack.c.h.b16 %v6833
        %v7194 = vunpack.c.l.b16 %v6834
        %v7195 = vunpack.c.h.b16 %v6834
        %v7196 = vunpack.c.l.b16 %v6835
        %v7197 = vunpack.c.h.b16 %v6835
        %v7198 = vunpack.c.l.b16 %v6836
        %v7199 = vunpack.c.h.b16 %v6836
        %v7200 = vunpack.c.l.b16 %v6837
        %v7201 = vunpack.c.h.b16 %v6837
        %v7202 = vunpack.c.l.b16 %v6838
        %v7203 = vunpack.c.h.b16 %v6838
        %v7204 = vunpack.c.l.b16 %v6839
        %v7205 = vunpack.c.h.b16 %v6839
        %v7206 = vunpack.c.l.b16 %v6840
        %v7207 = vunpack.c.h.b16 %v6840
        %v7208 = vunpack.c.l.b16 %v6841
        %v7209 = vunpack.c.h.b16 %v6841
        %v7210 = vunpack.c.l.b16 %v6842
        %v7211 = vunpack.c.h.b16 %v6842
        %v7212 = vunpack.c.l.b16 %v6843
        %v7213 = vunpack.c.h.b16 %v6843
        %v7214 = vunpack.c.l.b16 %v6844
        %v7215 = vunpack.c.h.b16 %v6844
        %v7216 = vunpack.c.l.b16 %v6845
        %v7217 = vunpack.c.h.b16 %v6845
        %v7218 = vunpack.c.l.b16 %v6846
        %v7219 = vunpack.c.h.b16 %v6846
        %v7220 = vunpack.c.l.b16 %v6847
        %v7221 = vunpack.c.h.b16 %v6847
        %v7222 = vunpack.c.l.b16 %v6848
        %v7223 = vunpack.c.h.b16 %v6848
        %v7224 = vunpack.c.l.b16 %v6849
        %v7225 = vunpack.c.h.b16 %v6849
        %v7226 = vunpack.c.l.b16 %v6850
        %v7227 = vunpack.c.h.b16 %v6850
        %v7228 = vunpack.c.l.b16 %v6851
        %v7229 = vunpack.c.h.b16 %v6851
        %v7230 = vunpack.c.l.b16 %v6852
        %v7231 = vunpack.c.h.b16 %v6852
        %v7232 = vunpack.c.l.b16 %v6853
        %v7233 = vunpack.c.h.b16 %v6853
        %v7234 = vunpack.c.l.b16 %v6854
        %v7235 = vunpack.c.h.b16 %v6854
        %v7236 = vunpack.c.l.b16 %v6855
        %v7237 = vunpack.c.h.b16 %v6855
        %v7238 = vunpack.c.l.b16 %v6856
        %v7239 = vunpack.c.h.b16 %v6856
        %v7240 = vunpack.c.l.b16 %v6857
        %v7241 = vunpack.c.h.b16 %v6857
        %v7242 = vpack.c.b16 %v7118, %v7114
        %v7243 = vpack.c.b16 %v7119, %v7115
        %v7244 = vpack.c.b16 %v7120, %v7116
        %v7245 = vpack.c.b16 %v7121, %v7117
        %v7246 = vpack.c.b16 %v7126, %v7122
        %v7247 = vpack.c.b16 %v7127, %v7123
        %v7248 = vpack.c.b16 %v7128, %v7124
        %v7249 = vpack.c.b16 %v7129, %v7125
        %v7250 = vpack.c.b16 %v7134, %v7130
        %v7251 = vpack.c.b16 %v7135, %v7131
        %v7252 = vpack.c.b16 %v7136, %v7132
        %v7253 = vpack.c.b16 %v7137, %v7133
        %v7254 = vpack.c.b16 %v7142, %v7138
        %v7255 = vpack.c.b16 %v7143, %v7139
        %v7256 = vpack.c.b16 %v7144, %v7140
        %v7257 = vpack.c.b16 %v7145, %v7141
        %v7258 = vpack.c.b16 %v7150, %v7146
        %v7259 = vpack.c.b16 %v7151, %v7147
        %v7260 = vpack.c.b16 %v7152, %v7148
        %v7261 = vpack.c.b16 %v7153, %v7149
        %v7262 = vpack.c.b16 %v7158, %v7154
        %v7263 = vpack.c.b16 %v7159, %v7155
        %v7264 = vpack.c.b16 %v7160, %v7156
        %v7265 = vpack.c.b16 %v7161, %v7157
        %v7266 = vpack.c.b16 %v7166, %v7162
        %v7267 = vpack.c.b16 %v7167, %v7163
        %v7268 = vpack.c.b16 %v7168, %v7164
        %v7269 = vpack.c.b16 %v7169, %v7165
        %v7270 = vpack.c.b16 %v7174, %v7170
        %v7271 = vpack.c.b16 %v7175, %v7171
        %v7272 = vpack.c.b16 %v7176, %v7172
        %v7273 = vpack.c.b16 %v7177, %v7173
        %v7274 = vpack.c.b16 %v7182, %v7178
        %v7275 = vpack.c.b16 %v7183, %v7179
        %v7276 = vpack.c.b16 %v7184, %v7180
        %v7277 = vpack.c.b16 %v7185, %v7181
        %v7278 = vpack.c.b16 %v7190, %v7186
        %v7279 = vpack.c.b16 %v7191, %v7187
        %v7280 = vpack.c.b16 %v7192, %v7188
        %v7281 = vpack.c.b16 %v7193, %v7189
        %v7282 = vpack.c.b16 %v7198, %v7194
        %v7283 = vpack.c.b16 %v7199, %v7195
        %v7284 = vpack.c.b16 %v7200, %v7196
        %v7285 = vpack.c.b16 %v7201, %v7197
        %v7286 = vpack.c.b16 %v7206, %v7202
        %v7287 = vpack.c.b16 %v7207, %v7203
        %v7288 = vpack.c.b16 %v7208, %v7204
        %v7289 = vpack.c.b16 %v7209, %v7205
        %v7290 = vpack.c.b16 %v7214, %v7210
        %v7291 = vpack.c.b16 %v7215, %v7211
        %v7292 = vpack.c.b16 %v7216, %v7212
        %v7293 = vpack.c.b16 %v7217, %v7213
        %v7294 = vpack.c.b16 %v7222, %v7218
        %v7295 = vpack.c.b16 %v7223, %v7219
        %v7296 = vpack.c.b16 %v7224, %v7220
        %v7297 = vpack.c.b16 %v7225, %v7221
        %v7298 = vpack.c.b16 %v7230, %v7226
        %v7299 = vpack.c.b16 %v7231, %v7227
        %v7300 = vpack.c.b16 %v7232, %v7228
        %v7301 = vpack.c.b16 %v7233, %v7229
        %v7302 = vpack.c.b16 %v7238, %v7234
        %v7303 = vpack.c.b16 %v7239, %v7235
        %v7304 = vpack.c.b16 %v7240, %v7236
        %v7305 = vpack.c.b16 %v7241, %v7237
        %7370 = vmatprep.subr.bf16.mxu0 0
        %7371 = vmatpush1.bf16.msra.mxu0 %v6762
        %7372 = vmatprep.subr.bf16.mxu0 0
        %7373 = vmatpush1.bf16.msra.mxu0 %v6763
        %7374 = vmatprep.subr.bf16.mxu0 0
        %7375 = vmatpush1.bf16.msra.mxu0 %v6764
        %7376 = vmatprep.subr.bf16.mxu0 0
        %7377 = vmatpush1.bf16.msra.mxu0 %v6765
        %7378 = vmatprep.subr.bf16.mxu0 0
        %7379 = vmatpush1.bf16.msra.mxu0 %v6766
        %7380 = vmatprep.subr.bf16.mxu0 0
        %7381 = vmatpush1.bf16.msra.mxu0 %v6767
        %7382 = vmatprep.subr.bf16.mxu0 0
        %7383 = vmatpush1.bf16.msra.mxu0 %v6768
        %7384 = vmatprep.subr.bf16.mxu0 0
        %7385 = vmatpush1.bf16.msra.mxu0 %v6769
        %7386 = vmatprep.subr.bf16.mxu0 0
        %7387 = vmatpush1.bf16.msra.mxu0 %v6770
        %7388 = vmatprep.subr.bf16.mxu0 0
        %7389 = vmatpush1.bf16.msra.mxu0 %v6771
        %7390 = vmatprep.subr.bf16.mxu0 0
        %7391 = vmatpush1.bf16.msra.mxu0 %v6772
        %7392 = vmatprep.subr.bf16.mxu0 0
        %7393 = vmatpush1.bf16.msra.mxu0 %v6773
        %7394 = vmatprep.subr.bf16.mxu0 0
        %7395 = vmatpush1.bf16.msra.mxu0 %v6774
        %7396 = vmatprep.subr.bf16.mxu0 0
        %7397 = vmatpush1.bf16.msra.mxu0 %v6775
        %7398 = vmatprep.subr.bf16.mxu0 0
        %7399 = vmatpush1.bf16.msra.mxu0 %v6776
        %7400 = vmatprep.subr.bf16.mxu0 0
        %7401 = vmatpush1.bf16.msra.mxu0 %v6777
        %7402 = vmatprep.mubr.bf16.mxu0 %v7243
        %7403 = vmatmul.mubr.bf16.gmra.mrb[0].mxu0 %v7242
        %v7404 = vpop.f32.mrb[0].mxu0
        %v7405 = vadd.f32 %v6893, %v7404
        %v7406 = vpop.f32.mrb[0].mxu0
        %v7407 = vpop.f32.mrb[0].mxu0
        %v7408 = vadd.f32 %v6898, %v7407
        %v7409 = vpop.f32.mrb[0].mxu0
        %7410 = vmatprep.mubr.bf16.mxu0 %v7247
        %7411 = vmatmul.mubr.bf16.gmra.mrb[0].mxu0 %v7246
        %v7412 = vpop.f32.mrb[0].mxu0
        %v7413 = vadd.f32 %v6903, %v7412
        %v7414 = vpop.f32.mrb[0].mxu0
        %v7415 = vpop.f32.mrb[0].mxu0
        %v7416 = vadd.f32 %v6908, %v7415
        %v7417 = vpop.f32.mrb[0].mxu0
        %7418 = vmatprep.mubr.bf16.mxu0 %v7251
        %7419 = vmatmul.mubr.bf16.gmra.mrb[0].mxu0 %v7250
        %v7420 = vpop.f32.mrb[0].mxu0
        %v7421 = vadd.f32 %v6913, %v7420
        %v7422 = vpop.f32.mrb[0].mxu0
        %v7423 = vpop.f32.mrb[0].mxu0
        %v7424 = vadd.f32 %v6918, %v7423
        %v7425 = vpop.f32.mrb[0].mxu0
        %7426 = vmatprep.mubr.bf16.mxu0 %v7255
        %7427 = vmatmul.mubr.bf16.gmra.mrb[0].mxu0 %v7254
        %v7428 = vpop.f32.mrb[0].mxu0
        %v7429 = vadd.f32 %v6923, %v7428
        %v7430 = vpop.f32.mrb[0].mxu0
        %v7431 = vpop.f32.mrb[0].mxu0
        %v7432 = vadd.f32 %v6928, %v7431
        %v7433 = vpop.f32.mrb[0].mxu0
        %7434 = vmatprep.mubr.bf16.mxu0 %v7259
        %7435 = vmatmul.mubr.bf16.gmra.mrb[0].mxu0 %v7258
        %v7436 = vpop.f32.mrb[0].mxu0
        %v7437 = vadd.f32 %v6933, %v7436
        %v7438 = vpop.f32.mrb[0].mxu0
        %v7439 = vpop.f32.mrb[0].mxu0
        %v7440 = vadd.f32 %v6938, %v7439
        %v7441 = vpop.f32.mrb[0].mxu0
        %7442 = vmatprep.mubr.bf16.mxu0 %v7263
        %7443 = vmatmul.mubr.bf16.gmra.mrb[0].mxu0 %v7262
        %v7444 = vpop.f32.mrb[0].mxu0
        %v7445 = vadd.f32 %v6943, %v7444
        %v7446 = vpop.f32.mrb[0].mxu0
        %v7447 = vpop.f32.mrb[0].mxu0
        %v7448 = vadd.f32 %v6948, %v7447
        %v7449 = vpop.f32.mrb[0].mxu0
        %7450 = vmatprep.mubr.bf16.mxu0 %v7267
        %7451 = vmatmul.mubr.bf16.gmra.mrb[0].mxu0 %v7266
        %v7452 = vpop.f32.mrb[0].mxu0
        %v7453 = vadd.f32 %v6953, %v7452
        %v7454 = vpop.f32.mrb[0].mxu0
        %v7455 = vpop.f32.mrb[0].mxu0
        %v7456 = vadd.f32 %v6958, %v7455
        %v7457 = vpop.f32.mrb[0].mxu0
        %7458 = vmatprep.mubr.bf16.mxu0 %v7271
        %7459 = vmatmul.mubr.bf16.gmra.mrb[0].mxu0 %v7270
        %v7460 = vpop.f32.mrb[0].mxu0
        %v7461 = vadd.f32 %v6963, %v7460
        %v7462 = vpop.f32.mrb[0].mxu0
        %v7463 = vpop.f32.mrb[0].mxu0
        %v7464 = vadd.f32 %v6968, %v7463
        %v7465 = vpop.f32.mrb[0].mxu0
        %7466 = vmatprep.mubr.bf16.mxu0 %v7275
        %7467 = vmatmul.mubr.bf16.gmra.mrb[0].mxu0 %v7274
        %v7468 = vpop.f32.mrb[0].mxu0
        %v7469 = vadd.f32 %v6973, %v7468
        %v7470 = vpop.f32.mrb[0].mxu0
        %v7471 = vpop.f32.mrb[0].mxu0
        %v7472 = vadd.f32 %v6978, %v7471
        %v7473 = vpop.f32.mrb[0].mxu0
        %7474 = vmatprep.mubr.bf16.mxu0 %v7279
        %7475 = vmatmul.mubr.bf16.gmra.mrb[0].mxu0 %v7278
        %v7476 = vpop.f32.mrb[0].mxu0
        %v7477 = vadd.f32 %v6983, %v7476
        %v7478 = vpop.f32.mrb[0].mxu0
        %v7479 = vpop.f32.mrb[0].mxu0
        %v7480 = vadd.f32 %v6988, %v7479
        %v7481 = vpop.f32.mrb[0].mxu0
        %7482 = vmatprep.mubr.bf16.mxu0 %v7283
        %7483 = vmatmul.mubr.bf16.gmra.mrb[0].mxu0 %v7282
        %v7484 = vpop.f32.mrb[0].mxu0
        %v7485 = vadd.f32 %v6993, %v7484
        %v7486 = vpop.f32.mrb[0].mxu0
        %v7487 = vpop.f32.mrb[0].mxu0
        %v7488 = vadd.f32 %v6998, %v7487
        %v7489 = vpop.f32.mrb[0].mxu0
        %7490 = vmatprep.mubr.bf16.mxu0 %v7287
        %7491 = vmatmul.mubr.bf16.gmra.mrb[0].mxu0 %v7286
        %v7492 = vpop.f32.mrb[0].mxu0
        %v7493 = vadd.f32 %v7003, %v7492
        %v7494 = vpop.f32.mrb[0].mxu0
        %v7495 = vpop.f32.mrb[0].mxu0
        %v7496 = vadd.f32 %v7008, %v7495
        %v7497 = vpop.f32.mrb[0].mxu0
        %7498 = vmatprep.mubr.bf16.mxu0 %v7291
        %7499 = vmatmul.mubr.bf16.gmra.mrb[0].mxu0 %v7290
        %v7500 = vpop.f32.mrb[0].mxu0
        %v7501 = vadd.f32 %v7013, %v7500
        %v7502 = vpop.f32.mrb[0].mxu0
        %v7503 = vpop.f32.mrb[0].mxu0
        %v7504 = vadd.f32 %v7018, %v7503
        %v7505 = vpop.f32.mrb[0].mxu0
        %7506 = vmatprep.mubr.bf16.mxu0 %v7295
        %7507 = vmatmul.mubr.bf16.gmra.mrb[0].mxu0 %v7294
        %v7508 = vpop.f32.mrb[0].mxu0
        %v7509 = vadd.f32 %v7023, %v7508
        %v7510 = vpop.f32.mrb[0].mxu0
        %v7511 = vpop.f32.mrb[0].mxu0
        %v7512 = vadd.f32 %v7028, %v7511
        %v7513 = vpop.f32.mrb[0].mxu0
        %7514 = vmatprep.mubr.bf16.mxu0 %v7299
        %7515 = vmatmul.mubr.bf16.gmra.mrb[0].mxu0 %v7298
        %v7516 = vpop.f32.mrb[0].mxu0
        %v7517 = vadd.f32 %v7033, %v7516
        %v7518 = vpop.f32.mrb[0].mxu0
        %v7519 = vpop.f32.mrb[0].mxu0
        %v7520 = vadd.f32 %v7038, %v7519
        %v7521 = vpop.f32.mrb[0].mxu0
        %7522 = vmatprep.mubr.bf16.mxu0 %v7303
        %7523 = vmatmul.mubr.bf16.gmra.mrb[0].mxu0 %v7302
        %v7524 = vpop.f32.mrb[0].mxu0
        %v7525 = vadd.f32 %v7043, %v7524
        %v7526 = vpop.f32.mrb[0].mxu0
        %v7527 = vpop.f32.mrb[0].mxu0
        %v7528 = vadd.f32 %v7048, %v7527
        %v7529 = vpop.f32.mrb[0].mxu0
        %7530 = vdwg.mxu0
        %7531 = vmatprep.subr.bf16.mxu0 0
        %7532 = vmatpush1.bf16.msra.mxu0 %v6778
        %7533 = vmatprep.subr.bf16.mxu0 0
        %7534 = vmatpush1.bf16.msra.mxu0 %v6779
        %7535 = vmatprep.subr.bf16.mxu0 0
        %7536 = vmatpush1.bf16.msra.mxu0 %v6780
        %7537 = vmatprep.subr.bf16.mxu0 0
        %7538 = vmatpush1.bf16.msra.mxu0 %v6781
        %7539 = vmatprep.subr.bf16.mxu0 0
        %7540 = vmatpush1.bf16.msra.mxu0 %v6782
        %7541 = vmatprep.subr.bf16.mxu0 0
        %7542 = vmatpush1.bf16.msra.mxu0 %v6783
        %7543 = vmatprep.subr.bf16.mxu0 0
        %7544 = vmatpush1.bf16.msra.mxu0 %v6784
        %7545 = vmatprep.subr.bf16.mxu0 0
        %7546 = vmatpush1.bf16.msra.mxu0 %v6785
        %7547 = vmatprep.subr.bf16.mxu0 0
        %7548 = vmatpush1.bf16.msra.mxu0 %v6786
        %7549 = vmatprep.subr.bf16.mxu0 0
        %7550 = vmatpush1.bf16.msra.mxu0 %v6787
        %7551 = vmatprep.subr.bf16.mxu0 0
        %7552 = vmatpush1.bf16.msra.mxu0 %v6788
        %7553 = vmatprep.subr.bf16.mxu0 0
        %7554 = vmatpush1.bf16.msra.mxu0 %v6789
        %7555 = vmatprep.subr.bf16.mxu0 0
        %7556 = vmatpush1.bf16.msra.mxu0 %v6790
        %7557 = vmatprep.subr.bf16.mxu0 0
        %7558 = vmatpush1.bf16.msra.mxu0 %v6791
        %7559 = vmatprep.subr.bf16.mxu0 0
        %7560 = vmatpush1.bf16.msra.mxu0 %v6792
        %7561 = vmatprep.subr.bf16.mxu0 0
        %7562 = vmatpush1.bf16.msra.mxu0 %v6793
        %7563 = vmatprep.mubr.bf16.mxu0 %v7245
        %7564 = vmatmul.mubr.bf16.gmra.mrb[0].mxu0 %v7244
        %v7565 = vpop.f32.mrb[0].mxu0
        %v7566 = vadd.f32 %v7405, %v7565
        %v7567 = vpop.f32.mrb[0].mxu0
        %v7568 = vpop.f32.mrb[0].mxu0
        %v7569 = vadd.f32 %v7408, %v7568
        %v7570 = vpop.f32.mrb[0].mxu0
        %7571 = vmatprep.mubr.bf16.mxu0 %v7249
        %7572 = vmatmul.mubr.bf16.gmra.mrb[0].mxu0 %v7248
        %v7573 = vpop.f32.mrb[0].mxu0
        %v7574 = vadd.f32 %v7413, %v7573
        %v7575 = vpop.f32.mrb[0].mxu0
        %v7576 = vpop.f32.mrb[0].mxu0
        %v7577 = vadd.f32 %v7416, %v7576
        %v7578 = vpop.f32.mrb[0].mxu0
        %7579 = vmatprep.mubr.bf16.mxu0 %v7253
        %7580 = vmatmul.mubr.bf16.gmra.mrb[0].mxu0 %v7252
        %v7581 = vpop.f32.mrb[0].mxu0
        %v7582 = vadd.f32 %v7421, %v7581
        %v7583 = vpop.f32.mrb[0].mxu0
        %v7584 = vpop.f32.mrb[0].mxu0
        %v7585 = vadd.f32 %v7424, %v7584
        %v7586 = vpop.f32.mrb[0].mxu0
        %7587 = vmatprep.mubr.bf16.mxu0 %v7257
        %7588 = vmatmul.mubr.bf16.gmra.mrb[0].mxu0 %v7256
        %v7589 = vpop.f32.mrb[0].mxu0
        %v7590 = vadd.f32 %v7429, %v7589
        %v7591 = vpop.f32.mrb[0].mxu0
        %v7592 = vpop.f32.mrb[0].mxu0
        %v7593 = vadd.f32 %v7432, %v7592
        %v7594 = vpop.f32.mrb[0].mxu0
        %7595 = vmatprep.mubr.bf16.mxu0 %v7261
        %7596 = vmatmul.mubr.bf16.gmra.mrb[0].mxu0 %v7260
        %v7597 = vpop.f32.mrb[0].mxu0
        %v7598 = vadd.f32 %v7437, %v7597
        %v7599 = vpop.f32.mrb[0].mxu0
        %v7600 = vpop.f32.mrb[0].mxu0
        %v7601 = vadd.f32 %v7440, %v7600
        %v7602 = vpop.f32.mrb[0].mxu0
        %7603 = vmatprep.mubr.bf16.mxu0 %v7265
        %7604 = vmatmul.mubr.bf16.gmra.mrb[0].mxu0 %v7264
        %v7605 = vpop.f32.mrb[0].mxu0
        %v7606 = vadd.f32 %v7445, %v7605
        %v7607 = vpop.f32.mrb[0].mxu0
        %v7608 = vpop.f32.mrb[0].mxu0
        %v7609 = vadd.f32 %v7448, %v7608
        %v7610 = vpop.f32.mrb[0].mxu0
        %7611 = vmatprep.mubr.bf16.mxu0 %v7269
        %7612 = vmatmul.mubr.bf16.gmra.mrb[0].mxu0 %v7268
        %v7613 = vpop.f32.mrb[0].mxu0
        %v7614 = vadd.f32 %v7453, %v7613
        %v7615 = vpop.f32.mrb[0].mxu0
        %v7616 = vpop.f32.mrb[0].mxu0
        %v7617 = vadd.f32 %v7456, %v7616
        %v7618 = vpop.f32.mrb[0].mxu0
        %7619 = vmatprep.mubr.bf16.mxu0 %v7273
        %7620 = vmatmul.mubr.bf16.gmra.mrb[0].mxu0 %v7272
        %v7621 = vpop.f32.mrb[0].mxu0
        %v7622 = vadd.f32 %v7461, %v7621
        %v7623 = vpop.f32.mrb[0].mxu0
        %v7624 = vpop.f32.mrb[0].mxu0
        %v7625 = vadd.f32 %v7464, %v7624
        %v7626 = vpop.f32.mrb[0].mxu0
        %7627 = vmatprep.mubr.bf16.mxu0 %v7277
        %7628 = vmatmul.mubr.bf16.gmra.mrb[0].mxu0 %v7276
        %v7629 = vpop.f32.mrb[0].mxu0
        %v7630 = vadd.f32 %v7469, %v7629
        %v7631 = vpop.f32.mrb[0].mxu0
        %v7632 = vpop.f32.mrb[0].mxu0
        %v7633 = vadd.f32 %v7472, %v7632
        %v7634 = vpop.f32.mrb[0].mxu0
        %7635 = vmatprep.mubr.bf16.mxu0 %v7281
        %7636 = vmatmul.mubr.bf16.gmra.mrb[0].mxu0 %v7280
        %v7637 = vpop.f32.mrb[0].mxu0
        %v7638 = vadd.f32 %v7477, %v7637
        %v7639 = vpop.f32.mrb[0].mxu0
        %v7640 = vpop.f32.mrb[0].mxu0
        %v7641 = vadd.f32 %v7480, %v7640
        %v7642 = vpop.f32.mrb[0].mxu0
        %7643 = vmatprep.mubr.bf16.mxu0 %v7285
        %7644 = vmatmul.mubr.bf16.gmra.mrb[0].mxu0 %v7284
        %v7645 = vpop.f32.mrb[0].mxu0
        %v7646 = vadd.f32 %v7485, %v7645
        %v7647 = vpop.f32.mrb[0].mxu0
        %v7648 = vpop.f32.mrb[0].mxu0
        %v7649 = vadd.f32 %v7488, %v7648
        %v7650 = vpop.f32.mrb[0].mxu0
        %7651 = vmatprep.mubr.bf16.mxu0 %v7289
        %7652 = vmatmul.mubr.bf16.gmra.mrb[0].mxu0 %v7288
        %v7653 = vpop.f32.mrb[0].mxu0
        %v7654 = vadd.f32 %v7493, %v7653
        %v7655 = vpop.f32.mrb[0].mxu0
        %v7656 = vpop.f32.mrb[0].mxu0
        %v7657 = vadd.f32 %v7496, %v7656
        %v7658 = vpop.f32.mrb[0].mxu0
        %7659 = vmatprep.mubr.bf16.mxu0 %v7293
        %7660 = vmatmul.mubr.bf16.gmra.mrb[0].mxu0 %v7292
        %v7661 = vpop.f32.mrb[0].mxu0
        %v7662 = vadd.f32 %v7501, %v7661
        %v7663 = vpop.f32.mrb[0].mxu0
        %v7664 = vpop.f32.mrb[0].mxu0
        %v7665 = vadd.f32 %v7504, %v7664
        %v7666 = vpop.f32.mrb[0].mxu0
        %7667 = vmatprep.mubr.bf16.mxu0 %v7297
        %7668 = vmatmul.mubr.bf16.gmra.mrb[0].mxu0 %v7296
        %v7669 = vpop.f32.mrb[0].mxu0
        %v7670 = vadd.f32 %v7509, %v7669
        %v7671 = vpop.f32.mrb[0].mxu0
        %v7672 = vpop.f32.mrb[0].mxu0
        %v7673 = vadd.f32 %v7512, %v7672
        %v7674 = vpop.f32.mrb[0].mxu0
        %7675 = vmatprep.mubr.bf16.mxu0 %v7301
        %7676 = vmatmul.mubr.bf16.gmra.mrb[0].mxu0 %v7300
        %v7677 = vpop.f32.mrb[0].mxu0
        %v7678 = vadd.f32 %v7517, %v7677
        %v7679 = vpop.f32.mrb[0].mxu0
        %v7680 = vpop.f32.mrb[0].mxu0
        %v7681 = vadd.f32 %v7520, %v7680
        %v7682 = vpop.f32.mrb[0].mxu0
        %7683 = vmatprep.mubr.bf16.mxu0 %v7305
        %7684 = vmatmul.mubr.bf16.gmra.mrb[0].mxu0 %v7304
        %v7685 = vpop.f32.mrb[0].mxu0
        %v7686 = vadd.f32 %v7525, %v7685
        %v7687 = vpop.f32.mrb[0].mxu0
        %v7688 = vpop.f32.mrb[0].mxu0
        %v7689 = vadd.f32 %v7528, %v7688
        %v7690 = vpop.f32.mrb[0].mxu0
        %7691 = vdwg.mxu0
        %v7692 = vmax.f32 %v7566, 0.0
        %v7693 = vmax.f32 %v7569, 0.0
        %v7694 = vmax.f32 %v7574, 0.0
        %v7695 = vmax.f32 %v7577, 0.0
        %v7696 = vmax.f32 %v7582, 0.0
        %v7697 = vmax.f32 %v7585, 0.0
        %v7698 = vmax.f32 %v7590, 0.0
        %v7699 = vmax.f32 %v7593, 0.0
        %v7700 = vmax.f32 %v7598, 0.0
        %v7701 = vmax.f32 %v7601, 0.0
        %v7702 = vmax.f32 %v7606, 0.0
        %v7703 = vmax.f32 %v7609, 0.0
        %v7704 = vmax.f32 %v7614, 0.0
        %v7705 = vmax.f32 %v7617, 0.0
        %v7706 = vmax.f32 %v7622, 0.0
        %v7707 = vmax.f32 %v7625, 0.0
        %v7708 = vmax.f32 %v7630, 0.0
        %v7709 = vmax.f32 %v7633, 0.0
        %v7710 = vmax.f32 %v7638, 0.0
        %v7711 = vmax.f32 %v7641, 0.0
        %v7712 = vmax.f32 %v7646, 0.0
        %v7713 = vmax.f32 %v7649, 0.0
        %v7714 = vmax.f32 %v7654, 0.0
        %v7715 = vmax.f32 %v7657, 0.0
        %v7716 = vmax.f32 %v7662, 0.0
        %v7717 = vmax.f32 %v7665, 0.0
        %v7718 = vmax.f32 %v7670, 0.0
        %v7719 = vmax.f32 %v7673, 0.0
        %v7720 = vmax.f32 %v7678, 0.0
        %v7721 = vmax.f32 %v7681, 0.0
        %v7722 = vmax.f32 %v7686, 0.0
        %v7723 = vmax.f32 %v7689, 0.0
        %v7724 = vpack.c.bf16 %v7693, %v7692
        %v7725 = vpack.c.bf16 %v7695, %v7694
        %v7726 = vpack.c.bf16 %v7697, %v7696
        %v7727 = vpack.c.bf16 %v7699, %v7698
        %v7728 = vpack.c.bf16 %v7701, %v7700
        %v7729 = vpack.c.bf16 %v7703, %v7702
        %v7730 = vpack.c.bf16 %v7705, %v7704
        %v7731 = vpack.c.bf16 %v7707, %v7706
        %v7732 = vpack.c.bf16 %v7709, %v7708
        %v7733 = vpack.c.bf16 %v7711, %v7710
        %v7734 = vpack.c.bf16 %v7713, %v7712
        %v7735 = vpack.c.bf16 %v7715, %v7714
        %v7736 = vpack.c.bf16 %v7717, %v7716
        %v7737 = vpack.c.bf16 %v7719, %v7718
        %v7738 = vpack.c.bf16 %v7721, %v7720
        %v7739 = vpack.c.bf16 %v7723, %v7722
        %v7740 = vld [vmem:[#allocation20] sm:$0xff]
        %v7741 = vld [vmem:[#allocation20 + $0x8] sm:$0xff]
        %v7742 = vld [vmem:[#allocation20 + $0x10] sm:$0xff]
        %v7743 = vld [vmem:[#allocation20 + $0x18] sm:$0xff]
        %v7744 = vld [vmem:[#allocation20 + $0x20] sm:$0xff]
        %v7745 = vld [vmem:[#allocation20 + $0x28] sm:$0xff]
        %v7746 = vld [vmem:[#allocation20 + $0x30] sm:$0xff]
        %v7747 = vld [vmem:[#allocation20 + $0x38] sm:$0xff]
        %v7748 = vld [vmem:[#allocation20 + $0x40] sm:$0xff]
        %v7749 = vld [vmem:[#allocation20 + $0x48] sm:$0xff]
        %v7750 = vld [vmem:[#allocation20 + $0x50] sm:$0xff]
        %v7751 = vld [vmem:[#allocation20 + $0x58] sm:$0xff]
        %v7752 = vld [vmem:[#allocation20 + $0x60] sm:$0xff]
        %v7753 = vld [vmem:[#allocation20 + $0x68] sm:$0xff]
        %v7754 = vld [vmem:[#allocation20 + $0x70] sm:$0xff]
        %v7755 = vld [vmem:[#allocation20 + $0x78] sm:$0xff]
        %v7756 = vld [vmem:[#allocation20 + $0x80] sm:$0xff]
        %v7757 = vld [vmem:[#allocation20 + $0x88] sm:$0xff]
        %v7758 = vld [vmem:[#allocation20 + $0x90] sm:$0xff]
        %v7759 = vld [vmem:[#allocation20 + $0x98] sm:$0xff]
        %v7760 = vld [vmem:[#allocation20 + $0xa0] sm:$0xff]
        %v7761 = vld [vmem:[#allocation20 + $0xa8] sm:$0xff]
        %v7762 = vld [vmem:[#allocation20 + $0xb0] sm:$0xff]
        %v7763 = vld [vmem:[#allocation20 + $0xb8] sm:$0xff]
        %v7764 = vld [vmem:[#allocation22] sm:$0xff]
        %v7765 = vld [vmem:[#allocation22 + $0x8] sm:$0xff]
        %v7766 = vld [vmem:[#allocation22 + $0x10] sm:$0xff]
        %v7767 = vld [vmem:[#allocation22 + $0x18] sm:$0xff]
        %v7768 = vld [vmem:[#allocation22 + $0x20] sm:$0xff]
        %v7769 = vld [vmem:[#allocation22 + $0x28] sm:$0xff]
        %v7770 = vld [vmem:[#allocation22 + $0x30] sm:$0xff]
        %v7771 = vld [vmem:[#allocation22 + $0x38] sm:$0xff]
        %v7772 = vld [vmem:[#allocation22 + $0x40] sm:$0xff]
        %v7773 = vld [vmem:[#allocation22 + $0x48] sm:$0xff]
        %v7774 = vld [vmem:[#allocation22 + $0x50] sm:$0xff]
        %v7775 = vld [vmem:[#allocation22 + $0x58] sm:$0xff]
        %v7776 = vld [vmem:[#allocation22 + $0x60] sm:$0xff]
        %v7777 = vld [vmem:[#allocation22 + $0x68] sm:$0xff]
        %v7778 = vld [vmem:[#allocation22 + $0x70] sm:$0xff]
        %v7779 = vld [vmem:[#allocation22 + $0x78] sm:$0xff]
        %v7780 = vld [vmem:[#allocation22 + $0x80] sm:$0xff]
        %v7781 = vld [vmem:[#allocation22 + $0x88] sm:$0xff]
        %v7782 = vld [vmem:[#allocation22 + $0x90] sm:$0xff]
        %v7783 = vld [vmem:[#allocation22 + $0x98] sm:$0xff]
        %v7784 = vld [vmem:[#allocation22 + $0xa0] sm:$0xff]
        %v7785 = vld [vmem:[#allocation22 + $0xa8] sm:$0xff]
        %v7786 = vld [vmem:[#allocation22 + $0xb0] sm:$0xff]
        %v7787 = vld [vmem:[#allocation22 + $0xb8] sm:$0xff]
        %7789 = vset.pattern.permute.xlu0 0
        %7790 = vperm.xlu0 %7789, %v7764
        %v7791 = vpop.permute.xlu0 %7790
        %7794 = vset.pattern.permute.xlu0 0
        %7795 = vperm.xlu0 %7794, %v7765
        %v7796 = vpop.permute.xlu0 %7795
        %7799 = vset.pattern.permute.xlu0 0
        %7800 = vperm.xlu0 %7799, %v7766
        %v7801 = vpop.permute.xlu0 %7800
        %7804 = vset.pattern.permute.xlu0 0
        %7805 = vperm.xlu0 %7804, %v7767
        %v7806 = vpop.permute.xlu0 %7805
        %7809 = vset.pattern.permute.xlu0 0
        %7810 = vperm.xlu0 %7809, %v7768
        %v7811 = vpop.permute.xlu0 %7810
        %7814 = vset.pattern.permute.xlu0 0
        %7815 = vperm.xlu0 %7814, %v7769
        %v7816 = vpop.permute.xlu0 %7815
        %7819 = vset.pattern.permute.xlu0 0
        %7820 = vperm.xlu0 %7819, %v7770
        %v7821 = vpop.permute.xlu0 %7820
        %7824 = vset.pattern.permute.xlu0 0
        %7825 = vperm.xlu0 %7824, %v7771
        %v7826 = vpop.permute.xlu0 %7825
        %7829 = vset.pattern.permute.xlu0 0
        %7830 = vperm.xlu0 %7829, %v7772
        %v7831 = vpop.permute.xlu0 %7830
        %7834 = vset.pattern.permute.xlu0 0
        %7835 = vperm.xlu0 %7834, %v7773
        %v7836 = vpop.permute.xlu0 %7835
        %7839 = vset.pattern.permute.xlu0 0
        %7840 = vperm.xlu0 %7839, %v7774
        %v7841 = vpop.permute.xlu0 %7840
        %7844 = vset.pattern.permute.xlu0 0
        %7845 = vperm.xlu0 %7844, %v7775
        %v7846 = vpop.permute.xlu0 %7845
        %7849 = vset.pattern.permute.xlu0 0
        %7850 = vperm.xlu0 %7849, %v7776
        %v7851 = vpop.permute.xlu0 %7850
        %7854 = vset.pattern.permute.xlu0 0
        %7855 = vperm.xlu0 %7854, %v7777
        %v7856 = vpop.permute.xlu0 %7855
        %7859 = vset.pattern.permute.xlu0 0
        %7860 = vperm.xlu0 %7859, %v7778
        %v7861 = vpop.permute.xlu0 %7860
        %7864 = vset.pattern.permute.xlu0 0
        %7865 = vperm.xlu0 %7864, %v7779
        %v7866 = vpop.permute.xlu0 %7865
        %7869 = vset.pattern.permute.xlu0 0
        %7870 = vperm.xlu0 %7869, %v7780
        %v7871 = vpop.permute.xlu0 %7870
        %7874 = vset.pattern.permute.xlu0 0
        %7875 = vperm.xlu0 %7874, %v7781
        %v7876 = vpop.permute.xlu0 %7875
        %7879 = vset.pattern.permute.xlu0 0
        %7880 = vperm.xlu0 %7879, %v7782
        %v7881 = vpop.permute.xlu0 %7880
        %7884 = vset.pattern.permute.xlu0 0
        %7885 = vperm.xlu0 %7884, %v7783
        %v7886 = vpop.permute.xlu0 %7885
        %7889 = vset.pattern.permute.xlu0 0
        %7890 = vperm.xlu0 %7889, %v7784
        %v7891 = vpop.permute.xlu0 %7890
        %7894 = vset.pattern.permute.xlu0 0
        %7895 = vperm.xlu0 %7894, %v7785
        %v7896 = vpop.permute.xlu0 %7895
        %7899 = vset.pattern.permute.xlu0 0
        %7900 = vperm.xlu0 %7899, %v7786
        %v7901 = vpop.permute.xlu0 %7900
        %7904 = vset.pattern.permute.xlu0 0
        %7905 = vperm.xlu0 %7904, %v7787
        %v7906 = vpop.permute.xlu0 %7905
        %v7932 = vunpack.c.l.b16 %v7740
        %v7933 = vunpack.c.h.b16 %v7740
        %v7934 = vunpack.c.l.b16 %v7741
        %v7935 = vunpack.c.h.b16 %v7741
        %v7936 = vunpack.c.l.b16 %v7742
        %v7937 = vunpack.c.h.b16 %v7742
        %v7938 = vunpack.c.l.b16 %v7743
        %v7939 = vunpack.c.h.b16 %v7743
        %v7940 = vunpack.c.l.b16 %v7744
        %v7941 = vunpack.c.h.b16 %v7744
        %v7942 = vunpack.c.l.b16 %v7745
        %v7943 = vunpack.c.h.b16 %v7745
        %v7944 = vunpack.c.l.b16 %v7746
        %v7945 = vunpack.c.h.b16 %v7746
        %v7946 = vunpack.c.l.b16 %v7747
        %v7947 = vunpack.c.h.b16 %v7747
        %v7948 = vunpack.c.l.b16 %v7748
        %v7949 = vunpack.c.h.b16 %v7748
        %v7950 = vunpack.c.l.b16 %v7749
        %v7951 = vunpack.c.h.b16 %v7749
        %v7952 = vunpack.c.l.b16 %v7750
        %v7953 = vunpack.c.h.b16 %v7750
        %v7954 = vunpack.c.l.b16 %v7751
        %v7955 = vunpack.c.h.b16 %v7751
        %v7956 = vunpack.c.l.b16 %v7752
        %v7957 = vunpack.c.h.b16 %v7752
        %v7958 = vunpack.c.l.b16 %v7753
        %v7959 = vunpack.c.h.b16 %v7753
        %v7960 = vunpack.c.l.b16 %v7754
        %v7961 = vunpack.c.h.b16 %v7754
        %v7962 = vunpack.c.l.b16 %v7755
        %v7963 = vunpack.c.h.b16 %v7755
        %v7964 = vunpack.c.l.b16 %v7756
        %v7965 = vunpack.c.h.b16 %v7756
        %v7966 = vunpack.c.l.b16 %v7757
        %v7967 = vunpack.c.h.b16 %v7757
        %v7968 = vunpack.c.l.b16 %v7758
        %v7969 = vunpack.c.h.b16 %v7758
        %v7970 = vunpack.c.l.b16 %v7759
        %v7971 = vunpack.c.h.b16 %v7759
        %v7972 = vunpack.c.l.b16 %v7760
        %v7973 = vunpack.c.h.b16 %v7760
        %v7974 = vunpack.c.l.b16 %v7761
        %v7975 = vunpack.c.h.b16 %v7761
        %v7976 = vunpack.c.l.b16 %v7762
        %v7977 = vunpack.c.h.b16 %v7762
        %v7978 = vunpack.c.l.b16 %v7763
        %v7979 = vunpack.c.h.b16 %v7763
        %v7980 = vpack.c.b16 %v7934, %v7932
        %v7981 = vpack.c.b16 %v7935, %v7933
        %v7982 = vpack.c.b16 %v7938, %v7936
        %v7983 = vpack.c.b16 %v7939, %v7937
        %v7984 = vpack.c.b16 %v7942, %v7940
        %v7985 = vpack.c.b16 %v7943, %v7941
        %v7986 = vpack.c.b16 %v7946, %v7944
        %v7987 = vpack.c.b16 %v7947, %v7945
        %v7988 = vpack.c.b16 %v7950, %v7948
        %v7989 = vpack.c.b16 %v7951, %v7949
        %v7990 = vpack.c.b16 %v7954, %v7952
        %v7991 = vpack.c.b16 %v7955, %v7953
        %v7992 = vpack.c.b16 %v7958, %v7956
        %v7993 = vpack.c.b16 %v7959, %v7957
        %v7994 = vpack.c.b16 %v7962, %v7960
        %v7995 = vpack.c.b16 %v7963, %v7961
        %v7996 = vpack.c.b16 %v7966, %v7964
        %v7997 = vpack.c.b16 %v7967, %v7965
        %v7998 = vpack.c.b16 %v7970, %v7968
        %v7999 = vpack.c.b16 %v7971, %v7969
        %v8000 = vpack.c.b16 %v7974, %v7972
        %v8001 = vpack.c.b16 %v7975, %v7973
        %v8002 = vpack.c.b16 %v7978, %v7976
        %v8003 = vpack.c.b16 %v7979, %v7977
        %8028 = vmatprep.subr.bf16.mxu0 0
        %8029 = vmatpush1.bf16.msra.mxu0 %v7724
        %8030 = vmatprep.subr.bf16.mxu0 0
        %8031 = vmatpush1.bf16.msra.mxu0 %v7725
        %8032 = vmatprep.subr.bf16.mxu0 0
        %8033 = vmatpush1.bf16.msra.mxu0 %v7726
        %8034 = vmatprep.subr.bf16.mxu0 0
        %8035 = vmatpush1.bf16.msra.mxu0 %v7727
        %8036 = vmatprep.subr.bf16.mxu0 0
        %8037 = vmatpush1.bf16.msra.mxu0 %v7728
        %8038 = vmatprep.subr.bf16.mxu0 0
        %8039 = vmatpush1.bf16.msra.mxu0 %v7729
        %8040 = vmatprep.subr.bf16.mxu0 0
        %8041 = vmatpush1.bf16.msra.mxu0 %v7730
        %8042 = vmatprep.subr.bf16.mxu0 0
        %8043 = vmatpush1.bf16.msra.mxu0 %v7731
        %8044 = vmatprep.subr.bf16.mxu0 0
        %8045 = vmatpush1.bf16.msra.mxu0 %v7732
        %8046 = vmatprep.subr.bf16.mxu0 0
        %8047 = vmatpush1.bf16.msra.mxu0 %v7733
        %8048 = vmatprep.subr.bf16.mxu0 0
        %8049 = vmatpush1.bf16.msra.mxu0 %v7734
        %8050 = vmatprep.subr.bf16.mxu0 0
        %8051 = vmatpush1.bf16.msra.mxu0 %v7735
        %8052 = vmatprep.subr.bf16.mxu0 0
        %8053 = vmatpush1.bf16.msra.mxu0 %v7736
        %8054 = vmatprep.subr.bf16.mxu0 0
        %8055 = vmatpush1.bf16.msra.mxu0 %v7737
        %8056 = vmatprep.subr.bf16.mxu0 0
        %8057 = vmatpush1.bf16.msra.mxu0 %v7738
        %8058 = vmatprep.subr.bf16.mxu0 0
        %8059 = vmatpush1.bf16.msra.mxu0 %v7739
        %8060 = vmatprep.mubr.bf16.mxu0 %v7981
        %8061 = vmatmul.mubr.bf16.gmra.mrb[0].mxu0 %v7980
        %v8062 = vpop.f32.mrb[0].mxu0
        %v8063 = vadd.f32 %v7791, %v8062
        %v8064 = vpop.f32.mrb[0].mxu0
        %v8065 = vpop.f32.mrb[0].mxu0
        %v8066 = vadd.f32 %v7796, %v8065
        %v8067 = vpop.f32.mrb[0].mxu0
        %8068 = vmatprep.mubr.bf16.mxu0 %v7983
        %8069 = vmatmul.mubr.bf16.gmra.mrb[0].mxu0 %v7982
        %v8070 = vpop.f32.mrb[0].mxu0
        %v8071 = vadd.f32 %v7801, %v8070
        %v8072 = vpop.f32.mrb[0].mxu0
        %v8073 = vpop.f32.mrb[0].mxu0
        %v8074 = vadd.f32 %v7806, %v8073
        %v8075 = vpop.f32.mrb[0].mxu0
        %8076 = vmatprep.mubr.bf16.mxu0 %v7985
        %8077 = vmatmul.mubr.bf16.gmra.mrb[0].mxu0 %v7984
        %v8078 = vpop.f32.mrb[0].mxu0
        %v8079 = vadd.f32 %v7811, %v8078
        %v8080 = vpop.f32.mrb[0].mxu0
        %v8081 = vpop.f32.mrb[0].mxu0
        %v8082 = vadd.f32 %v7816, %v8081
        %v8083 = vpop.f32.mrb[0].mxu0
        %8084 = vmatprep.mubr.bf16.mxu0 %v7987
        %8085 = vmatmul.mubr.bf16.gmra.mrb[0].mxu0 %v7986
        %v8086 = vpop.f32.mrb[0].mxu0
        %v8087 = vadd.f32 %v7821, %v8086
        %v8088 = vpop.f32.mrb[0].mxu0
        %v8089 = vpop.f32.mrb[0].mxu0
        %v8090 = vadd.f32 %v7826, %v8089
        %v8091 = vpop.f32.mrb[0].mxu0
        %8092 = vmatprep.mubr.bf16.mxu0 %v7989
        %8093 = vmatmul.mubr.bf16.gmra.mrb[0].mxu0 %v7988
        %v8094 = vpop.f32.mrb[0].mxu0
        %v8095 = vadd.f32 %v7831, %v8094
        %v8096 = vpop.f32.mrb[0].mxu0
        %v8097 = vpop.f32.mrb[0].mxu0
        %v8098 = vadd.f32 %v7836, %v8097
        %v8099 = vpop.f32.mrb[0].mxu0
        %8100 = vmatprep.mubr.bf16.mxu0 %v7991
        %8101 = vmatmul.mubr.bf16.gmra.mrb[0].mxu0 %v7990
        %v8102 = vpop.f32.mrb[0].mxu0
        %v8103 = vadd.f32 %v7841, %v8102
        %v8104 = vpop.f32.mrb[0].mxu0
        %v8105 = vpop.f32.mrb[0].mxu0
        %v8106 = vadd.f32 %v7846, %v8105
        %v8107 = vpop.f32.mrb[0].mxu0
        %8108 = vmatprep.mubr.bf16.mxu0 %v7993
        %8109 = vmatmul.mubr.bf16.gmra.mrb[0].mxu0 %v7992
        %v8110 = vpop.f32.mrb[0].mxu0
        %v8111 = vadd.f32 %v7851, %v8110
        %v8112 = vpop.f32.mrb[0].mxu0
        %v8113 = vpop.f32.mrb[0].mxu0
        %v8114 = vadd.f32 %v7856, %v8113
        %v8115 = vpop.f32.mrb[0].mxu0
        %8116 = vmatprep.mubr.bf16.mxu0 %v7995
        %8117 = vmatmul.mubr.bf16.gmra.mrb[0].mxu0 %v7994
        %v8118 = vpop.f32.mrb[0].mxu0
        %v8119 = vadd.f32 %v7861, %v8118
        %v8120 = vpop.f32.mrb[0].mxu0
        %v8121 = vpop.f32.mrb[0].mxu0
        %v8122 = vadd.f32 %v7866, %v8121
        %v8123 = vpop.f32.mrb[0].mxu0
        %8124 = vmatprep.mubr.bf16.mxu0 %v7997
        %8125 = vmatmul.mubr.bf16.gmra.mrb[0].mxu0 %v7996
        %v8126 = vpop.f32.mrb[0].mxu0
        %v8127 = vadd.f32 %v7871, %v8126
        %v8128 = vpop.f32.mrb[0].mxu0
        %v8129 = vpop.f32.mrb[0].mxu0
        %v8130 = vadd.f32 %v7876, %v8129
        %v8131 = vpop.f32.mrb[0].mxu0
        %8132 = vmatprep.mubr.bf16.mxu0 %v7999
        %8133 = vmatmul.mubr.bf16.gmra.mrb[0].mxu0 %v7998
        %v8134 = vpop.f32.mrb[0].mxu0
        %v8135 = vadd.f32 %v7881, %v8134
        %v8136 = vpop.f32.mrb[0].mxu0
        %v8137 = vpop.f32.mrb[0].mxu0
        %v8138 = vadd.f32 %v7886, %v8137
        %v8139 = vpop.f32.mrb[0].mxu0
        %8140 = vmatprep.mubr.bf16.mxu0 %v8001
        %8141 = vmatmul.mubr.bf16.gmra.mrb[0].mxu0 %v8000
        %v8142 = vpop.f32.mrb[0].mxu0
        %v8143 = vadd.f32 %v7891, %v8142
        %v8144 = vpop.f32.mrb[0].mxu0
        %v8145 = vpop.f32.mrb[0].mxu0
        %v8146 = vadd.f32 %v7896, %v8145
        %v8147 = vpop.f32.mrb[0].mxu0
        %8148 = vmatprep.mubr.bf16.mxu0 %v8003
        %8149 = vmatmul.mubr.bf16.gmra.mrb[0].mxu0 %v8002
        %v8150 = vpop.f32.mrb[0].mxu0
        %v8151 = vadd.f32 %v7901, %v8150
        %v8152 = vpop.f32.mrb[0].mxu0
        %v8153 = vpop.f32.mrb[0].mxu0
        %v8154 = vadd.f32 %v7906, %v8153
        %v8155 = vpop.f32.mrb[0].mxu0
        %8156 = vdwg.mxu0
        %v8157 = vlaneseq
        %v8158 = vand.u32 %v8157, 127
        %v8159 = vld [vmem:[#allocation23] sm:$0xff]
        %v8160 = vld [vmem:[#allocation23 + $0x8] sm:$0xff]
        %v8161 = vld [vmem:[#allocation23 + $0x10] sm:$0xff]
        %v8162 = vld [vmem:[#allocation23 + $0x18] sm:$0xff]
        %v8163 = vld [vmem:[#allocation23 + $0x20] sm:$0xff]
        %v8164 = vld [vmem:[#allocation23 + $0x28] sm:$0xff]
        %v8165 = vld [vmem:[#allocation23 + $0x30] sm:$0xff]
        %v8166 = vld [vmem:[#allocation23 + $0x38] sm:$0xff]
        %vm8167 = vcmp.eq.s32.totalorder %v8158, 0
        %v8168 = vsel %vm8167, 1, 0
        %v8169 = vcvt.s32.f32 %v8168
        %8171 = vset.pattern.permute.xlu0 0
        %8172 = vperm.xlu0 %8171, %v8063
        %v8173 = vpop.permute.xlu0 %8172
        %8176 = vset.pattern.permute.xlu0 0
        %8177 = vperm.xlu0 %8176, %v8066
        %v8178 = vpop.permute.xlu0 %8177
        %8181 = vset.pattern.permute.xlu0 0
        %8182 = vperm.xlu0 %8181, %v8071
        %v8183 = vpop.permute.xlu0 %8182
        %8186 = vset.pattern.permute.xlu0 0
        %8187 = vperm.xlu0 %8186, %v8074
        %v8188 = vpop.permute.xlu0 %8187
        %8191 = vset.pattern.permute.xlu0 0
        %8192 = vperm.xlu0 %8191, %v8079
        %v8193 = vpop.permute.xlu0 %8192
        %8196 = vset.pattern.permute.xlu0 0
        %8197 = vperm.xlu0 %8196, %v8082
        %v8198 = vpop.permute.xlu0 %8197
        %8201 = vset.pattern.permute.xlu0 0
        %8202 = vperm.xlu0 %8201, %v8087
        %v8203 = vpop.permute.xlu0 %8202
        %8206 = vset.pattern.permute.xlu0 0
        %8207 = vperm.xlu0 %8206, %v8090
        %v8208 = vpop.permute.xlu0 %8207
        %v8210 = vmul.f32 %v8173, %v8169
        %v8211 = vmul.f32 %v8178, %v8169
        %v8212 = vmul.f32 %v8183, %v8169
        %v8213 = vmul.f32 %v8188, %v8169
        %v8214 = vmul.f32 %v8193, %v8169
        %v8215 = vmul.f32 %v8198, %v8169
        %v8216 = vmul.f32 %v8203, %v8169
        %v8217 = vmul.f32 %v8208, %v8169
        %v8218 = vadd.f32 %v8159, %v8210
        %v8219 = vadd.f32 %v8160, %v8211
        %v8220 = vadd.f32 %v8161, %v8212
        %v8221 = vadd.f32 %v8162, %v8213
        %v8222 = vadd.f32 %v8163, %v8214
        %v8223 = vadd.f32 %v8164, %v8215
        %v8224 = vadd.f32 %v8165, %v8216
        %v8225 = vadd.f32 %v8166, %v8217
        %vm8226 = vcmp.eq.s32.totalorder %v8158, 1
        %v8227 = vsel %vm8226, 1, 0
        %v8228 = vcvt.s32.f32 %v8227
        %8230 = vset.pattern.permute.xlu0 0
        %8231 = vperm.xlu0 %8230, %v8095
        %v8232 = vpop.permute.xlu0 %8231
        %8235 = vset.pattern.permute.xlu0 0
        %8236 = vperm.xlu0 %8235, %v8098
        %v8237 = vpop.permute.xlu0 %8236
        %8240 = vset.pattern.permute.xlu0 0
        %8241 = vperm.xlu0 %8240, %v8103
        %v8242 = vpop.permute.xlu0 %8241
        %8245 = vset.pattern.permute.xlu0 0
        %8246 = vperm.xlu0 %8245, %v8106
        %v8247 = vpop.permute.xlu0 %8246
        %8250 = vset.pattern.permute.xlu0 0
        %8251 = vperm.xlu0 %8250, %v8111
        %v8252 = vpop.permute.xlu0 %8251
        %8255 = vset.pattern.permute.xlu0 0
        %8256 = vperm.xlu0 %8255, %v8114
        %v8257 = vpop.permute.xlu0 %8256
        %8260 = vset.pattern.permute.xlu0 0
        %8261 = vperm.xlu0 %8260, %v8119
        %v8262 = vpop.permute.xlu0 %8261
        %8265 = vset.pattern.permute.xlu0 0
        %8266 = vperm.xlu0 %8265, %v8122
        %v8267 = vpop.permute.xlu0 %8266
        %v8269 = vmul.f32 %v8232, %v8228
        %v8270 = vmul.f32 %v8237, %v8228
        %v8271 = vmul.f32 %v8242, %v8228
        %v8272 = vmul.f32 %v8247, %v8228
        %v8273 = vmul.f32 %v8252, %v8228
        %v8274 = vmul.f32 %v8257, %v8228
        %v8275 = vmul.f32 %v8262, %v8228
        %v8276 = vmul.f32 %v8267, %v8228
        %v8277 = vadd.f32 %v8218, %v8269
        %v8278 = vadd.f32 %v8219, %v8270
        %v8279 = vadd.f32 %v8220, %v8271
        %v8280 = vadd.f32 %v8221, %v8272
        %v8281 = vadd.f32 %v8222, %v8273
        %v8282 = vadd.f32 %v8223, %v8274
        %v8283 = vadd.f32 %v8224, %v8275
        %v8284 = vadd.f32 %v8225, %v8276
        %vm8285 = vcmp.eq.s32.totalorder %v8158, 2
        %v8286 = vsel %vm8285, 1, 0
        %v8287 = vcvt.s32.f32 %v8286
        %8289 = vset.pattern.permute.xlu0 0
        %8290 = vperm.xlu0 %8289, %v8127
        %v8291 = vpop.permute.xlu0 %8290
        %8294 = vset.pattern.permute.xlu0 0
        %8295 = vperm.xlu0 %8294, %v8130
        %v8296 = vpop.permute.xlu0 %8295
        %8299 = vset.pattern.permute.xlu0 0
        %8300 = vperm.xlu0 %8299, %v8135
        %v8301 = vpop.permute.xlu0 %8300
        %8304 = vset.pattern.permute.xlu0 0
        %8305 = vperm.xlu0 %8304, %v8138
        %v8306 = vpop.permute.xlu0 %8305
        %8309 = vset.pattern.permute.xlu0 0
        %8310 = vperm.xlu0 %8309, %v8143
        %v8311 = vpop.permute.xlu0 %8310
        %8314 = vset.pattern.permute.xlu0 0
        %8315 = vperm.xlu0 %8314, %v8146
        %v8316 = vpop.permute.xlu0 %8315
        %8319 = vset.pattern.permute.xlu0 0
        %8320 = vperm.xlu0 %8319, %v8151
        %v8321 = vpop.permute.xlu0 %8320
        %8324 = vset.pattern.permute.xlu0 0
        %8325 = vperm.xlu0 %8324, %v8154
        %v8326 = vpop.permute.xlu0 %8325
        %v8328 = vmul.f32 %v8291, %v8287
        %v8329 = vmul.f32 %v8296, %v8287
        %v8330 = vmul.f32 %v8301, %v8287
        %v8331 = vmul.f32 %v8306, %v8287
        %v8332 = vmul.f32 %v8311, %v8287
        %v8333 = vmul.f32 %v8316, %v8287
        %v8334 = vmul.f32 %v8321, %v8287
        %v8335 = vmul.f32 %v8326, %v8287
        %v8336 = vadd.f32 %v8277, %v8328
        %v8337 = vadd.f32 %v8278, %v8329
        %v8338 = vadd.f32 %v8279, %v8330
        %v8339 = vadd.f32 %v8280, %v8331
        %v8340 = vadd.f32 %v8281, %v8332
        %v8341 = vadd.f32 %v8282, %v8333
        %v8342 = vadd.f32 %v8283, %v8334
        %v8343 = vadd.f32 %v8284, %v8335
        %v8344 = vpack.c.bf16 %v8337, %v8336
        %v8345 = vpack.c.bf16 %v8339, %v8338
        %v8346 = vpack.c.bf16 %v8341, %v8340
        %v8347 = vpack.c.bf16 %v8343, %v8342
        %v8348 = vld [vmem:[#allocation25] sm:$0xff]
        %v8349 = vld [vmem:[#allocation25 + $0x8] sm:$0xff]
        %v8350 = vld [vmem:[#allocation25 + $0x10] sm:$0xff]
        %v8351 = vld [vmem:[#allocation25 + $0x18] sm:$0xff]
        %v8352 = vld [vmem:[#allocation25 + $0x20] sm:$0xff]
        %v8353 = vld [vmem:[#allocation25 + $0x28] sm:$0xff]
        %v8354 = vld [vmem:[#allocation25 + $0x30] sm:$0xff]
        %v8355 = vld [vmem:[#allocation25 + $0x38] sm:$0xff]
        %8357 = vset.pattern.permute.xlu0 0
        %8358 = vperm.xlu0 %8357, %v8348
        %v8359 = vpop.permute.xlu0 %8358
        %8362 = vset.pattern.permute.xlu0 0
        %8363 = vperm.xlu0 %8362, %v8349
        %v8364 = vpop.permute.xlu0 %8363
        %8367 = vset.pattern.permute.xlu0 0
        %8368 = vperm.xlu0 %8367, %v8350
        %v8369 = vpop.permute.xlu0 %8368
        %8372 = vset.pattern.permute.xlu0 0
        %8373 = vperm.xlu0 %8372, %v8351
        %v8374 = vpop.permute.xlu0 %8373
        %8377 = vset.pattern.permute.xlu0 0
        %8378 = vperm.xlu0 %8377, %v8352
        %v8379 = vpop.permute.xlu0 %8378
        %8382 = vset.pattern.permute.xlu0 0
        %8383 = vperm.xlu0 %8382, %v8353
        %v8384 = vpop.permute.xlu0 %8383
        %8387 = vset.pattern.permute.xlu0 0
        %8388 = vperm.xlu0 %8387, %v8354
        %v8389 = vpop.permute.xlu0 %8388
        %8392 = vset.pattern.permute.xlu0 0
        %8393 = vperm.xlu0 %8392, %v8355
        %v8394 = vpop.permute.xlu0 %8393
        %v8397 = vsel %vm957, %v8344, 0
        %v8400 = vsel %vm957, %v8345, 0
        %v8403 = vsel %vm957, %v8346, 0
        %v8406 = vsel %vm957, %v8347, 0
        %8408 = vmatprep.subr.bf16.mxu0 0
        %8409 = vmatpush1.bf16.msra.mxu0 %v972
        %8410 = vmatprep.subr.bf16.mxu0 0
        %8411 = vmatpush1.bf16.msra.mxu0 0
        %8412 = vmatprep.subr.bf16.mxu0 0
        %8413 = vmatpush1.bf16.msra.mxu0 0
        %8414 = vmatprep.subr.bf16.mxu0 0
        %8415 = vmatpush1.bf16.msra.mxu0 0
        %8416 = vmatprep.subr.bf16.mxu0 0
        %8417 = vmatpush1.bf16.msra.mxu0 0
        %8418 = vmatprep.subr.bf16.mxu0 0
        %8419 = vmatpush1.bf16.msra.mxu0 0
        %8420 = vmatprep.subr.bf16.mxu0 0
        %8421 = vmatpush1.bf16.msra.mxu0 0
        %8422 = vmatprep.subr.bf16.mxu0 0
        %8423 = vmatpush1.bf16.msra.mxu0 0
        %8424 = vmatprep.subr.bf16.mxu0 0
        %8425 = vmatpush1.bf16.msra.mxu0 0
        %8426 = vmatprep.subr.bf16.mxu0 0
        %8427 = vmatpush1.bf16.msra.mxu0 0
        %8428 = vmatprep.subr.bf16.mxu0 0
        %8429 = vmatpush1.bf16.msra.mxu0 0
        %8430 = vmatprep.subr.bf16.mxu0 0
        %8431 = vmatpush1.bf16.msra.mxu0 0
        %8432 = vmatprep.subr.bf16.mxu0 0
        %8433 = vmatpush1.bf16.msra.mxu0 0
        %8434 = vmatprep.subr.bf16.mxu0 0
        %8435 = vmatpush1.bf16.msra.mxu0 0
        %8436 = vmatprep.subr.bf16.mxu0 0
        %8437 = vmatpush1.bf16.msra.mxu0 0
        %8438 = vmatprep.subr.bf16.mxu0 0
        %8439 = vmatpush1.bf16.msra.mxu0 0
        %8440 = vmatprep.mubr.bf16.mxu0 0
        %8441 = vmatmul.mubr.bf16.gmra.mrb[0].mxu0 %v8397
        %v8442 = vpop.f32.mrb[0].mxu0
        %v8443 = vadd.f32 %v8359, %v8442
        %v8444 = vpop.f32.mrb[0].mxu0
        %v8445 = vpop.f32.mrb[0].mxu0
        %v8446 = vadd.f32 %v8364, %v8445
        %v8447 = vpop.f32.mrb[0].mxu0
        %8448 = vmatprep.mubr.bf16.mxu0 0
        %8449 = vmatmul.mubr.bf16.gmra.mrb[0].mxu0 %v8400
        %v8450 = vpop.f32.mrb[0].mxu0
        %v8451 = vadd.f32 %v8369, %v8450
        %v8452 = vpop.f32.mrb[0].mxu0
        %v8453 = vpop.f32.mrb[0].mxu0
        %v8454 = vadd.f32 %v8374, %v8453
        %v8455 = vpop.f32.mrb[0].mxu0
        %8456 = vmatprep.mubr.bf16.mxu0 0
        %8457 = vmatmul.mubr.bf16.gmra.mrb[0].mxu0 %v8403
        %v8458 = vpop.f32.mrb[0].mxu0
        %v8459 = vadd.f32 %v8379, %v8458
        %v8460 = vpop.f32.mrb[0].mxu0
        %v8461 = vpop.f32.mrb[0].mxu0
        %v8462 = vadd.f32 %v8384, %v8461
        %v8463 = vpop.f32.mrb[0].mxu0
        %8464 = vmatprep.mubr.bf16.mxu0 0
        %8465 = vmatmul.mubr.bf16.gmra.mrb[0].mxu0 %v8406
        %v8466 = vpop.f32.mrb[0].mxu0
        %v8467 = vadd.f32 %v8389, %v8466
        %v8468 = vpop.f32.mrb[0].mxu0
        %v8469 = vpop.f32.mrb[0].mxu0
        %v8470 = vadd.f32 %v8394, %v8469
        %v8471 = vpop.f32.mrb[0].mxu0
        %8472 = vdwg.mxu0
        %v8473 = vmax.f32 %v8443, 0.0
        %v8474 = vmax.f32 %v8446, 0.0
        %v8475 = vmax.f32 %v8451, 0.0
        %v8476 = vmax.f32 %v8454, 0.0
        %v8477 = vmax.f32 %v8459, 0.0
        %v8478 = vmax.f32 %v8462, 0.0
        %v8479 = vmax.f32 %v8467, 0.0
        %v8480 = vmax.f32 %v8470, 0.0
        %v8481 = vpack.c.bf16 %v8474, %v8473
        %v8482 = vpack.c.bf16 %v8476, %v8475
        %v8483 = vpack.c.bf16 %v8478, %v8477
        %v8484 = vpack.c.bf16 %v8480, %v8479
        %v8485 = vld [vmem:[#allocation26] sm:$0xf]
        %v8486 = vld [vmem:[#allocation26 + $0x4] sm:$0xf]
        %v8487 = vld [vmem:[#allocation26 + $0x8] sm:$0xf]
        %v8488 = vld [vmem:[#allocation26 + $0xc] sm:$0xf]
        %v8489 = vld [vmem:[#allocation26 + $0x10] sm:$0xf]
        %v8490 = vld [vmem:[#allocation26 + $0x14] sm:$0xf]
        %v8491 = vld [vmem:[#allocation26 + $0x18] sm:$0xf]
        %v8492 = vld [vmem:[#allocation26 + $0x1c] sm:$0xf]
        %v8493 = vld [vmem:[#allocation26 + $0x20] sm:$0xf]
        %v8494 = vld [vmem:[#allocation26 + $0x24] sm:$0xf]
        %v8495 = vld [vmem:[#allocation26 + $0x28] sm:$0xf]
        %v8496 = vld [vmem:[#allocation26 + $0x2c] sm:$0xf]
        %v8497 = vld [vmem:[#allocation26 + $0x30] sm:$0xf]
        %v8498 = vld [vmem:[#allocation26 + $0x34] sm:$0xf]
        %v8499 = vld [vmem:[#allocation26 + $0x38] sm:$0xf]
        %v8500 = vld [vmem:[#allocation26 + $0x3c] sm:$0xf]
        %v8501 = vld [vmem:[#allocation28] sm:$0xff]
        %v8502 = vld [vmem:[#allocation28 + $0x8] sm:$0xff]
        %v8503 = vld [vmem:[#allocation28 + $0x10] sm:$0xff]
        %v8504 = vld [vmem:[#allocation28 + $0x18] sm:$0xff]
        %v8505 = vld [vmem:[#allocation28 + $0x20] sm:$0xff]
        %v8506 = vld [vmem:[#allocation28 + $0x28] sm:$0xff]
        %v8507 = vld [vmem:[#allocation28 + $0x30] sm:$0xff]
        %v8508 = vld [vmem:[#allocation28 + $0x38] sm:$0xff]
        %v8509 = vld [vmem:[#allocation28 + $0x40] sm:$0xff]
        %v8510 = vld [vmem:[#allocation28 + $0x48] sm:$0xff]
        %v8511 = vld [vmem:[#allocation28 + $0x50] sm:$0xff]
        %v8512 = vld [vmem:[#allocation28 + $0x58] sm:$0xff]
        %v8513 = vld [vmem:[#allocation28 + $0x60] sm:$0xff]
        %v8514 = vld [vmem:[#allocation28 + $0x68] sm:$0xff]
        %v8515 = vld [vmem:[#allocation28 + $0x70] sm:$0xff]
        %v8516 = vld [vmem:[#allocation28 + $0x78] sm:$0xff]
        %8518 = vset.pattern.permute.xlu0 0
        %8519 = vperm.xlu0 %8518, %v8501
        %v8520 = vpop.permute.xlu0 %8519
        %8523 = vset.pattern.permute.xlu0 0
        %8524 = vperm.xlu0 %8523, %v8502
        %v8525 = vpop.permute.xlu0 %8524
        %8528 = vset.pattern.permute.xlu0 0
        %8529 = vperm.xlu0 %8528, %v8503
        %v8530 = vpop.permute.xlu0 %8529
        %8533 = vset.pattern.permute.xlu0 0
        %8534 = vperm.xlu0 %8533, %v8504
        %v8535 = vpop.permute.xlu0 %8534
        %8538 = vset.pattern.permute.xlu0 0
        %8539 = vperm.xlu0 %8538, %v8505
        %v8540 = vpop.permute.xlu0 %8539
        %8543 = vset.pattern.permute.xlu0 0
        %8544 = vperm.xlu0 %8543, %v8506
        %v8545 = vpop.permute.xlu0 %8544
        %8548 = vset.pattern.permute.xlu0 0
        %8549 = vperm.xlu0 %8548, %v8507
        %v8550 = vpop.permute.xlu0 %8549
        %8553 = vset.pattern.permute.xlu0 0
        %8554 = vperm.xlu0 %8553, %v8508
        %v8555 = vpop.permute.xlu0 %8554
        %8558 = vset.pattern.permute.xlu0 0
        %8559 = vperm.xlu0 %8558, %v8509
        %v8560 = vpop.permute.xlu0 %8559
        %8563 = vset.pattern.permute.xlu0 0
        %8564 = vperm.xlu0 %8563, %v8510
        %v8565 = vpop.permute.xlu0 %8564
        %8568 = vset.pattern.permute.xlu0 0
        %8569 = vperm.xlu0 %8568, %v8511
        %v8570 = vpop.permute.xlu0 %8569
        %8573 = vset.pattern.permute.xlu0 0
        %8574 = vperm.xlu0 %8573, %v8512
        %v8575 = vpop.permute.xlu0 %8574
        %8578 = vset.pattern.permute.xlu0 0
        %8579 = vperm.xlu0 %8578, %v8513
        %v8580 = vpop.permute.xlu0 %8579
        %8583 = vset.pattern.permute.xlu0 0
        %8584 = vperm.xlu0 %8583, %v8514
        %v8585 = vpop.permute.xlu0 %8584
        %8588 = vset.pattern.permute.xlu0 0
        %8589 = vperm.xlu0 %8588, %v8515
        %v8590 = vpop.permute.xlu0 %8589
        %8593 = vset.pattern.permute.xlu0 0
        %8594 = vperm.xlu0 %8593, %v8516
        %v8595 = vpop.permute.xlu0 %8594
        %v8613 = vunpack.c.l.b16 %v8485
        %v8614 = vunpack.c.l.b16 %v8486
        %v8615 = vunpack.c.l.b16 %v8487
        %v8616 = vunpack.c.l.b16 %v8488
        %v8617 = vunpack.c.l.b16 %v8489
        %v8618 = vunpack.c.l.b16 %v8490
        %v8619 = vunpack.c.l.b16 %v8491
        %v8620 = vunpack.c.l.b16 %v8492
        %v8621 = vunpack.c.l.b16 %v8493
        %v8622 = vunpack.c.l.b16 %v8494
        %v8623 = vunpack.c.l.b16 %v8495
        %v8624 = vunpack.c.l.b16 %v8496
        %v8625 = vunpack.c.l.b16 %v8497
        %v8626 = vunpack.c.l.b16 %v8498
        %v8627 = vunpack.c.l.b16 %v8499
        %v8628 = vunpack.c.l.b16 %v8500
        %v8629 = vpack.c.b16 %v8614, %v8613
        %v8630 = vpack.c.b16 %v8616, %v8615
        %v8631 = vpack.c.b16 %v8618, %v8617
        %v8632 = vpack.c.b16 %v8620, %v8619
        %v8633 = vpack.c.b16 %v8622, %v8621
        %v8634 = vpack.c.b16 %v8624, %v8623
        %v8635 = vpack.c.b16 %v8626, %v8625
        %v8636 = vpack.c.b16 %v8628, %v8627
        %v8638 = vsel %vm1203, %v8629, 0
        %v8641 = vsel %vm1203, %v8630, 0
        %v8644 = vsel %vm1203, %v8631, 0
        %v8647 = vsel %vm1203, %v8632, 0
        %v8650 = vsel %vm1203, %v8633, 0
        %v8653 = vsel %vm1203, %v8634, 0
        %v8656 = vsel %vm1203, %v8635, 0
        %v8659 = vsel %vm1203, %v8636, 0
        %8661 = vmatprep.subr.bf16.mxu0 0
        %8662 = vmatpush1.bf16.msra.mxu0 %v8481
        %8663 = vmatprep.subr.bf16.mxu0 0
        %8664 = vmatpush1.bf16.msra.mxu0 %v8482
        %8665 = vmatprep.subr.bf16.mxu0 0
        %8666 = vmatpush1.bf16.msra.mxu0 %v8483
        %8667 = vmatprep.subr.bf16.mxu0 0
        %8668 = vmatpush1.bf16.msra.mxu0 %v8484
        %8669 = vmatprep.subr.bf16.mxu0 0
        %8670 = vmatpush1.bf16.msra.mxu0 0
        %8671 = vmatprep.subr.bf16.mxu0 0
        %8672 = vmatpush1.bf16.msra.mxu0 0
        %8673 = vmatprep.subr.bf16.mxu0 0
        %8674 = vmatpush1.bf16.msra.mxu0 0
        %8675 = vmatprep.subr.bf16.mxu0 0
        %8676 = vmatpush1.bf16.msra.mxu0 0
        %8677 = vmatprep.subr.bf16.mxu0 0
        %8678 = vmatpush1.bf16.msra.mxu0 0
        %8679 = vmatprep.subr.bf16.mxu0 0
        %8680 = vmatpush1.bf16.msra.mxu0 0
        %8681 = vmatprep.subr.bf16.mxu0 0
        %8682 = vmatpush1.bf16.msra.mxu0 0
        %8683 = vmatprep.subr.bf16.mxu0 0
        %8684 = vmatpush1.bf16.msra.mxu0 0
        %8685 = vmatprep.subr.bf16.mxu0 0
        %8686 = vmatpush1.bf16.msra.mxu0 0
        %8687 = vmatprep.subr.bf16.mxu0 0
        %8688 = vmatpush1.bf16.msra.mxu0 0
        %8689 = vmatprep.subr.bf16.mxu0 0
        %8690 = vmatpush1.bf16.msra.mxu0 0
        %8691 = vmatprep.subr.bf16.mxu0 0
        %8692 = vmatpush1.bf16.msra.mxu0 0
        %8693 = vmatprep.mubr.bf16.mxu0 0
        %8694 = vmatmul.mubr.bf16.gmra.mrb[0].mxu0 %v8638
        %v8695 = vpop.f32.mrb[0].mxu0
        %v8696 = vadd.f32 %v8520, %v8695
        %v8697 = vpop.f32.mrb[0].mxu0
        %v8698 = vpop.f32.mrb[0].mxu0
        %v8699 = vadd.f32 %v8525, %v8698
        %v8700 = vpop.f32.mrb[0].mxu0
        %8701 = vmatprep.mubr.bf16.mxu0 0
        %8702 = vmatmul.mubr.bf16.gmra.mrb[0].mxu0 %v8641
        %v8703 = vpop.f32.mrb[0].mxu0
        %v8704 = vadd.f32 %v8530, %v8703
        %v8705 = vpop.f32.mrb[0].mxu0
        %v8706 = vpop.f32.mrb[0].mxu0
        %v8707 = vadd.f32 %v8535, %v8706
        %v8708 = vpop.f32.mrb[0].mxu0
        %8709 = vmatprep.mubr.bf16.mxu0 0
        %8710 = vmatmul.mubr.bf16.gmra.mrb[0].mxu0 %v8644
        %v8711 = vpop.f32.mrb[0].mxu0
        %v8712 = vadd.f32 %v8540, %v8711
        %v8713 = vpop.f32.mrb[0].mxu0
        %v8714 = vpop.f32.mrb[0].mxu0
        %v8715 = vadd.f32 %v8545, %v8714
        %v8716 = vpop.f32.mrb[0].mxu0
        %8717 = vmatprep.mubr.bf16.mxu0 0
        %8718 = vmatmul.mubr.bf16.gmra.mrb[0].mxu0 %v8647
        %v8719 = vpop.f32.mrb[0].mxu0
        %v8720 = vadd.f32 %v8550, %v8719
        %v8721 = vpop.f32.mrb[0].mxu0
        %v8722 = vpop.f32.mrb[0].mxu0
        %v8723 = vadd.f32 %v8555, %v8722
        %v8724 = vpop.f32.mrb[0].mxu0
        %8725 = vmatprep.mubr.bf16.mxu0 0
        %8726 = vmatmul.mubr.bf16.gmra.mrb[0].mxu0 %v8650
        %v8727 = vpop.f32.mrb[0].mxu0
        %v8728 = vadd.f32 %v8560, %v8727
        %v8729 = vpop.f32.mrb[0].mxu0
        %v8730 = vpop.f32.mrb[0].mxu0
        %v8731 = vadd.f32 %v8565, %v8730
        %v8732 = vpop.f32.mrb[0].mxu0
        %8733 = vmatprep.mubr.bf16.mxu0 0
        %8734 = vmatmul.mubr.bf16.gmra.mrb[0].mxu0 %v8653
        %v8735 = vpop.f32.mrb[0].mxu0
        %v8736 = vadd.f32 %v8570, %v8735
        %v8737 = vpop.f32.mrb[0].mxu0
        %v8738 = vpop.f32.mrb[0].mxu0
        %v8739 = vadd.f32 %v8575, %v8738
        %v8740 = vpop.f32.mrb[0].mxu0
        %8741 = vmatprep.mubr.bf16.mxu0 0
        %8742 = vmatmul.mubr.bf16.gmra.mrb[0].mxu0 %v8656
        %v8743 = vpop.f32.mrb[0].mxu0
        %v8744 = vadd.f32 %v8580, %v8743
        %v8745 = vpop.f32.mrb[0].mxu0
        %v8746 = vpop.f32.mrb[0].mxu0
        %v8747 = vadd.f32 %v8585, %v8746
        %v8748 = vpop.f32.mrb[0].mxu0
        %8749 = vmatprep.mubr.bf16.mxu0 0
        %8750 = vmatmul.mubr.bf16.gmra.mrb[0].mxu0 %v8659
        %v8751 = vpop.f32.mrb[0].mxu0
        %v8752 = vadd.f32 %v8590, %v8751
        %v8753 = vpop.f32.mrb[0].mxu0
        %v8754 = vpop.f32.mrb[0].mxu0
        %v8755 = vadd.f32 %v8595, %v8754
        %v8756 = vpop.f32.mrb[0].mxu0
        %8757 = vdwg.mxu0
        %v8758 = vmax.f32 %v8696, 0.0
        %v8759 = vmax.f32 %v8699, 0.0
        %v8760 = vmax.f32 %v8704, 0.0
        %v8761 = vmax.f32 %v8707, 0.0
        %v8762 = vmax.f32 %v8712, 0.0
        %v8763 = vmax.f32 %v8715, 0.0
        %v8764 = vmax.f32 %v8720, 0.0
        %v8765 = vmax.f32 %v8723, 0.0
        %v8766 = vmax.f32 %v8728, 0.0
        %v8767 = vmax.f32 %v8731, 0.0
        %v8768 = vmax.f32 %v8736, 0.0
        %v8769 = vmax.f32 %v8739, 0.0
        %v8770 = vmax.f32 %v8744, 0.0
        %v8771 = vmax.f32 %v8747, 0.0
        %v8772 = vmax.f32 %v8752, 0.0
        %v8773 = vmax.f32 %v8755, 0.0
        %v8774 = vpack.c.bf16 %v8759, %v8758
        %v8775 = vpack.c.bf16 %v8761, %v8760
        %v8776 = vpack.c.bf16 %v8763, %v8762
        %v8777 = vpack.c.bf16 %v8765, %v8764
        %v8778 = vpack.c.bf16 %v8767, %v8766
        %v8779 = vpack.c.bf16 %v8769, %v8768
        %v8780 = vpack.c.bf16 %v8771, %v8770
        %v8781 = vpack.c.bf16 %v8773, %v8772
        %v8782 = vld [vmem:[#allocation29] sm:$0xf]
        %v8783 = vld [vmem:[#allocation29 + $0x4] sm:$0xf]
        %v8784 = vld [vmem:[#allocation29 + $0x8] sm:$0xf]
        %v8785 = vld [vmem:[#allocation29 + $0xc] sm:$0xf]
        %v8786 = vld [vmem:[#allocation31] sm:$0xff]
        %v8787 = vld [vmem:[#allocation31 + $0x8] sm:$0xff]
        %v8788 = vld [vmem:[#allocation31 + $0x10] sm:$0xff]
        %v8789 = vld [vmem:[#allocation31 + $0x18] sm:$0xff]
        %8791 = vset.pattern.permute.xlu0 0
        %8792 = vperm.xlu0 %8791, %v8786
        %v8793 = vpop.permute.xlu0 %8792
        %8796 = vset.pattern.permute.xlu0 0
        %8797 = vperm.xlu0 %8796, %v8787
        %v8798 = vpop.permute.xlu0 %8797
        %8801 = vset.pattern.permute.xlu0 0
        %8802 = vperm.xlu0 %8801, %v8788
        %v8803 = vpop.permute.xlu0 %8802
        %8806 = vset.pattern.permute.xlu0 0
        %8807 = vperm.xlu0 %8806, %v8789
        %v8808 = vpop.permute.xlu0 %8807
        %v8814 = vunpack.c.l.b16 %v8782
        %v8815 = vunpack.c.l.b16 %v8783
        %v8816 = vunpack.c.l.b16 %v8784
        %v8817 = vunpack.c.l.b16 %v8785
        %v8818 = vpack.c.b16 %v8815, %v8814
        %v8819 = vpack.c.b16 %v8817, %v8816
        %8822 = vmatprep.subr.bf16.mxu0 0
        %8823 = vmatpush1.bf16.msra.mxu0 %v8774
        %8824 = vmatprep.subr.bf16.mxu0 0
        %8825 = vmatpush1.bf16.msra.mxu0 %v8775
        %8826 = vmatprep.subr.bf16.mxu0 0
        %8827 = vmatpush1.bf16.msra.mxu0 %v8776
        %8828 = vmatprep.subr.bf16.mxu0 0
        %8829 = vmatpush1.bf16.msra.mxu0 %v8777
        %8830 = vmatprep.subr.bf16.mxu0 0
        %8831 = vmatpush1.bf16.msra.mxu0 %v8778
        %8832 = vmatprep.subr.bf16.mxu0 0
        %8833 = vmatpush1.bf16.msra.mxu0 %v8779
        %8834 = vmatprep.subr.bf16.mxu0 0
        %8835 = vmatpush1.bf16.msra.mxu0 %v8780
        %8836 = vmatprep.subr.bf16.mxu0 0
        %8837 = vmatpush1.bf16.msra.mxu0 %v8781
        %8838 = vmatprep.subr.bf16.mxu0 0
        %8839 = vmatpush1.bf16.msra.mxu0 0
        %8840 = vmatprep.subr.bf16.mxu0 0
        %8841 = vmatpush1.bf16.msra.mxu0 0
        %8842 = vmatprep.subr.bf16.mxu0 0
        %8843 = vmatpush1.bf16.msra.mxu0 0
        %8844 = vmatprep.subr.bf16.mxu0 0
        %8845 = vmatpush1.bf16.msra.mxu0 0
        %8846 = vmatprep.subr.bf16.mxu0 0
        %8847 = vmatpush1.bf16.msra.mxu0 0
        %8848 = vmatprep.subr.bf16.mxu0 0
        %8849 = vmatpush1.bf16.msra.mxu0 0
        %8850 = vmatprep.subr.bf16.mxu0 0
        %8851 = vmatpush1.bf16.msra.mxu0 0
        %8852 = vmatprep.subr.bf16.mxu0 0
        %8853 = vmatpush1.bf16.msra.mxu0 0
        %8854 = vmatprep.mubr.bf16.mxu0 0
        %8855 = vmatmul.mubr.bf16.gmra.mrb[0].mxu0 %v8818
        %v8856 = vpop.f32.mrb[0].mxu0
        %v8857 = vadd.f32 %v8793, %v8856
        %v8858 = vpop.f32.mrb[0].mxu0
        %v8859 = vpop.f32.mrb[0].mxu0
        %v8860 = vadd.f32 %v8798, %v8859
        %v8861 = vpop.f32.mrb[0].mxu0
        %8862 = vmatprep.mubr.bf16.mxu0 0
        %8863 = vmatmul.mubr.bf16.gmra.mrb[0].mxu0 %v8819
        %v8864 = vpop.f32.mrb[0].mxu0
        %v8865 = vadd.f32 %v8803, %v8864
        %v8866 = vpop.f32.mrb[0].mxu0
        %v8867 = vpop.f32.mrb[0].mxu0
        %v8868 = vadd.f32 %v8808, %v8867
        %v8869 = vpop.f32.mrb[0].mxu0
        %8870 = vdwg.mxu0
        %8871 = vmax.xlane.f32.xlu0 %v8857
        %v8872 = vpop.xlane.xlu0 %8871
        %8873 = vmax.xlane.f32.xlu0 %v8860
        %v8874 = vpop.xlane.xlu0 %8873
        %8875 = vmax.xlane.f32.xlu0 %v8865
        %v8876 = vpop.xlane.xlu0 %8875
        %8877 = vmax.xlane.f32.xlu0 %v8868
        %v8878 = vpop.xlane.xlu0 %8877
        %vm8879 = vcmask 7168
        %8880 = vst.msk [vmem:[%s878] sm:$0xff] %vm8879, %v8872
        %8881 = vst.msk [vmem:[%s878 + $0x8] sm:$0xff] %vm8879, %v8874
        %8882 = vst.msk [vmem:[%s878 + $0x10] sm:$0xff] %vm8879, %v8876
        %8883 = vst.msk [vmem:[%s878 + $0x18] sm:$0xff] %vm8879, %v8878
        %s8884 = sand.u32 %s457, 1
        %s8885 = scalar_lea.sflag [#allocation4], %s8884
        %s8886 = sand.u32 %s457, 1
        %s8887 = smul.addr %s8886, 32
        %s8888 = scalar_lea.vmem [#allocation32], %s8887
        // Predicated region
        $region173: #{pointnet_encoder_forward.1} parent=95 // pred_check
          %p8889 = pneg %p467
        $region174: #{pointnet_encoder_forward.1} parent=95 // pred_check_branch
          %8891 = sbr.rel (%p8889) target = $region176
        $region175: #{pointnet_encoder_forward.1} parent=95 // pred_region
          %s8893 = ssub.s32 512, 512
          %8894 = vsyncadd %s8885, %s8893
          %s8895 = smul.addr %s45, 4
          %s8896 = smul.addr %s8895, 128
          %s8897 = scalar_lea.hbm %s19, %s8896
          %s8898 = sshll.u32 %s8888, 4
          %s8899 = int_to_ptr.vmem [resolvable:$true] %s8898
          %8904 = dma.vmem_to_hbm [thread:$0]  %s8899, 512, %s8897, %s8885, 128, 128, 8
        $region176: #{pointnet_encoder_forward.1} parent=95 // pred_fallthru
          _
      $region96: #{pointnet_encoder_forward.1} parent=5 // pred_fallthru
        _
      %p8905 = scmp.le.s32.totalorder 2, %s40
      // Predicated region
      $region177: #{pointnet_encoder_forward.1} parent=5 // pred_check
        %p8906 = pneg %p8905
      $region178: #{pointnet_encoder_forward.1} parent=5 // pred_check_branch
        %8908 = sbr.rel (%p8906) target = $region180
      $region179: #{pointnet_encoder_forward.1} parent=5 // pred_region
        %s8909 = ssub.s32 %s40, 2
        // Predicated region
        $region181: #{pointnet_encoder_forward.1} parent=179 // pred_check
          %p8910 = pneg %p473
        $region182: #{pointnet_encoder_forward.1} parent=179 // pred_check_branch
          %8912 = sbr.rel (%p8910) target = $region184
        $region183: #{pointnet_encoder_forward.1} parent=179 // pred_region
          %s8913 = sand.u32 %s458, 1
          %s8914 = scalar_lea.sflag [#allocation4], %s8913
          %s8915 = sand.u32 %s458, 1
          %s8916 = smul.addr %s8915, 32
          %s8917 = scalar_lea.vmem [#allocation32], %s8916
          %8918 = dma.done %s8914, 512
        $region184: #{pointnet_encoder_forward.1} parent=179 // pred_fallthru
          _
      $region180: #{pointnet_encoder_forward.1} parent=5 // pred_fallthru
        _
    $region6: #{pointnet_encoder_forward.1} parent=1 // loop_footer
      %s44 = sadd.s32 1, %s40
    $region7: #{pointnet_encoder_forward.1} parent=1 // loop_footer_branch
      %39 = sbr.rel target = $region3
    $region8: #{pointnet_encoder_forward.1} parent=1 // loop_exit
      _
    %8919 = vsyncpa [#allocation3], 1
    %s8920 = scalar_lea.sflag [#allocation3], 1
    %8921 = vsyncpa %s8920, 1
    %8922 = vsyncpa [#allocation6], 1
    %8923 = vsyncpa [#allocation9], 1
    %8924 = vsyncpa [#allocation12], 1
    %8925 = vsyncpa [#allocation15], 1
    %8926 = vsyncpa [#allocation18], 1
    %8927 = vsyncpa [#allocation21], 1
    %8928 = vsyncpa [#allocation24], 1
    %8929 = vsyncpa [#allocation27], 1
    %8930 = vsyncpa [#allocation30], 1
    %8931 = vsyncpa [#allocation4], 1
    %s8932 = scalar_lea.sflag [#allocation4], 1
    %8933 = vsyncpa %s8932, 1

</llo_original>
